<compile_context>
chip_gen: v7x
topology: tpu7x:2x2x1
jax: 0.10.0
libtpu: 0.0.40
codegen_flags: <defaults>
</compile_context>

<pallas_src>
import functools

import jax
import jax.numpy as jnp
from jax.experimental import pallas as pl
from jax.experimental.pallas import tpu as pltpu


# ----------------------------------------------------------------------------
# Fused kernel: 3x conv3x3 -> maxpool(3,2) -> relu -> flatten -> folded linear
# ----------------------------------------------------------------------------
def _fused_kernel(x_ref,
                  w1_ref, b1_ref, w2_ref, b2_ref, w3_ref, b3_ref,
                  wf_ref, bf_ref,
                  o_ref,
                  pad_ref,
                  *, Bt, H, W):
    bf16 = jnp.bfloat16
    Hp, Wp = H + 2, W + 2
    M = Bt * H * W

    # One bulk zero of the shared pad buffer per grid step (bf16).  The halo
    # (rows 0/Hp-1, cols 0/Wp-1) is never overwritten by the interior writes
    # below, so all three convs see correct zero padding.
    pad_ref[...] = jnp.zeros(pad_ref.shape, bf16)

    def conv3x3(act_bf16, w_ref, b_ref):
        # act_bf16: (Bt, H, W, Cin) bf16; w_ref: (9*Cin, Cout) bf16 in
        # (dh, dw, cin) row order; b_ref: (1, Cout) f32.
        cin = act_bf16.shape[-1]
        cout = w_ref.shape[-1]
        # Interior write into the shared pad buffer (channels 0:cin).
        pad_ref[:, 1:1 + H, 1:1 + W, 0:cin] = act_bf16
        acc = None
        # dh-split im2col: 3 matmuls with K = 3*Cin (smaller lhs temporaries,
        # MXU-friendly K), accumulated in f32.
        for dh in range(3):
            taps = [pad_ref[:, dh:dh + H, dw:dw + W, 0:cin] for dw in range(3)]
            lhs = jnp.concatenate(taps, axis=-1).reshape(M, 3 * cin)
            w_dh = w_ref[dh * 3 * cin:(dh + 1) * 3 * cin, :]
            part = jnp.dot(lhs, w_dh, preferred_element_type=jnp.float32)
            acc = part if acc is None else acc + part
        acc = acc + b_ref[...]                        # f32 bias add
        return acc.astype(bf16).reshape(Bt, H, W, cout)

    a1 = conv3x3(x_ref[...], w1_ref, b1_ref)          # (Bt, H, W, 128) bf16
    a2 = conv3x3(a1, w2_ref, b2_ref)                  # (Bt, H, W, 256) bf16
    a3 = conv3x3(a2, w3_ref, b3_ref)                  # (Bt, H, W, 256) bf16

    # MaxPool2d(3, stride=2) + ReLU in bf16, emitting the NHWC flatten order
    # (h, w, c) directly (classifier weights are pre-permuted to match).
    Ho = (H - 3) // 2 + 1
    Wo = (W - 3) // 2 + 1
    row_max = [jnp.max(a3[:, 2 * oh:2 * oh + 3, :, :], axis=1)   # (Bt, W, 256)
               for oh in range(Ho)]
    parts = [jnp.max(row_max[oh][:, 2 * ow:2 * ow + 3, :], axis=1)
             for oh in range(Ho) for ow in range(Wo)]
    flat = jnp.maximum(jnp.concatenate(parts, axis=-1), 0.0)     # bf16 (Bt, 2304)

    # Folded classifier (Linear∘Linear∘Linear -> one matmul), lane-dense out.
    out = jnp.dot(flat, wf_ref[...],
                  preferred_element_type=jnp.float32) + bf_ref[...]
    o_ref[...] = out                                              # (Bt, 128) f32


# ----------------------------------------------------------------------------
# Per-generation tiling / VMEM configuration
# ----------------------------------------------------------------------------
def _device_config():
    try:
        kind = jax.devices()[0].device_kind.lower()
    except Exception:
        kind = ""
    if "v5" in kind or "v6" in kind:
        # 128 MiB physical VMEM, single TensorCore: big tiles, high limit.
        return dict(bt_max=64, vmem_bytes=100 << 20, split_two=False)
    # v7x (64 MiB VMEM/core, 2 TensorCores) and unknown chips: conservative
    # limit, and keep >= 2 grid steps so both cores get work.
    return dict(bt_max=32, vmem_bytes=56 << 20, split_two=True)


# ----------------------------------------------------------------------------
# Wrapper
# ----------------------------------------------------------------------------
def alexnet_up_forward(x_nchw, prep):
    # x_nchw: (N, 64, H, W) float32; H=W=8 so the pooled spatial is 3x3 as the
    # classifier's 256*3*3 flatten requires.
    N, Cin, H, W = x_nchw.shape
    assert Cin == 64
    Ho = (H - 3) // 2 + 1
    Wo = (W - 3) // 2 + 1
    assert Ho == 3 and Wo == 3, "classifier expects pooled 3x3 spatial"

    cfg = _device_config()
    if N <= 8:
        Bt = N                                   # block == full batch dim
    else:
        Bt = min(cfg["bt_max"], 8 * pl.cdiv(N, 8))   # multiple of 8
        if cfg["split_two"]:
            # keep >= 2 grid steps (megacore) without dropping below 8 rows
            Bt = min(Bt, max(8, 8 * pl.cdiv(N, 16)))
    nb = pl.cdiv(N, Bt)
    Np = nb * Bt

    # NCHW -> NHWC, cast to bf16, zero-pad channels 64 -> 128 (lane-aligned
    # conv1 taps) and batch up to a multiple of Bt.  One-off XLA pass.
    x = jnp.transpose(x_nchw, (0, 2, 3, 1)).astype(jnp.bfloat16)
    x = jnp.pad(x, ((0, Np - N), (0, 0), (0, 0), (0, 64)))

    out = pl.pallas_call(
        functools.partial(_fused_kernel, Bt=Bt, H=H, W=W),
        out_shape=jax.ShapeDtypeStruct((Np, 128), jnp.float32),
        grid=(nb,),
        in_specs=[
            pl.BlockSpec((Bt, H, W, 128), lambda i: (i, 0, 0, 0)),   # x (padded ch)
            pl.BlockSpec((9 * 128, 128),  lambda i: (0, 0)),          # w1 (padded)
            pl.BlockSpec((1, 128),        lambda i: (0, 0)),          # b1
            pl.BlockSpec((9 * 128, 256),  lambda i: (0, 0)),          # w2
            pl.BlockSpec((1, 256),        lambda i: (0, 0)),          # b2
            pl.BlockSpec((9 * 256, 256),  lambda i: (0, 0)),          # w3
            pl.BlockSpec((1, 256),        lambda i: (0, 0)),          # b3
            pl.BlockSpec((2304, 128),     lambda i: (0, 0)),          # wf (folded)
            pl.BlockSpec((1, 128),        lambda i: (0, 0)),          # bf (folded)
        ],
        out_specs=pl.BlockSpec((Bt, 128), lambda i: (i, 0)),
        scratch_shapes=[
            # single shared bf16 pad buffer, reused by all three convs
            pltpu.VMEM((Bt, H + 2, W + 2, 256), jnp.bfloat16),
        ],
        compiler_params=pltpu.CompilerParams(
            dimension_semantics=("parallel",),
            vmem_limit_bytes=cfg["vmem_bytes"]),
    )(x,
      prep["w1"], prep["b1"], prep["w2"], prep["b2"], prep["w3"], prep["b3"],
      prep["wf"], prep["bf"])

    return out[:N, :10]


# ----------------------------------------------------------------------------
# Parameters: PyTorch-like shapes, then a one-time "prepare" into kernel layout
# ----------------------------------------------------------------------------
def init_params(key):
    ks = jax.random.split(key, 6)

    def conv_w(k, cin, cout):
        scale = 1.0 / jnp.sqrt(cin * 9.0)
        return jax.random.normal(k, (3, 3, cin, cout), jnp.float32) * scale

    def lin_w(k, din, dout):
        scale = 1.0 / jnp.sqrt(float(din))
        return jax.random.normal(k, (din, dout), jnp.float32) * scale

    return {
        "w_c1": conv_w(ks[0], 64, 128),  "b_c1": jnp.full((128,), 0.01, jnp.float32),
        "w_c2": conv_w(ks[1], 128, 256), "b_c2": jnp.full((256,), 0.01, jnp.float32),
        "w_c3": conv_w(ks[2], 256, 256), "b_c3": jnp.full((256,), 0.01, jnp.float32),
        "w_l1": lin_w(ks[3], 256 * 3 * 3, 1024), "b_l1": jnp.zeros((1024,), jnp.float32),
        "w_l2": lin_w(ks[4], 1024, 512),         "b_l2": jnp.zeros((512,), jnp.float32),
        "w_l3": lin_w(ks[5], 512, 10),           "b_l3": jnp.zeros((10,), jnp.float32),
    }


def prepare_params(p):
    """One-time conversion into the fused kernel's weight layout.

    * conv weights (3,3,Cin,Cout) -> im2col matrices (9*Cin, Cout), bf16;
      conv1's Cin is zero-padded 64 -> 128 to match the lane-padded input.
    * classifier fold (valid: no nonlinearities between the three Linears):
        Wf = Wl1_perm @ Wl2 @ Wl3_pad           (2304, 128), f32 then bf16
        bf = (b1 @ Wl2 + b2) @ Wl3_pad + b3_pad (128,)
      where Wl1's rows are permuted from the NCHW flatten order (c*9+h*3+w)
      to the NHWC order (h*3*256 + w*256 + c) the kernel emits, and Wl3/b3
      are zero-padded from 10 to 128 output columns (lane-dense store).
    """
    bf16 = jnp.bfloat16
    f32 = jnp.float32

    w1 = jnp.pad(p["w_c1"], ((0, 0), (0, 0), (0, 64), (0, 0)))      # (3,3,128,128)
    w1 = w1.reshape(9 * 128, 128)
    w2 = p["w_c2"].reshape(9 * 128, 256)
    w3 = p["w_c3"].reshape(9 * 256, 256)

    wl1p = (p["w_l1"].reshape(256, 3, 3, 1024)
            .transpose(1, 2, 0, 3)
            .reshape(2304, 1024))                                    # NHWC row order
    wl3p = jnp.zeros((512, 128), f32).at[:, :10].set(p["w_l3"])
    bl3p = jnp.zeros((128,), f32).at[:10].set(p["b_l3"])
    wf = wl1p @ p["w_l2"] @ wl3p                                     # (2304, 128) f32
    bf = (p["b_l1"] @ p["w_l2"] + p["b_l2"]) @ wl3p + bl3p           # (128,)    f32

    return {
        "w1": w1.astype(bf16), "b1": p["b_c1"].reshape(1, 128).astype(f32),
        "w2": w2.astype(bf16), "b2": p["b_c2"].reshape(1, 256).astype(f32),
        "w3": w3.astype(bf16), "b3": p["b_c3"].reshape(1, 256).astype(f32),
        "wf": wf.astype(bf16), "bf": bf.reshape(1, 128).astype(f32),
    }


if __name__ == "__main__":
    key = jax.random.PRNGKey(0)
    kx, kp = jax.random.split(key)
    # 8x8 spatial so MaxPool(3, stride=2) yields 3x3 as the classifier needs.
    x = jax.random.normal(kx, (2, 64, 8, 8), jnp.float32)
    params = init_params(kp)
    prep = prepare_params(params)        # one-time weight layout conversion

    out = jax.jit(alexnet_up_forward)(x, prep)
    out = jax.block_until_ready(out)
    assert out.shape == (2, 10), out.shape
    print("KERNEL_OK")
</pallas_src>

<mosaic_0001>
module attributes {stable_mosaic.version = 11 : i64} {
  func.func @_fused_kernel(%arg0: i32, %arg1: memref<2x8x8x128xbf16, #tpu.memory_space<vmem>>, %arg2: memref<1152x128xbf16, #tpu.memory_space<vmem>>, %arg3: memref<1x128xf32, #tpu.memory_space<vmem>>, %arg4: memref<1152x256xbf16, #tpu.memory_space<vmem>>, %arg5: memref<1x256xf32, #tpu.memory_space<vmem>>, %arg6: memref<2304x256xbf16, #tpu.memory_space<vmem>>, %arg7: memref<1x256xf32, #tpu.memory_space<vmem>>, %arg8: memref<2304x128xbf16, #tpu.memory_space<vmem>>, %arg9: memref<1x128xf32, #tpu.memory_space<vmem>>, %arg10: memref<2x128xf32, #tpu.memory_space<vmem>>, %arg11: memref<2x10x10x256xbf16, #tpu.memory_space<vmem>>) attributes {dimension_semantics = [#tpu.dimension_semantics<parallel>], iteration_bounds = array<i64: 1>, scalar_prefetch = 0 : i64, scratch_operands = 1 : i64, tpu.core_type = #tpu.core_type<tc>, window_params = [{transform_indices = @transform_0, window_bounds = array<i64: 2, 8, 8, 128>}, {pipeline_mode = #tpu.pipeline_mode<synchronous>, transform_indices = @transform_1, window_bounds = array<i64: 1152, 128>}, {pipeline_mode = #tpu.pipeline_mode<synchronous>, transform_indices = @transform_2, window_bounds = array<i64: 1, 128>}, {pipeline_mode = #tpu.pipeline_mode<synchronous>, transform_indices = @transform_3, window_bounds = array<i64: 1152, 256>}, {pipeline_mode = #tpu.pipeline_mode<synchronous>, transform_indices = @transform_4, window_bounds = array<i64: 1, 256>}, {pipeline_mode = #tpu.pipeline_mode<synchronous>, transform_indices = @transform_5, window_bounds = array<i64: 2304, 256>}, {pipeline_mode = #tpu.pipeline_mode<synchronous>, transform_indices = @transform_6, window_bounds = array<i64: 1, 256>}, {pipeline_mode = #tpu.pipeline_mode<synchronous>, transform_indices = @transform_7, window_bounds = array<i64: 2304, 128>}, {pipeline_mode = #tpu.pipeline_mode<synchronous>, transform_indices = @transform_8, window_bounds = array<i64: 1, 128>}, {transform_indices = @transform_9, window_bounds = array<i64: 2, 128>}]} {
    %cst = arith.constant 0.000000e+00 : bf16
    %0 = vector.broadcast %cst : bf16 to vector<2x10x10x256xbf16>
    %c0 = arith.constant 0 : index
    %c0_0 = arith.constant 0 : index
    %c0_1 = arith.constant 0 : index
    %c0_2 = arith.constant 0 : index
    %1 = vector.load %arg11[%c0, %c0_0, %c0_1, %c0_2] : memref<2x10x10x256xbf16, #tpu.memory_space<vmem>>, vector<2x10x10x256xbf16>
    tpu.vector_store %arg11[%c0, %c0_0, %c0_1, %c0_2], %0 {strides = array<i32>} : memref<2x10x10x256xbf16, #tpu.memory_space<vmem>>, vector<2x10x10x256xbf16>,
    %c0_3 = arith.constant 0 : index
    %c0_4 = arith.constant 0 : index
    %c0_5 = arith.constant 0 : index
    %c0_6 = arith.constant 0 : index
    %2 = vector.load %arg1[%c0_3, %c0_4, %c0_5, %c0_6] : memref<2x8x8x128xbf16, #tpu.memory_space<vmem>>, vector<2x8x8x128xbf16>
    %c0_7 = arith.constant 0 : index
    %c1 = arith.constant 1 : index
    %c1_8 = arith.constant 1 : index
    %c0_9 = arith.constant 0 : index
    %3 = vector.load %arg11[%c0_7, %c1, %c1_8, %c0_9] : memref<2x10x10x256xbf16, #tpu.memory_space<vmem>>, vector<2x8x8x128xbf16>
    tpu.vector_store %arg11[%c0_7, %c1, %c1_8, %c0_9], %2 {strides = array<i32>} : memref<2x10x10x256xbf16, #tpu.memory_space<vmem>>, vector<2x8x8x128xbf16>,
    %c0_10 = arith.constant 0 : index
    %c0_11 = arith.constant 0 : index
    %c0_12 = arith.constant 0 : index
    %c0_13 = arith.constant 0 : index
    %4 = vector.load %arg11[%c0_10, %c0_11, %c0_12, %c0_13] : memref<2x10x10x256xbf16, #tpu.memory_space<vmem>>, vector<2x8x8x128xbf16>
    %c0_14 = arith.constant 0 : index
    %c0_15 = arith.constant 0 : index
    %c1_16 = arith.constant 1 : index
    %c0_17 = arith.constant 0 : index
    %5 = vector.load %arg11[%c0_14, %c0_15, %c1_16, %c0_17] : memref<2x10x10x256xbf16, #tpu.memory_space<vmem>>, vector<2x8x8x128xbf16>
    %c0_18 = arith.constant 0 : index
    %c0_19 = arith.constant 0 : index
    %c2 = arith.constant 2 : index
    %c0_20 = arith.constant 0 : index
    %6 = vector.load %arg11[%c0_18, %c0_19, %c2, %c0_20] : memref<2x10x10x256xbf16, #tpu.memory_space<vmem>>, vector<2x8x8x128xbf16>
    %7 = tpu.concatenate %4, %5, %6 in 3 : vector<2x8x8x128xbf16>, vector<2x8x8x128xbf16>, vector<2x8x8x128xbf16> -> vector<2x8x8x384xbf16>
    %8 = vector.shape_cast %7 : vector<2x8x8x384xbf16> to vector<128x384xbf16>
    %c0_21 = arith.constant 0 : index
    %c0_22 = arith.constant 0 : index
    %9 = vector.load %arg2[%c0_21, %c0_22] : memref<1152x128xbf16, #tpu.memory_space<vmem>>, vector<384x128xbf16>
    %cst_23 = arith.constant dense<0.000000e+00> : vector<128x128xf32>
    %10 = tpu.matmul %8, %9, %cst_23 {dimension_numbers = #tpu.dot_dimension_numbers<[1], [0], [0], [1], [0, 0, 1, 1], [], []>} : vector<128x384xbf16>, vector<384x128xbf16>, vector<128x128xf32> -> vector<128x128xf32>
    %c0_24 = arith.constant 0 : index
    %c1_25 = arith.constant 1 : index
    %c0_26 = arith.constant 0 : index
    %c0_27 = arith.constant 0 : index
    %11 = vector.load %arg11[%c0_24, %c1_25, %c0_26, %c0_27] : memref<2x10x10x256xbf16, #tpu.memory_space<vmem>>, vector<2x8x8x128xbf16>
    %c0_28 = arith.constant 0 : index
    %c1_29 = arith.constant 1 : index
    %c1_30 = arith.constant 1 : index
    %c0_31 = arith.constant 0 : index
    %12 = vector.load %arg11[%c0_28, %c1_29, %c1_30, %c0_31] : memref<2x10x10x256xbf16, #tpu.memory_space<vmem>>, vector<2x8x8x128xbf16>
    %c0_32 = arith.constant 0 : index
    %c1_33 = arith.constant 1 : index
    %c2_34 = arith.constant 2 : index
    %c0_35 = arith.constant 0 : index
    %13 = vector.load %arg11[%c0_32, %c1_33, %c2_34, %c0_35] : memref<2x10x10x256xbf16, #tpu.memory_space<vmem>>, vector<2x8x8x128xbf16>
    %14 = tpu.concatenate %11, %12, %13 in 3 : vector<2x8x8x128xbf16>, vector<2x8x8x128xbf16>, vector<2x8x8x128xbf16> -> vector<2x8x8x384xbf16>
    %15 = vector.shape_cast %14 : vector<2x8x8x384xbf16> to vector<128x384xbf16>
    %c384 = arith.constant 384 : index
    %c0_36 = arith.constant 0 : index
    %16 = vector.load %arg2[%c384, %c0_36] : memref<1152x128xbf16, #tpu.memory_space<vmem>>, vector<384x128xbf16>
    %cst_37 = arith.constant dense<0.000000e+00> : vector<128x128xf32>
    %17 = tpu.matmul %15, %16, %cst_37 {dimension_numbers = #tpu.dot_dimension_numbers<[1], [0], [0], [1], [0, 0, 1, 1], [], []>} : vector<128x384xbf16>, vector<384x128xbf16>, vector<128x128xf32> -> vector<128x128xf32>
    %18 = arith.addf %10, %17 : vector<128x128xf32>
    %c0_38 = arith.constant 0 : index
    %c2_39 = arith.constant 2 : index
    %c0_40 = arith.constant 0 : index
    %c0_41 = arith.constant 0 : index
    %19 = vector.load %arg11[%c0_38, %c2_39, %c0_40, %c0_41] : memref<2x10x10x256xbf16, #tpu.memory_space<vmem>>, vector<2x8x8x128xbf16>
    %c0_42 = arith.constant 0 : index
    %c2_43 = arith.constant 2 : index
    %c1_44 = arith.constant 1 : index
    %c0_45 = arith.constant 0 : index
    %20 = vector.load %arg11[%c0_42, %c2_43, %c1_44, %c0_45] : memref<2x10x10x256xbf16, #tpu.memory_space<vmem>>, vector<2x8x8x128xbf16>
    %c0_46 = arith.constant 0 : index
    %c2_47 = arith.constant 2 : index
    %c2_48 = arith.constant 2 : index
    %c0_49 = arith.constant 0 : index
    %21 = vector.load %arg11[%c0_46, %c2_47, %c2_48, %c0_49] : memref<2x10x10x256xbf16, #tpu.memory_space<vmem>>, vector<2x8x8x128xbf16>
    %22 = tpu.concatenate %19, %20, %21 in 3 : vector<2x8x8x128xbf16>, vector<2x8x8x128xbf16>, vector<2x8x8x128xbf16> -> vector<2x8x8x384xbf16>
    %23 = vector.shape_cast %22 : vector<2x8x8x384xbf16> to vector<128x384xbf16>
    %c768 = arith.constant 768 : index
    %c0_50 = arith.constant 0 : index
    %24 = vector.load %arg2[%c768, %c0_50] : memref<1152x128xbf16, #tpu.memory_space<vmem>>, vector<384x128xbf16>
    %cst_51 = arith.constant dense<0.000000e+00> : vector<128x128xf32>
    %25 = tpu.matmul %23, %24, %cst_51 {dimension_numbers = #tpu.dot_dimension_numbers<[1], [0], [0], [1], [0, 0, 1, 1], [], []>} : vector<128x384xbf16>, vector<384x128xbf16>, vector<128x128xf32> -> vector<128x128xf32>
    %26 = arith.addf %18, %25 : vector<128x128xf32>
    %c0_52 = arith.constant 0 : index
    %c0_53 = arith.constant 0 : index
    %27 = vector.load %arg3[%c0_52, %c0_53] : memref<1x128xf32, #tpu.memory_space<vmem>>, vector<1x128xf32>
    %28 = vector.broadcast %27 : vector<1x128xf32> to vector<128x128xf32>
    %29 = arith.addf %26, %28 : vector<128x128xf32>
    %30 = arith.truncf %29 : vector<128x128xf32> to vector<128x128xbf16>
    %31 = vector.shape_cast %30 : vector<128x128xbf16> to vector<2x8x8x128xbf16>
    %c0_54 = arith.constant 0 : index
    %c1_55 = arith.constant 1 : index
    %c1_56 = arith.constant 1 : index
    %c0_57 = arith.constant 0 : index
    %32 = vector.load %arg11[%c0_54, %c1_55, %c1_56, %c0_57] : memref<2x10x10x256xbf16, #tpu.memory_space<vmem>>, vector<2x8x8x128xbf16>
    tpu.vector_store %arg11[%c0_54, %c1_55, %c1_56, %c0_57], %31 {strides = array<i32>} : memref<2x10x10x256xbf16, #tpu.memory_space<vmem>>, vector<2x8x8x128xbf16>,
    %c0_58 = arith.constant 0 : index
    %c0_59 = arith.constant 0 : index
    %c0_60 = arith.constant 0 : index
    %c0_61 = arith.constant 0 : index
    %33 = vector.load %arg11[%c0_58, %c0_59, %c0_60, %c0_61] : memref<2x10x10x256xbf16, #tpu.memory_space<vmem>>, vector<2x8x8x128xbf16>
    %c0_62 = arith.constant 0 : index
    %c0_63 = arith.constant 0 : index
    %c1_64 = arith.constant 1 : index
    %c0_65 = arith.constant 0 : index
    %34 = vector.load %arg11[%c0_62, %c0_63, %c1_64, %c0_65] : memref<2x10x10x256xbf16, #tpu.memory_space<vmem>>, vector<2x8x8x128xbf16>
    %c0_66 = arith.constant 0 : index
    %c0_67 = arith.constant 0 : index
    %c2_68 = arith.constant 2 : index
    %c0_69 = arith.constant 0 : index
    %35 = vector.load %arg11[%c0_66, %c0_67, %c2_68, %c0_69] : memref<2x10x10x256xbf16, #tpu.memory_space<vmem>>, vector<2x8x8x128xbf16>
    %36 = tpu.concatenate %33, %34, %35 in 3 : vector<2x8x8x128xbf16>, vector<2x8x8x128xbf16>, vector<2x8x8x128xbf16> -> vector<2x8x8x384xbf16>
    %37 = vector.shape_cast %36 : vector<2x8x8x384xbf16> to vector<128x384xbf16>
    %c0_70 = arith.constant 0 : index
    %c0_71 = arith.constant 0 : index
    %38 = vector.load %arg4[%c0_70, %c0_71] : memref<1152x256xbf16, #tpu.memory_space<vmem>>, vector<384x256xbf16>
    %cst_72 = arith.constant dense<0.000000e+00> : vector<128x256xf32>
    %39 = tpu.matmul %37, %38, %cst_72 {dimension_numbers = #tpu.dot_dimension_numbers<[1], [0], [0], [1], [0, 0, 1, 1], [], []>} : vector<128x384xbf16>, vector<384x256xbf16>, vector<128x256xf32> -> vector<128x256xf32>
    %c0_73 = arith.constant 0 : index
    %c1_74 = arith.constant 1 : index
    %c0_75 = arith.constant 0 : index
    %c0_76 = arith.constant 0 : index
    %40 = vector.load %arg11[%c0_73, %c1_74, %c0_75, %c0_76] : memref<2x10x10x256xbf16, #tpu.memory_space<vmem>>, vector<2x8x8x128xbf16>
    %c0_77 = arith.constant 0 : index
    %c1_78 = arith.constant 1 : index
    %c1_79 = arith.constant 1 : index
    %c0_80 = arith.constant 0 : index
    %41 = vector.load %arg11[%c0_77, %c1_78, %c1_79, %c0_80] : memref<2x10x10x256xbf16, #tpu.memory_space<vmem>>, vector<2x8x8x128xbf16>
    %c0_81 = arith.constant 0 : index
    %c1_82 = arith.constant 1 : index
    %c2_83 = arith.constant 2 : index
    %c0_84 = arith.constant 0 : index
    %42 = vector.load %arg11[%c0_81, %c1_82, %c2_83, %c0_84] : memref<2x10x10x256xbf16, #tpu.memory_space<vmem>>, vector<2x8x8x128xbf16>
    %43 = tpu.concatenate %40, %41, %42 in 3 : vector<2x8x8x128xbf16>, vector<2x8x8x128xbf16>, vector<2x8x8x128xbf16> -> vector<2x8x8x384xbf16>
    %44 = vector.shape_cast %43 : vector<2x8x8x384xbf16> to vector<128x384xbf16>
    %c384_85 = arith.constant 384 : index
    %c0_86 = arith.constant 0 : index
    %45 = vector.load %arg4[%c384_85, %c0_86] : memref<1152x256xbf16, #tpu.memory_space<vmem>>, vector<384x256xbf16>
    %cst_87 = arith.constant dense<0.000000e+00> : vector<128x256xf32>
    %46 = tpu.matmul %44, %45, %cst_87 {dimension_numbers = #tpu.dot_dimension_numbers<[1], [0], [0], [1], [0, 0, 1, 1], [], []>} : vector<128x384xbf16>, vector<384x256xbf16>, vector<128x256xf32> -> vector<128x256xf32>
    %47 = arith.addf %39, %46 : vector<128x256xf32>
    %c0_88 = arith.constant 0 : index
    %c2_89 = arith.constant 2 : index
    %c0_90 = arith.constant 0 : index
    %c0_91 = arith.constant 0 : index
    %48 = vector.load %arg11[%c0_88, %c2_89, %c0_90, %c0_91] : memref<2x10x10x256xbf16, #tpu.memory_space<vmem>>, vector<2x8x8x128xbf16>
    %c0_92 = arith.constant 0 : index
    %c2_93 = arith.constant 2 : index
    %c1_94 = arith.constant 1 : index
    %c0_95 = arith.constant 0 : index
    %49 = vector.load %arg11[%c0_92, %c2_93, %c1_94, %c0_95] : memref<2x10x10x256xbf16, #tpu.memory_space<vmem>>, vector<2x8x8x128xbf16>
    %c0_96 = arith.constant 0 : index
    %c2_97 = arith.constant 2 : index
    %c2_98 = arith.constant 2 : index
    %c0_99 = arith.constant 0 : index
    %50 = vector.load %arg11[%c0_96, %c2_97, %c2_98, %c0_99] : memref<2x10x10x256xbf16, #tpu.memory_space<vmem>>, vector<2x8x8x128xbf16>
    %51 = tpu.concatenate %48, %49, %50 in 3 : vector<2x8x8x128xbf16>, vector<2x8x8x128xbf16>, vector<2x8x8x128xbf16> -> vector<2x8x8x384xbf16>
    %52 = vector.shape_cast %51 : vector<2x8x8x384xbf16> to vector<128x384xbf16>
    %c768_100 = arith.constant 768 : index
    %c0_101 = arith.constant 0 : index
    %53 = vector.load %arg4[%c768_100, %c0_101] : memref<1152x256xbf16, #tpu.memory_space<vmem>>, vector<384x256xbf16>
    %cst_102 = arith.constant dense<0.000000e+00> : vector<128x256xf32>
    %54 = tpu.matmul %52, %53, %cst_102 {dimension_numbers = #tpu.dot_dimension_numbers<[1], [0], [0], [1], [0, 0, 1, 1], [], []>} : vector<128x384xbf16>, vector<384x256xbf16>, vector<128x256xf32> -> vector<128x256xf32>
    %55 = arith.addf %47, %54 : vector<128x256xf32>
    %c0_103 = arith.constant 0 : index
    %c0_104 = arith.constant 0 : index
    %56 = vector.load %arg5[%c0_103, %c0_104] : memref<1x256xf32, #tpu.memory_space<vmem>>, vector<1x256xf32>
    %57 = vector.broadcast %56 : vector<1x256xf32> to vector<128x256xf32>
    %58 = arith.addf %55, %57 : vector<128x256xf32>
    %59 = arith.truncf %58 : vector<128x256xf32> to vector<128x256xbf16>
    %60 = vector.shape_cast %59 : vector<128x256xbf16> to vector<2x8x8x256xbf16>
    %c0_105 = arith.constant 0 : index
    %c1_106 = arith.constant 1 : index
    %c1_107 = arith.constant 1 : index
    %c0_108 = arith.constant 0 : index
    %61 = vector.load %arg11[%c0_105, %c1_106, %c1_107, %c0_108] : memref<2x10x10x256xbf16, #tpu.memory_space<vmem>>, vector<2x8x8x256xbf16>
    tpu.vector_store %arg11[%c0_105, %c1_106, %c1_107, %c0_108], %60 {strides = array<i32>} : memref<2x10x10x256xbf16, #tpu.memory_space<vmem>>, vector<2x8x8x256xbf16>,
    %c0_109 = arith.constant 0 : index
    %c0_110 = arith.constant 0 : index
    %c0_111 = arith.constant 0 : index
    %c0_112 = arith.constant 0 : index
    %62 = vector.load %arg11[%c0_109, %c0_110, %c0_111, %c0_112] : memref<2x10x10x256xbf16, #tpu.memory_space<vmem>>, vector<2x8x8x256xbf16>
    %c0_113 = arith.constant 0 : index
    %c0_114 = arith.constant 0 : index
    %c1_115 = arith.constant 1 : index
    %c0_116 = arith.constant 0 : index
    %63 = vector.load %arg11[%c0_113, %c0_114, %c1_115, %c0_116] : memref<2x10x10x256xbf16, #tpu.memory_space<vmem>>, vector<2x8x8x256xbf16>
    %c0_117 = arith.constant 0 : index
    %c0_118 = arith.constant 0 : index
    %c2_119 = arith.constant 2 : index
    %c0_120 = arith.constant 0 : index
    %64 = vector.load %arg11[%c0_117, %c0_118, %c2_119, %c0_120] : memref<2x10x10x256xbf16, #tpu.memory_space<vmem>>, vector<2x8x8x256xbf16>
    %65 = tpu.concatenate %62, %63, %64 in 3 : vector<2x8x8x256xbf16>, vector<2x8x8x256xbf16>, vector<2x8x8x256xbf16> -> vector<2x8x8x768xbf16>
    %66 = vector.shape_cast %65 : vector<2x8x8x768xbf16> to vector<128x768xbf16>
    %c0_121 = arith.constant 0 : index
    %c0_122 = arith.constant 0 : index
    %67 = vector.load %arg6[%c0_121, %c0_122] : memref<2304x256xbf16, #tpu.memory_space<vmem>>, vector<768x256xbf16>
    %cst_123 = arith.constant dense<0.000000e+00> : vector<128x256xf32>
    %68 = tpu.matmul %66, %67, %cst_123 {dimension_numbers = #tpu.dot_dimension_numbers<[1], [0], [0], [1], [0, 0, 1, 1], [], []>} : vector<128x768xbf16>, vector<768x256xbf16>, vector<128x256xf32> -> vector<128x256xf32>
    %c0_124 = arith.constant 0 : index
    %c1_125 = arith.constant 1 : index
    %c0_126 = arith.constant 0 : index
    %c0_127 = arith.constant 0 : index
    %69 = vector.load %arg11[%c0_124, %c1_125, %c0_126, %c0_127] : memref<2x10x10x256xbf16, #tpu.memory_space<vmem>>, vector<2x8x8x256xbf16>
    %c0_128 = arith.constant 0 : index
    %c1_129 = arith.constant 1 : index
    %c1_130 = arith.constant 1 : index
    %c0_131 = arith.constant 0 : index
    %70 = vector.load %arg11[%c0_128, %c1_129, %c1_130, %c0_131] : memref<2x10x10x256xbf16, #tpu.memory_space<vmem>>, vector<2x8x8x256xbf16>
    %c0_132 = arith.constant 0 : index
    %c1_133 = arith.constant 1 : index
    %c2_134 = arith.constant 2 : index
    %c0_135 = arith.constant 0 : index
    %71 = vector.load %arg11[%c0_132, %c1_133, %c2_134, %c0_135] : memref<2x10x10x256xbf16, #tpu.memory_space<vmem>>, vector<2x8x8x256xbf16>
    %72 = tpu.concatenate %69, %70, %71 in 3 : vector<2x8x8x256xbf16>, vector<2x8x8x256xbf16>, vector<2x8x8x256xbf16> -> vector<2x8x8x768xbf16>
    %73 = vector.shape_cast %72 : vector<2x8x8x768xbf16> to vector<128x768xbf16>
    %c768_136 = arith.constant 768 : index
    %c0_137 = arith.constant 0 : index
    %74 = vector.load %arg6[%c768_136, %c0_137] : memref<2304x256xbf16, #tpu.memory_space<vmem>>, vector<768x256xbf16>
    %cst_138 = arith.constant dense<0.000000e+00> : vector<128x256xf32>
    %75 = tpu.matmul %73, %74, %cst_138 {dimension_numbers = #tpu.dot_dimension_numbers<[1], [0], [0], [1], [0, 0, 1, 1], [], []>} : vector<128x768xbf16>, vector<768x256xbf16>, vector<128x256xf32> -> vector<128x256xf32>
    %76 = arith.addf %68, %75 : vector<128x256xf32>
    %c0_139 = arith.constant 0 : index
    %c2_140 = arith.constant 2 : index
    %c0_141 = arith.constant 0 : index
    %c0_142 = arith.constant 0 : index
    %77 = vector.load %arg11[%c0_139, %c2_140, %c0_141, %c0_142] : memref<2x10x10x256xbf16, #tpu.memory_space<vmem>>, vector<2x8x8x256xbf16>
    %c0_143 = arith.constant 0 : index
    %c2_144 = arith.constant 2 : index
    %c1_145 = arith.constant 1 : index
    %c0_146 = arith.constant 0 : index
    %78 = vector.load %arg11[%c0_143, %c2_144, %c1_145, %c0_146] : memref<2x10x10x256xbf16, #tpu.memory_space<vmem>>, vector<2x8x8x256xbf16>
    %c0_147 = arith.constant 0 : index
    %c2_148 = arith.constant 2 : index
    %c2_149 = arith.constant 2 : index
    %c0_150 = arith.constant 0 : index
    %79 = vector.load %arg11[%c0_147, %c2_148, %c2_149, %c0_150] : memref<2x10x10x256xbf16, #tpu.memory_space<vmem>>, vector<2x8x8x256xbf16>
    %80 = tpu.concatenate %77, %78, %79 in 3 : vector<2x8x8x256xbf16>, vector<2x8x8x256xbf16>, vector<2x8x8x256xbf16> -> vector<2x8x8x768xbf16>
    %81 = vector.shape_cast %80 : vector<2x8x8x768xbf16> to vector<128x768xbf16>
    %c1536 = arith.constant 1536 : index
    %c0_151 = arith.constant 0 : index
    %82 = vector.load %arg6[%c1536, %c0_151] : memref<2304x256xbf16, #tpu.memory_space<vmem>>, vector<768x256xbf16>
    %cst_152 = arith.constant dense<0.000000e+00> : vector<128x256xf32>
    %83 = tpu.matmul %81, %82, %cst_152 {dimension_numbers = #tpu.dot_dimension_numbers<[1], [0], [0], [1], [0, 0, 1, 1], [], []>} : vector<128x768xbf16>, vector<768x256xbf16>, vector<128x256xf32> -> vector<128x256xf32>
    %84 = arith.addf %76, %83 : vector<128x256xf32>
    %c0_153 = arith.constant 0 : index
    %c0_154 = arith.constant 0 : index
    %85 = vector.load %arg7[%c0_153, %c0_154] : memref<1x256xf32, #tpu.memory_space<vmem>>, vector<1x256xf32>
    %86 = vector.broadcast %85 : vector<1x256xf32> to vector<128x256xf32>
    %87 = arith.addf %84, %86 : vector<128x256xf32>
    %88 = arith.truncf %87 : vector<128x256xf32> to vector<128x256xbf16>
    %89 = vector.shape_cast %88 : vector<128x256xbf16> to vector<2x8x8x256xbf16>
    %90 = vector.extract_strided_slice %89 {offsets = [0, 0, 0, 0], sizes = [2, 3, 8, 256], strides = [1, 1, 1, 1]} : vector<2x8x8x256xbf16> to vector<2x3x8x256xbf16>
    %cst_155 = arith.constant dense<0xFF80> : vector<2x8x256xbf16>
    %91 = vector.multi_reduction <maximumf>, %90, %cst_155 [1] : vector<2x3x8x256xbf16> to vector<2x8x256xbf16>
    %92 = vector.extract_strided_slice %89 {offsets = [0, 2, 0, 0], sizes = [2, 3, 8, 256], strides = [1, 1, 1, 1]} : vector<2x8x8x256xbf16> to vector<2x3x8x256xbf16>
    %cst_156 = arith.constant dense<0xFF80> : vector<2x8x256xbf16>
    %93 = vector.multi_reduction <maximumf>, %92, %cst_156 [1] : vector<2x3x8x256xbf16> to vector<2x8x256xbf16>
    %94 = vector.extract_strided_slice %89 {offsets = [0, 4, 0, 0], sizes = [2, 3, 8, 256], strides = [1, 1, 1, 1]} : vector<2x8x8x256xbf16> to vector<2x3x8x256xbf16>
    %cst_157 = arith.constant dense<0xFF80> : vector<2x8x256xbf16>
    %95 = vector.multi_reduction <maximumf>, %94, %cst_157 [1] : vector<2x3x8x256xbf16> to vector<2x8x256xbf16>
    %96 = vector.extract_strided_slice %91 {offsets = [0, 0, 0], sizes = [2, 3, 256], strides = [1, 1, 1]} : vector<2x8x256xbf16> to vector<2x3x256xbf16>
    %cst_158 = arith.constant dense<0xFF80> : vector<2x256xbf16>
    %97 = vector.multi_reduction <maximumf>, %96, %cst_158 [1] : vector<2x3x256xbf16> to vector<2x256xbf16>
    %98 = vector.extract_strided_slice %91 {offsets = [0, 2, 0], sizes = [2, 3, 256], strides = [1, 1, 1]} : vector<2x8x256xbf16> to vector<2x3x256xbf16>
    %cst_159 = arith.constant dense<0xFF80> : vector<2x256xbf16>
    %99 = vector.multi_reduction <maximumf>, %98, %cst_159 [1] : vector<2x3x256xbf16> to vector<2x256xbf16>
    %100 = vector.extract_strided_slice %91 {offsets = [0, 4, 0], sizes = [2, 3, 256], strides = [1, 1, 1]} : vector<2x8x256xbf16> to vector<2x3x256xbf16>
    %cst_160 = arith.constant dense<0xFF80> : vector<2x256xbf16>
    %101 = vector.multi_reduction <maximumf>, %100, %cst_160 [1] : vector<2x3x256xbf16> to vector<2x256xbf16>
    %102 = vector.extract_strided_slice %93 {offsets = [0, 0, 0], sizes = [2, 3, 256], strides = [1, 1, 1]} : vector<2x8x256xbf16> to vector<2x3x256xbf16>
    %cst_161 = arith.constant dense<0xFF80> : vector<2x256xbf16>
    %103 = vector.multi_reduction <maximumf>, %102, %cst_161 [1] : vector<2x3x256xbf16> to vector<2x256xbf16>
    %104 = vector.extract_strided_slice %93 {offsets = [0, 2, 0], sizes = [2, 3, 256], strides = [1, 1, 1]} : vector<2x8x256xbf16> to vector<2x3x256xbf16>
    %cst_162 = arith.constant dense<0xFF80> : vector<2x256xbf16>
    %105 = vector.multi_reduction <maximumf>, %104, %cst_162 [1] : vector<2x3x256xbf16> to vector<2x256xbf16>
    %106 = vector.extract_strided_slice %93 {offsets = [0, 4, 0], sizes = [2, 3, 256], strides = [1, 1, 1]} : vector<2x8x256xbf16> to vector<2x3x256xbf16>
    %cst_163 = arith.constant dense<0xFF80> : vector<2x256xbf16>
    %107 = vector.multi_reduction <maximumf>, %106, %cst_163 [1] : vector<2x3x256xbf16> to vector<2x256xbf16>
    %108 = vector.extract_strided_slice %95 {offsets = [0, 0, 0], sizes = [2, 3, 256], strides = [1, 1, 1]} : vector<2x8x256xbf16> to vector<2x3x256xbf16>
    %cst_164 = arith.constant dense<0xFF80> : vector<2x256xbf16>
    %109 = vector.multi_reduction <maximumf>, %108, %cst_164 [1] : vector<2x3x256xbf16> to vector<2x256xbf16>
    %110 = vector.extract_strided_slice %95 {offsets = [0, 2, 0], sizes = [2, 3, 256], strides = [1, 1, 1]} : vector<2x8x256xbf16> to vector<2x3x256xbf16>
    %cst_165 = arith.constant dense<0xFF80> : vector<2x256xbf16>
    %111 = vector.multi_reduction <maximumf>, %110, %cst_165 [1] : vector<2x3x256xbf16> to vector<2x256xbf16>
    %112 = vector.extract_strided_slice %95 {offsets = [0, 4, 0], sizes = [2, 3, 256], strides = [1, 1, 1]} : vector<2x8x256xbf16> to vector<2x3x256xbf16>
    %cst_166 = arith.constant dense<0xFF80> : vector<2x256xbf16>
    %113 = vector.multi_reduction <maximumf>, %112, %cst_166 [1] : vector<2x3x256xbf16> to vector<2x256xbf16>
    %114 = tpu.concatenate %97, %99, %101, %103, %105, %107, %109, %111, %113 in 1 : vector<2x256xbf16>, vector<2x256xbf16>, vector<2x256xbf16>, vector<2x256xbf16>, vector<2x256xbf16>, vector<2x256xbf16>, vector<2x256xbf16>, vector<2x256xbf16>, vector<2x256xbf16> -> vector<2x2304xbf16>
    %cst_167 = arith.constant 0.000000e+00 : bf16
    %115 = vector.broadcast %cst_167 : bf16 to vector<2x2304xbf16>
    %116 = arith.maximumf %114, %115 : vector<2x2304xbf16>
    %c0_168 = arith.constant 0 : index
    %c0_169 = arith.constant 0 : index
    %117 = vector.load %arg8[%c0_168, %c0_169] : memref<2304x128xbf16, #tpu.memory_space<vmem>>, vector<2304x128xbf16>
    %cst_170 = arith.constant dense<0.000000e+00> : vector<2x128xf32>
    %118 = tpu.matmul %116, %117, %cst_170 {dimension_numbers = #tpu.dot_dimension_numbers<[1], [0], [0], [1], [0, 0, 1, 1], [], []>} : vector<2x2304xbf16>, vector<2304x128xbf16>, vector<2x128xf32> -> vector<2x128xf32>
    %c0_171 = arith.constant 0 : index
    %c0_172 = arith.constant 0 : index
    %119 = vector.load %arg9[%c0_171, %c0_172] : memref<1x128xf32, #tpu.memory_space<vmem>>, vector<1x128xf32>
    %120 = vector.broadcast %119 : vector<1x128xf32> to vector<2x128xf32>
    %121 = arith.addf %118, %120 : vector<2x128xf32>
    %c0_173 = arith.constant 0 : index
    %c0_174 = arith.constant 0 : index
    %122 = vector.load %arg10[%c0_173, %c0_174] : memref<2x128xf32, #tpu.memory_space<vmem>>, vector<2x128xf32>
    tpu.vector_store %arg10[%c0_173, %c0_174], %121 {strides = array<i32>} : memref<2x128xf32, #tpu.memory_space<vmem>>, vector<2x128xf32>,
    return
  }
  func.func @transform_0(%arg0: i32) -> (i32, i32, i32, i32) {
    %c0_i32 = arith.constant 0 : i32
    %c0_i32_0 = arith.constant 0 : i32
    %c0_i32_1 = arith.constant 0 : i32
    %c0_i32_2 = arith.constant 0 : i32
    return %arg0, %c0_i32, %c0_i32_0, %c0_i32_1 : i32, i32, i32, i32
  }
  func.func @transform_1(%arg0: i32) -> (i32, i32) {
    %c0_i32 = arith.constant 0 : i32
    %c0_i32_0 = arith.constant 0 : i32
    %c0_i32_1 = arith.constant 0 : i32
    return %c0_i32, %c0_i32_0 : i32, i32
  }
  func.func @transform_2(%arg0: i32) -> (i32, i32) {
    %c0_i32 = arith.constant 0 : i32
    %c0_i32_0 = arith.constant 0 : i32
    %c0_i32_1 = arith.constant 0 : i32
    return %c0_i32, %c0_i32_0 : i32, i32
  }
  func.func @transform_3(%arg0: i32) -> (i32, i32) {
    %c0_i32 = arith.constant 0 : i32
    %c0_i32_0 = arith.constant 0 : i32
    %c0_i32_1 = arith.constant 0 : i32
    return %c0_i32, %c0_i32_0 : i32, i32
  }
  func.func @transform_4(%arg0: i32) -> (i32, i32) {
    %c0_i32 = arith.constant 0 : i32
    %c0_i32_0 = arith.constant 0 : i32
    %c0_i32_1 = arith.constant 0 : i32
    return %c0_i32, %c0_i32_0 : i32, i32
  }
  func.func @transform_5(%arg0: i32) -> (i32, i32) {
    %c0_i32 = arith.constant 0 : i32
    %c0_i32_0 = arith.constant 0 : i32
    %c0_i32_1 = arith.constant 0 : i32
    return %c0_i32, %c0_i32_0 : i32, i32
  }
  func.func @transform_6(%arg0: i32) -> (i32, i32) {
    %c0_i32 = arith.constant 0 : i32
    %c0_i32_0 = arith.constant 0 : i32
    %c0_i32_1 = arith.constant 0 : i32
    return %c0_i32, %c0_i32_0 : i32, i32
  }
  func.func @transform_7(%arg0: i32) -> (i32, i32) {
    %c0_i32 = arith.constant 0 : i32
    %c0_i32_0 = arith.constant 0 : i32
    %c0_i32_1 = arith.constant 0 : i32
    return %c0_i32, %c0_i32_0 : i32, i32
  }
  func.func @transform_8(%arg0: i32) -> (i32, i32) {
    %c0_i32 = arith.constant 0 : i32
    %c0_i32_0 = arith.constant 0 : i32
    %c0_i32_1 = arith.constant 0 : i32
    return %c0_i32, %c0_i32_0 : i32, i32
  }
  func.func @transform_9(%arg0: i32) -> (i32, i32) {
    %c0_i32 = arith.constant 0 : i32
    %c0_i32_0 = arith.constant 0 : i32
    return %arg0, %c0_i32 : i32, i32
  }
}

</mosaic_0001>

<llo_original>
// kernel: alexnet_up_forward.1
$region0: #{alexnet_up_forward.1}
  #allocation0 [shape = 'u32[]', space=smem, size = 0x4, offset = 0x4, fixed_abs, tag = 'smem constant byte address 0x4 - core index']
  #allocation1 [shape = 'u32[144,128]{1,0:T(1,128)}', space=vmem, size = 0x12000, scoped, tag = 'internal scratch']
  #allocation2 [shape = 'bf16[2,10,10,256]{3,2,1,0:T(8,128)(2,1)}', space=vmem, size = 0x28000, scoped, tag = 'scratch operand']
  %s0 = inlined_call_operand.vmem [shape: bf16[2,8,8,128], index: 0, kind: input, shape index: {}]
  %s1 = inlined_call_operand.hbm [shape: bf16[1152,128], index: 1, kind: input, shape index: {}]
  %s2 = inlined_call_operand.hbm [shape: f32[1,128], index: 2, kind: input, shape index: {}]
  %s3 = inlined_call_operand.hbm [shape: bf16[1152,256], index: 3, kind: input, shape index: {}]
  %s4 = inlined_call_operand.hbm [shape: f32[1,256], index: 4, kind: input, shape index: {}]
  %s5 = inlined_call_operand.hbm [shape: bf16[2304,256], index: 5, kind: input, shape index: {}]
  %s6 = inlined_call_operand.hbm [shape: f32[1,256], index: 6, kind: input, shape index: {}]
  %s7 = inlined_call_operand.hbm [shape: bf16[2304,128], index: 7, kind: input, shape index: {}]
  %s8 = inlined_call_operand.hbm [shape: f32[1,128], index: 8, kind: input, shape index: {}]
  %s9 = inlined_call_operand.hbm [shape: f32[2,128], index: 9, kind: output, shape index: {}]
  %s10 = sld [smem:[#allocation0]]
  $region78: #{alexnet_up_forward.1} parent=0
    _
  %s12 = ssub.s32 1, %s10
  %s13 = scalar_select 0, %s12, %s10
  $region1: #{alexnet_up_forward.1} parent=0
    #allocation3 [shape = 'u8[294912]{0}', space=vmem, size = 0x48000, scoped, tag = 'input window, operand 1, single buffered']
    #allocation4 [shape = 's32[1]{0}', space=sflag, size = 0x4, scoped, tag = 'scoped memory for alexnet_up_forward.1']
    #allocation5 [shape = 's32[1]{0}', space=sflag, size = 0x4, scoped, tag = 'scoped memory for alexnet_up_forward.1']
    #allocation6 [shape = 'u8[512]{0}', space=vmem, size = 0x400, scoped, tag = 'input window, operand 2, single buffered']
    #allocation7 [shape = 's32[1]{0}', space=sflag, size = 0x4, scoped, tag = 'scoped memory for alexnet_up_forward.1']
    #allocation8 [shape = 'u8[589824]{0}', space=vmem, size = 0x90000, scoped, tag = 'input window, operand 3, single buffered']
    #allocation9 [shape = 'u8[1024]{0}', space=vmem, size = 0x400, scoped, tag = 'input window, operand 4, single buffered']
    #allocation10 [shape = 's32[1]{0}', space=sflag, size = 0x4, scoped, tag = 'scoped memory for alexnet_up_forward.1']
    #allocation11 [shape = 'u8[1179648]{0}', space=vmem, size = 0x120000, scoped, tag = 'input window, operand 5, single buffered']
    #allocation12 [shape = 'u8[1024]{0}', space=vmem, size = 0x400, scoped, tag = 'input window, operand 6, single buffered']
    #allocation13 [shape = 's32[1]{0}', space=sflag, size = 0x4, scoped, tag = 'scoped memory for alexnet_up_forward.1']
    #allocation14 [shape = 'u8[589824]{0}', space=vmem, size = 0x90000, scoped, tag = 'input window, operand 7, single buffered']
    #allocation15 [shape = 'u8[512]{0}', space=vmem, size = 0x400, scoped, tag = 'input window, operand 8, single buffered']
    #allocation16 [shape = 's32[1]{0}', space=sflag, size = 0x4, scoped, tag = 'scoped memory for alexnet_up_forward.1']
    #allocation17 [shape = 'u8[1024]{0}', space=vmem, size = 0x400, scoped, tag = 'output window, operand 0, single buffered']
    %14 = vsyncpa [#allocation4], 0
    %15 = vsyncpa [#allocation7], 0
    %16 = vsyncpa [#allocation10], 0
    %17 = vsyncpa [#allocation13], 0
    %18 = vsyncpa [#allocation16], 0
    %19 = vsyncpa [#allocation5], 0
    // Predicated region
    $region2: #{alexnet_up_forward.1} parent=1 // pred_check
      _
    $region3: #{alexnet_up_forward.1} parent=1 // pred_check_branch
      %21 = sbr.rel (0) target = $region5
    $region4: #{alexnet_up_forward.1} parent=1 // pred_region
      _
    $region5: #{alexnet_up_forward.1} parent=1 // pred_fallthru
      _
    // Predicated region
    $region6: #{alexnet_up_forward.1} parent=1 // pred_check
      _
    $region7: #{alexnet_up_forward.1} parent=1 // pred_check_branch
      %23 = sbr.rel (0) target = $region9
    $region8: #{alexnet_up_forward.1} parent=1 // pred_region
      %s25 = ssub.s32 9216, 9216
      %26 = vsyncadd [#allocation4], %s25
      %s27 = sshll.u32 [#allocation3], 4
      %s28 = int_to_ptr.vmem [resolvable:$true] %s27
      %33 = dma.hbm_to_vmem [thread:$0]  %s1, 9216, %s28, [#allocation4], 64, 64, 4
    $region9: #{alexnet_up_forward.1} parent=1 // pred_fallthru
      _
    // Predicated region
    $region10: #{alexnet_up_forward.1} parent=1 // pred_check
      _
    $region11: #{alexnet_up_forward.1} parent=1 // pred_check_branch
      %35 = sbr.rel (0) target = $region13
    $region12: #{alexnet_up_forward.1} parent=1 // pred_region
      %s37 = ssub.s32 16, 16
      %38 = vsyncadd [#allocation7], %s37
      %s40 = sshll.u32 [#allocation6], 4
      %s41 = int_to_ptr.vmem [resolvable:$true] %s40
      %43 = dma.hbm_to_vmem [thread:$0]  %s2, 16, %s41, [#allocation7]
    $region13: #{alexnet_up_forward.1} parent=1 // pred_fallthru
      _
    // Predicated region
    $region14: #{alexnet_up_forward.1} parent=1 // pred_check
      _
    $region15: #{alexnet_up_forward.1} parent=1 // pred_check_branch
      %45 = sbr.rel (0) target = $region17
    $region16: #{alexnet_up_forward.1} parent=1 // pred_region
      %s47 = ssub.s32 18432, 18432
      %48 = vsyncadd [#allocation7], %s47
      %s49 = sshll.u32 [#allocation8], 4
      %s50 = int_to_ptr.vmem [resolvable:$true] %s49
      %55 = dma.hbm_to_vmem [thread:$0]  %s3, 18432, %s50, [#allocation7], 128, 128, 8
    $region17: #{alexnet_up_forward.1} parent=1 // pred_fallthru
      _
    // Predicated region
    $region18: #{alexnet_up_forward.1} parent=1 // pred_check
      _
    $region19: #{alexnet_up_forward.1} parent=1 // pred_check_branch
      %57 = sbr.rel (0) target = $region21
    $region20: #{alexnet_up_forward.1} parent=1 // pred_region
      %s59 = ssub.s32 32, 32
      %60 = vsyncadd [#allocation10], %s59
      %s62 = sshll.u32 [#allocation9], 4
      %s63 = int_to_ptr.vmem [resolvable:$true] %s62
      %65 = dma.hbm_to_vmem [thread:$0]  %s4, 32, %s63, [#allocation10]
    $region21: #{alexnet_up_forward.1} parent=1 // pred_fallthru
      _
    // Predicated region
    $region22: #{alexnet_up_forward.1} parent=1 // pred_check
      _
    $region23: #{alexnet_up_forward.1} parent=1 // pred_check_branch
      %67 = sbr.rel (0) target = $region25
    $region24: #{alexnet_up_forward.1} parent=1 // pred_region
      %s69 = ssub.s32 36864, 36864
      %70 = vsyncadd [#allocation10], %s69
      %s71 = sshll.u32 [#allocation11], 4
      %s72 = int_to_ptr.vmem [resolvable:$true] %s71
      %77 = dma.hbm_to_vmem [thread:$0]  %s5, 36864, %s72, [#allocation10], 128, 128, 8
    $region25: #{alexnet_up_forward.1} parent=1 // pred_fallthru
      _
    // Predicated region
    $region26: #{alexnet_up_forward.1} parent=1 // pred_check
      _
    $region27: #{alexnet_up_forward.1} parent=1 // pred_check_branch
      %79 = sbr.rel (0) target = $region29
    $region28: #{alexnet_up_forward.1} parent=1 // pred_region
      %s81 = ssub.s32 32, 32
      %82 = vsyncadd [#allocation13], %s81
      %s84 = sshll.u32 [#allocation12], 4
      %s85 = int_to_ptr.vmem [resolvable:$true] %s84
      %87 = dma.hbm_to_vmem [thread:$0]  %s6, 32, %s85, [#allocation13]
    $region29: #{alexnet_up_forward.1} parent=1 // pred_fallthru
      _
    // Predicated region
    $region30: #{alexnet_up_forward.1} parent=1 // pred_check
      _
    $region31: #{alexnet_up_forward.1} parent=1 // pred_check_branch
      %89 = sbr.rel (0) target = $region33
    $region32: #{alexnet_up_forward.1} parent=1 // pred_region
      %s91 = ssub.s32 18432, 18432
      %92 = vsyncadd [#allocation13], %s91
      %s93 = sshll.u32 [#allocation14], 4
      %s94 = int_to_ptr.vmem [resolvable:$true] %s93
      %99 = dma.hbm_to_vmem [thread:$0]  %s7, 18432, %s94, [#allocation13], 64, 64, 4
    $region33: #{alexnet_up_forward.1} parent=1 // pred_fallthru
      _
    // Predicated region
    $region34: #{alexnet_up_forward.1} parent=1 // pred_check
      _
    $region35: #{alexnet_up_forward.1} parent=1 // pred_check_branch
      %101 = sbr.rel (0) target = $region37
    $region36: #{alexnet_up_forward.1} parent=1 // pred_region
      %s103 = ssub.s32 16, 16
      %104 = vsyncadd [#allocation16], %s103
      %s106 = sshll.u32 [#allocation15], 4
      %s107 = int_to_ptr.vmem [resolvable:$true] %s106
      %109 = dma.hbm_to_vmem [thread:$0]  %s8, 16, %s107, [#allocation16]
    $region37: #{alexnet_up_forward.1} parent=1 // pred_fallthru
      _
    // Predicated region
    $region38: #{alexnet_up_forward.1} parent=1 // pred_check
      _
    $region39: #{alexnet_up_forward.1} parent=1 // pred_check_branch
      %111 = sbr.rel (0) target = $region41
    $region40: #{alexnet_up_forward.1} parent=1 // pred_region
      %112 = dma.done [#allocation4], 9216
    $region41: #{alexnet_up_forward.1} parent=1 // pred_fallthru
      _
    // Predicated region
    $region42: #{alexnet_up_forward.1} parent=1 // pred_check
      _
    $region43: #{alexnet_up_forward.1} parent=1 // pred_check_branch
      %114 = sbr.rel (0) target = $region45
    $region44: #{alexnet_up_forward.1} parent=1 // pred_region
      %115 = dma.done [#allocation7], 16
    $region45: #{alexnet_up_forward.1} parent=1 // pred_fallthru
      _
    // Predicated region
    $region46: #{alexnet_up_forward.1} parent=1 // pred_check
      _
    $region47: #{alexnet_up_forward.1} parent=1 // pred_check_branch
      %117 = sbr.rel (0) target = $region49
    $region48: #{alexnet_up_forward.1} parent=1 // pred_region
      %118 = dma.done [#allocation7], 18432
    $region49: #{alexnet_up_forward.1} parent=1 // pred_fallthru
      _
    // Predicated region
    $region50: #{alexnet_up_forward.1} parent=1 // pred_check
      _
    $region51: #{alexnet_up_forward.1} parent=1 // pred_check_branch
      %120 = sbr.rel (0) target = $region53
    $region52: #{alexnet_up_forward.1} parent=1 // pred_region
      %121 = dma.done [#allocation10], 32
    $region53: #{alexnet_up_forward.1} parent=1 // pred_fallthru
      _
    // Predicated region
    $region54: #{alexnet_up_forward.1} parent=1 // pred_check
      _
    $region55: #{alexnet_up_forward.1} parent=1 // pred_check_branch
      %123 = sbr.rel (0) target = $region57
    $region56: #{alexnet_up_forward.1} parent=1 // pred_region
      %124 = dma.done [#allocation10], 36864
    $region57: #{alexnet_up_forward.1} parent=1 // pred_fallthru
      _
    // Predicated region
    $region58: #{alexnet_up_forward.1} parent=1 // pred_check
      _
    $region59: #{alexnet_up_forward.1} parent=1 // pred_check_branch
      %126 = sbr.rel (0) target = $region61
    $region60: #{alexnet_up_forward.1} parent=1 // pred_region
      %127 = dma.done [#allocation13], 32
    $region61: #{alexnet_up_forward.1} parent=1 // pred_fallthru
      _
    // Predicated region
    $region62: #{alexnet_up_forward.1} parent=1 // pred_check
      _
    $region63: #{alexnet_up_forward.1} parent=1 // pred_check_branch
      %129 = sbr.rel (0) target = $region65
    $region64: #{alexnet_up_forward.1} parent=1 // pred_region
      %130 = dma.done [#allocation13], 18432
    $region65: #{alexnet_up_forward.1} parent=1 // pred_fallthru
      _
    // Predicated region
    $region66: #{alexnet_up_forward.1} parent=1 // pred_check
      _
    $region67: #{alexnet_up_forward.1} parent=1 // pred_check_branch
      %132 = sbr.rel (0) target = $region69
    $region68: #{alexnet_up_forward.1} parent=1 // pred_region
      %133 = dma.done [#allocation16], 16
    $region69: #{alexnet_up_forward.1} parent=1 // pred_fallthru
      _
    %136 = vst [vmem:[#allocation2] sm:$0xff] 0
    %137 = vst [vmem:[#allocation2 + $0x8] sm:$0x11] 0
    %138 = vst [vmem:[#allocation2 + $0x10] sm:$0xff] 0
    %139 = vst [vmem:[#allocation2 + $0x18] sm:$0x11] 0
    %140 = vst [vmem:[#allocation2 + $0x20] sm:$0xff] 0
    %141 = vst [vmem:[#allocation2 + $0x28] sm:$0x11] 0
    %142 = vst [vmem:[#allocation2 + $0x30] sm:$0xff] 0
    %143 = vst [vmem:[#allocation2 + $0x38] sm:$0x11] 0
    %144 = vst [vmem:[#allocation2 + $0x40] sm:$0xff] 0
    %145 = vst [vmem:[#allocation2 + $0x48] sm:$0x11] 0
    %146 = vst [vmem:[#allocation2 + $0x50] sm:$0xff] 0
    %147 = vst [vmem:[#allocation2 + $0x58] sm:$0x11] 0
    %148 = vst [vmem:[#allocation2 + $0x60] sm:$0xff] 0
    %149 = vst [vmem:[#allocation2 + $0x68] sm:$0x11] 0
    %150 = vst [vmem:[#allocation2 + $0x70] sm:$0xff] 0
    %151 = vst [vmem:[#allocation2 + $0x78] sm:$0x11] 0
    %152 = vst [vmem:[#allocation2 + $0x80] sm:$0xff] 0
    %153 = vst [vmem:[#allocation2 + $0x88] sm:$0x11] 0
    %154 = vst [vmem:[#allocation2 + $0x90] sm:$0xff] 0
    %155 = vst [vmem:[#allocation2 + $0x98] sm:$0x11] 0
    %156 = vst [vmem:[#allocation2 + $0xa0] sm:$0xff] 0
    %157 = vst [vmem:[#allocation2 + $0xa8] sm:$0x11] 0
    %158 = vst [vmem:[#allocation2 + $0xb0] sm:$0xff] 0
    %159 = vst [vmem:[#allocation2 + $0xb8] sm:$0x11] 0
    %160 = vst [vmem:[#allocation2 + $0xc0] sm:$0xff] 0
    %161 = vst [vmem:[#allocation2 + $0xc8] sm:$0x11] 0
    %162 = vst [vmem:[#allocation2 + $0xd0] sm:$0xff] 0
    %163 = vst [vmem:[#allocation2 + $0xd8] sm:$0x11] 0
    %164 = vst [vmem:[#allocation2 + $0xe0] sm:$0xff] 0
    %165 = vst [vmem:[#allocation2 + $0xe8] sm:$0x11] 0
    %166 = vst [vmem:[#allocation2 + $0xf0] sm:$0xff] 0
    %167 = vst [vmem:[#allocation2 + $0xf8] sm:$0x11] 0
    %168 = vst [vmem:[#allocation2 + $0x100] sm:$0xff] 0
    %169 = vst [vmem:[#allocation2 + $0x108] sm:$0x11] 0
    %170 = vst [vmem:[#allocation2 + $0x110] sm:$0xff] 0
    %171 = vst [vmem:[#allocation2 + $0x118] sm:$0x11] 0
    %172 = vst [vmem:[#allocation2 + $0x120] sm:$0xff] 0
    %173 = vst [vmem:[#allocation2 + $0x128] sm:$0x11] 0
    %174 = vst [vmem:[#allocation2 + $0x130] sm:$0xff] 0
    %175 = vst [vmem:[#allocation2 + $0x138] sm:$0x11] 0
    %v176 = vld [vmem:[%s0] sm:$0xf]
    %v177 = vld [vmem:[%s0 + $0x4] sm:$0xf]
    %v178 = vld [vmem:[%s0 + $0x8] sm:$0xf]
    %v179 = vld [vmem:[%s0 + $0xc] sm:$0xf]
    %v180 = vld [vmem:[%s0 + $0x10] sm:$0xf]
    %v181 = vld [vmem:[%s0 + $0x14] sm:$0xf]
    %v182 = vld [vmem:[%s0 + $0x18] sm:$0xf]
    %v183 = vld [vmem:[%s0 + $0x1c] sm:$0xf]
    %v184 = vld [vmem:[%s0 + $0x20] sm:$0xf]
    %v185 = vld [vmem:[%s0 + $0x24] sm:$0xf]
    %v186 = vld [vmem:[%s0 + $0x28] sm:$0xf]
    %v187 = vld [vmem:[%s0 + $0x2c] sm:$0xf]
    %v188 = vld [vmem:[%s0 + $0x30] sm:$0xf]
    %v189 = vld [vmem:[%s0 + $0x34] sm:$0xf]
    %v190 = vld [vmem:[%s0 + $0x38] sm:$0xf]
    %v191 = vld [vmem:[%s0 + $0x3c] sm:$0xf]
    %v193 = vshrl.u32 %v176, 16
    %v195 = vrot.slane %v193, 7
    %v196 = vshll.u32 %v176, 16
    %v198 = vor.u32 %v195, %v196
    %v199 = vrot.slane %v195, 4
    %v201 = vshrl.u32 %v177, 16
    %v203 = vrot.slane %v201, 7
    %v204 = vshll.u32 %v177, 16
    %v206 = vor.u32 %v203, %v204
    %v207 = vrot.slane %v203, 4
    %v209 = vshrl.u32 %v178, 16
    %v211 = vrot.slane %v209, 7
    %v212 = vshll.u32 %v178, 16
    %v214 = vor.u32 %v211, %v212
    %v215 = vrot.slane %v211, 4
    %v217 = vshrl.u32 %v179, 16
    %v219 = vrot.slane %v217, 7
    %v220 = vshll.u32 %v179, 16
    %v222 = vor.u32 %v219, %v220
    %v223 = vrot.slane %v219, 4
    %v225 = vshrl.u32 %v180, 16
    %v227 = vrot.slane %v225, 7
    %v228 = vshll.u32 %v180, 16
    %v230 = vor.u32 %v227, %v228
    %v231 = vrot.slane %v227, 4
    %v233 = vshrl.u32 %v181, 16
    %v235 = vrot.slane %v233, 7
    %v236 = vshll.u32 %v181, 16
    %v238 = vor.u32 %v235, %v236
    %v239 = vrot.slane %v235, 4
    %v241 = vshrl.u32 %v182, 16
    %v243 = vrot.slane %v241, 7
    %v244 = vshll.u32 %v182, 16
    %v246 = vor.u32 %v243, %v244
    %v247 = vrot.slane %v243, 4
    %v249 = vshrl.u32 %v183, 16
    %v251 = vrot.slane %v249, 7
    %v252 = vshll.u32 %v183, 16
    %v254 = vor.u32 %v251, %v252
    %v255 = vrot.slane %v251, 4
    %v257 = vshrl.u32 %v184, 16
    %v259 = vrot.slane %v257, 7
    %v260 = vshll.u32 %v184, 16
    %v262 = vor.u32 %v259, %v260
    %v263 = vrot.slane %v259, 4
    %v265 = vshrl.u32 %v185, 16
    %v267 = vrot.slane %v265, 7
    %v268 = vshll.u32 %v185, 16
    %v270 = vor.u32 %v267, %v268
    %v271 = vrot.slane %v267, 4
    %v273 = vshrl.u32 %v186, 16
    %v275 = vrot.slane %v273, 7
    %v276 = vshll.u32 %v186, 16
    %v278 = vor.u32 %v275, %v276
    %v279 = vrot.slane %v275, 4
    %v281 = vshrl.u32 %v187, 16
    %v283 = vrot.slane %v281, 7
    %v284 = vshll.u32 %v187, 16
    %v286 = vor.u32 %v283, %v284
    %v287 = vrot.slane %v283, 4
    %v289 = vshrl.u32 %v188, 16
    %v291 = vrot.slane %v289, 7
    %v292 = vshll.u32 %v188, 16
    %v294 = vor.u32 %v291, %v292
    %v295 = vrot.slane %v291, 4
    %v297 = vshrl.u32 %v189, 16
    %v299 = vrot.slane %v297, 7
    %v300 = vshll.u32 %v189, 16
    %v302 = vor.u32 %v299, %v300
    %v303 = vrot.slane %v299, 4
    %v305 = vshrl.u32 %v190, 16
    %v307 = vrot.slane %v305, 7
    %v308 = vshll.u32 %v190, 16
    %v310 = vor.u32 %v307, %v308
    %v311 = vrot.slane %v307, 4
    %v313 = vshrl.u32 %v191, 16
    %v315 = vrot.slane %v313, 7
    %v316 = vshll.u32 %v191, 16
    %v318 = vor.u32 %v315, %v316
    %v319 = vrot.slane %v315, 4
    %s352 = scalar_lea.vmem [#allocation2], 16
    %vm353 = vcmask 1043456
    %vm354 = vsmask.f32 7938
    %vm355 = vmand %vm353, %vm354
    %v356 = vld [vmem:[%s352] sm:$0xf]
    %v357 = vsel %vm355, %v198, %v356
    %358 = vst [vmem:[%s352] sm:$0xf] %v357
    %vm359 = vcmask 1040384
    %vm360 = vsmask.f32 256
    %vm361 = vmand %vm359, %vm360
    %v362 = vld [vmem:[%s352 + $0x8] sm:$0x1]
    %v363 = vsel %vm361, %v199, %v362
    %364 = vst [vmem:[%s352 + $0x8] sm:$0x1] %v363
    %v365 = vld [vmem:[%s352 + $0x10] sm:$0xf]
    %v366 = vsel %vm355, %v206, %v365
    %367 = vst [vmem:[%s352 + $0x10] sm:$0xf] %v366
    %v368 = vld [vmem:[%s352 + $0x18] sm:$0x1]
    %v369 = vsel %vm361, %v207, %v368
    %370 = vst [vmem:[%s352 + $0x18] sm:$0x1] %v369
    %v371 = vld [vmem:[%s352 + $0x20] sm:$0xf]
    %v372 = vsel %vm355, %v214, %v371
    %373 = vst [vmem:[%s352 + $0x20] sm:$0xf] %v372
    %v374 = vld [vmem:[%s352 + $0x28] sm:$0x1]
    %v375 = vsel %vm361, %v215, %v374
    %376 = vst [vmem:[%s352 + $0x28] sm:$0x1] %v375
    %v377 = vld [vmem:[%s352 + $0x30] sm:$0xf]
    %v378 = vsel %vm355, %v222, %v377
    %379 = vst [vmem:[%s352 + $0x30] sm:$0xf] %v378
    %v380 = vld [vmem:[%s352 + $0x38] sm:$0x1]
    %v381 = vsel %vm361, %v223, %v380
    %382 = vst [vmem:[%s352 + $0x38] sm:$0x1] %v381
    %v383 = vld [vmem:[%s352 + $0x40] sm:$0xf]
    %v384 = vsel %vm355, %v230, %v383
    %385 = vst [vmem:[%s352 + $0x40] sm:$0xf] %v384
    %v386 = vld [vmem:[%s352 + $0x48] sm:$0x1]
    %v387 = vsel %vm361, %v231, %v386
    %388 = vst [vmem:[%s352 + $0x48] sm:$0x1] %v387
    %v389 = vld [vmem:[%s352 + $0x50] sm:$0xf]
    %v390 = vsel %vm355, %v238, %v389
    %391 = vst [vmem:[%s352 + $0x50] sm:$0xf] %v390
    %v392 = vld [vmem:[%s352 + $0x58] sm:$0x1]
    %v393 = vsel %vm361, %v239, %v392
    %394 = vst [vmem:[%s352 + $0x58] sm:$0x1] %v393
    %v395 = vld [vmem:[%s352 + $0x60] sm:$0xf]
    %v396 = vsel %vm355, %v246, %v395
    %397 = vst [vmem:[%s352 + $0x60] sm:$0xf] %v396
    %v398 = vld [vmem:[%s352 + $0x68] sm:$0x1]
    %v399 = vsel %vm361, %v247, %v398
    %400 = vst [vmem:[%s352 + $0x68] sm:$0x1] %v399
    %v401 = vld [vmem:[%s352 + $0x70] sm:$0xf]
    %v402 = vsel %vm355, %v254, %v401
    %403 = vst [vmem:[%s352 + $0x70] sm:$0xf] %v402
    %v404 = vld [vmem:[%s352 + $0x78] sm:$0x1]
    %v405 = vsel %vm361, %v255, %v404
    %406 = vst [vmem:[%s352 + $0x78] sm:$0x1] %v405
    %v407 = vld [vmem:[%s352 + $0xa0] sm:$0xf]
    %v408 = vsel %vm355, %v262, %v407
    %409 = vst [vmem:[%s352 + $0xa0] sm:$0xf] %v408
    %v410 = vld [vmem:[%s352 + $0xa8] sm:$0x1]
    %v411 = vsel %vm361, %v263, %v410
    %412 = vst [vmem:[%s352 + $0xa8] sm:$0x1] %v411
    %v413 = vld [vmem:[%s352 + $0xb0] sm:$0xf]
    %v414 = vsel %vm355, %v270, %v413
    %415 = vst [vmem:[%s352 + $0xb0] sm:$0xf] %v414
    %v416 = vld [vmem:[%s352 + $0xb8] sm:$0x1]
    %v417 = vsel %vm361, %v271, %v416
    %418 = vst [vmem:[%s352 + $0xb8] sm:$0x1] %v417
    %v419 = vld [vmem:[%s352 + $0xc0] sm:$0xf]
    %v420 = vsel %vm355, %v278, %v419
    %421 = vst [vmem:[%s352 + $0xc0] sm:$0xf] %v420
    %v422 = vld [vmem:[%s352 + $0xc8] sm:$0x1]
    %v423 = vsel %vm361, %v279, %v422
    %424 = vst [vmem:[%s352 + $0xc8] sm:$0x1] %v423
    %v425 = vld [vmem:[%s352 + $0xd0] sm:$0xf]
    %v426 = vsel %vm355, %v286, %v425
    %427 = vst [vmem:[%s352 + $0xd0] sm:$0xf] %v426
    %v428 = vld [vmem:[%s352 + $0xd8] sm:$0x1]
    %v429 = vsel %vm361, %v287, %v428
    %430 = vst [vmem:[%s352 + $0xd8] sm:$0x1] %v429
    %v431 = vld [vmem:[%s352 + $0xe0] sm:$0xf]
    %v432 = vsel %vm355, %v294, %v431
    %433 = vst [vmem:[%s352 + $0xe0] sm:$0xf] %v432
    %v434 = vld [vmem:[%s352 + $0xe8] sm:$0x1]
    %v435 = vsel %vm361, %v295, %v434
    %436 = vst [vmem:[%s352 + $0xe8] sm:$0x1] %v435
    %v437 = vld [vmem:[%s352 + $0xf0] sm:$0xf]
    %v438 = vsel %vm355, %v302, %v437
    %439 = vst [vmem:[%s352 + $0xf0] sm:$0xf] %v438
    %v440 = vld [vmem:[%s352 + $0xf8] sm:$0x1]
    %v441 = vsel %vm361, %v303, %v440
    %442 = vst [vmem:[%s352 + $0xf8] sm:$0x1] %v441
    %v443 = vld [vmem:[%s352 + $0x100] sm:$0xf]
    %v444 = vsel %vm355, %v310, %v443
    %445 = vst [vmem:[%s352 + $0x100] sm:$0xf] %v444
    %v446 = vld [vmem:[%s352 + $0x108] sm:$0x1]
    %v447 = vsel %vm361, %v311, %v446
    %448 = vst [vmem:[%s352 + $0x108] sm:$0x1] %v447
    %v449 = vld [vmem:[%s352 + $0x110] sm:$0xf]
    %v450 = vsel %vm355, %v318, %v449
    %451 = vst [vmem:[%s352 + $0x110] sm:$0xf] %v450
    %v452 = vld [vmem:[%s352 + $0x118] sm:$0x1]
    %v453 = vsel %vm361, %v319, %v452
    %454 = vst [vmem:[%s352 + $0x118] sm:$0x1] %v453
    %v455 = vld [vmem:[#allocation2] sm:$0xf]
    %v456 = vld [vmem:[#allocation2 + $0x10] sm:$0xf]
    %v457 = vld [vmem:[#allocation2 + $0x20] sm:$0xf]
    %v458 = vld [vmem:[#allocation2 + $0x30] sm:$0xf]
    %v459 = vld [vmem:[#allocation2 + $0x40] sm:$0xf]
    %v460 = vld [vmem:[#allocation2 + $0x50] sm:$0xf]
    %v461 = vld [vmem:[#allocation2 + $0x60] sm:$0xf]
    %v462 = vld [vmem:[#allocation2 + $0x70] sm:$0xf]
    %v463 = vld [vmem:[#allocation2 + $0xa0] sm:$0xf]
    %v464 = vld [vmem:[#allocation2 + $0xb0] sm:$0xf]
    %v465 = vld [vmem:[#allocation2 + $0xc0] sm:$0xf]
    %v466 = vld [vmem:[#allocation2 + $0xd0] sm:$0xf]
    %v467 = vld [vmem:[#allocation2 + $0xe0] sm:$0xf]
    %v468 = vld [vmem:[#allocation2 + $0xf0] sm:$0xf]
    %v469 = vld [vmem:[#allocation2 + $0x100] sm:$0xf]
    %v470 = vld [vmem:[#allocation2 + $0x110] sm:$0xf]
    %v471 = vld [vmem:[#allocation2 + $0x8] sm:$0x1]
    %v472 = vld [vmem:[#allocation2 + $0x18] sm:$0x1]
    %v473 = vld [vmem:[#allocation2 + $0x28] sm:$0x1]
    %v474 = vld [vmem:[#allocation2 + $0x38] sm:$0x1]
    %v475 = vld [vmem:[#allocation2 + $0x48] sm:$0x1]
    %v476 = vld [vmem:[#allocation2 + $0x58] sm:$0x1]
    %v477 = vld [vmem:[#allocation2 + $0x68] sm:$0x1]
    %v478 = vld [vmem:[#allocation2 + $0x78] sm:$0x1]
    %v479 = vld [vmem:[#allocation2 + $0xa8] sm:$0x1]
    %v480 = vld [vmem:[#allocation2 + $0xb8] sm:$0x1]
    %v481 = vld [vmem:[#allocation2 + $0xc8] sm:$0x1]
    %v482 = vld [vmem:[#allocation2 + $0xd8] sm:$0x1]
    %v483 = vld [vmem:[#allocation2 + $0xe8] sm:$0x1]
    %v484 = vld [vmem:[#allocation2 + $0xf8] sm:$0x1]
    %v485 = vld [vmem:[#allocation2 + $0x108] sm:$0x1]
    %v486 = vld [vmem:[#allocation2 + $0x118] sm:$0x1]
    %v487 = vld [vmem:[#allocation2] sm:$0xe]
    %v488 = vld [vmem:[#allocation2 + $0x10] sm:$0xe]
    %v489 = vld [vmem:[#allocation2 + $0x20] sm:$0xe]
    %v490 = vld [vmem:[#allocation2 + $0x30] sm:$0xe]
    %v491 = vld [vmem:[#allocation2 + $0x40] sm:$0xe]
    %v492 = vld [vmem:[#allocation2 + $0x50] sm:$0xe]
    %v493 = vld [vmem:[#allocation2 + $0x60] sm:$0xe]
    %v494 = vld [vmem:[#allocation2 + $0x70] sm:$0xe]
    %v495 = vld [vmem:[#allocation2 + $0xa0] sm:$0xe]
    %v496 = vld [vmem:[#allocation2 + $0xb0] sm:$0xe]
    %v497 = vld [vmem:[#allocation2 + $0xc0] sm:$0xe]
    %v498 = vld [vmem:[#allocation2 + $0xd0] sm:$0xe]
    %v499 = vld [vmem:[#allocation2 + $0xe0] sm:$0xe]
    %v500 = vld [vmem:[#allocation2 + $0xf0] sm:$0xe]
    %v501 = vld [vmem:[#allocation2 + $0x100] sm:$0xe]
    %v502 = vld [vmem:[#allocation2 + $0x110] sm:$0xe]
    %v535 = vunpack.c.l.b16 %v455
    %v536 = vunpack.c.l.b16 %v471
    %v537 = vunpack.c.l.b16 %v456
    %v538 = vunpack.c.l.b16 %v472
    %v539 = vunpack.c.l.b16 %v457
    %v540 = vunpack.c.l.b16 %v473
    %v541 = vunpack.c.l.b16 %v458
    %v542 = vunpack.c.l.b16 %v474
    %v543 = vunpack.c.l.b16 %v459
    %v544 = vunpack.c.l.b16 %v475
    %v545 = vunpack.c.l.b16 %v460
    %v546 = vunpack.c.l.b16 %v476
    %v547 = vunpack.c.l.b16 %v461
    %v548 = vunpack.c.l.b16 %v477
    %v549 = vunpack.c.l.b16 %v462
    %v550 = vunpack.c.l.b16 %v478
    %v551 = vunpack.c.l.b16 %v463
    %v552 = vunpack.c.l.b16 %v479
    %v553 = vunpack.c.l.b16 %v464
    %v554 = vunpack.c.l.b16 %v480
    %v555 = vunpack.c.l.b16 %v465
    %v556 = vunpack.c.l.b16 %v481
    %v557 = vunpack.c.l.b16 %v466
    %v558 = vunpack.c.l.b16 %v482
    %v559 = vunpack.c.l.b16 %v467
    %v560 = vunpack.c.l.b16 %v483
    %v561 = vunpack.c.l.b16 %v468
    %v562 = vunpack.c.l.b16 %v484
    %v563 = vunpack.c.l.b16 %v469
    %v564 = vunpack.c.l.b16 %v485
    %v565 = vunpack.c.l.b16 %v470
    %v566 = vunpack.c.l.b16 %v486
    %v567 = vpack.c.b16 %v536, %v535
    %v568 = vpack.c.b16 %v538, %v537
    %v569 = vpack.c.b16 %v540, %v539
    %v570 = vpack.c.b16 %v542, %v541
    %v571 = vpack.c.b16 %v544, %v543
    %v572 = vpack.c.b16 %v546, %v545
    %v573 = vpack.c.b16 %v548, %v547
    %v574 = vpack.c.b16 %v550, %v549
    %v575 = vpack.c.b16 %v552, %v551
    %v576 = vpack.c.b16 %v554, %v553
    %v577 = vpack.c.b16 %v556, %v555
    %v578 = vpack.c.b16 %v558, %v557
    %v579 = vpack.c.b16 %v560, %v559
    %v580 = vpack.c.b16 %v562, %v561
    %v581 = vpack.c.b16 %v564, %v563
    %v582 = vpack.c.b16 %v566, %v565
    %v584 = vshrl.u32 %v567, 16
    %v586 = vshll.u32 %v567, 16
    %v588 = vrot.slane %v586, 1
    %v589 = vor.u32 %v584, %v588
    %v591 = vshrl.u32 %v568, 16
    %v593 = vshll.u32 %v568, 16
    %v595 = vrot.slane %v593, 1
    %v596 = vor.u32 %v591, %v595
    %v598 = vshrl.u32 %v569, 16
    %v600 = vshll.u32 %v569, 16
    %v602 = vrot.slane %v600, 1
    %v603 = vor.u32 %v598, %v602
    %v605 = vshrl.u32 %v570, 16
    %v607 = vshll.u32 %v570, 16
    %v609 = vrot.slane %v607, 1
    %v610 = vor.u32 %v605, %v609
    %v612 = vshrl.u32 %v571, 16
    %v614 = vshll.u32 %v571, 16
    %v616 = vrot.slane %v614, 1
    %v617 = vor.u32 %v612, %v616
    %v619 = vshrl.u32 %v572, 16
    %v621 = vshll.u32 %v572, 16
    %v623 = vrot.slane %v621, 1
    %v624 = vor.u32 %v619, %v623
    %v626 = vshrl.u32 %v573, 16
    %v628 = vshll.u32 %v573, 16
    %v630 = vrot.slane %v628, 1
    %v631 = vor.u32 %v626, %v630
    %v633 = vshrl.u32 %v574, 16
    %v635 = vshll.u32 %v574, 16
    %v637 = vrot.slane %v635, 1
    %v638 = vor.u32 %v633, %v637
    %v640 = vshrl.u32 %v575, 16
    %v642 = vshll.u32 %v575, 16
    %v644 = vrot.slane %v642, 1
    %v645 = vor.u32 %v640, %v644
    %v647 = vshrl.u32 %v576, 16
    %v649 = vshll.u32 %v576, 16
    %v651 = vrot.slane %v649, 1
    %v652 = vor.u32 %v647, %v651
    %v654 = vshrl.u32 %v577, 16
    %v656 = vshll.u32 %v577, 16
    %v658 = vrot.slane %v656, 1
    %v659 = vor.u32 %v654, %v658
    %v661 = vshrl.u32 %v578, 16
    %v663 = vshll.u32 %v578, 16
    %v665 = vrot.slane %v663, 1
    %v666 = vor.u32 %v661, %v665
    %v668 = vshrl.u32 %v579, 16
    %v670 = vshll.u32 %v579, 16
    %v672 = vrot.slane %v670, 1
    %v673 = vor.u32 %v668, %v672
    %v675 = vshrl.u32 %v580, 16
    %v677 = vshll.u32 %v580, 16
    %v679 = vrot.slane %v677, 1
    %v680 = vor.u32 %v675, %v679
    %v682 = vshrl.u32 %v581, 16
    %v684 = vshll.u32 %v581, 16
    %v686 = vrot.slane %v684, 1
    %v687 = vor.u32 %v682, %v686
    %v689 = vshrl.u32 %v582, 16
    %v691 = vshll.u32 %v582, 16
    %v693 = vrot.slane %v691, 1
    %v694 = vor.u32 %v689, %v693
    %v711 = vunpack.c.l.b16 %v487
    %v712 = vunpack.c.l.b16 %v488
    %v713 = vunpack.c.l.b16 %v489
    %v714 = vunpack.c.l.b16 %v490
    %v715 = vunpack.c.l.b16 %v491
    %v716 = vunpack.c.l.b16 %v492
    %v717 = vunpack.c.l.b16 %v493
    %v718 = vunpack.c.l.b16 %v494
    %v719 = vunpack.c.l.b16 %v495
    %v720 = vunpack.c.l.b16 %v496
    %v721 = vunpack.c.l.b16 %v497
    %v722 = vunpack.c.l.b16 %v498
    %v723 = vunpack.c.l.b16 %v499
    %v724 = vunpack.c.l.b16 %v500
    %v725 = vunpack.c.l.b16 %v501
    %v726 = vunpack.c.l.b16 %v502
    %v727 = vpack.c.b16 %v536, %v711
    %v728 = vpack.c.b16 %v538, %v712
    %v729 = vpack.c.b16 %v540, %v713
    %v730 = vpack.c.b16 %v542, %v714
    %v731 = vpack.c.b16 %v544, %v715
    %v732 = vpack.c.b16 %v546, %v716
    %v733 = vpack.c.b16 %v548, %v717
    %v734 = vpack.c.b16 %v550, %v718
    %v735 = vpack.c.b16 %v552, %v719
    %v736 = vpack.c.b16 %v554, %v720
    %v737 = vpack.c.b16 %v556, %v721
    %v738 = vpack.c.b16 %v558, %v722
    %v739 = vpack.c.b16 %v560, %v723
    %v740 = vpack.c.b16 %v562, %v724
    %v741 = vpack.c.b16 %v564, %v725
    %v742 = vpack.c.b16 %v566, %v726
    %v743 = vrot.slane %v727, 1
    %v744 = vrot.slane %v728, 1
    %v745 = vrot.slane %v729, 1
    %v746 = vrot.slane %v730, 1
    %v747 = vrot.slane %v731, 1
    %v748 = vrot.slane %v732, 1
    %v749 = vrot.slane %v733, 1
    %v750 = vrot.slane %v734, 1
    %v751 = vrot.slane %v735, 1
    %v752 = vrot.slane %v736, 1
    %v753 = vrot.slane %v737, 1
    %v754 = vrot.slane %v738, 1
    %v755 = vrot.slane %v739, 1
    %v756 = vrot.slane %v740, 1
    %v757 = vrot.slane %v741, 1
    %v758 = vrot.slane %v742, 1
    %v759 = vunpack.c.l.b16 %v589
    %v760 = vunpack.c.l.b16 %v743
    %v761 = vunpack.c.l.b16 %v596
    %v762 = vunpack.c.l.b16 %v744
    %v763 = vunpack.c.l.b16 %v603
    %v764 = vunpack.c.l.b16 %v745
    %v765 = vunpack.c.l.b16 %v610
    %v766 = vunpack.c.l.b16 %v746
    %v767 = vunpack.c.l.b16 %v617
    %v768 = vunpack.c.l.b16 %v747
    %v769 = vunpack.c.l.b16 %v624
    %v770 = vunpack.c.l.b16 %v748
    %v771 = vunpack.c.l.b16 %v631
    %v772 = vunpack.c.l.b16 %v749
    %v773 = vunpack.c.l.b16 %v638
    %v774 = vunpack.c.l.b16 %v750
    %v775 = vunpack.c.l.b16 %v645
    %v776 = vunpack.c.l.b16 %v751
    %v777 = vunpack.c.l.b16 %v652
    %v778 = vunpack.c.l.b16 %v752
    %v779 = vunpack.c.l.b16 %v659
    %v780 = vunpack.c.l.b16 %v753
    %v781 = vunpack.c.l.b16 %v666
    %v782 = vunpack.c.l.b16 %v754
    %v783 = vunpack.c.l.b16 %v673
    %v784 = vunpack.c.l.b16 %v755
    %v785 = vunpack.c.l.b16 %v680
    %v786 = vunpack.c.l.b16 %v756
    %v787 = vunpack.c.l.b16 %v687
    %v788 = vunpack.c.l.b16 %v757
    %v789 = vunpack.c.l.b16 %v694
    %v790 = vunpack.c.l.b16 %v758
    %v791 = vld [vmem:[#allocation3] sm:$0xf]
    %v792 = vld [vmem:[#allocation3 + $0x4] sm:$0xf]
    %v793 = vld [vmem:[#allocation3 + $0x8] sm:$0xf]
    %v794 = vld [vmem:[#allocation3 + $0xc] sm:$0xf]
    %v795 = vld [vmem:[#allocation3 + $0x10] sm:$0xf]
    %v796 = vld [vmem:[#allocation3 + $0x14] sm:$0xf]
    %v797 = vld [vmem:[#allocation3 + $0x18] sm:$0xf]
    %v798 = vld [vmem:[#allocation3 + $0x1c] sm:$0xf]
    %v799 = vld [vmem:[#allocation3 + $0x20] sm:$0xf]
    %v800 = vld [vmem:[#allocation3 + $0x24] sm:$0xf]
    %v801 = vld [vmem:[#allocation3 + $0x28] sm:$0xf]
    %v802 = vld [vmem:[#allocation3 + $0x2c] sm:$0xf]
    %v803 = vld [vmem:[#allocation3 + $0x30] sm:$0xf]
    %v804 = vld [vmem:[#allocation3 + $0x34] sm:$0xf]
    %v805 = vld [vmem:[#allocation3 + $0x38] sm:$0xf]
    %v806 = vld [vmem:[#allocation3 + $0x3c] sm:$0xf]
    %v807 = vld [vmem:[#allocation3 + $0x40] sm:$0xf]
    %v808 = vld [vmem:[#allocation3 + $0x44] sm:$0xf]
    %v809 = vld [vmem:[#allocation3 + $0x48] sm:$0xf]
    %v810 = vld [vmem:[#allocation3 + $0x4c] sm:$0xf]
    %v811 = vld [vmem:[#allocation3 + $0x50] sm:$0xf]
    %v812 = vld [vmem:[#allocation3 + $0x54] sm:$0xf]
    %v813 = vld [vmem:[#allocation3 + $0x58] sm:$0xf]
    %v814 = vld [vmem:[#allocation3 + $0x5c] sm:$0xf]
    %v815 = vld [vmem:[#allocation3 + $0x60] sm:$0xf]
    %v816 = vld [vmem:[#allocation3 + $0x64] sm:$0xf]
    %v817 = vld [vmem:[#allocation3 + $0x68] sm:$0xf]
    %v818 = vld [vmem:[#allocation3 + $0x6c] sm:$0xf]
    %v819 = vld [vmem:[#allocation3 + $0x70] sm:$0xf]
    %v820 = vld [vmem:[#allocation3 + $0x74] sm:$0xf]
    %v821 = vld [vmem:[#allocation3 + $0x78] sm:$0xf]
    %v822 = vld [vmem:[#allocation3 + $0x7c] sm:$0xf]
    %v823 = vld [vmem:[#allocation3 + $0x80] sm:$0xf]
    %v824 = vld [vmem:[#allocation3 + $0x84] sm:$0xf]
    %v825 = vld [vmem:[#allocation3 + $0x88] sm:$0xf]
    %v826 = vld [vmem:[#allocation3 + $0x8c] sm:$0xf]
    %v827 = vld [vmem:[#allocation3 + $0x90] sm:$0xf]
    %v828 = vld [vmem:[#allocation3 + $0x94] sm:$0xf]
    %v829 = vld [vmem:[#allocation3 + $0x98] sm:$0xf]
    %v830 = vld [vmem:[#allocation3 + $0x9c] sm:$0xf]
    %v831 = vld [vmem:[#allocation3 + $0xa0] sm:$0xf]
    %v832 = vld [vmem:[#allocation3 + $0xa4] sm:$0xf]
    %v833 = vld [vmem:[#allocation3 + $0xa8] sm:$0xf]
    %v834 = vld [vmem:[#allocation3 + $0xac] sm:$0xf]
    %v835 = vld [vmem:[#allocation3 + $0xb0] sm:$0xf]
    %v836 = vld [vmem:[#allocation3 + $0xb4] sm:$0xf]
    %v837 = vld [vmem:[#allocation3 + $0xb8] sm:$0xf]
    %v838 = vld [vmem:[#allocation3 + $0xbc] sm:$0xf]
    %v839 = vld [vmem:[%s352] sm:$0xf]
    %v840 = vld [vmem:[%s352 + $0x10] sm:$0xf]
    %v841 = vld [vmem:[%s352 + $0x20] sm:$0xf]
    %v842 = vld [vmem:[%s352 + $0x30] sm:$0xf]
    %v843 = vld [vmem:[%s352 + $0x40] sm:$0xf]
    %v844 = vld [vmem:[%s352 + $0x50] sm:$0xf]
    %v845 = vld [vmem:[%s352 + $0x60] sm:$0xf]
    %v846 = vld [vmem:[%s352 + $0x70] sm:$0xf]
    %v847 = vld [vmem:[%s352 + $0xa0] sm:$0xf]
    %v848 = vld [vmem:[%s352 + $0xb0] sm:$0xf]
    %v849 = vld [vmem:[%s352 + $0xc0] sm:$0xf]
    %v850 = vld [vmem:[%s352 + $0xd0] sm:$0xf]
    %v851 = vld [vmem:[%s352 + $0xe0] sm:$0xf]
    %v852 = vld [vmem:[%s352 + $0xf0] sm:$0xf]
    %v853 = vld [vmem:[%s352 + $0x100] sm:$0xf]
    %v854 = vld [vmem:[%s352 + $0x110] sm:$0xf]
    %v855 = vld [vmem:[%s352 + $0x8] sm:$0x1]
    %v856 = vld [vmem:[%s352 + $0x18] sm:$0x1]
    %v857 = vld [vmem:[%s352 + $0x28] sm:$0x1]
    %v858 = vld [vmem:[%s352 + $0x38] sm:$0x1]
    %v859 = vld [vmem:[%s352 + $0x48] sm:$0x1]
    %v860 = vld [vmem:[%s352 + $0x58] sm:$0x1]
    %v861 = vld [vmem:[%s352 + $0x68] sm:$0x1]
    %v862 = vld [vmem:[%s352 + $0x78] sm:$0x1]
    %v863 = vld [vmem:[%s352 + $0xa8] sm:$0x1]
    %v864 = vld [vmem:[%s352 + $0xb8] sm:$0x1]
    %v865 = vld [vmem:[%s352 + $0xc8] sm:$0x1]
    %v866 = vld [vmem:[%s352 + $0xd8] sm:$0x1]
    %v867 = vld [vmem:[%s352 + $0xe8] sm:$0x1]
    %v868 = vld [vmem:[%s352 + $0xf8] sm:$0x1]
    %v869 = vld [vmem:[%s352 + $0x108] sm:$0x1]
    %v870 = vld [vmem:[%s352 + $0x118] sm:$0x1]
    %v871 = vld [vmem:[%s352] sm:$0xe]
    %v872 = vld [vmem:[%s352 + $0x10] sm:$0xe]
    %v873 = vld [vmem:[%s352 + $0x20] sm:$0xe]
    %v874 = vld [vmem:[%s352 + $0x30] sm:$0xe]
    %v875 = vld [vmem:[%s352 + $0x40] sm:$0xe]
    %v876 = vld [vmem:[%s352 + $0x50] sm:$0xe]
    %v877 = vld [vmem:[%s352 + $0x60] sm:$0xe]
    %v878 = vld [vmem:[%s352 + $0x70] sm:$0xe]
    %v879 = vld [vmem:[%s352 + $0xa0] sm:$0xe]
    %v880 = vld [vmem:[%s352 + $0xb0] sm:$0xe]
    %v881 = vld [vmem:[%s352 + $0xc0] sm:$0xe]
    %v882 = vld [vmem:[%s352 + $0xd0] sm:$0xe]
    %v883 = vld [vmem:[%s352 + $0xe0] sm:$0xe]
    %v884 = vld [vmem:[%s352 + $0xf0] sm:$0xe]
    %v885 = vld [vmem:[%s352 + $0x100] sm:$0xe]
    %v886 = vld [vmem:[%s352 + $0x110] sm:$0xe]
    %v919 = vunpack.c.l.b16 %v839
    %v920 = vunpack.c.l.b16 %v855
    %v921 = vunpack.c.l.b16 %v840
    %v922 = vunpack.c.l.b16 %v856
    %v923 = vunpack.c.l.b16 %v841
    %v924 = vunpack.c.l.b16 %v857
    %v925 = vunpack.c.l.b16 %v842
    %v926 = vunpack.c.l.b16 %v858
    %v927 = vunpack.c.l.b16 %v843
    %v928 = vunpack.c.l.b16 %v859
    %v929 = vunpack.c.l.b16 %v844
    %v930 = vunpack.c.l.b16 %v860
    %v931 = vunpack.c.l.b16 %v845
    %v932 = vunpack.c.l.b16 %v861
    %v933 = vunpack.c.l.b16 %v846
    %v934 = vunpack.c.l.b16 %v862
    %v935 = vunpack.c.l.b16 %v847
    %v936 = vunpack.c.l.b16 %v863
    %v937 = vunpack.c.l.b16 %v848
    %v938 = vunpack.c.l.b16 %v864
    %v939 = vunpack.c.l.b16 %v849
    %v940 = vunpack.c.l.b16 %v865
    %v941 = vunpack.c.l.b16 %v850
    %v942 = vunpack.c.l.b16 %v866
    %v943 = vunpack.c.l.b16 %v851
    %v944 = vunpack.c.l.b16 %v867
    %v945 = vunpack.c.l.b16 %v852
    %v946 = vunpack.c.l.b16 %v868
    %v947 = vunpack.c.l.b16 %v853
    %v948 = vunpack.c.l.b16 %v869
    %v949 = vunpack.c.l.b16 %v854
    %v950 = vunpack.c.l.b16 %v870
    %v951 = vpack.c.b16 %v920, %v919
    %v952 = vpack.c.b16 %v922, %v921
    %v953 = vpack.c.b16 %v924, %v923
    %v954 = vpack.c.b16 %v926, %v925
    %v955 = vpack.c.b16 %v928, %v927
    %v956 = vpack.c.b16 %v930, %v929
    %v957 = vpack.c.b16 %v932, %v931
    %v958 = vpack.c.b16 %v934, %v933
    %v959 = vpack.c.b16 %v936, %v935
    %v960 = vpack.c.b16 %v938, %v937
    %v961 = vpack.c.b16 %v940, %v939
    %v962 = vpack.c.b16 %v942, %v941
    %v963 = vpack.c.b16 %v944, %v943
    %v964 = vpack.c.b16 %v946, %v945
    %v965 = vpack.c.b16 %v948, %v947
    %v966 = vpack.c.b16 %v950, %v949
    %v968 = vshrl.u32 %v951, 16
    %v970 = vshll.u32 %v951, 16
    %v972 = vrot.slane %v970, 1
    %v973 = vor.u32 %v968, %v972
    %v975 = vshrl.u32 %v952, 16
    %v977 = vshll.u32 %v952, 16
    %v979 = vrot.slane %v977, 1
    %v980 = vor.u32 %v975, %v979
    %v982 = vshrl.u32 %v953, 16
    %v984 = vshll.u32 %v953, 16
    %v986 = vrot.slane %v984, 1
    %v987 = vor.u32 %v982, %v986
    %v989 = vshrl.u32 %v954, 16
    %v991 = vshll.u32 %v954, 16
    %v993 = vrot.slane %v991, 1
    %v994 = vor.u32 %v989, %v993
    %v996 = vshrl.u32 %v955, 16
    %v998 = vshll.u32 %v955, 16
    %v1000 = vrot.slane %v998, 1
    %v1001 = vor.u32 %v996, %v1000
    %v1003 = vshrl.u32 %v956, 16
    %v1005 = vshll.u32 %v956, 16
    %v1007 = vrot.slane %v1005, 1
    %v1008 = vor.u32 %v1003, %v1007
    %v1010 = vshrl.u32 %v957, 16
    %v1012 = vshll.u32 %v957, 16
    %v1014 = vrot.slane %v1012, 1
    %v1015 = vor.u32 %v1010, %v1014
    %v1017 = vshrl.u32 %v958, 16
    %v1019 = vshll.u32 %v958, 16
    %v1021 = vrot.slane %v1019, 1
    %v1022 = vor.u32 %v1017, %v1021
    %v1024 = vshrl.u32 %v959, 16
    %v1026 = vshll.u32 %v959, 16
    %v1028 = vrot.slane %v1026, 1
    %v1029 = vor.u32 %v1024, %v1028
    %v1031 = vshrl.u32 %v960, 16
    %v1033 = vshll.u32 %v960, 16
    %v1035 = vrot.slane %v1033, 1
    %v1036 = vor.u32 %v1031, %v1035
    %v1038 = vshrl.u32 %v961, 16
    %v1040 = vshll.u32 %v961, 16
    %v1042 = vrot.slane %v1040, 1
    %v1043 = vor.u32 %v1038, %v1042
    %v1045 = vshrl.u32 %v962, 16
    %v1047 = vshll.u32 %v962, 16
    %v1049 = vrot.slane %v1047, 1
    %v1050 = vor.u32 %v1045, %v1049
    %v1052 = vshrl.u32 %v963, 16
    %v1054 = vshll.u32 %v963, 16
    %v1056 = vrot.slane %v1054, 1
    %v1057 = vor.u32 %v1052, %v1056
    %v1059 = vshrl.u32 %v964, 16
    %v1061 = vshll.u32 %v964, 16
    %v1063 = vrot.slane %v1061, 1
    %v1064 = vor.u32 %v1059, %v1063
    %v1066 = vshrl.u32 %v965, 16
    %v1068 = vshll.u32 %v965, 16
    %v1070 = vrot.slane %v1068, 1
    %v1071 = vor.u32 %v1066, %v1070
    %v1073 = vshrl.u32 %v966, 16
    %v1075 = vshll.u32 %v966, 16
    %v1077 = vrot.slane %v1075, 1
    %v1078 = vor.u32 %v1073, %v1077
    %v1095 = vunpack.c.l.b16 %v871
    %v1096 = vunpack.c.l.b16 %v872
    %v1097 = vunpack.c.l.b16 %v873
    %v1098 = vunpack.c.l.b16 %v874
    %v1099 = vunpack.c.l.b16 %v875
    %v1100 = vunpack.c.l.b16 %v876
    %v1101 = vunpack.c.l.b16 %v877
    %v1102 = vunpack.c.l.b16 %v878
    %v1103 = vunpack.c.l.b16 %v879
    %v1104 = vunpack.c.l.b16 %v880
    %v1105 = vunpack.c.l.b16 %v881
    %v1106 = vunpack.c.l.b16 %v882
    %v1107 = vunpack.c.l.b16 %v883
    %v1108 = vunpack.c.l.b16 %v884
    %v1109 = vunpack.c.l.b16 %v885
    %v1110 = vunpack.c.l.b16 %v886
    %v1111 = vpack.c.b16 %v920, %v1095
    %v1112 = vpack.c.b16 %v922, %v1096
    %v1113 = vpack.c.b16 %v924, %v1097
    %v1114 = vpack.c.b16 %v926, %v1098
    %v1115 = vpack.c.b16 %v928, %v1099
    %v1116 = vpack.c.b16 %v930, %v1100
    %v1117 = vpack.c.b16 %v932, %v1101
    %v1118 = vpack.c.b16 %v934, %v1102
    %v1119 = vpack.c.b16 %v936, %v1103
    %v1120 = vpack.c.b16 %v938, %v1104
    %v1121 = vpack.c.b16 %v940, %v1105
    %v1122 = vpack.c.b16 %v942, %v1106
    %v1123 = vpack.c.b16 %v944, %v1107
    %v1124 = vpack.c.b16 %v946, %v1108
    %v1125 = vpack.c.b16 %v948, %v1109
    %v1126 = vpack.c.b16 %v950, %v1110
    %v1127 = vrot.slane %v1111, 1
    %v1128 = vrot.slane %v1112, 1
    %v1129 = vrot.slane %v1113, 1
    %v1130 = vrot.slane %v1114, 1
    %v1131 = vrot.slane %v1115, 1
    %v1132 = vrot.slane %v1116, 1
    %v1133 = vrot.slane %v1117, 1
    %v1134 = vrot.slane %v1118, 1
    %v1135 = vrot.slane %v1119, 1
    %v1136 = vrot.slane %v1120, 1
    %v1137 = vrot.slane %v1121, 1
    %v1138 = vrot.slane %v1122, 1
    %v1139 = vrot.slane %v1123, 1
    %v1140 = vrot.slane %v1124, 1
    %v1141 = vrot.slane %v1125, 1
    %v1142 = vrot.slane %v1126, 1
    %v1143 = vunpack.c.l.b16 %v973
    %v1144 = vunpack.c.l.b16 %v1127
    %v1145 = vunpack.c.l.b16 %v980
    %v1146 = vunpack.c.l.b16 %v1128
    %v1147 = vunpack.c.l.b16 %v987
    %v1148 = vunpack.c.l.b16 %v1129
    %v1149 = vunpack.c.l.b16 %v994
    %v1150 = vunpack.c.l.b16 %v1130
    %v1151 = vunpack.c.l.b16 %v1001
    %v1152 = vunpack.c.l.b16 %v1131
    %v1153 = vunpack.c.l.b16 %v1008
    %v1154 = vunpack.c.l.b16 %v1132
    %v1155 = vunpack.c.l.b16 %v1015
    %v1156 = vunpack.c.l.b16 %v1133
    %v1157 = vunpack.c.l.b16 %v1022
    %v1158 = vunpack.c.l.b16 %v1134
    %v1159 = vunpack.c.l.b16 %v1029
    %v1160 = vunpack.c.l.b16 %v1135
    %v1161 = vunpack.c.l.b16 %v1036
    %v1162 = vunpack.c.l.b16 %v1136
    %v1163 = vunpack.c.l.b16 %v1043
    %v1164 = vunpack.c.l.b16 %v1137
    %v1165 = vunpack.c.l.b16 %v1050
    %v1166 = vunpack.c.l.b16 %v1138
    %v1167 = vunpack.c.l.b16 %v1057
    %v1168 = vunpack.c.l.b16 %v1139
    %v1169 = vunpack.c.l.b16 %v1064
    %v1170 = vunpack.c.l.b16 %v1140
    %v1171 = vunpack.c.l.b16 %v1071
    %v1172 = vunpack.c.l.b16 %v1141
    %v1173 = vunpack.c.l.b16 %v1078
    %v1174 = vunpack.c.l.b16 %v1142
    %v1175 = vld [vmem:[#allocation3 + $0xc0] sm:$0xf]
    %v1176 = vld [vmem:[#allocation3 + $0xc4] sm:$0xf]
    %v1177 = vld [vmem:[#allocation3 + $0xc8] sm:$0xf]
    %v1178 = vld [vmem:[#allocation3 + $0xcc] sm:$0xf]
    %v1179 = vld [vmem:[#allocation3 + $0xd0] sm:$0xf]
    %v1180 = vld [vmem:[#allocation3 + $0xd4] sm:$0xf]
    %v1181 = vld [vmem:[#allocation3 + $0xd8] sm:$0xf]
    %v1182 = vld [vmem:[#allocation3 + $0xdc] sm:$0xf]
    %v1183 = vld [vmem:[#allocation3 + $0xe0] sm:$0xf]
    %v1184 = vld [vmem:[#allocation3 + $0xe4] sm:$0xf]
    %v1185 = vld [vmem:[#allocation3 + $0xe8] sm:$0xf]
    %v1186 = vld [vmem:[#allocation3 + $0xec] sm:$0xf]
    %v1187 = vld [vmem:[#allocation3 + $0xf0] sm:$0xf]
    %v1188 = vld [vmem:[#allocation3 + $0xf4] sm:$0xf]
    %v1189 = vld [vmem:[#allocation3 + $0xf8] sm:$0xf]
    %v1190 = vld [vmem:[#allocation3 + $0xfc] sm:$0xf]
    %v1191 = vld [vmem:[#allocation3 + $0x100] sm:$0xf]
    %v1192 = vld [vmem:[#allocation3 + $0x104] sm:$0xf]
    %v1193 = vld [vmem:[#allocation3 + $0x108] sm:$0xf]
    %v1194 = vld [vmem:[#allocation3 + $0x10c] sm:$0xf]
    %v1195 = vld [vmem:[#allocation3 + $0x110] sm:$0xf]
    %v1196 = vld [vmem:[#allocation3 + $0x114] sm:$0xf]
    %v1197 = vld [vmem:[#allocation3 + $0x118] sm:$0xf]
    %v1198 = vld [vmem:[#allocation3 + $0x11c] sm:$0xf]
    %v1199 = vld [vmem:[#allocation3 + $0x120] sm:$0xf]
    %v1200 = vld [vmem:[#allocation3 + $0x124] sm:$0xf]
    %v1201 = vld [vmem:[#allocation3 + $0x128] sm:$0xf]
    %v1202 = vld [vmem:[#allocation3 + $0x12c] sm:$0xf]
    %v1203 = vld [vmem:[#allocation3 + $0x130] sm:$0xf]
    %v1204 = vld [vmem:[#allocation3 + $0x134] sm:$0xf]
    %v1205 = vld [vmem:[#allocation3 + $0x138] sm:$0xf]
    %v1206 = vld [vmem:[#allocation3 + $0x13c] sm:$0xf]
    %v1207 = vld [vmem:[#allocation3 + $0x140] sm:$0xf]
    %v1208 = vld [vmem:[#allocation3 + $0x144] sm:$0xf]
    %v1209 = vld [vmem:[#allocation3 + $0x148] sm:$0xf]
    %v1210 = vld [vmem:[#allocation3 + $0x14c] sm:$0xf]
    %v1211 = vld [vmem:[#allocation3 + $0x150] sm:$0xf]
    %v1212 = vld [vmem:[#allocation3 + $0x154] sm:$0xf]
    %v1213 = vld [vmem:[#allocation3 + $0x158] sm:$0xf]
    %v1214 = vld [vmem:[#allocation3 + $0x15c] sm:$0xf]
    %v1215 = vld [vmem:[#allocation3 + $0x160] sm:$0xf]
    %v1216 = vld [vmem:[#allocation3 + $0x164] sm:$0xf]
    %v1217 = vld [vmem:[#allocation3 + $0x168] sm:$0xf]
    %v1218 = vld [vmem:[#allocation3 + $0x16c] sm:$0xf]
    %v1219 = vld [vmem:[#allocation3 + $0x170] sm:$0xf]
    %v1220 = vld [vmem:[#allocation3 + $0x174] sm:$0xf]
    %v1221 = vld [vmem:[#allocation3 + $0x178] sm:$0xf]
    %v1222 = vld [vmem:[#allocation3 + $0x17c] sm:$0xf]
    %v1223 = vpack.c.b16 %v921, %v919
    %v1224 = vpack.c.b16 %v1145, %v1143
    %v1225 = vpack.c.b16 %v1146, %v1144
    %v1226 = vpack.c.b16 %v925, %v923
    %v1227 = vpack.c.b16 %v1149, %v1147
    %v1228 = vpack.c.b16 %v1150, %v1148
    %v1229 = vpack.c.b16 %v929, %v927
    %v1230 = vpack.c.b16 %v1153, %v1151
    %v1231 = vpack.c.b16 %v1154, %v1152
    %v1232 = vpack.c.b16 %v933, %v931
    %v1233 = vpack.c.b16 %v1157, %v1155
    %v1234 = vpack.c.b16 %v1158, %v1156
    %v1235 = vpack.c.b16 %v937, %v935
    %v1236 = vpack.c.b16 %v1161, %v1159
    %v1237 = vpack.c.b16 %v1162, %v1160
    %v1238 = vpack.c.b16 %v941, %v939
    %v1239 = vpack.c.b16 %v1165, %v1163
    %v1240 = vpack.c.b16 %v1166, %v1164
    %v1241 = vpack.c.b16 %v945, %v943
    %v1242 = vpack.c.b16 %v1169, %v1167
    %v1243 = vpack.c.b16 %v1170, %v1168
    %v1244 = vpack.c.b16 %v949, %v947
    %v1245 = vpack.c.b16 %v1173, %v1171
    %v1246 = vpack.c.b16 %v1174, %v1172
    %v1319 = vunpack.c.l.b16 %v1175
    %v1320 = vunpack.c.l.b16 %v1176
    %v1321 = vunpack.c.l.b16 %v1177
    %v1322 = vunpack.c.l.b16 %v1178
    %v1323 = vunpack.c.l.b16 %v1179
    %v1324 = vunpack.c.l.b16 %v1180
    %v1325 = vunpack.c.l.b16 %v1181
    %v1326 = vunpack.c.l.b16 %v1182
    %v1327 = vunpack.c.l.b16 %v1183
    %v1328 = vunpack.c.l.b16 %v1184
    %v1329 = vunpack.c.l.b16 %v1185
    %v1330 = vunpack.c.l.b16 %v1186
    %v1331 = vunpack.c.l.b16 %v1187
    %v1332 = vunpack.c.l.b16 %v1188
    %v1333 = vunpack.c.l.b16 %v1189
    %v1334 = vunpack.c.l.b16 %v1190
    %v1335 = vunpack.c.l.b16 %v1191
    %v1336 = vunpack.c.l.b16 %v1192
    %v1337 = vunpack.c.l.b16 %v1193
    %v1338 = vunpack.c.l.b16 %v1194
    %v1339 = vunpack.c.l.b16 %v1195
    %v1340 = vunpack.c.l.b16 %v1196
    %v1341 = vunpack.c.l.b16 %v1197
    %v1342 = vunpack.c.l.b16 %v1198
    %v1343 = vunpack.c.l.b16 %v1199
    %v1344 = vunpack.c.l.b16 %v1200
    %v1345 = vunpack.c.l.b16 %v1201
    %v1346 = vunpack.c.l.b16 %v1202
    %v1347 = vunpack.c.l.b16 %v1203
    %v1348 = vunpack.c.l.b16 %v1204
    %v1349 = vunpack.c.l.b16 %v1205
    %v1350 = vunpack.c.l.b16 %v1206
    %v1351 = vunpack.c.l.b16 %v1207
    %v1352 = vunpack.c.l.b16 %v1208
    %v1353 = vunpack.c.l.b16 %v1209
    %v1354 = vunpack.c.l.b16 %v1210
    %v1355 = vunpack.c.l.b16 %v1211
    %v1356 = vunpack.c.l.b16 %v1212
    %v1357 = vunpack.c.l.b16 %v1213
    %v1358 = vunpack.c.l.b16 %v1214
    %v1359 = vunpack.c.l.b16 %v1215
    %v1360 = vunpack.c.l.b16 %v1216
    %v1361 = vunpack.c.l.b16 %v1217
    %v1362 = vunpack.c.l.b16 %v1218
    %v1363 = vunpack.c.l.b16 %v1219
    %v1364 = vunpack.c.l.b16 %v1220
    %v1365 = vunpack.c.l.b16 %v1221
    %v1366 = vunpack.c.l.b16 %v1222
    %v1367 = vpack.c.b16 %v1320, %v1319
    %v1368 = vpack.c.b16 %v1322, %v1321
    %v1369 = vpack.c.b16 %v1324, %v1323
    %v1370 = vpack.c.b16 %v1326, %v1325
    %v1371 = vpack.c.b16 %v1328, %v1327
    %v1372 = vpack.c.b16 %v1330, %v1329
    %v1373 = vpack.c.b16 %v1332, %v1331
    %v1374 = vpack.c.b16 %v1334, %v1333
    %v1375 = vpack.c.b16 %v1336, %v1335
    %v1376 = vpack.c.b16 %v1338, %v1337
    %v1377 = vpack.c.b16 %v1340, %v1339
    %v1378 = vpack.c.b16 %v1342, %v1341
    %v1379 = vpack.c.b16 %v1344, %v1343
    %v1380 = vpack.c.b16 %v1346, %v1345
    %v1381 = vpack.c.b16 %v1348, %v1347
    %v1382 = vpack.c.b16 %v1350, %v1349
    %v1383 = vpack.c.b16 %v1352, %v1351
    %v1384 = vpack.c.b16 %v1354, %v1353
    %v1385 = vpack.c.b16 %v1356, %v1355
    %v1386 = vpack.c.b16 %v1358, %v1357
    %v1387 = vpack.c.b16 %v1360, %v1359
    %v1388 = vpack.c.b16 %v1362, %v1361
    %v1389 = vpack.c.b16 %v1364, %v1363
    %v1390 = vpack.c.b16 %v1366, %v1365
    %1415 = vmatprep.subr.bf16.mxu0 0
    %1416 = vmatpush1.bf16.msra.mxu0 %v1367
    %1417 = vmatprep.subr.bf16.mxu0 0
    %1418 = vmatpush1.bf16.msra.mxu0 %v1368
    %1419 = vmatprep.subr.bf16.mxu0 0
    %1420 = vmatpush1.bf16.msra.mxu0 %v1369
    %1421 = vmatprep.subr.bf16.mxu0 0
    %1422 = vmatpush1.bf16.msra.mxu0 %v1370
    %1423 = vmatprep.subr.bf16.mxu0 0
    %1424 = vmatpush1.bf16.msra.mxu0 %v1371
    %1425 = vmatprep.subr.bf16.mxu0 0
    %1426 = vmatpush1.bf16.msra.mxu0 %v1372
    %1427 = vmatprep.subr.bf16.mxu0 0
    %1428 = vmatpush1.bf16.msra.mxu0 %v1373
    %1429 = vmatprep.subr.bf16.mxu0 0
    %1430 = vmatpush1.bf16.msra.mxu0 %v1374
    %1431 = vmatprep.subr.bf16.mxu0 0
    %1432 = vmatpush1.bf16.msra.mxu0 %v1375
    %1433 = vmatprep.subr.bf16.mxu0 0
    %1434 = vmatpush1.bf16.msra.mxu0 %v1376
    %1435 = vmatprep.subr.bf16.mxu0 0
    %1436 = vmatpush1.bf16.msra.mxu0 %v1377
    %1437 = vmatprep.subr.bf16.mxu0 0
    %1438 = vmatpush1.bf16.msra.mxu0 %v1378
    %1439 = vmatprep.subr.bf16.mxu0 0
    %1440 = vmatpush1.bf16.msra.mxu0 %v1379
    %1441 = vmatprep.subr.bf16.mxu0 0
    %1442 = vmatpush1.bf16.msra.mxu0 %v1380
    %1443 = vmatprep.subr.bf16.mxu0 0
    %1444 = vmatpush1.bf16.msra.mxu0 %v1381
    %1445 = vmatprep.subr.bf16.mxu0 0
    %1446 = vmatpush1.bf16.msra.mxu0 %v1382
    %1447 = vmatprep.mubr.bf16.mxu0 %v1224
    %1448 = vmatmul.mubr.bf16.gmra.mrb[0].mxu0 %v1223
    %v1449 = vpop.f32.mrb[0].mxu0
    %v1450 = vadd.f32 0.0, %v1449
    %v1451 = vpop.f32.mrb[0].mxu0
    %v1452 = vpop.f32.mrb[0].mxu0
    %v1453 = vadd.f32 0.0, %v1452
    %v1454 = vpop.f32.mrb[0].mxu0
    %1455 = vmatprep.mubr.bf16.mxu0 %v1227
    %1456 = vmatmul.mubr.bf16.gmra.mrb[0].mxu0 %v1226
    %v1457 = vpop.f32.mrb[0].mxu0
    %v1458 = vadd.f32 0.0, %v1457
    %v1459 = vpop.f32.mrb[0].mxu0
    %v1460 = vpop.f32.mrb[0].mxu0
    %v1461 = vadd.f32 0.0, %v1460
    %v1462 = vpop.f32.mrb[0].mxu0
    %1463 = vmatprep.mubr.bf16.mxu0 %v1230
    %1464 = vmatmul.mubr.bf16.gmra.mrb[0].mxu0 %v1229
    %v1465 = vpop.f32.mrb[0].mxu0
    %v1466 = vadd.f32 0.0, %v1465
    %v1467 = vpop.f32.mrb[0].mxu0
    %v1468 = vpop.f32.mrb[0].mxu0
    %v1469 = vadd.f32 0.0, %v1468
    %v1470 = vpop.f32.mrb[0].mxu0
    %1471 = vmatprep.mubr.bf16.mxu0 %v1233
    %1472 = vmatmul.mubr.bf16.gmra.mrb[0].mxu0 %v1232
    %v1473 = vpop.f32.mrb[0].mxu0
    %v1474 = vadd.f32 0.0, %v1473
    %v1475 = vpop.f32.mrb[0].mxu0
    %v1476 = vpop.f32.mrb[0].mxu0
    %v1477 = vadd.f32 0.0, %v1476
    %v1478 = vpop.f32.mrb[0].mxu0
    %1479 = vmatprep.mubr.bf16.mxu0 %v1236
    %1480 = vmatmul.mubr.bf16.gmra.mrb[0].mxu0 %v1235
    %v1481 = vpop.f32.mrb[0].mxu0
    %v1482 = vadd.f32 0.0, %v1481
    %v1483 = vpop.f32.mrb[0].mxu0
    %v1484 = vpop.f32.mrb[0].mxu0
    %v1485 = vadd.f32 0.0, %v1484
    %v1486 = vpop.f32.mrb[0].mxu0
    %1487 = vmatprep.mubr.bf16.mxu0 %v1239
    %1488 = vmatmul.mubr.bf16.gmra.mrb[0].mxu0 %v1238
    %v1489 = vpop.f32.mrb[0].mxu0
    %v1490 = vadd.f32 0.0, %v1489
    %v1491 = vpop.f32.mrb[0].mxu0
    %v1492 = vpop.f32.mrb[0].mxu0
    %v1493 = vadd.f32 0.0, %v1492
    %v1494 = vpop.f32.mrb[0].mxu0
    %1495 = vmatprep.mubr.bf16.mxu0 %v1242
    %1496 = vmatmul.mubr.bf16.gmra.mrb[0].mxu0 %v1241
    %v1497 = vpop.f32.mrb[0].mxu0
    %v1498 = vadd.f32 0.0, %v1497
    %v1499 = vpop.f32.mrb[0].mxu0
    %v1500 = vpop.f32.mrb[0].mxu0
    %v1501 = vadd.f32 0.0, %v1500
    %v1502 = vpop.f32.mrb[0].mxu0
    %1503 = vmatprep.mubr.bf16.mxu0 %v1245
    %1504 = vmatmul.mubr.bf16.gmra.mrb[0].mxu0 %v1244
    %v1505 = vpop.f32.mrb[0].mxu0
    %v1506 = vadd.f32 0.0, %v1505
    %v1507 = vpop.f32.mrb[0].mxu0
    %v1508 = vpop.f32.mrb[0].mxu0
    %v1509 = vadd.f32 0.0, %v1508
    %v1510 = vpop.f32.mrb[0].mxu0
    %1511 = vdwg.mxu0
    %1512 = vmatprep.subr.bf16.mxu0 0
    %1513 = vmatpush1.bf16.msra.mxu0 %v1383
    %1514 = vmatprep.subr.bf16.mxu0 0
    %1515 = vmatpush1.bf16.msra.mxu0 %v1384
    %1516 = vmatprep.subr.bf16.mxu0 0
    %1517 = vmatpush1.bf16.msra.mxu0 %v1385
    %1518 = vmatprep.subr.bf16.mxu0 0
    %1519 = vmatpush1.bf16.msra.mxu0 %v1386
    %1520 = vmatprep.subr.bf16.mxu0 0
    %1521 = vmatpush1.bf16.msra.mxu0 %v1387
    %1522 = vmatprep.subr.bf16.mxu0 0
    %1523 = vmatpush1.bf16.msra.mxu0 %v1388
    %1524 = vmatprep.subr.bf16.mxu0 0
    %1525 = vmatpush1.bf16.msra.mxu0 %v1389
    %1526 = vmatprep.subr.bf16.mxu0 0
    %1527 = vmatpush1.bf16.msra.mxu0 %v1390
    %1528 = vmatprep.subr.bf16.mxu0 0
    %1529 = vmatpush1.bf16.msra.mxu0 0
    %1530 = vmatprep.subr.bf16.mxu0 0
    %1531 = vmatpush1.bf16.msra.mxu0 0
    %1532 = vmatprep.subr.bf16.mxu0 0
    %1533 = vmatpush1.bf16.msra.mxu0 0
    %1534 = vmatprep.subr.bf16.mxu0 0
    %1535 = vmatpush1.bf16.msra.mxu0 0
    %1536 = vmatprep.subr.bf16.mxu0 0
    %1537 = vmatpush1.bf16.msra.mxu0 0
    %1538 = vmatprep.subr.bf16.mxu0 0
    %1539 = vmatpush1.bf16.msra.mxu0 0
    %1540 = vmatprep.subr.bf16.mxu0 0
    %1541 = vmatpush1.bf16.msra.mxu0 0
    %1542 = vmatprep.subr.bf16.mxu0 0
    %1543 = vmatpush1.bf16.msra.mxu0 0
    %1544 = vmatprep.mubr.bf16.mxu0 0
    %1545 = vmatmul.mubr.bf16.gmra.mrb[0].mxu0 %v1225
    %v1546 = vpop.f32.mrb[0].mxu0
    %v1547 = vadd.f32 %v1450, %v1546
    %v1548 = vpop.f32.mrb[0].mxu0
    %v1549 = vpop.f32.mrb[0].mxu0
    %v1550 = vadd.f32 %v1453, %v1549
    %v1551 = vpop.f32.mrb[0].mxu0
    %1552 = vmatprep.mubr.bf16.mxu0 0
    %1553 = vmatmul.mubr.bf16.gmra.mrb[0].mxu0 %v1228
    %v1554 = vpop.f32.mrb[0].mxu0
    %v1555 = vadd.f32 %v1458, %v1554
    %v1556 = vpop.f32.mrb[0].mxu0
    %v1557 = vpop.f32.mrb[0].mxu0
    %v1558 = vadd.f32 %v1461, %v1557
    %v1559 = vpop.f32.mrb[0].mxu0
    %1560 = vmatprep.mubr.bf16.mxu0 0
    %1561 = vmatmul.mubr.bf16.gmra.mrb[0].mxu0 %v1231
    %v1562 = vpop.f32.mrb[0].mxu0
    %v1563 = vadd.f32 %v1466, %v1562
    %v1564 = vpop.f32.mrb[0].mxu0
    %v1565 = vpop.f32.mrb[0].mxu0
    %v1566 = vadd.f32 %v1469, %v1565
    %v1567 = vpop.f32.mrb[0].mxu0
    %1568 = vmatprep.mubr.bf16.mxu0 0
    %1569 = vmatmul.mubr.bf16.gmra.mrb[0].mxu0 %v1234
    %v1570 = vpop.f32.mrb[0].mxu0
    %v1571 = vadd.f32 %v1474, %v1570
    %v1572 = vpop.f32.mrb[0].mxu0
    %v1573 = vpop.f32.mrb[0].mxu0
    %v1574 = vadd.f32 %v1477, %v1573
    %v1575 = vpop.f32.mrb[0].mxu0
    %1576 = vmatprep.mubr.bf16.mxu0 0
    %1577 = vmatmul.mubr.bf16.gmra.mrb[0].mxu0 %v1237
    %v1578 = vpop.f32.mrb[0].mxu0
    %v1579 = vadd.f32 %v1482, %v1578
    %v1580 = vpop.f32.mrb[0].mxu0
    %v1581 = vpop.f32.mrb[0].mxu0
    %v1582 = vadd.f32 %v1485, %v1581
    %v1583 = vpop.f32.mrb[0].mxu0
    %1584 = vmatprep.mubr.bf16.mxu0 0
    %1585 = vmatmul.mubr.bf16.gmra.mrb[0].mxu0 %v1240
    %v1586 = vpop.f32.mrb[0].mxu0
    %v1587 = vadd.f32 %v1490, %v1586
    %v1588 = vpop.f32.mrb[0].mxu0
    %v1589 = vpop.f32.mrb[0].mxu0
    %v1590 = vadd.f32 %v1493, %v1589
    %v1591 = vpop.f32.mrb[0].mxu0
    %1592 = vmatprep.mubr.bf16.mxu0 0
    %1593 = vmatmul.mubr.bf16.gmra.mrb[0].mxu0 %v1243
    %v1594 = vpop.f32.mrb[0].mxu0
    %v1595 = vadd.f32 %v1498, %v1594
    %v1596 = vpop.f32.mrb[0].mxu0
    %v1597 = vpop.f32.mrb[0].mxu0
    %v1598 = vadd.f32 %v1501, %v1597
    %v1599 = vpop.f32.mrb[0].mxu0
    %1600 = vmatprep.mubr.bf16.mxu0 0
    %1601 = vmatmul.mubr.bf16.gmra.mrb[0].mxu0 %v1246
    %v1602 = vpop.f32.mrb[0].mxu0
    %v1603 = vadd.f32 %v1506, %v1602
    %v1604 = vpop.f32.mrb[0].mxu0
    %v1605 = vpop.f32.mrb[0].mxu0
    %v1606 = vadd.f32 %v1509, %v1605
    %v1607 = vpop.f32.mrb[0].mxu0
    %1608 = vdwg.mxu0
    %v1609 = vpack.c.b16 %v537, %v535
    %v1610 = vpack.c.b16 %v761, %v759
    %v1611 = vpack.c.b16 %v762, %v760
    %v1612 = vpack.c.b16 %v541, %v539
    %v1613 = vpack.c.b16 %v765, %v763
    %v1614 = vpack.c.b16 %v766, %v764
    %v1615 = vpack.c.b16 %v545, %v543
    %v1616 = vpack.c.b16 %v769, %v767
    %v1617 = vpack.c.b16 %v770, %v768
    %v1618 = vpack.c.b16 %v549, %v547
    %v1619 = vpack.c.b16 %v773, %v771
    %v1620 = vpack.c.b16 %v774, %v772
    %v1621 = vpack.c.b16 %v553, %v551
    %v1622 = vpack.c.b16 %v777, %v775
    %v1623 = vpack.c.b16 %v778, %v776
    %v1624 = vpack.c.b16 %v557, %v555
    %v1625 = vpack.c.b16 %v781, %v779
    %v1626 = vpack.c.b16 %v782, %v780
    %v1627 = vpack.c.b16 %v561, %v559
    %v1628 = vpack.c.b16 %v785, %v783
    %v1629 = vpack.c.b16 %v786, %v784
    %v1630 = vpack.c.b16 %v565, %v563
    %v1631 = vpack.c.b16 %v789, %v787
    %v1632 = vpack.c.b16 %v790, %v788
    %v1705 = vunpack.c.l.b16 %v791
    %v1706 = vunpack.c.l.b16 %v792
    %v1707 = vunpack.c.l.b16 %v793
    %v1708 = vunpack.c.l.b16 %v794
    %v1709 = vunpack.c.l.b16 %v795
    %v1710 = vunpack.c.l.b16 %v796
    %v1711 = vunpack.c.l.b16 %v797
    %v1712 = vunpack.c.l.b16 %v798
    %v1713 = vunpack.c.l.b16 %v799
    %v1714 = vunpack.c.l.b16 %v800
    %v1715 = vunpack.c.l.b16 %v801
    %v1716 = vunpack.c.l.b16 %v802
    %v1717 = vunpack.c.l.b16 %v803
    %v1718 = vunpack.c.l.b16 %v804
    %v1719 = vunpack.c.l.b16 %v805
    %v1720 = vunpack.c.l.b16 %v806
    %v1721 = vunpack.c.l.b16 %v807
    %v1722 = vunpack.c.l.b16 %v808
    %v1723 = vunpack.c.l.b16 %v809
    %v1724 = vunpack.c.l.b16 %v810
    %v1725 = vunpack.c.l.b16 %v811
    %v1726 = vunpack.c.l.b16 %v812
    %v1727 = vunpack.c.l.b16 %v813
    %v1728 = vunpack.c.l.b16 %v814
    %v1729 = vunpack.c.l.b16 %v815
    %v1730 = vunpack.c.l.b16 %v816
    %v1731 = vunpack.c.l.b16 %v817
    %v1732 = vunpack.c.l.b16 %v818
    %v1733 = vunpack.c.l.b16 %v819
    %v1734 = vunpack.c.l.b16 %v820
    %v1735 = vunpack.c.l.b16 %v821
    %v1736 = vunpack.c.l.b16 %v822
    %v1737 = vunpack.c.l.b16 %v823
    %v1738 = vunpack.c.l.b16 %v824
    %v1739 = vunpack.c.l.b16 %v825
    %v1740 = vunpack.c.l.b16 %v826
    %v1741 = vunpack.c.l.b16 %v827
    %v1742 = vunpack.c.l.b16 %v828
    %v1743 = vunpack.c.l.b16 %v829
    %v1744 = vunpack.c.l.b16 %v830
    %v1745 = vunpack.c.l.b16 %v831
    %v1746 = vunpack.c.l.b16 %v832
    %v1747 = vunpack.c.l.b16 %v833
    %v1748 = vunpack.c.l.b16 %v834
    %v1749 = vunpack.c.l.b16 %v835
    %v1750 = vunpack.c.l.b16 %v836
    %v1751 = vunpack.c.l.b16 %v837
    %v1752 = vunpack.c.l.b16 %v838
    %v1753 = vpack.c.b16 %v1706, %v1705
    %v1754 = vpack.c.b16 %v1708, %v1707
    %v1755 = vpack.c.b16 %v1710, %v1709
    %v1756 = vpack.c.b16 %v1712, %v1711
    %v1757 = vpack.c.b16 %v1714, %v1713
    %v1758 = vpack.c.b16 %v1716, %v1715
    %v1759 = vpack.c.b16 %v1718, %v1717
    %v1760 = vpack.c.b16 %v1720, %v1719
    %v1761 = vpack.c.b16 %v1722, %v1721
    %v1762 = vpack.c.b16 %v1724, %v1723
    %v1763 = vpack.c.b16 %v1726, %v1725
    %v1764 = vpack.c.b16 %v1728, %v1727
    %v1765 = vpack.c.b16 %v1730, %v1729
    %v1766 = vpack.c.b16 %v1732, %v1731
    %v1767 = vpack.c.b16 %v1734, %v1733
    %v1768 = vpack.c.b16 %v1736, %v1735
    %v1769 = vpack.c.b16 %v1738, %v1737
    %v1770 = vpack.c.b16 %v1740, %v1739
    %v1771 = vpack.c.b16 %v1742, %v1741
    %v1772 = vpack.c.b16 %v1744, %v1743
    %v1773 = vpack.c.b16 %v1746, %v1745
    %v1774 = vpack.c.b16 %v1748, %v1747
    %v1775 = vpack.c.b16 %v1750, %v1749
    %v1776 = vpack.c.b16 %v1752, %v1751
    %1801 = vmatprep.subr.bf16.mxu0 0
    %1802 = vmatpush1.bf16.msra.mxu0 %v1753
    %1803 = vmatprep.subr.bf16.mxu0 0
    %1804 = vmatpush1.bf16.msra.mxu0 %v1754
    %1805 = vmatprep.subr.bf16.mxu0 0
    %1806 = vmatpush1.bf16.msra.mxu0 %v1755
    %1807 = vmatprep.subr.bf16.mxu0 0
    %1808 = vmatpush1.bf16.msra.mxu0 %v1756
    %1809 = vmatprep.subr.bf16.mxu0 0
    %1810 = vmatpush1.bf16.msra.mxu0 %v1757
    %1811 = vmatprep.subr.bf16.mxu0 0
    %1812 = vmatpush1.bf16.msra.mxu0 %v1758
    %1813 = vmatprep.subr.bf16.mxu0 0
    %1814 = vmatpush1.bf16.msra.mxu0 %v1759
    %1815 = vmatprep.subr.bf16.mxu0 0
    %1816 = vmatpush1.bf16.msra.mxu0 %v1760
    %1817 = vmatprep.subr.bf16.mxu0 0
    %1818 = vmatpush1.bf16.msra.mxu0 %v1761
    %1819 = vmatprep.subr.bf16.mxu0 0
    %1820 = vmatpush1.bf16.msra.mxu0 %v1762
    %1821 = vmatprep.subr.bf16.mxu0 0
    %1822 = vmatpush1.bf16.msra.mxu0 %v1763
    %1823 = vmatprep.subr.bf16.mxu0 0
    %1824 = vmatpush1.bf16.msra.mxu0 %v1764
    %1825 = vmatprep.subr.bf16.mxu0 0
    %1826 = vmatpush1.bf16.msra.mxu0 %v1765
    %1827 = vmatprep.subr.bf16.mxu0 0
    %1828 = vmatpush1.bf16.msra.mxu0 %v1766
    %1829 = vmatprep.subr.bf16.mxu0 0
    %1830 = vmatpush1.bf16.msra.mxu0 %v1767
    %1831 = vmatprep.subr.bf16.mxu0 0
    %1832 = vmatpush1.bf16.msra.mxu0 %v1768
    %1833 = vmatprep.mubr.bf16.mxu0 %v1610
    %1834 = vmatmul.mubr.bf16.gmra.mrb[0].mxu0 %v1609
    %v1835 = vpop.f32.mrb[0].mxu0
    %v1836 = vadd.f32 %v1547, %v1835
    %v1837 = vpop.f32.mrb[0].mxu0
    %v1838 = vpop.f32.mrb[0].mxu0
    %v1839 = vadd.f32 %v1550, %v1838
    %v1840 = vpop.f32.mrb[0].mxu0
    %1841 = vmatprep.mubr.bf16.mxu0 %v1613
    %1842 = vmatmul.mubr.bf16.gmra.mrb[0].mxu0 %v1612
    %v1843 = vpop.f32.mrb[0].mxu0
    %v1844 = vadd.f32 %v1555, %v1843
    %v1845 = vpop.f32.mrb[0].mxu0
    %v1846 = vpop.f32.mrb[0].mxu0
    %v1847 = vadd.f32 %v1558, %v1846
    %v1848 = vpop.f32.mrb[0].mxu0
    %1849 = vmatprep.mubr.bf16.mxu0 %v1616
    %1850 = vmatmul.mubr.bf16.gmra.mrb[0].mxu0 %v1615
    %v1851 = vpop.f32.mrb[0].mxu0
    %v1852 = vadd.f32 %v1563, %v1851
    %v1853 = vpop.f32.mrb[0].mxu0
    %v1854 = vpop.f32.mrb[0].mxu0
    %v1855 = vadd.f32 %v1566, %v1854
    %v1856 = vpop.f32.mrb[0].mxu0
    %1857 = vmatprep.mubr.bf16.mxu0 %v1619
    %1858 = vmatmul.mubr.bf16.gmra.mrb[0].mxu0 %v1618
    %v1859 = vpop.f32.mrb[0].mxu0
    %v1860 = vadd.f32 %v1571, %v1859
    %v1861 = vpop.f32.mrb[0].mxu0
    %v1862 = vpop.f32.mrb[0].mxu0
    %v1863 = vadd.f32 %v1574, %v1862
    %v1864 = vpop.f32.mrb[0].mxu0
    %1865 = vmatprep.mubr.bf16.mxu0 %v1622
    %1866 = vmatmul.mubr.bf16.gmra.mrb[0].mxu0 %v1621
    %v1867 = vpop.f32.mrb[0].mxu0
    %v1868 = vadd.f32 %v1579, %v1867
    %v1869 = vpop.f32.mrb[0].mxu0
    %v1870 = vpop.f32.mrb[0].mxu0
    %v1871 = vadd.f32 %v1582, %v1870
    %v1872 = vpop.f32.mrb[0].mxu0
    %1873 = vmatprep.mubr.bf16.mxu0 %v1625
    %1874 = vmatmul.mubr.bf16.gmra.mrb[0].mxu0 %v1624
    %v1875 = vpop.f32.mrb[0].mxu0
    %v1876 = vadd.f32 %v1587, %v1875
    %v1877 = vpop.f32.mrb[0].mxu0
    %v1878 = vpop.f32.mrb[0].mxu0
    %v1879 = vadd.f32 %v1590, %v1878
    %v1880 = vpop.f32.mrb[0].mxu0
    %1881 = vmatprep.mubr.bf16.mxu0 %v1628
    %1882 = vmatmul.mubr.bf16.gmra.mrb[0].mxu0 %v1627
    %v1883 = vpop.f32.mrb[0].mxu0
    %v1884 = vadd.f32 %v1595, %v1883
    %v1885 = vpop.f32.mrb[0].mxu0
    %v1886 = vpop.f32.mrb[0].mxu0
    %v1887 = vadd.f32 %v1598, %v1886
    %v1888 = vpop.f32.mrb[0].mxu0
    %1889 = vmatprep.mubr.bf16.mxu0 %v1631
    %1890 = vmatmul.mubr.bf16.gmra.mrb[0].mxu0 %v1630
    %v1891 = vpop.f32.mrb[0].mxu0
    %v1892 = vadd.f32 %v1603, %v1891
    %v1893 = vpop.f32.mrb[0].mxu0
    %v1894 = vpop.f32.mrb[0].mxu0
    %v1895 = vadd.f32 %v1606, %v1894
    %v1896 = vpop.f32.mrb[0].mxu0
    %1897 = vdwg.mxu0
    %1898 = vmatprep.subr.bf16.mxu0 0
    %1899 = vmatpush1.bf16.msra.mxu0 %v1769
    %1900 = vmatprep.subr.bf16.mxu0 0
    %1901 = vmatpush1.bf16.msra.mxu0 %v1770
    %1902 = vmatprep.subr.bf16.mxu0 0
    %1903 = vmatpush1.bf16.msra.mxu0 %v1771
    %1904 = vmatprep.subr.bf16.mxu0 0
    %1905 = vmatpush1.bf16.msra.mxu0 %v1772
    %1906 = vmatprep.subr.bf16.mxu0 0
    %1907 = vmatpush1.bf16.msra.mxu0 %v1773
    %1908 = vmatprep.subr.bf16.mxu0 0
    %1909 = vmatpush1.bf16.msra.mxu0 %v1774
    %1910 = vmatprep.subr.bf16.mxu0 0
    %1911 = vmatpush1.bf16.msra.mxu0 %v1775
    %1912 = vmatprep.subr.bf16.mxu0 0
    %1913 = vmatpush1.bf16.msra.mxu0 %v1776
    %1914 = vmatprep.subr.bf16.mxu0 0
    %1915 = vmatpush1.bf16.msra.mxu0 0
    %1916 = vmatprep.subr.bf16.mxu0 0
    %1917 = vmatpush1.bf16.msra.mxu0 0
    %1918 = vmatprep.subr.bf16.mxu0 0
    %1919 = vmatpush1.bf16.msra.mxu0 0
    %1920 = vmatprep.subr.bf16.mxu0 0
    %1921 = vmatpush1.bf16.msra.mxu0 0
    %1922 = vmatprep.subr.bf16.mxu0 0
    %1923 = vmatpush1.bf16.msra.mxu0 0
    %1924 = vmatprep.subr.bf16.mxu0 0
    %1925 = vmatpush1.bf16.msra.mxu0 0
    %1926 = vmatprep.subr.bf16.mxu0 0
    %1927 = vmatpush1.bf16.msra.mxu0 0
    %1928 = vmatprep.subr.bf16.mxu0 0
    %1929 = vmatpush1.bf16.msra.mxu0 0
    %1930 = vmatprep.mubr.bf16.mxu0 0
    %1931 = vmatmul.mubr.bf16.gmra.mrb[0].mxu0 %v1611
    %v1932 = vpop.f32.mrb[0].mxu0
    %v1933 = vadd.f32 %v1836, %v1932
    %v1934 = vpop.f32.mrb[0].mxu0
    %v1935 = vpop.f32.mrb[0].mxu0
    %v1936 = vadd.f32 %v1839, %v1935
    %v1937 = vpop.f32.mrb[0].mxu0
    %1938 = vmatprep.mubr.bf16.mxu0 0
    %1939 = vmatmul.mubr.bf16.gmra.mrb[0].mxu0 %v1614
    %v1940 = vpop.f32.mrb[0].mxu0
    %v1941 = vadd.f32 %v1844, %v1940
    %v1942 = vpop.f32.mrb[0].mxu0
    %v1943 = vpop.f32.mrb[0].mxu0
    %v1944 = vadd.f32 %v1847, %v1943
    %v1945 = vpop.f32.mrb[0].mxu0
    %1946 = vmatprep.mubr.bf16.mxu0 0
    %1947 = vmatmul.mubr.bf16.gmra.mrb[0].mxu0 %v1617
    %v1948 = vpop.f32.mrb[0].mxu0
    %v1949 = vadd.f32 %v1852, %v1948
    %v1950 = vpop.f32.mrb[0].mxu0
    %v1951 = vpop.f32.mrb[0].mxu0
    %v1952 = vadd.f32 %v1855, %v1951
    %v1953 = vpop.f32.mrb[0].mxu0
    %1954 = vmatprep.mubr.bf16.mxu0 0
    %1955 = vmatmul.mubr.bf16.gmra.mrb[0].mxu0 %v1620
    %v1956 = vpop.f32.mrb[0].mxu0
    %v1957 = vadd.f32 %v1860, %v1956
    %v1958 = vpop.f32.mrb[0].mxu0
    %v1959 = vpop.f32.mrb[0].mxu0
    %v1960 = vadd.f32 %v1863, %v1959
    %v1961 = vpop.f32.mrb[0].mxu0
    %1962 = vmatprep.mubr.bf16.mxu0 0
    %1963 = vmatmul.mubr.bf16.gmra.mrb[0].mxu0 %v1623
    %v1964 = vpop.f32.mrb[0].mxu0
    %v1965 = vadd.f32 %v1868, %v1964
    %v1966 = vpop.f32.mrb[0].mxu0
    %v1967 = vpop.f32.mrb[0].mxu0
    %v1968 = vadd.f32 %v1871, %v1967
    %v1969 = vpop.f32.mrb[0].mxu0
    %1970 = vmatprep.mubr.bf16.mxu0 0
    %1971 = vmatmul.mubr.bf16.gmra.mrb[0].mxu0 %v1626
    %v1972 = vpop.f32.mrb[0].mxu0
    %v1973 = vadd.f32 %v1876, %v1972
    %v1974 = vpop.f32.mrb[0].mxu0
    %v1975 = vpop.f32.mrb[0].mxu0
    %v1976 = vadd.f32 %v1879, %v1975
    %v1977 = vpop.f32.mrb[0].mxu0
    %1978 = vmatprep.mubr.bf16.mxu0 0
    %1979 = vmatmul.mubr.bf16.gmra.mrb[0].mxu0 %v1629
    %v1980 = vpop.f32.mrb[0].mxu0
    %v1981 = vadd.f32 %v1884, %v1980
    %v1982 = vpop.f32.mrb[0].mxu0
    %v1983 = vpop.f32.mrb[0].mxu0
    %v1984 = vadd.f32 %v1887, %v1983
    %v1985 = vpop.f32.mrb[0].mxu0
    %1986 = vmatprep.mubr.bf16.mxu0 0
    %1987 = vmatmul.mubr.bf16.gmra.mrb[0].mxu0 %v1632
    %v1988 = vpop.f32.mrb[0].mxu0
    %v1989 = vadd.f32 %v1892, %v1988
    %v1990 = vpop.f32.mrb[0].mxu0
    %v1991 = vpop.f32.mrb[0].mxu0
    %v1992 = vadd.f32 %v1895, %v1991
    %v1993 = vpop.f32.mrb[0].mxu0
    %1994 = vdwg.mxu0
    %s1995 = scalar_lea.vmem [#allocation2], 32
    %v1996 = vld [vmem:[%s1995] sm:$0xf]
    %v1997 = vld [vmem:[%s1995 + $0x10] sm:$0xf]
    %v1998 = vld [vmem:[%s1995 + $0x20] sm:$0xf]
    %v1999 = vld [vmem:[%s1995 + $0x30] sm:$0xf]
    %v2000 = vld [vmem:[%s1995 + $0x40] sm:$0xf]
    %v2001 = vld [vmem:[%s1995 + $0x50] sm:$0xf]
    %v2002 = vld [vmem:[%s1995 + $0x60] sm:$0xf]
    %v2003 = vld [vmem:[%s1995 + $0x70] sm:$0xf]
    %v2004 = vld [vmem:[%s1995 + $0xa0] sm:$0xf]
    %v2005 = vld [vmem:[%s1995 + $0xb0] sm:$0xf]
    %v2006 = vld [vmem:[%s1995 + $0xc0] sm:$0xf]
    %v2007 = vld [vmem:[%s1995 + $0xd0] sm:$0xf]
    %v2008 = vld [vmem:[%s1995 + $0xe0] sm:$0xf]
    %v2009 = vld [vmem:[%s1995 + $0xf0] sm:$0xf]
    %v2010 = vld [vmem:[%s1995 + $0x100] sm:$0xf]
    %v2011 = vld [vmem:[%s1995 + $0x110] sm:$0xf]
    %v2012 = vld [vmem:[%s1995 + $0x8] sm:$0x1]
    %v2013 = vld [vmem:[%s1995 + $0x18] sm:$0x1]
    %v2014 = vld [vmem:[%s1995 + $0x28] sm:$0x1]
    %v2015 = vld [vmem:[%s1995 + $0x38] sm:$0x1]
    %v2016 = vld [vmem:[%s1995 + $0x48] sm:$0x1]
    %v2017 = vld [vmem:[%s1995 + $0x58] sm:$0x1]
    %v2018 = vld [vmem:[%s1995 + $0x68] sm:$0x1]
    %v2019 = vld [vmem:[%s1995 + $0x78] sm:$0x1]
    %v2020 = vld [vmem:[%s1995 + $0xa8] sm:$0x1]
    %v2021 = vld [vmem:[%s1995 + $0xb8] sm:$0x1]
    %v2022 = vld [vmem:[%s1995 + $0xc8] sm:$0x1]
    %v2023 = vld [vmem:[%s1995 + $0xd8] sm:$0x1]
    %v2024 = vld [vmem:[%s1995 + $0xe8] sm:$0x1]
    %v2025 = vld [vmem:[%s1995 + $0xf8] sm:$0x1]
    %v2026 = vld [vmem:[%s1995 + $0x108] sm:$0x1]
    %v2027 = vld [vmem:[%s1995 + $0x118] sm:$0x1]
    %v2028 = vld [vmem:[%s1995] sm:$0xe]
    %v2029 = vld [vmem:[%s1995 + $0x10] sm:$0xe]
    %v2030 = vld [vmem:[%s1995 + $0x20] sm:$0xe]
    %v2031 = vld [vmem:[%s1995 + $0x30] sm:$0xe]
    %v2032 = vld [vmem:[%s1995 + $0x40] sm:$0xe]
    %v2033 = vld [vmem:[%s1995 + $0x50] sm:$0xe]
    %v2034 = vld [vmem:[%s1995 + $0x60] sm:$0xe]
    %v2035 = vld [vmem:[%s1995 + $0x70] sm:$0xe]
    %v2036 = vld [vmem:[%s1995 + $0xa0] sm:$0xe]
    %v2037 = vld [vmem:[%s1995 + $0xb0] sm:$0xe]
    %v2038 = vld [vmem:[%s1995 + $0xc0] sm:$0xe]
    %v2039 = vld [vmem:[%s1995 + $0xd0] sm:$0xe]
    %v2040 = vld [vmem:[%s1995 + $0xe0] sm:$0xe]
    %v2041 = vld [vmem:[%s1995 + $0xf0] sm:$0xe]
    %v2042 = vld [vmem:[%s1995 + $0x100] sm:$0xe]
    %v2043 = vld [vmem:[%s1995 + $0x110] sm:$0xe]
    %v2076 = vunpack.c.l.b16 %v1996
    %v2077 = vunpack.c.l.b16 %v2012
    %v2078 = vunpack.c.l.b16 %v1997
    %v2079 = vunpack.c.l.b16 %v2013
    %v2080 = vunpack.c.l.b16 %v1998
    %v2081 = vunpack.c.l.b16 %v2014
    %v2082 = vunpack.c.l.b16 %v1999
    %v2083 = vunpack.c.l.b16 %v2015
    %v2084 = vunpack.c.l.b16 %v2000
    %v2085 = vunpack.c.l.b16 %v2016
    %v2086 = vunpack.c.l.b16 %v2001
    %v2087 = vunpack.c.l.b16 %v2017
    %v2088 = vunpack.c.l.b16 %v2002
    %v2089 = vunpack.c.l.b16 %v2018
    %v2090 = vunpack.c.l.b16 %v2003
    %v2091 = vunpack.c.l.b16 %v2019
    %v2092 = vunpack.c.l.b16 %v2004
    %v2093 = vunpack.c.l.b16 %v2020
    %v2094 = vunpack.c.l.b16 %v2005
    %v2095 = vunpack.c.l.b16 %v2021
    %v2096 = vunpack.c.l.b16 %v2006
    %v2097 = vunpack.c.l.b16 %v2022
    %v2098 = vunpack.c.l.b16 %v2007
    %v2099 = vunpack.c.l.b16 %v2023
    %v2100 = vunpack.c.l.b16 %v2008
    %v2101 = vunpack.c.l.b16 %v2024
    %v2102 = vunpack.c.l.b16 %v2009
    %v2103 = vunpack.c.l.b16 %v2025
    %v2104 = vunpack.c.l.b16 %v2010
    %v2105 = vunpack.c.l.b16 %v2026
    %v2106 = vunpack.c.l.b16 %v2011
    %v2107 = vunpack.c.l.b16 %v2027
    %v2108 = vpack.c.b16 %v2077, %v2076
    %v2109 = vpack.c.b16 %v2079, %v2078
    %v2110 = vpack.c.b16 %v2081, %v2080
    %v2111 = vpack.c.b16 %v2083, %v2082
    %v2112 = vpack.c.b16 %v2085, %v2084
    %v2113 = vpack.c.b16 %v2087, %v2086
    %v2114 = vpack.c.b16 %v2089, %v2088
    %v2115 = vpack.c.b16 %v2091, %v2090
    %v2116 = vpack.c.b16 %v2093, %v2092
    %v2117 = vpack.c.b16 %v2095, %v2094
    %v2118 = vpack.c.b16 %v2097, %v2096
    %v2119 = vpack.c.b16 %v2099, %v2098
    %v2120 = vpack.c.b16 %v2101, %v2100
    %v2121 = vpack.c.b16 %v2103, %v2102
    %v2122 = vpack.c.b16 %v2105, %v2104
    %v2123 = vpack.c.b16 %v2107, %v2106
    %v2125 = vshrl.u32 %v2108, 16
    %v2127 = vshll.u32 %v2108, 16
    %v2129 = vrot.slane %v2127, 1
    %v2130 = vor.u32 %v2125, %v2129
    %v2132 = vshrl.u32 %v2109, 16
    %v2134 = vshll.u32 %v2109, 16
    %v2136 = vrot.slane %v2134, 1
    %v2137 = vor.u32 %v2132, %v2136
    %v2139 = vshrl.u32 %v2110, 16
    %v2141 = vshll.u32 %v2110, 16
    %v2143 = vrot.slane %v2141, 1
    %v2144 = vor.u32 %v2139, %v2143
    %v2146 = vshrl.u32 %v2111, 16
    %v2148 = vshll.u32 %v2111, 16
    %v2150 = vrot.slane %v2148, 1
    %v2151 = vor.u32 %v2146, %v2150
    %v2153 = vshrl.u32 %v2112, 16
    %v2155 = vshll.u32 %v2112, 16
    %v2157 = vrot.slane %v2155, 1
    %v2158 = vor.u32 %v2153, %v2157
    %v2160 = vshrl.u32 %v2113, 16
    %v2162 = vshll.u32 %v2113, 16
    %v2164 = vrot.slane %v2162, 1
    %v2165 = vor.u32 %v2160, %v2164
    %v2167 = vshrl.u32 %v2114, 16
    %v2169 = vshll.u32 %v2114, 16
    %v2171 = vrot.slane %v2169, 1
    %v2172 = vor.u32 %v2167, %v2171
    %v2174 = vshrl.u32 %v2115, 16
    %v2176 = vshll.u32 %v2115, 16
    %v2178 = vrot.slane %v2176, 1
    %v2179 = vor.u32 %v2174, %v2178
    %v2181 = vshrl.u32 %v2116, 16
    %v2183 = vshll.u32 %v2116, 16
    %v2185 = vrot.slane %v2183, 1
    %v2186 = vor.u32 %v2181, %v2185
    %v2188 = vshrl.u32 %v2117, 16
    %v2190 = vshll.u32 %v2117, 16
    %v2192 = vrot.slane %v2190, 1
    %v2193 = vor.u32 %v2188, %v2192
    %v2195 = vshrl.u32 %v2118, 16
    %v2197 = vshll.u32 %v2118, 16
    %v2199 = vrot.slane %v2197, 1
    %v2200 = vor.u32 %v2195, %v2199
    %v2202 = vshrl.u32 %v2119, 16
    %v2204 = vshll.u32 %v2119, 16
    %v2206 = vrot.slane %v2204, 1
    %v2207 = vor.u32 %v2202, %v2206
    %v2209 = vshrl.u32 %v2120, 16
    %v2211 = vshll.u32 %v2120, 16
    %v2213 = vrot.slane %v2211, 1
    %v2214 = vor.u32 %v2209, %v2213
    %v2216 = vshrl.u32 %v2121, 16
    %v2218 = vshll.u32 %v2121, 16
    %v2220 = vrot.slane %v2218, 1
    %v2221 = vor.u32 %v2216, %v2220
    %v2223 = vshrl.u32 %v2122, 16
    %v2225 = vshll.u32 %v2122, 16
    %v2227 = vrot.slane %v2225, 1
    %v2228 = vor.u32 %v2223, %v2227
    %v2230 = vshrl.u32 %v2123, 16
    %v2232 = vshll.u32 %v2123, 16
    %v2234 = vrot.slane %v2232, 1
    %v2235 = vor.u32 %v2230, %v2234
    %v2252 = vunpack.c.l.b16 %v2028
    %v2253 = vunpack.c.l.b16 %v2029
    %v2254 = vunpack.c.l.b16 %v2030
    %v2255 = vunpack.c.l.b16 %v2031
    %v2256 = vunpack.c.l.b16 %v2032
    %v2257 = vunpack.c.l.b16 %v2033
    %v2258 = vunpack.c.l.b16 %v2034
    %v2259 = vunpack.c.l.b16 %v2035
    %v2260 = vunpack.c.l.b16 %v2036
    %v2261 = vunpack.c.l.b16 %v2037
    %v2262 = vunpack.c.l.b16 %v2038
    %v2263 = vunpack.c.l.b16 %v2039
    %v2264 = vunpack.c.l.b16 %v2040
    %v2265 = vunpack.c.l.b16 %v2041
    %v2266 = vunpack.c.l.b16 %v2042
    %v2267 = vunpack.c.l.b16 %v2043
    %v2268 = vpack.c.b16 %v2077, %v2252
    %v2269 = vpack.c.b16 %v2079, %v2253
    %v2270 = vpack.c.b16 %v2081, %v2254
    %v2271 = vpack.c.b16 %v2083, %v2255
    %v2272 = vpack.c.b16 %v2085, %v2256
    %v2273 = vpack.c.b16 %v2087, %v2257
    %v2274 = vpack.c.b16 %v2089, %v2258
    %v2275 = vpack.c.b16 %v2091, %v2259
    %v2276 = vpack.c.b16 %v2093, %v2260
    %v2277 = vpack.c.b16 %v2095, %v2261
    %v2278 = vpack.c.b16 %v2097, %v2262
    %v2279 = vpack.c.b16 %v2099, %v2263
    %v2280 = vpack.c.b16 %v2101, %v2264
    %v2281 = vpack.c.b16 %v2103, %v2265
    %v2282 = vpack.c.b16 %v2105, %v2266
    %v2283 = vpack.c.b16 %v2107, %v2267
    %v2284 = vrot.slane %v2268, 1
    %v2285 = vrot.slane %v2269, 1
    %v2286 = vrot.slane %v2270, 1
    %v2287 = vrot.slane %v2271, 1
    %v2288 = vrot.slane %v2272, 1
    %v2289 = vrot.slane %v2273, 1
    %v2290 = vrot.slane %v2274, 1
    %v2291 = vrot.slane %v2275, 1
    %v2292 = vrot.slane %v2276, 1
    %v2293 = vrot.slane %v2277, 1
    %v2294 = vrot.slane %v2278, 1
    %v2295 = vrot.slane %v2279, 1
    %v2296 = vrot.slane %v2280, 1
    %v2297 = vrot.slane %v2281, 1
    %v2298 = vrot.slane %v2282, 1
    %v2299 = vrot.slane %v2283, 1
    %v2300 = vunpack.c.l.b16 %v2130
    %v2301 = vunpack.c.l.b16 %v2284
    %v2302 = vunpack.c.l.b16 %v2137
    %v2303 = vunpack.c.l.b16 %v2285
    %v2304 = vunpack.c.l.b16 %v2144
    %v2305 = vunpack.c.l.b16 %v2286
    %v2306 = vunpack.c.l.b16 %v2151
    %v2307 = vunpack.c.l.b16 %v2287
    %v2308 = vunpack.c.l.b16 %v2158
    %v2309 = vunpack.c.l.b16 %v2288
    %v2310 = vunpack.c.l.b16 %v2165
    %v2311 = vunpack.c.l.b16 %v2289
    %v2312 = vunpack.c.l.b16 %v2172
    %v2313 = vunpack.c.l.b16 %v2290
    %v2314 = vunpack.c.l.b16 %v2179
    %v2315 = vunpack.c.l.b16 %v2291
    %v2316 = vunpack.c.l.b16 %v2186
    %v2317 = vunpack.c.l.b16 %v2292
    %v2318 = vunpack.c.l.b16 %v2193
    %v2319 = vunpack.c.l.b16 %v2293
    %v2320 = vunpack.c.l.b16 %v2200
    %v2321 = vunpack.c.l.b16 %v2294
    %v2322 = vunpack.c.l.b16 %v2207
    %v2323 = vunpack.c.l.b16 %v2295
    %v2324 = vunpack.c.l.b16 %v2214
    %v2325 = vunpack.c.l.b16 %v2296
    %v2326 = vunpack.c.l.b16 %v2221
    %v2327 = vunpack.c.l.b16 %v2297
    %v2328 = vunpack.c.l.b16 %v2228
    %v2329 = vunpack.c.l.b16 %v2298
    %v2330 = vunpack.c.l.b16 %v2235
    %v2331 = vunpack.c.l.b16 %v2299
    %v2332 = vld [vmem:[#allocation3 + $0x180] sm:$0xf]
    %v2333 = vld [vmem:[#allocation3 + $0x184] sm:$0xf]
    %v2334 = vld [vmem:[#allocation3 + $0x188] sm:$0xf]
    %v2335 = vld [vmem:[#allocation3 + $0x18c] sm:$0xf]
    %v2336 = vld [vmem:[#allocation3 + $0x190] sm:$0xf]
    %v2337 = vld [vmem:[#allocation3 + $0x194] sm:$0xf]
    %v2338 = vld [vmem:[#allocation3 + $0x198] sm:$0xf]
    %v2339 = vld [vmem:[#allocation3 + $0x19c] sm:$0xf]
    %v2340 = vld [vmem:[#allocation3 + $0x1a0] sm:$0xf]
    %v2341 = vld [vmem:[#allocation3 + $0x1a4] sm:$0xf]
    %v2342 = vld [vmem:[#allocation3 + $0x1a8] sm:$0xf]
    %v2343 = vld [vmem:[#allocation3 + $0x1ac] sm:$0xf]
    %v2344 = vld [vmem:[#allocation3 + $0x1b0] sm:$0xf]
    %v2345 = vld [vmem:[#allocation3 + $0x1b4] sm:$0xf]
    %v2346 = vld [vmem:[#allocation3 + $0x1b8] sm:$0xf]
    %v2347 = vld [vmem:[#allocation3 + $0x1bc] sm:$0xf]
    %v2348 = vld [vmem:[#allocation3 + $0x1c0] sm:$0xf]
    %v2349 = vld [vmem:[#allocation3 + $0x1c4] sm:$0xf]
    %v2350 = vld [vmem:[#allocation3 + $0x1c8] sm:$0xf]
    %v2351 = vld [vmem:[#allocation3 + $0x1cc] sm:$0xf]
    %v2352 = vld [vmem:[#allocation3 + $0x1d0] sm:$0xf]
    %v2353 = vld [vmem:[#allocation3 + $0x1d4] sm:$0xf]
    %v2354 = vld [vmem:[#allocation3 + $0x1d8] sm:$0xf]
    %v2355 = vld [vmem:[#allocation3 + $0x1dc] sm:$0xf]
    %v2356 = vld [vmem:[#allocation3 + $0x1e0] sm:$0xf]
    %v2357 = vld [vmem:[#allocation3 + $0x1e4] sm:$0xf]
    %v2358 = vld [vmem:[#allocation3 + $0x1e8] sm:$0xf]
    %v2359 = vld [vmem:[#allocation3 + $0x1ec] sm:$0xf]
    %v2360 = vld [vmem:[#allocation3 + $0x1f0] sm:$0xf]
    %v2361 = vld [vmem:[#allocation3 + $0x1f4] sm:$0xf]
    %v2362 = vld [vmem:[#allocation3 + $0x1f8] sm:$0xf]
    %v2363 = vld [vmem:[#allocation3 + $0x1fc] sm:$0xf]
    %v2364 = vld [vmem:[#allocation3 + $0x200] sm:$0xf]
    %v2365 = vld [vmem:[#allocation3 + $0x204] sm:$0xf]
    %v2366 = vld [vmem:[#allocation3 + $0x208] sm:$0xf]
    %v2367 = vld [vmem:[#allocation3 + $0x20c] sm:$0xf]
    %v2368 = vld [vmem:[#allocation3 + $0x210] sm:$0xf]
    %v2369 = vld [vmem:[#allocation3 + $0x214] sm:$0xf]
    %v2370 = vld [vmem:[#allocation3 + $0x218] sm:$0xf]
    %v2371 = vld [vmem:[#allocation3 + $0x21c] sm:$0xf]
    %v2372 = vld [vmem:[#allocation3 + $0x220] sm:$0xf]
    %v2373 = vld [vmem:[#allocation3 + $0x224] sm:$0xf]
    %v2374 = vld [vmem:[#allocation3 + $0x228] sm:$0xf]
    %v2375 = vld [vmem:[#allocation3 + $0x22c] sm:$0xf]
    %v2376 = vld [vmem:[#allocation3 + $0x230] sm:$0xf]
    %v2377 = vld [vmem:[#allocation3 + $0x234] sm:$0xf]
    %v2378 = vld [vmem:[#allocation3 + $0x238] sm:$0xf]
    %v2379 = vld [vmem:[#allocation3 + $0x23c] sm:$0xf]
    %v2380 = vpack.c.b16 %v2078, %v2076
    %v2381 = vpack.c.b16 %v2302, %v2300
    %v2382 = vpack.c.b16 %v2303, %v2301
    %v2383 = vpack.c.b16 %v2082, %v2080
    %v2384 = vpack.c.b16 %v2306, %v2304
    %v2385 = vpack.c.b16 %v2307, %v2305
    %v2386 = vpack.c.b16 %v2086, %v2084
    %v2387 = vpack.c.b16 %v2310, %v2308
    %v2388 = vpack.c.b16 %v2311, %v2309
    %v2389 = vpack.c.b16 %v2090, %v2088
    %v2390 = vpack.c.b16 %v2314, %v2312
    %v2391 = vpack.c.b16 %v2315, %v2313
    %v2392 = vpack.c.b16 %v2094, %v2092
    %v2393 = vpack.c.b16 %v2318, %v2316
    %v2394 = vpack.c.b16 %v2319, %v2317
    %v2395 = vpack.c.b16 %v2098, %v2096
    %v2396 = vpack.c.b16 %v2322, %v2320
    %v2397 = vpack.c.b16 %v2323, %v2321
    %v2398 = vpack.c.b16 %v2102, %v2100
    %v2399 = vpack.c.b16 %v2326, %v2324
    %v2400 = vpack.c.b16 %v2327, %v2325
    %v2401 = vpack.c.b16 %v2106, %v2104
    %v2402 = vpack.c.b16 %v2330, %v2328
    %v2403 = vpack.c.b16 %v2331, %v2329
    %v2476 = vunpack.c.l.b16 %v2332
    %v2477 = vunpack.c.l.b16 %v2333
    %v2478 = vunpack.c.l.b16 %v2334
    %v2479 = vunpack.c.l.b16 %v2335
    %v2480 = vunpack.c.l.b16 %v2336
    %v2481 = vunpack.c.l.b16 %v2337
    %v2482 = vunpack.c.l.b16 %v2338
    %v2483 = vunpack.c.l.b16 %v2339
    %v2484 = vunpack.c.l.b16 %v2340
    %v2485 = vunpack.c.l.b16 %v2341
    %v2486 = vunpack.c.l.b16 %v2342
    %v2487 = vunpack.c.l.b16 %v2343
    %v2488 = vunpack.c.l.b16 %v2344
    %v2489 = vunpack.c.l.b16 %v2345
    %v2490 = vunpack.c.l.b16 %v2346
    %v2491 = vunpack.c.l.b16 %v2347
    %v2492 = vunpack.c.l.b16 %v2348
    %v2493 = vunpack.c.l.b16 %v2349
    %v2494 = vunpack.c.l.b16 %v2350
    %v2495 = vunpack.c.l.b16 %v2351
    %v2496 = vunpack.c.l.b16 %v2352
    %v2497 = vunpack.c.l.b16 %v2353
    %v2498 = vunpack.c.l.b16 %v2354
    %v2499 = vunpack.c.l.b16 %v2355
    %v2500 = vunpack.c.l.b16 %v2356
    %v2501 = vunpack.c.l.b16 %v2357
    %v2502 = vunpack.c.l.b16 %v2358
    %v2503 = vunpack.c.l.b16 %v2359
    %v2504 = vunpack.c.l.b16 %v2360
    %v2505 = vunpack.c.l.b16 %v2361
    %v2506 = vunpack.c.l.b16 %v2362
    %v2507 = vunpack.c.l.b16 %v2363
    %v2508 = vunpack.c.l.b16 %v2364
    %v2509 = vunpack.c.l.b16 %v2365
    %v2510 = vunpack.c.l.b16 %v2366
    %v2511 = vunpack.c.l.b16 %v2367
    %v2512 = vunpack.c.l.b16 %v2368
    %v2513 = vunpack.c.l.b16 %v2369
    %v2514 = vunpack.c.l.b16 %v2370
    %v2515 = vunpack.c.l.b16 %v2371
    %v2516 = vunpack.c.l.b16 %v2372
    %v2517 = vunpack.c.l.b16 %v2373
    %v2518 = vunpack.c.l.b16 %v2374
    %v2519 = vunpack.c.l.b16 %v2375
    %v2520 = vunpack.c.l.b16 %v2376
    %v2521 = vunpack.c.l.b16 %v2377
    %v2522 = vunpack.c.l.b16 %v2378
    %v2523 = vunpack.c.l.b16 %v2379
    %v2524 = vpack.c.b16 %v2477, %v2476
    %v2525 = vpack.c.b16 %v2479, %v2478
    %v2526 = vpack.c.b16 %v2481, %v2480
    %v2527 = vpack.c.b16 %v2483, %v2482
    %v2528 = vpack.c.b16 %v2485, %v2484
    %v2529 = vpack.c.b16 %v2487, %v2486
    %v2530 = vpack.c.b16 %v2489, %v2488
    %v2531 = vpack.c.b16 %v2491, %v2490
    %v2532 = vpack.c.b16 %v2493, %v2492
    %v2533 = vpack.c.b16 %v2495, %v2494
    %v2534 = vpack.c.b16 %v2497, %v2496
    %v2535 = vpack.c.b16 %v2499, %v2498
    %v2536 = vpack.c.b16 %v2501, %v2500
    %v2537 = vpack.c.b16 %v2503, %v2502
    %v2538 = vpack.c.b16 %v2505, %v2504
    %v2539 = vpack.c.b16 %v2507, %v2506
    %v2540 = vpack.c.b16 %v2509, %v2508
    %v2541 = vpack.c.b16 %v2511, %v2510
    %v2542 = vpack.c.b16 %v2513, %v2512
    %v2543 = vpack.c.b16 %v2515, %v2514
    %v2544 = vpack.c.b16 %v2517, %v2516
    %v2545 = vpack.c.b16 %v2519, %v2518
    %v2546 = vpack.c.b16 %v2521, %v2520
    %v2547 = vpack.c.b16 %v2523, %v2522
    %2572 = vmatprep.subr.bf16.mxu0 0
    %2573 = vmatpush1.bf16.msra.mxu0 %v2524
    %2574 = vmatprep.subr.bf16.mxu0 0
    %2575 = vmatpush1.bf16.msra.mxu0 %v2525
    %2576 = vmatprep.subr.bf16.mxu0 0
    %2577 = vmatpush1.bf16.msra.mxu0 %v2526
    %2578 = vmatprep.subr.bf16.mxu0 0
    %2579 = vmatpush1.bf16.msra.mxu0 %v2527
    %2580 = vmatprep.subr.bf16.mxu0 0
    %2581 = vmatpush1.bf16.msra.mxu0 %v2528
    %2582 = vmatprep.subr.bf16.mxu0 0
    %2583 = vmatpush1.bf16.msra.mxu0 %v2529
    %2584 = vmatprep.subr.bf16.mxu0 0
    %2585 = vmatpush1.bf16.msra.mxu0 %v2530
    %2586 = vmatprep.subr.bf16.mxu0 0
    %2587 = vmatpush1.bf16.msra.mxu0 %v2531
    %2588 = vmatprep.subr.bf16.mxu0 0
    %2589 = vmatpush1.bf16.msra.mxu0 %v2532
    %2590 = vmatprep.subr.bf16.mxu0 0
    %2591 = vmatpush1.bf16.msra.mxu0 %v2533
    %2592 = vmatprep.subr.bf16.mxu0 0
    %2593 = vmatpush1.bf16.msra.mxu0 %v2534
    %2594 = vmatprep.subr.bf16.mxu0 0
    %2595 = vmatpush1.bf16.msra.mxu0 %v2535
    %2596 = vmatprep.subr.bf16.mxu0 0
    %2597 = vmatpush1.bf16.msra.mxu0 %v2536
    %2598 = vmatprep.subr.bf16.mxu0 0
    %2599 = vmatpush1.bf16.msra.mxu0 %v2537
    %2600 = vmatprep.subr.bf16.mxu0 0
    %2601 = vmatpush1.bf16.msra.mxu0 %v2538
    %2602 = vmatprep.subr.bf16.mxu0 0
    %2603 = vmatpush1.bf16.msra.mxu0 %v2539
    %2604 = vmatprep.mubr.bf16.mxu0 %v2381
    %2605 = vmatmul.mubr.bf16.gmra.mrb[0].mxu0 %v2380
    %v2606 = vpop.f32.mrb[0].mxu0
    %v2607 = vadd.f32 0.0, %v2606
    %v2608 = vpop.f32.mrb[0].mxu0
    %v2609 = vpop.f32.mrb[0].mxu0
    %v2610 = vadd.f32 0.0, %v2609
    %v2611 = vpop.f32.mrb[0].mxu0
    %2612 = vmatprep.mubr.bf16.mxu0 %v2384
    %2613 = vmatmul.mubr.bf16.gmra.mrb[0].mxu0 %v2383
    %v2614 = vpop.f32.mrb[0].mxu0
    %v2615 = vadd.f32 0.0, %v2614
    %v2616 = vpop.f32.mrb[0].mxu0
    %v2617 = vpop.f32.mrb[0].mxu0
    %v2618 = vadd.f32 0.0, %v2617
    %v2619 = vpop.f32.mrb[0].mxu0
    %2620 = vmatprep.mubr.bf16.mxu0 %v2387
    %2621 = vmatmul.mubr.bf16.gmra.mrb[0].mxu0 %v2386
    %v2622 = vpop.f32.mrb[0].mxu0
    %v2623 = vadd.f32 0.0, %v2622
    %v2624 = vpop.f32.mrb[0].mxu0
    %v2625 = vpop.f32.mrb[0].mxu0
    %v2626 = vadd.f32 0.0, %v2625
    %v2627 = vpop.f32.mrb[0].mxu0
    %2628 = vmatprep.mubr.bf16.mxu0 %v2390
    %2629 = vmatmul.mubr.bf16.gmra.mrb[0].mxu0 %v2389
    %v2630 = vpop.f32.mrb[0].mxu0
    %v2631 = vadd.f32 0.0, %v2630
    %v2632 = vpop.f32.mrb[0].mxu0
    %v2633 = vpop.f32.mrb[0].mxu0
    %v2634 = vadd.f32 0.0, %v2633
    %v2635 = vpop.f32.mrb[0].mxu0
    %2636 = vmatprep.mubr.bf16.mxu0 %v2393
    %2637 = vmatmul.mubr.bf16.gmra.mrb[0].mxu0 %v2392
    %v2638 = vpop.f32.mrb[0].mxu0
    %v2639 = vadd.f32 0.0, %v2638
    %v2640 = vpop.f32.mrb[0].mxu0
    %v2641 = vpop.f32.mrb[0].mxu0
    %v2642 = vadd.f32 0.0, %v2641
    %v2643 = vpop.f32.mrb[0].mxu0
    %2644 = vmatprep.mubr.bf16.mxu0 %v2396
    %2645 = vmatmul.mubr.bf16.gmra.mrb[0].mxu0 %v2395
    %v2646 = vpop.f32.mrb[0].mxu0
    %v2647 = vadd.f32 0.0, %v2646
    %v2648 = vpop.f32.mrb[0].mxu0
    %v2649 = vpop.f32.mrb[0].mxu0
    %v2650 = vadd.f32 0.0, %v2649
    %v2651 = vpop.f32.mrb[0].mxu0
    %2652 = vmatprep.mubr.bf16.mxu0 %v2399
    %2653 = vmatmul.mubr.bf16.gmra.mrb[0].mxu0 %v2398
    %v2654 = vpop.f32.mrb[0].mxu0
    %v2655 = vadd.f32 0.0, %v2654
    %v2656 = vpop.f32.mrb[0].mxu0
    %v2657 = vpop.f32.mrb[0].mxu0
    %v2658 = vadd.f32 0.0, %v2657
    %v2659 = vpop.f32.mrb[0].mxu0
    %2660 = vmatprep.mubr.bf16.mxu0 %v2402
    %2661 = vmatmul.mubr.bf16.gmra.mrb[0].mxu0 %v2401
    %v2662 = vpop.f32.mrb[0].mxu0
    %v2663 = vadd.f32 0.0, %v2662
    %v2664 = vpop.f32.mrb[0].mxu0
    %v2665 = vpop.f32.mrb[0].mxu0
    %v2666 = vadd.f32 0.0, %v2665
    %v2667 = vpop.f32.mrb[0].mxu0
    %2668 = vdwg.mxu0
    %2669 = vmatprep.subr.bf16.mxu0 0
    %2670 = vmatpush1.bf16.msra.mxu0 %v2540
    %2671 = vmatprep.subr.bf16.mxu0 0
    %2672 = vmatpush1.bf16.msra.mxu0 %v2541
    %2673 = vmatprep.subr.bf16.mxu0 0
    %2674 = vmatpush1.bf16.msra.mxu0 %v2542
    %2675 = vmatprep.subr.bf16.mxu0 0
    %2676 = vmatpush1.bf16.msra.mxu0 %v2543
    %2677 = vmatprep.subr.bf16.mxu0 0
    %2678 = vmatpush1.bf16.msra.mxu0 %v2544
    %2679 = vmatprep.subr.bf16.mxu0 0
    %2680 = vmatpush1.bf16.msra.mxu0 %v2545
    %2681 = vmatprep.subr.bf16.mxu0 0
    %2682 = vmatpush1.bf16.msra.mxu0 %v2546
    %2683 = vmatprep.subr.bf16.mxu0 0
    %2684 = vmatpush1.bf16.msra.mxu0 %v2547
    %2685 = vmatprep.subr.bf16.mxu0 0
    %2686 = vmatpush1.bf16.msra.mxu0 0
    %2687 = vmatprep.subr.bf16.mxu0 0
    %2688 = vmatpush1.bf16.msra.mxu0 0
    %2689 = vmatprep.subr.bf16.mxu0 0
    %2690 = vmatpush1.bf16.msra.mxu0 0
    %2691 = vmatprep.subr.bf16.mxu0 0
    %2692 = vmatpush1.bf16.msra.mxu0 0
    %2693 = vmatprep.subr.bf16.mxu0 0
    %2694 = vmatpush1.bf16.msra.mxu0 0
    %2695 = vmatprep.subr.bf16.mxu0 0
    %2696 = vmatpush1.bf16.msra.mxu0 0
    %2697 = vmatprep.subr.bf16.mxu0 0
    %2698 = vmatpush1.bf16.msra.mxu0 0
    %2699 = vmatprep.subr.bf16.mxu0 0
    %2700 = vmatpush1.bf16.msra.mxu0 0
    %2701 = vmatprep.mubr.bf16.mxu0 0
    %2702 = vmatmul.mubr.bf16.gmra.mrb[0].mxu0 %v2382
    %v2703 = vpop.f32.mrb[0].mxu0
    %v2704 = vadd.f32 %v2607, %v2703
    %v2705 = vpop.f32.mrb[0].mxu0
    %v2706 = vpop.f32.mrb[0].mxu0
    %v2707 = vadd.f32 %v2610, %v2706
    %v2708 = vpop.f32.mrb[0].mxu0
    %2709 = vmatprep.mubr.bf16.mxu0 0
    %2710 = vmatmul.mubr.bf16.gmra.mrb[0].mxu0 %v2385
    %v2711 = vpop.f32.mrb[0].mxu0
    %v2712 = vadd.f32 %v2615, %v2711
    %v2713 = vpop.f32.mrb[0].mxu0
    %v2714 = vpop.f32.mrb[0].mxu0
    %v2715 = vadd.f32 %v2618, %v2714
    %v2716 = vpop.f32.mrb[0].mxu0
    %2717 = vmatprep.mubr.bf16.mxu0 0
    %2718 = vmatmul.mubr.bf16.gmra.mrb[0].mxu0 %v2388
    %v2719 = vpop.f32.mrb[0].mxu0
    %v2720 = vadd.f32 %v2623, %v2719
    %v2721 = vpop.f32.mrb[0].mxu0
    %v2722 = vpop.f32.mrb[0].mxu0
    %v2723 = vadd.f32 %v2626, %v2722
    %v2724 = vpop.f32.mrb[0].mxu0
    %2725 = vmatprep.mubr.bf16.mxu0 0
    %2726 = vmatmul.mubr.bf16.gmra.mrb[0].mxu0 %v2391
    %v2727 = vpop.f32.mrb[0].mxu0
    %v2728 = vadd.f32 %v2631, %v2727
    %v2729 = vpop.f32.mrb[0].mxu0
    %v2730 = vpop.f32.mrb[0].mxu0
    %v2731 = vadd.f32 %v2634, %v2730
    %v2732 = vpop.f32.mrb[0].mxu0
    %2733 = vmatprep.mubr.bf16.mxu0 0
    %2734 = vmatmul.mubr.bf16.gmra.mrb[0].mxu0 %v2394
    %v2735 = vpop.f32.mrb[0].mxu0
    %v2736 = vadd.f32 %v2639, %v2735
    %v2737 = vpop.f32.mrb[0].mxu0
    %v2738 = vpop.f32.mrb[0].mxu0
    %v2739 = vadd.f32 %v2642, %v2738
    %v2740 = vpop.f32.mrb[0].mxu0
    %2741 = vmatprep.mubr.bf16.mxu0 0
    %2742 = vmatmul.mubr.bf16.gmra.mrb[0].mxu0 %v2397
    %v2743 = vpop.f32.mrb[0].mxu0
    %v2744 = vadd.f32 %v2647, %v2743
    %v2745 = vpop.f32.mrb[0].mxu0
    %v2746 = vpop.f32.mrb[0].mxu0
    %v2747 = vadd.f32 %v2650, %v2746
    %v2748 = vpop.f32.mrb[0].mxu0
    %2749 = vmatprep.mubr.bf16.mxu0 0
    %2750 = vmatmul.mubr.bf16.gmra.mrb[0].mxu0 %v2400
    %v2751 = vpop.f32.mrb[0].mxu0
    %v2752 = vadd.f32 %v2655, %v2751
    %v2753 = vpop.f32.mrb[0].mxu0
    %v2754 = vpop.f32.mrb[0].mxu0
    %v2755 = vadd.f32 %v2658, %v2754
    %v2756 = vpop.f32.mrb[0].mxu0
    %2757 = vmatprep.mubr.bf16.mxu0 0
    %2758 = vmatmul.mubr.bf16.gmra.mrb[0].mxu0 %v2403
    %v2759 = vpop.f32.mrb[0].mxu0
    %v2760 = vadd.f32 %v2663, %v2759
    %v2761 = vpop.f32.mrb[0].mxu0
    %v2762 = vpop.f32.mrb[0].mxu0
    %v2763 = vadd.f32 %v2666, %v2762
    %v2764 = vpop.f32.mrb[0].mxu0
    %2765 = vdwg.mxu0
    %v2766 = vadd.f32 %v1933, %v2704
    %v2767 = vadd.f32 %v1936, %v2707
    %v2768 = vadd.f32 %v1941, %v2712
    %v2769 = vadd.f32 %v1944, %v2715
    %v2770 = vadd.f32 %v1949, %v2720
    %v2771 = vadd.f32 %v1952, %v2723
    %v2772 = vadd.f32 %v1957, %v2728
    %v2773 = vadd.f32 %v1960, %v2731
    %v2774 = vadd.f32 %v1965, %v2736
    %v2775 = vadd.f32 %v1968, %v2739
    %v2776 = vadd.f32 %v1973, %v2744
    %v2777 = vadd.f32 %v1976, %v2747
    %v2778 = vadd.f32 %v1981, %v2752
    %v2779 = vadd.f32 %v1984, %v2755
    %v2780 = vadd.f32 %v1989, %v2760
    %v2781 = vadd.f32 %v1992, %v2763
    %v2782 = vld [vmem:[#allocation6] sm:$0x1]
    %v2784 = vlaneseq
    %v2785 = vshrl.u32 %v2784, 7
    %v2786 = vsub.s32 0, %v2785
    %v2787 = vrot.slane %v2782, %v2786
    %v2789 = vadd.f32 %v2766, %v2787
    %v2790 = vadd.f32 %v2767, %v2787
    %v2791 = vadd.f32 %v2768, %v2787
    %v2792 = vadd.f32 %v2769, %v2787
    %v2793 = vadd.f32 %v2770, %v2787
    %v2794 = vadd.f32 %v2771, %v2787
    %v2795 = vadd.f32 %v2772, %v2787
    %v2796 = vadd.f32 %v2773, %v2787
    %v2797 = vadd.f32 %v2774, %v2787
    %v2798 = vadd.f32 %v2775, %v2787
    %v2799 = vadd.f32 %v2776, %v2787
    %v2800 = vadd.f32 %v2777, %v2787
    %v2801 = vadd.f32 %v2778, %v2787
    %v2802 = vadd.f32 %v2779, %v2787
    %v2803 = vadd.f32 %v2780, %v2787
    %v2804 = vadd.f32 %v2781, %v2787
    %v2805 = vpack.c.bf16 %v2790, %v2789
    %v2806 = vpack.c.bf16 %v2792, %v2791
    %v2807 = vpack.c.bf16 %v2794, %v2793
    %v2808 = vpack.c.bf16 %v2796, %v2795
    %v2809 = vpack.c.bf16 %v2798, %v2797
    %v2810 = vpack.c.bf16 %v2800, %v2799
    %v2811 = vpack.c.bf16 %v2802, %v2801
    %v2812 = vpack.c.bf16 %v2804, %v2803
    %v2821 = vunpack.c.l.b16 %v2805
    %v2822 = vunpack.c.h.b16 %v2805
    %v2823 = vunpack.c.l.b16 %v2806
    %v2824 = vunpack.c.h.b16 %v2806
    %v2825 = vunpack.c.l.b16 %v2807
    %v2826 = vunpack.c.h.b16 %v2807
    %v2827 = vunpack.c.l.b16 %v2808
    %v2828 = vunpack.c.h.b16 %v2808
    %v2829 = vunpack.c.l.b16 %v2809
    %v2830 = vunpack.c.h.b16 %v2809
    %v2831 = vunpack.c.l.b16 %v2810
    %v2832 = vunpack.c.h.b16 %v2810
    %v2833 = vunpack.c.l.b16 %v2811
    %v2834 = vunpack.c.h.b16 %v2811
    %v2835 = vunpack.c.l.b16 %v2812
    %v2836 = vunpack.c.h.b16 %v2812
    %v2837 = vpack.c.b16 %v2821, %v2821
    %v2838 = vpack.c.b16 %v2822, %v2822
    %v2839 = vpack.c.b16 %v2823, %v2823
    %v2840 = vpack.c.b16 %v2824, %v2824
    %v2841 = vpack.c.b16 %v2825, %v2825
    %v2842 = vpack.c.b16 %v2826, %v2826
    %v2843 = vpack.c.b16 %v2827, %v2827
    %v2844 = vpack.c.b16 %v2828, %v2828
    %v2845 = vpack.c.b16 %v2829, %v2829
    %v2846 = vpack.c.b16 %v2830, %v2830
    %v2847 = vpack.c.b16 %v2831, %v2831
    %v2848 = vpack.c.b16 %v2832, %v2832
    %v2849 = vpack.c.b16 %v2833, %v2833
    %v2850 = vpack.c.b16 %v2834, %v2834
    %v2851 = vpack.c.b16 %v2835, %v2835
    %v2852 = vpack.c.b16 %v2836, %v2836
    %v2854 = vshrl.u32 %v2837, 16
    %v2856 = vrot.slane %v2854, 7
    %v2857 = vshll.u32 %v2837, 16
    %v2859 = vor.u32 %v2856, %v2857
    %v2860 = vrot.slane %v2856, 4
    %v2862 = vshrl.u32 %v2838, 16
    %v2864 = vrot.slane %v2862, 7
    %v2865 = vshll.u32 %v2838, 16
    %v2867 = vor.u32 %v2864, %v2865
    %v2868 = vrot.slane %v2864, 4
    %v2870 = vshrl.u32 %v2839, 16
    %v2872 = vrot.slane %v2870, 7
    %v2873 = vshll.u32 %v2839, 16
    %v2875 = vor.u32 %v2872, %v2873
    %v2876 = vrot.slane %v2872, 4
    %v2878 = vshrl.u32 %v2840, 16
    %v2880 = vrot.slane %v2878, 7
    %v2881 = vshll.u32 %v2840, 16
    %v2883 = vor.u32 %v2880, %v2881
    %v2884 = vrot.slane %v2880, 4
    %v2886 = vshrl.u32 %v2841, 16
    %v2888 = vrot.slane %v2886, 7
    %v2889 = vshll.u32 %v2841, 16
    %v2891 = vor.u32 %v2888, %v2889
    %v2892 = vrot.slane %v2888, 4
    %v2894 = vshrl.u32 %v2842, 16
    %v2896 = vrot.slane %v2894, 7
    %v2897 = vshll.u32 %v2842, 16
    %v2899 = vor.u32 %v2896, %v2897
    %v2900 = vrot.slane %v2896, 4
    %v2902 = vshrl.u32 %v2843, 16
    %v2904 = vrot.slane %v2902, 7
    %v2905 = vshll.u32 %v2843, 16
    %v2907 = vor.u32 %v2904, %v2905
    %v2908 = vrot.slane %v2904, 4
    %v2910 = vshrl.u32 %v2844, 16
    %v2912 = vrot.slane %v2910, 7
    %v2913 = vshll.u32 %v2844, 16
    %v2915 = vor.u32 %v2912, %v2913
    %v2916 = vrot.slane %v2912, 4
    %v2918 = vshrl.u32 %v2845, 16
    %v2920 = vrot.slane %v2918, 7
    %v2921 = vshll.u32 %v2845, 16
    %v2923 = vor.u32 %v2920, %v2921
    %v2924 = vrot.slane %v2920, 4
    %v2926 = vshrl.u32 %v2846, 16
    %v2928 = vrot.slane %v2926, 7
    %v2929 = vshll.u32 %v2846, 16
    %v2931 = vor.u32 %v2928, %v2929
    %v2932 = vrot.slane %v2928, 4
    %v2934 = vshrl.u32 %v2847, 16
    %v2936 = vrot.slane %v2934, 7
    %v2937 = vshll.u32 %v2847, 16
    %v2939 = vor.u32 %v2936, %v2937
    %v2940 = vrot.slane %v2936, 4
    %v2942 = vshrl.u32 %v2848, 16
    %v2944 = vrot.slane %v2942, 7
    %v2945 = vshll.u32 %v2848, 16
    %v2947 = vor.u32 %v2944, %v2945
    %v2948 = vrot.slane %v2944, 4
    %v2950 = vshrl.u32 %v2849, 16
    %v2952 = vrot.slane %v2950, 7
    %v2953 = vshll.u32 %v2849, 16
    %v2955 = vor.u32 %v2952, %v2953
    %v2956 = vrot.slane %v2952, 4
    %v2958 = vshrl.u32 %v2850, 16
    %v2960 = vrot.slane %v2958, 7
    %v2961 = vshll.u32 %v2850, 16
    %v2963 = vor.u32 %v2960, %v2961
    %v2964 = vrot.slane %v2960, 4
    %v2966 = vshrl.u32 %v2851, 16
    %v2968 = vrot.slane %v2966, 7
    %v2969 = vshll.u32 %v2851, 16
    %v2971 = vor.u32 %v2968, %v2969
    %v2972 = vrot.slane %v2968, 4
    %v2974 = vshrl.u32 %v2852, 16
    %v2976 = vrot.slane %v2974, 7
    %v2977 = vshll.u32 %v2852, 16
    %v2979 = vor.u32 %v2976, %v2977
    %v2980 = vrot.slane %v2976, 4
    %v3013 = vsel %vm355, %v2859, %v839
    %3014 = vst [vmem:[%s352] sm:$0xf] %v3013
    %v3015 = vld [vmem:[%s352 + $0x8] sm:$0x1]
    %v3016 = vsel %vm361, %v2860, %v3015
    %3017 = vst [vmem:[%s352 + $0x8] sm:$0x1] %v3016
    %v3018 = vld [vmem:[%s352 + $0x10] sm:$0xf]
    %v3019 = vsel %vm355, %v2867, %v3018
    %3020 = vst [vmem:[%s352 + $0x10] sm:$0xf] %v3019
    %v3021 = vld [vmem:[%s352 + $0x18] sm:$0x1]
    %v3022 = vsel %vm361, %v2868, %v3021
    %3023 = vst [vmem:[%s352 + $0x18] sm:$0x1] %v3022
    %v3024 = vld [vmem:[%s352 + $0x20] sm:$0xf]
    %v3025 = vsel %vm355, %v2875, %v3024
    %3026 = vst [vmem:[%s352 + $0x20] sm:$0xf] %v3025
    %v3027 = vld [vmem:[%s352 + $0x28] sm:$0x1]
    %v3028 = vsel %vm361, %v2876, %v3027
    %3029 = vst [vmem:[%s352 + $0x28] sm:$0x1] %v3028
    %v3030 = vld [vmem:[%s352 + $0x30] sm:$0xf]
    %v3031 = vsel %vm355, %v2883, %v3030
    %3032 = vst [vmem:[%s352 + $0x30] sm:$0xf] %v3031
    %v3033 = vld [vmem:[%s352 + $0x38] sm:$0x1]
    %v3034 = vsel %vm361, %v2884, %v3033
    %3035 = vst [vmem:[%s352 + $0x38] sm:$0x1] %v3034
    %v3036 = vld [vmem:[%s352 + $0x40] sm:$0xf]
    %v3037 = vsel %vm355, %v2891, %v3036
    %3038 = vst [vmem:[%s352 + $0x40] sm:$0xf] %v3037
    %v3039 = vld [vmem:[%s352 + $0x48] sm:$0x1]
    %v3040 = vsel %vm361, %v2892, %v3039
    %3041 = vst [vmem:[%s352 + $0x48] sm:$0x1] %v3040
    %v3042 = vld [vmem:[%s352 + $0x50] sm:$0xf]
    %v3043 = vsel %vm355, %v2899, %v3042
    %3044 = vst [vmem:[%s352 + $0x50] sm:$0xf] %v3043
    %v3045 = vld [vmem:[%s352 + $0x58] sm:$0x1]
    %v3046 = vsel %vm361, %v2900, %v3045
    %3047 = vst [vmem:[%s352 + $0x58] sm:$0x1] %v3046
    %v3048 = vld [vmem:[%s352 + $0x60] sm:$0xf]
    %v3049 = vsel %vm355, %v2907, %v3048
    %3050 = vst [vmem:[%s352 + $0x60] sm:$0xf] %v3049
    %v3051 = vld [vmem:[%s352 + $0x68] sm:$0x1]
    %v3052 = vsel %vm361, %v2908, %v3051
    %3053 = vst [vmem:[%s352 + $0x68] sm:$0x1] %v3052
    %v3054 = vld [vmem:[%s352 + $0x70] sm:$0xf]
    %v3055 = vsel %vm355, %v2915, %v3054
    %3056 = vst [vmem:[%s352 + $0x70] sm:$0xf] %v3055
    %v3057 = vld [vmem:[%s352 + $0x78] sm:$0x1]
    %v3058 = vsel %vm361, %v2916, %v3057
    %3059 = vst [vmem:[%s352 + $0x78] sm:$0x1] %v3058
    %v3060 = vld [vmem:[%s352 + $0xa0] sm:$0xf]
    %v3061 = vsel %vm355, %v2923, %v3060
    %3062 = vst [vmem:[%s352 + $0xa0] sm:$0xf] %v3061
    %v3063 = vld [vmem:[%s352 + $0xa8] sm:$0x1]
    %v3064 = vsel %vm361, %v2924, %v3063
    %3065 = vst [vmem:[%s352 + $0xa8] sm:$0x1] %v3064
    %v3066 = vld [vmem:[%s352 + $0xb0] sm:$0xf]
    %v3067 = vsel %vm355, %v2931, %v3066
    %3068 = vst [vmem:[%s352 + $0xb0] sm:$0xf] %v3067
    %v3069 = vld [vmem:[%s352 + $0xb8] sm:$0x1]
    %v3070 = vsel %vm361, %v2932, %v3069
    %3071 = vst [vmem:[%s352 + $0xb8] sm:$0x1] %v3070
    %v3072 = vld [vmem:[%s352 + $0xc0] sm:$0xf]
    %v3073 = vsel %vm355, %v2939, %v3072
    %3074 = vst [vmem:[%s352 + $0xc0] sm:$0xf] %v3073
    %v3075 = vld [vmem:[%s352 + $0xc8] sm:$0x1]
    %v3076 = vsel %vm361, %v2940, %v3075
    %3077 = vst [vmem:[%s352 + $0xc8] sm:$0x1] %v3076
    %v3078 = vld [vmem:[%s352 + $0xd0] sm:$0xf]
    %v3079 = vsel %vm355, %v2947, %v3078
    %3080 = vst [vmem:[%s352 + $0xd0] sm:$0xf] %v3079
    %v3081 = vld [vmem:[%s352 + $0xd8] sm:$0x1]
    %v3082 = vsel %vm361, %v2948, %v3081
    %3083 = vst [vmem:[%s352 + $0xd8] sm:$0x1] %v3082
    %v3084 = vld [vmem:[%s352 + $0xe0] sm:$0xf]
    %v3085 = vsel %vm355, %v2955, %v3084
    %3086 = vst [vmem:[%s352 + $0xe0] sm:$0xf] %v3085
    %v3087 = vld [vmem:[%s352 + $0xe8] sm:$0x1]
    %v3088 = vsel %vm361, %v2956, %v3087
    %3089 = vst [vmem:[%s352 + $0xe8] sm:$0x1] %v3088
    %v3090 = vld [vmem:[%s352 + $0xf0] sm:$0xf]
    %v3091 = vsel %vm355, %v2963, %v3090
    %3092 = vst [vmem:[%s352 + $0xf0] sm:$0xf] %v3091
    %v3093 = vld [vmem:[%s352 + $0xf8] sm:$0x1]
    %v3094 = vsel %vm361, %v2964, %v3093
    %3095 = vst [vmem:[%s352 + $0xf8] sm:$0x1] %v3094
    %v3096 = vld [vmem:[%s352 + $0x100] sm:$0xf]
    %v3097 = vsel %vm355, %v2971, %v3096
    %3098 = vst [vmem:[%s352 + $0x100] sm:$0xf] %v3097
    %v3099 = vld [vmem:[%s352 + $0x108] sm:$0x1]
    %v3100 = vsel %vm361, %v2972, %v3099
    %3101 = vst [vmem:[%s352 + $0x108] sm:$0x1] %v3100
    %v3102 = vld [vmem:[%s352 + $0x110] sm:$0xf]
    %v3103 = vsel %vm355, %v2979, %v3102
    %3104 = vst [vmem:[%s352 + $0x110] sm:$0xf] %v3103
    %v3105 = vld [vmem:[%s352 + $0x118] sm:$0x1]
    %v3106 = vsel %vm361, %v2980, %v3105
    %3107 = vst [vmem:[%s352 + $0x118] sm:$0x1] %v3106
    %v3108 = vld [vmem:[#allocation2] sm:$0xf]
    %v3109 = vld [vmem:[#allocation2 + $0x10] sm:$0xf]
    %v3110 = vld [vmem:[#allocation2 + $0x20] sm:$0xf]
    %v3111 = vld [vmem:[#allocation2 + $0x30] sm:$0xf]
    %v3112 = vld [vmem:[#allocation2 + $0x40] sm:$0xf]
    %v3113 = vld [vmem:[#allocation2 + $0x50] sm:$0xf]
    %v3114 = vld [vmem:[#allocation2 + $0x60] sm:$0xf]
    %v3115 = vld [vmem:[#allocation2 + $0x70] sm:$0xf]
    %v3116 = vld [vmem:[#allocation2 + $0xa0] sm:$0xf]
    %v3117 = vld [vmem:[#allocation2 + $0xb0] sm:$0xf]
    %v3118 = vld [vmem:[#allocation2 + $0xc0] sm:$0xf]
    %v3119 = vld [vmem:[#allocation2 + $0xd0] sm:$0xf]
    %v3120 = vld [vmem:[#allocation2 + $0xe0] sm:$0xf]
    %v3121 = vld [vmem:[#allocation2 + $0xf0] sm:$0xf]
    %v3122 = vld [vmem:[#allocation2 + $0x100] sm:$0xf]
    %v3123 = vld [vmem:[#allocation2 + $0x110] sm:$0xf]
    %v3124 = vld [vmem:[#allocation2 + $0x8] sm:$0x1]
    %v3125 = vld [vmem:[#allocation2 + $0x18] sm:$0x1]
    %v3126 = vld [vmem:[#allocation2 + $0x28] sm:$0x1]
    %v3127 = vld [vmem:[#allocation2 + $0x38] sm:$0x1]
    %v3128 = vld [vmem:[#allocation2 + $0x48] sm:$0x1]
    %v3129 = vld [vmem:[#allocation2 + $0x58] sm:$0x1]
    %v3130 = vld [vmem:[#allocation2 + $0x68] sm:$0x1]
    %v3131 = vld [vmem:[#allocation2 + $0x78] sm:$0x1]
    %v3132 = vld [vmem:[#allocation2 + $0xa8] sm:$0x1]
    %v3133 = vld [vmem:[#allocation2 + $0xb8] sm:$0x1]
    %v3134 = vld [vmem:[#allocation2 + $0xc8] sm:$0x1]
    %v3135 = vld [vmem:[#allocation2 + $0xd8] sm:$0x1]
    %v3136 = vld [vmem:[#allocation2 + $0xe8] sm:$0x1]
    %v3137 = vld [vmem:[#allocation2 + $0xf8] sm:$0x1]
    %v3138 = vld [vmem:[#allocation2 + $0x108] sm:$0x1]
    %v3139 = vld [vmem:[#allocation2 + $0x118] sm:$0x1]
    %v3140 = vld [vmem:[#allocation2] sm:$0xe]
    %v3141 = vld [vmem:[#allocation2 + $0x10] sm:$0xe]
    %v3142 = vld [vmem:[#allocation2 + $0x20] sm:$0xe]
    %v3143 = vld [vmem:[#allocation2 + $0x30] sm:$0xe]
    %v3144 = vld [vmem:[#allocation2 + $0x40] sm:$0xe]
    %v3145 = vld [vmem:[#allocation2 + $0x50] sm:$0xe]
    %v3146 = vld [vmem:[#allocation2 + $0x60] sm:$0xe]
    %v3147 = vld [vmem:[#allocation2 + $0x70] sm:$0xe]
    %v3148 = vld [vmem:[#allocation2 + $0xa0] sm:$0xe]
    %v3149 = vld [vmem:[#allocation2 + $0xb0] sm:$0xe]
    %v3150 = vld [vmem:[#allocation2 + $0xc0] sm:$0xe]
    %v3151 = vld [vmem:[#allocation2 + $0xd0] sm:$0xe]
    %v3152 = vld [vmem:[#allocation2 + $0xe0] sm:$0xe]
    %v3153 = vld [vmem:[#allocation2 + $0xf0] sm:$0xe]
    %v3154 = vld [vmem:[#allocation2 + $0x100] sm:$0xe]
    %v3155 = vld [vmem:[#allocation2 + $0x110] sm:$0xe]
    %v3188 = vunpack.c.l.b16 %v3108
    %v3189 = vunpack.c.l.b16 %v3124
    %v3190 = vunpack.c.l.b16 %v3109
    %v3191 = vunpack.c.l.b16 %v3125
    %v3192 = vunpack.c.l.b16 %v3110
    %v3193 = vunpack.c.l.b16 %v3126
    %v3194 = vunpack.c.l.b16 %v3111
    %v3195 = vunpack.c.l.b16 %v3127
    %v3196 = vunpack.c.l.b16 %v3112
    %v3197 = vunpack.c.l.b16 %v3128
    %v3198 = vunpack.c.l.b16 %v3113
    %v3199 = vunpack.c.l.b16 %v3129
    %v3200 = vunpack.c.l.b16 %v3114
    %v3201 = vunpack.c.l.b16 %v3130
    %v3202 = vunpack.c.l.b16 %v3115
    %v3203 = vunpack.c.l.b16 %v3131
    %v3204 = vunpack.c.l.b16 %v3116
    %v3205 = vunpack.c.l.b16 %v3132
    %v3206 = vunpack.c.l.b16 %v3117
    %v3207 = vunpack.c.l.b16 %v3133
    %v3208 = vunpack.c.l.b16 %v3118
    %v3209 = vunpack.c.l.b16 %v3134
    %v3210 = vunpack.c.l.b16 %v3119
    %v3211 = vunpack.c.l.b16 %v3135
    %v3212 = vunpack.c.l.b16 %v3120
    %v3213 = vunpack.c.l.b16 %v3136
    %v3214 = vunpack.c.l.b16 %v3121
    %v3215 = vunpack.c.l.b16 %v3137
    %v3216 = vunpack.c.l.b16 %v3122
    %v3217 = vunpack.c.l.b16 %v3138
    %v3218 = vunpack.c.l.b16 %v3123
    %v3219 = vunpack.c.l.b16 %v3139
    %v3220 = vpack.c.b16 %v3189, %v3188
    %v3221 = vpack.c.b16 %v3191, %v3190
    %v3222 = vpack.c.b16 %v3193, %v3192
    %v3223 = vpack.c.b16 %v3195, %v3194
    %v3224 = vpack.c.b16 %v3197, %v3196
    %v3225 = vpack.c.b16 %v3199, %v3198
    %v3226 = vpack.c.b16 %v3201, %v3200
    %v3227 = vpack.c.b16 %v3203, %v3202
    %v3228 = vpack.c.b16 %v3205, %v3204
    %v3229 = vpack.c.b16 %v3207, %v3206
    %v3230 = vpack.c.b16 %v3209, %v3208
    %v3231 = vpack.c.b16 %v3211, %v3210
    %v3232 = vpack.c.b16 %v3213, %v3212
    %v3233 = vpack.c.b16 %v3215, %v3214
    %v3234 = vpack.c.b16 %v3217, %v3216
    %v3235 = vpack.c.b16 %v3219, %v3218
    %v3237 = vshrl.u32 %v3220, 16
    %v3239 = vshll.u32 %v3220, 16
    %v3241 = vrot.slane %v3239, 1
    %v3242 = vor.u32 %v3237, %v3241
    %v3244 = vshrl.u32 %v3221, 16
    %v3246 = vshll.u32 %v3221, 16
    %v3248 = vrot.slane %v3246, 1
    %v3249 = vor.u32 %v3244, %v3248
    %v3251 = vshrl.u32 %v3222, 16
    %v3253 = vshll.u32 %v3222, 16
    %v3255 = vrot.slane %v3253, 1
    %v3256 = vor.u32 %v3251, %v3255
    %v3258 = vshrl.u32 %v3223, 16
    %v3260 = vshll.u32 %v3223, 16
    %v3262 = vrot.slane %v3260, 1
    %v3263 = vor.u32 %v3258, %v3262
    %v3265 = vshrl.u32 %v3224, 16
    %v3267 = vshll.u32 %v3224, 16
    %v3269 = vrot.slane %v3267, 1
    %v3270 = vor.u32 %v3265, %v3269
    %v3272 = vshrl.u32 %v3225, 16
    %v3274 = vshll.u32 %v3225, 16
    %v3276 = vrot.slane %v3274, 1
    %v3277 = vor.u32 %v3272, %v3276
    %v3279 = vshrl.u32 %v3226, 16
    %v3281 = vshll.u32 %v3226, 16
    %v3283 = vrot.slane %v3281, 1
    %v3284 = vor.u32 %v3279, %v3283
    %v3286 = vshrl.u32 %v3227, 16
    %v3288 = vshll.u32 %v3227, 16
    %v3290 = vrot.slane %v3288, 1
    %v3291 = vor.u32 %v3286, %v3290
    %v3293 = vshrl.u32 %v3228, 16
    %v3295 = vshll.u32 %v3228, 16
    %v3297 = vrot.slane %v3295, 1
    %v3298 = vor.u32 %v3293, %v3297
    %v3300 = vshrl.u32 %v3229, 16
    %v3302 = vshll.u32 %v3229, 16
    %v3304 = vrot.slane %v3302, 1
    %v3305 = vor.u32 %v3300, %v3304
    %v3307 = vshrl.u32 %v3230, 16
    %v3309 = vshll.u32 %v3230, 16
    %v3311 = vrot.slane %v3309, 1
    %v3312 = vor.u32 %v3307, %v3311
    %v3314 = vshrl.u32 %v3231, 16
    %v3316 = vshll.u32 %v3231, 16
    %v3318 = vrot.slane %v3316, 1
    %v3319 = vor.u32 %v3314, %v3318
    %v3321 = vshrl.u32 %v3232, 16
    %v3323 = vshll.u32 %v3232, 16
    %v3325 = vrot.slane %v3323, 1
    %v3326 = vor.u32 %v3321, %v3325
    %v3328 = vshrl.u32 %v3233, 16
    %v3330 = vshll.u32 %v3233, 16
    %v3332 = vrot.slane %v3330, 1
    %v3333 = vor.u32 %v3328, %v3332
    %v3335 = vshrl.u32 %v3234, 16
    %v3337 = vshll.u32 %v3234, 16
    %v3339 = vrot.slane %v3337, 1
    %v3340 = vor.u32 %v3335, %v3339
    %v3342 = vshrl.u32 %v3235, 16
    %v3344 = vshll.u32 %v3235, 16
    %v3346 = vrot.slane %v3344, 1
    %v3347 = vor.u32 %v3342, %v3346
    %v3364 = vunpack.c.l.b16 %v3140
    %v3365 = vunpack.c.l.b16 %v3141
    %v3366 = vunpack.c.l.b16 %v3142
    %v3367 = vunpack.c.l.b16 %v3143
    %v3368 = vunpack.c.l.b16 %v3144
    %v3369 = vunpack.c.l.b16 %v3145
    %v3370 = vunpack.c.l.b16 %v3146
    %v3371 = vunpack.c.l.b16 %v3147
    %v3372 = vunpack.c.l.b16 %v3148
    %v3373 = vunpack.c.l.b16 %v3149
    %v3374 = vunpack.c.l.b16 %v3150
    %v3375 = vunpack.c.l.b16 %v3151
    %v3376 = vunpack.c.l.b16 %v3152
    %v3377 = vunpack.c.l.b16 %v3153
    %v3378 = vunpack.c.l.b16 %v3154
    %v3379 = vunpack.c.l.b16 %v3155
    %v3380 = vpack.c.b16 %v3189, %v3364
    %v3381 = vpack.c.b16 %v3191, %v3365
    %v3382 = vpack.c.b16 %v3193, %v3366
    %v3383 = vpack.c.b16 %v3195, %v3367
    %v3384 = vpack.c.b16 %v3197, %v3368
    %v3385 = vpack.c.b16 %v3199, %v3369
    %v3386 = vpack.c.b16 %v3201, %v3370
    %v3387 = vpack.c.b16 %v3203, %v3371
    %v3388 = vpack.c.b16 %v3205, %v3372
    %v3389 = vpack.c.b16 %v3207, %v3373
    %v3390 = vpack.c.b16 %v3209, %v3374
    %v3391 = vpack.c.b16 %v3211, %v3375
    %v3392 = vpack.c.b16 %v3213, %v3376
    %v3393 = vpack.c.b16 %v3215, %v3377
    %v3394 = vpack.c.b16 %v3217, %v3378
    %v3395 = vpack.c.b16 %v3219, %v3379
    %v3396 = vrot.slane %v3380, 1
    %v3397 = vrot.slane %v3381, 1
    %v3398 = vrot.slane %v3382, 1
    %v3399 = vrot.slane %v3383, 1
    %v3400 = vrot.slane %v3384, 1
    %v3401 = vrot.slane %v3385, 1
    %v3402 = vrot.slane %v3386, 1
    %v3403 = vrot.slane %v3387, 1
    %v3404 = vrot.slane %v3388, 1
    %v3405 = vrot.slane %v3389, 1
    %v3406 = vrot.slane %v3390, 1
    %v3407 = vrot.slane %v3391, 1
    %v3408 = vrot.slane %v3392, 1
    %v3409 = vrot.slane %v3393, 1
    %v3410 = vrot.slane %v3394, 1
    %v3411 = vrot.slane %v3395, 1
    %v3412 = vunpack.c.l.b16 %v3242
    %v3413 = vunpack.c.l.b16 %v3396
    %v3414 = vunpack.c.l.b16 %v3249
    %v3415 = vunpack.c.l.b16 %v3397
    %v3416 = vunpack.c.l.b16 %v3256
    %v3417 = vunpack.c.l.b16 %v3398
    %v3418 = vunpack.c.l.b16 %v3263
    %v3419 = vunpack.c.l.b16 %v3399
    %v3420 = vunpack.c.l.b16 %v3270
    %v3421 = vunpack.c.l.b16 %v3400
    %v3422 = vunpack.c.l.b16 %v3277
    %v3423 = vunpack.c.l.b16 %v3401
    %v3424 = vunpack.c.l.b16 %v3284
    %v3425 = vunpack.c.l.b16 %v3402
    %v3426 = vunpack.c.l.b16 %v3291
    %v3427 = vunpack.c.l.b16 %v3403
    %v3428 = vunpack.c.l.b16 %v3298
    %v3429 = vunpack.c.l.b16 %v3404
    %v3430 = vunpack.c.l.b16 %v3305
    %v3431 = vunpack.c.l.b16 %v3405
    %v3432 = vunpack.c.l.b16 %v3312
    %v3433 = vunpack.c.l.b16 %v3406
    %v3434 = vunpack.c.l.b16 %v3319
    %v3435 = vunpack.c.l.b16 %v3407
    %v3436 = vunpack.c.l.b16 %v3326
    %v3437 = vunpack.c.l.b16 %v3408
    %v3438 = vunpack.c.l.b16 %v3333
    %v3439 = vunpack.c.l.b16 %v3409
    %v3440 = vunpack.c.l.b16 %v3340
    %v3441 = vunpack.c.l.b16 %v3410
    %v3442 = vunpack.c.l.b16 %v3347
    %v3443 = vunpack.c.l.b16 %v3411
    %v3444 = vld [vmem:[#allocation8] sm:$0xff]
    %v3445 = vld [vmem:[#allocation8 + $0x8] sm:$0xff]
    %v3446 = vld [vmem:[#allocation8 + $0x10] sm:$0xff]
    %v3447 = vld [vmem:[#allocation8 + $0x18] sm:$0xff]
    %v3448 = vld [vmem:[#allocation8 + $0x20] sm:$0xff]
    %v3449 = vld [vmem:[#allocation8 + $0x28] sm:$0xff]
    %v3450 = vld [vmem:[#allocation8 + $0x30] sm:$0xff]
    %v3451 = vld [vmem:[#allocation8 + $0x38] sm:$0xff]
    %v3452 = vld [vmem:[#allocation8 + $0x40] sm:$0xff]
    %v3453 = vld [vmem:[#allocation8 + $0x48] sm:$0xff]
    %v3454 = vld [vmem:[#allocation8 + $0x50] sm:$0xff]
    %v3455 = vld [vmem:[#allocation8 + $0x58] sm:$0xff]
    %v3456 = vld [vmem:[#allocation8 + $0x60] sm:$0xff]
    %v3457 = vld [vmem:[#allocation8 + $0x68] sm:$0xff]
    %v3458 = vld [vmem:[#allocation8 + $0x70] sm:$0xff]
    %v3459 = vld [vmem:[#allocation8 + $0x78] sm:$0xff]
    %v3460 = vld [vmem:[#allocation8 + $0x80] sm:$0xff]
    %v3461 = vld [vmem:[#allocation8 + $0x88] sm:$0xff]
    %v3462 = vld [vmem:[#allocation8 + $0x90] sm:$0xff]
    %v3463 = vld [vmem:[#allocation8 + $0x98] sm:$0xff]
    %v3464 = vld [vmem:[#allocation8 + $0xa0] sm:$0xff]
    %v3465 = vld [vmem:[#allocation8 + $0xa8] sm:$0xff]
    %v3466 = vld [vmem:[#allocation8 + $0xb0] sm:$0xff]
    %v3467 = vld [vmem:[#allocation8 + $0xb8] sm:$0xff]
    %v3468 = vld [vmem:[#allocation8 + $0xc0] sm:$0xff]
    %v3469 = vld [vmem:[#allocation8 + $0xc8] sm:$0xff]
    %v3470 = vld [vmem:[#allocation8 + $0xd0] sm:$0xff]
    %v3471 = vld [vmem:[#allocation8 + $0xd8] sm:$0xff]
    %v3472 = vld [vmem:[#allocation8 + $0xe0] sm:$0xff]
    %v3473 = vld [vmem:[#allocation8 + $0xe8] sm:$0xff]
    %v3474 = vld [vmem:[#allocation8 + $0xf0] sm:$0xff]
    %v3475 = vld [vmem:[#allocation8 + $0xf8] sm:$0xff]
    %v3476 = vld [vmem:[#allocation8 + $0x100] sm:$0xff]
    %v3477 = vld [vmem:[#allocation8 + $0x108] sm:$0xff]
    %v3478 = vld [vmem:[#allocation8 + $0x110] sm:$0xff]
    %v3479 = vld [vmem:[#allocation8 + $0x118] sm:$0xff]
    %v3480 = vld [vmem:[#allocation8 + $0x120] sm:$0xff]
    %v3481 = vld [vmem:[#allocation8 + $0x128] sm:$0xff]
    %v3482 = vld [vmem:[#allocation8 + $0x130] sm:$0xff]
    %v3483 = vld [vmem:[#allocation8 + $0x138] sm:$0xff]
    %v3484 = vld [vmem:[#allocation8 + $0x140] sm:$0xff]
    %v3485 = vld [vmem:[#allocation8 + $0x148] sm:$0xff]
    %v3486 = vld [vmem:[#allocation8 + $0x150] sm:$0xff]
    %v3487 = vld [vmem:[#allocation8 + $0x158] sm:$0xff]
    %v3488 = vld [vmem:[#allocation8 + $0x160] sm:$0xff]
    %v3489 = vld [vmem:[#allocation8 + $0x168] sm:$0xff]
    %v3490 = vld [vmem:[#allocation8 + $0x170] sm:$0xff]
    %v3491 = vld [vmem:[#allocation8 + $0x178] sm:$0xff]
    %v3492 = vld [vmem:[%s352] sm:$0xf]
    %v3493 = vld [vmem:[%s352 + $0x10] sm:$0xf]
    %v3494 = vld [vmem:[%s352 + $0x20] sm:$0xf]
    %v3495 = vld [vmem:[%s352 + $0x30] sm:$0xf]
    %v3496 = vld [vmem:[%s352 + $0x40] sm:$0xf]
    %v3497 = vld [vmem:[%s352 + $0x50] sm:$0xf]
    %v3498 = vld [vmem:[%s352 + $0x60] sm:$0xf]
    %v3499 = vld [vmem:[%s352 + $0x70] sm:$0xf]
    %v3500 = vld [vmem:[%s352 + $0xa0] sm:$0xf]
    %v3501 = vld [vmem:[%s352 + $0xb0] sm:$0xf]
    %v3502 = vld [vmem:[%s352 + $0xc0] sm:$0xf]
    %v3503 = vld [vmem:[%s352 + $0xd0] sm:$0xf]
    %v3504 = vld [vmem:[%s352 + $0xe0] sm:$0xf]
    %v3505 = vld [vmem:[%s352 + $0xf0] sm:$0xf]
    %v3506 = vld [vmem:[%s352 + $0x100] sm:$0xf]
    %v3507 = vld [vmem:[%s352 + $0x110] sm:$0xf]
    %v3508 = vld [vmem:[%s352 + $0x8] sm:$0x1]
    %v3509 = vld [vmem:[%s352 + $0x18] sm:$0x1]
    %v3510 = vld [vmem:[%s352 + $0x28] sm:$0x1]
    %v3511 = vld [vmem:[%s352 + $0x38] sm:$0x1]
    %v3512 = vld [vmem:[%s352 + $0x48] sm:$0x1]
    %v3513 = vld [vmem:[%s352 + $0x58] sm:$0x1]
    %v3514 = vld [vmem:[%s352 + $0x68] sm:$0x1]
    %v3515 = vld [vmem:[%s352 + $0x78] sm:$0x1]
    %v3516 = vld [vmem:[%s352 + $0xa8] sm:$0x1]
    %v3517 = vld [vmem:[%s352 + $0xb8] sm:$0x1]
    %v3518 = vld [vmem:[%s352 + $0xc8] sm:$0x1]
    %v3519 = vld [vmem:[%s352 + $0xd8] sm:$0x1]
    %v3520 = vld [vmem:[%s352 + $0xe8] sm:$0x1]
    %v3521 = vld [vmem:[%s352 + $0xf8] sm:$0x1]
    %v3522 = vld [vmem:[%s352 + $0x108] sm:$0x1]
    %v3523 = vld [vmem:[%s352 + $0x118] sm:$0x1]
    %v3524 = vld [vmem:[%s352] sm:$0xe]
    %v3525 = vld [vmem:[%s352 + $0x10] sm:$0xe]
    %v3526 = vld [vmem:[%s352 + $0x20] sm:$0xe]
    %v3527 = vld [vmem:[%s352 + $0x30] sm:$0xe]
    %v3528 = vld [vmem:[%s352 + $0x40] sm:$0xe]
    %v3529 = vld [vmem:[%s352 + $0x50] sm:$0xe]
    %v3530 = vld [vmem:[%s352 + $0x60] sm:$0xe]
    %v3531 = vld [vmem:[%s352 + $0x70] sm:$0xe]
    %v3532 = vld [vmem:[%s352 + $0xa0] sm:$0xe]
    %v3533 = vld [vmem:[%s352 + $0xb0] sm:$0xe]
    %v3534 = vld [vmem:[%s352 + $0xc0] sm:$0xe]
    %v3535 = vld [vmem:[%s352 + $0xd0] sm:$0xe]
    %v3536 = vld [vmem:[%s352 + $0xe0] sm:$0xe]
    %v3537 = vld [vmem:[%s352 + $0xf0] sm:$0xe]
    %v3538 = vld [vmem:[%s352 + $0x100] sm:$0xe]
    %v3539 = vld [vmem:[%s352 + $0x110] sm:$0xe]
    %v3572 = vunpack.c.l.b16 %v3492
    %v3573 = vunpack.c.l.b16 %v3508
    %v3574 = vunpack.c.l.b16 %v3493
    %v3575 = vunpack.c.l.b16 %v3509
    %v3576 = vunpack.c.l.b16 %v3494
    %v3577 = vunpack.c.l.b16 %v3510
    %v3578 = vunpack.c.l.b16 %v3495
    %v3579 = vunpack.c.l.b16 %v3511
    %v3580 = vunpack.c.l.b16 %v3496
    %v3581 = vunpack.c.l.b16 %v3512
    %v3582 = vunpack.c.l.b16 %v3497
    %v3583 = vunpack.c.l.b16 %v3513
    %v3584 = vunpack.c.l.b16 %v3498
    %v3585 = vunpack.c.l.b16 %v3514
    %v3586 = vunpack.c.l.b16 %v3499
    %v3587 = vunpack.c.l.b16 %v3515
    %v3588 = vunpack.c.l.b16 %v3500
    %v3589 = vunpack.c.l.b16 %v3516
    %v3590 = vunpack.c.l.b16 %v3501
    %v3591 = vunpack.c.l.b16 %v3517
    %v3592 = vunpack.c.l.b16 %v3502
    %v3593 = vunpack.c.l.b16 %v3518
    %v3594 = vunpack.c.l.b16 %v3503
    %v3595 = vunpack.c.l.b16 %v3519
    %v3596 = vunpack.c.l.b16 %v3504
    %v3597 = vunpack.c.l.b16 %v3520
    %v3598 = vunpack.c.l.b16 %v3505
    %v3599 = vunpack.c.l.b16 %v3521
    %v3600 = vunpack.c.l.b16 %v3506
    %v3601 = vunpack.c.l.b16 %v3522
    %v3602 = vunpack.c.l.b16 %v3507
    %v3603 = vunpack.c.l.b16 %v3523
    %v3604 = vpack.c.b16 %v3573, %v3572
    %v3605 = vpack.c.b16 %v3575, %v3574
    %v3606 = vpack.c.b16 %v3577, %v3576
    %v3607 = vpack.c.b16 %v3579, %v3578
    %v3608 = vpack.c.b16 %v3581, %v3580
    %v3609 = vpack.c.b16 %v3583, %v3582
    %v3610 = vpack.c.b16 %v3585, %v3584
    %v3611 = vpack.c.b16 %v3587, %v3586
    %v3612 = vpack.c.b16 %v3589, %v3588
    %v3613 = vpack.c.b16 %v3591, %v3590
    %v3614 = vpack.c.b16 %v3593, %v3592
    %v3615 = vpack.c.b16 %v3595, %v3594
    %v3616 = vpack.c.b16 %v3597, %v3596
    %v3617 = vpack.c.b16 %v3599, %v3598
    %v3618 = vpack.c.b16 %v3601, %v3600
    %v3619 = vpack.c.b16 %v3603, %v3602
    %v3621 = vshrl.u32 %v3604, 16
    %v3623 = vshll.u32 %v3604, 16
    %v3625 = vrot.slane %v3623, 1
    %v3626 = vor.u32 %v3621, %v3625
    %v3628 = vshrl.u32 %v3605, 16
    %v3630 = vshll.u32 %v3605, 16
    %v3632 = vrot.slane %v3630, 1
    %v3633 = vor.u32 %v3628, %v3632
    %v3635 = vshrl.u32 %v3606, 16
    %v3637 = vshll.u32 %v3606, 16
    %v3639 = vrot.slane %v3637, 1
    %v3640 = vor.u32 %v3635, %v3639
    %v3642 = vshrl.u32 %v3607, 16
    %v3644 = vshll.u32 %v3607, 16
    %v3646 = vrot.slane %v3644, 1
    %v3647 = vor.u32 %v3642, %v3646
    %v3649 = vshrl.u32 %v3608, 16
    %v3651 = vshll.u32 %v3608, 16
    %v3653 = vrot.slane %v3651, 1
    %v3654 = vor.u32 %v3649, %v3653
    %v3656 = vshrl.u32 %v3609, 16
    %v3658 = vshll.u32 %v3609, 16
    %v3660 = vrot.slane %v3658, 1
    %v3661 = vor.u32 %v3656, %v3660
    %v3663 = vshrl.u32 %v3610, 16
    %v3665 = vshll.u32 %v3610, 16
    %v3667 = vrot.slane %v3665, 1
    %v3668 = vor.u32 %v3663, %v3667
    %v3670 = vshrl.u32 %v3611, 16
    %v3672 = vshll.u32 %v3611, 16
    %v3674 = vrot.slane %v3672, 1
    %v3675 = vor.u32 %v3670, %v3674
    %v3677 = vshrl.u32 %v3612, 16
    %v3679 = vshll.u32 %v3612, 16
    %v3681 = vrot.slane %v3679, 1
    %v3682 = vor.u32 %v3677, %v3681
    %v3684 = vshrl.u32 %v3613, 16
    %v3686 = vshll.u32 %v3613, 16
    %v3688 = vrot.slane %v3686, 1
    %v3689 = vor.u32 %v3684, %v3688
    %v3691 = vshrl.u32 %v3614, 16
    %v3693 = vshll.u32 %v3614, 16
    %v3695 = vrot.slane %v3693, 1
    %v3696 = vor.u32 %v3691, %v3695
    %v3698 = vshrl.u32 %v3615, 16
    %v3700 = vshll.u32 %v3615, 16
    %v3702 = vrot.slane %v3700, 1
    %v3703 = vor.u32 %v3698, %v3702
    %v3705 = vshrl.u32 %v3616, 16
    %v3707 = vshll.u32 %v3616, 16
    %v3709 = vrot.slane %v3707, 1
    %v3710 = vor.u32 %v3705, %v3709
    %v3712 = vshrl.u32 %v3617, 16
    %v3714 = vshll.u32 %v3617, 16
    %v3716 = vrot.slane %v3714, 1
    %v3717 = vor.u32 %v3712, %v3716
    %v3719 = vshrl.u32 %v3618, 16
    %v3721 = vshll.u32 %v3618, 16
    %v3723 = vrot.slane %v3721, 1
    %v3724 = vor.u32 %v3719, %v3723
    %v3726 = vshrl.u32 %v3619, 16
    %v3728 = vshll.u32 %v3619, 16
    %v3730 = vrot.slane %v3728, 1
    %v3731 = vor.u32 %v3726, %v3730
    %v3748 = vunpack.c.l.b16 %v3524
    %v3749 = vunpack.c.l.b16 %v3525
    %v3750 = vunpack.c.l.b16 %v3526
    %v3751 = vunpack.c.l.b16 %v3527
    %v3752 = vunpack.c.l.b16 %v3528
    %v3753 = vunpack.c.l.b16 %v3529
    %v3754 = vunpack.c.l.b16 %v3530
    %v3755 = vunpack.c.l.b16 %v3531
    %v3756 = vunpack.c.l.b16 %v3532
    %v3757 = vunpack.c.l.b16 %v3533
    %v3758 = vunpack.c.l.b16 %v3534
    %v3759 = vunpack.c.l.b16 %v3535
    %v3760 = vunpack.c.l.b16 %v3536
    %v3761 = vunpack.c.l.b16 %v3537
    %v3762 = vunpack.c.l.b16 %v3538
    %v3763 = vunpack.c.l.b16 %v3539
    %v3764 = vpack.c.b16 %v3573, %v3748
    %v3765 = vpack.c.b16 %v3575, %v3749
    %v3766 = vpack.c.b16 %v3577, %v3750
    %v3767 = vpack.c.b16 %v3579, %v3751
    %v3768 = vpack.c.b16 %v3581, %v3752
    %v3769 = vpack.c.b16 %v3583, %v3753
    %v3770 = vpack.c.b16 %v3585, %v3754
    %v3771 = vpack.c.b16 %v3587, %v3755
    %v3772 = vpack.c.b16 %v3589, %v3756
    %v3773 = vpack.c.b16 %v3591, %v3757
    %v3774 = vpack.c.b16 %v3593, %v3758
    %v3775 = vpack.c.b16 %v3595, %v3759
    %v3776 = vpack.c.b16 %v3597, %v3760
    %v3777 = vpack.c.b16 %v3599, %v3761
    %v3778 = vpack.c.b16 %v3601, %v3762
    %v3779 = vpack.c.b16 %v3603, %v3763
    %v3780 = vrot.slane %v3764, 1
    %v3781 = vrot.slane %v3765, 1
    %v3782 = vrot.slane %v3766, 1
    %v3783 = vrot.slane %v3767, 1
    %v3784 = vrot.slane %v3768, 1
    %v3785 = vrot.slane %v3769, 1
    %v3786 = vrot.slane %v3770, 1
    %v3787 = vrot.slane %v3771, 1
    %v3788 = vrot.slane %v3772, 1
    %v3789 = vrot.slane %v3773, 1
    %v3790 = vrot.slane %v3774, 1
    %v3791 = vrot.slane %v3775, 1
    %v3792 = vrot.slane %v3776, 1
    %v3793 = vrot.slane %v3777, 1
    %v3794 = vrot.slane %v3778, 1
    %v3795 = vrot.slane %v3779, 1
    %v3796 = vunpack.c.l.b16 %v3626
    %v3797 = vunpack.c.l.b16 %v3780
    %v3798 = vunpack.c.l.b16 %v3633
    %v3799 = vunpack.c.l.b16 %v3781
    %v3800 = vunpack.c.l.b16 %v3640
    %v3801 = vunpack.c.l.b16 %v3782
    %v3802 = vunpack.c.l.b16 %v3647
    %v3803 = vunpack.c.l.b16 %v3783
    %v3804 = vunpack.c.l.b16 %v3654
    %v3805 = vunpack.c.l.b16 %v3784
    %v3806 = vunpack.c.l.b16 %v3661
    %v3807 = vunpack.c.l.b16 %v3785
    %v3808 = vunpack.c.l.b16 %v3668
    %v3809 = vunpack.c.l.b16 %v3786
    %v3810 = vunpack.c.l.b16 %v3675
    %v3811 = vunpack.c.l.b16 %v3787
    %v3812 = vunpack.c.l.b16 %v3682
    %v3813 = vunpack.c.l.b16 %v3788
    %v3814 = vunpack.c.l.b16 %v3689
    %v3815 = vunpack.c.l.b16 %v3789
    %v3816 = vunpack.c.l.b16 %v3696
    %v3817 = vunpack.c.l.b16 %v3790
    %v3818 = vunpack.c.l.b16 %v3703
    %v3819 = vunpack.c.l.b16 %v3791
    %v3820 = vunpack.c.l.b16 %v3710
    %v3821 = vunpack.c.l.b16 %v3792
    %v3822 = vunpack.c.l.b16 %v3717
    %v3823 = vunpack.c.l.b16 %v3793
    %v3824 = vunpack.c.l.b16 %v3724
    %v3825 = vunpack.c.l.b16 %v3794
    %v3826 = vunpack.c.l.b16 %v3731
    %v3827 = vunpack.c.l.b16 %v3795
    %v3828 = vld [vmem:[#allocation8 + $0x180] sm:$0xff]
    %v3829 = vld [vmem:[#allocation8 + $0x188] sm:$0xff]
    %v3830 = vld [vmem:[#allocation8 + $0x190] sm:$0xff]
    %v3831 = vld [vmem:[#allocation8 + $0x198] sm:$0xff]
    %v3832 = vld [vmem:[#allocation8 + $0x1a0] sm:$0xff]
    %v3833 = vld [vmem:[#allocation8 + $0x1a8] sm:$0xff]
    %v3834 = vld [vmem:[#allocation8 + $0x1b0] sm:$0xff]
    %v3835 = vld [vmem:[#allocation8 + $0x1b8] sm:$0xff]
    %v3836 = vld [vmem:[#allocation8 + $0x1c0] sm:$0xff]
    %v3837 = vld [vmem:[#allocation8 + $0x1c8] sm:$0xff]
    %v3838 = vld [vmem:[#allocation8 + $0x1d0] sm:$0xff]
    %v3839 = vld [vmem:[#allocation8 + $0x1d8] sm:$0xff]
    %v3840 = vld [vmem:[#allocation8 + $0x1e0] sm:$0xff]
    %v3841 = vld [vmem:[#allocation8 + $0x1e8] sm:$0xff]
    %v3842 = vld [vmem:[#allocation8 + $0x1f0] sm:$0xff]
    %v3843 = vld [vmem:[#allocation8 + $0x1f8] sm:$0xff]
    %v3844 = vld [vmem:[#allocation8 + $0x200] sm:$0xff]
    %v3845 = vld [vmem:[#allocation8 + $0x208] sm:$0xff]
    %v3846 = vld [vmem:[#allocation8 + $0x210] sm:$0xff]
    %v3847 = vld [vmem:[#allocation8 + $0x218] sm:$0xff]
    %v3848 = vld [vmem:[#allocation8 + $0x220] sm:$0xff]
    %v3849 = vld [vmem:[#allocation8 + $0x228] sm:$0xff]
    %v3850 = vld [vmem:[#allocation8 + $0x230] sm:$0xff]
    %v3851 = vld [vmem:[#allocation8 + $0x238] sm:$0xff]
    %v3852 = vld [vmem:[#allocation8 + $0x240] sm:$0xff]
    %v3853 = vld [vmem:[#allocation8 + $0x248] sm:$0xff]
    %v3854 = vld [vmem:[#allocation8 + $0x250] sm:$0xff]
    %v3855 = vld [vmem:[#allocation8 + $0x258] sm:$0xff]
    %v3856 = vld [vmem:[#allocation8 + $0x260] sm:$0xff]
    %v3857 = vld [vmem:[#allocation8 + $0x268] sm:$0xff]
    %v3858 = vld [vmem:[#allocation8 + $0x270] sm:$0xff]
    %v3859 = vld [vmem:[#allocation8 + $0x278] sm:$0xff]
    %v3860 = vld [vmem:[#allocation8 + $0x280] sm:$0xff]
    %v3861 = vld [vmem:[#allocation8 + $0x288] sm:$0xff]
    %v3862 = vld [vmem:[#allocation8 + $0x290] sm:$0xff]
    %v3863 = vld [vmem:[#allocation8 + $0x298] sm:$0xff]
    %v3864 = vld [vmem:[#allocation8 + $0x2a0] sm:$0xff]
    %v3865 = vld [vmem:[#allocation8 + $0x2a8] sm:$0xff]
    %v3866 = vld [vmem:[#allocation8 + $0x2b0] sm:$0xff]
    %v3867 = vld [vmem:[#allocation8 + $0x2b8] sm:$0xff]
    %v3868 = vld [vmem:[#allocation8 + $0x2c0] sm:$0xff]
    %v3869 = vld [vmem:[#allocation8 + $0x2c8] sm:$0xff]
    %v3870 = vld [vmem:[#allocation8 + $0x2d0] sm:$0xff]
    %v3871 = vld [vmem:[#allocation8 + $0x2d8] sm:$0xff]
    %v3872 = vld [vmem:[#allocation8 + $0x2e0] sm:$0xff]
    %v3873 = vld [vmem:[#allocation8 + $0x2e8] sm:$0xff]
    %v3874 = vld [vmem:[#allocation8 + $0x2f0] sm:$0xff]
    %v3875 = vld [vmem:[#allocation8 + $0x2f8] sm:$0xff]
    %v3876 = vpack.c.b16 %v3574, %v3572
    %v3877 = vpack.c.b16 %v3798, %v3796
    %v3878 = vpack.c.b16 %v3799, %v3797
    %v3879 = vpack.c.b16 %v3578, %v3576
    %v3880 = vpack.c.b16 %v3802, %v3800
    %v3881 = vpack.c.b16 %v3803, %v3801
    %v3882 = vpack.c.b16 %v3582, %v3580
    %v3883 = vpack.c.b16 %v3806, %v3804
    %v3884 = vpack.c.b16 %v3807, %v3805
    %v3885 = vpack.c.b16 %v3586, %v3584
    %v3886 = vpack.c.b16 %v3810, %v3808
    %v3887 = vpack.c.b16 %v3811, %v3809
    %v3888 = vpack.c.b16 %v3590, %v3588
    %v3889 = vpack.c.b16 %v3814, %v3812
    %v3890 = vpack.c.b16 %v3815, %v3813
    %v3891 = vpack.c.b16 %v3594, %v3592
    %v3892 = vpack.c.b16 %v3818, %v3816
    %v3893 = vpack.c.b16 %v3819, %v3817
    %v3894 = vpack.c.b16 %v3598, %v3596
    %v3895 = vpack.c.b16 %v3822, %v3820
    %v3896 = vpack.c.b16 %v3823, %v3821
    %v3897 = vpack.c.b16 %v3602, %v3600
    %v3898 = vpack.c.b16 %v3826, %v3824
    %v3899 = vpack.c.b16 %v3827, %v3825
    %v3972 = vunpack.c.l.b16 %v3828
    %v3973 = vunpack.c.h.b16 %v3828
    %v3974 = vunpack.c.l.b16 %v3829
    %v3975 = vunpack.c.h.b16 %v3829
    %v3976 = vunpack.c.l.b16 %v3830
    %v3977 = vunpack.c.h.b16 %v3830
    %v3978 = vunpack.c.l.b16 %v3831
    %v3979 = vunpack.c.h.b16 %v3831
    %v3980 = vunpack.c.l.b16 %v3832
    %v3981 = vunpack.c.h.b16 %v3832
    %v3982 = vunpack.c.l.b16 %v3833
    %v3983 = vunpack.c.h.b16 %v3833
    %v3984 = vunpack.c.l.b16 %v3834
    %v3985 = vunpack.c.h.b16 %v3834
    %v3986 = vunpack.c.l.b16 %v3835
    %v3987 = vunpack.c.h.b16 %v3835
    %v3988 = vunpack.c.l.b16 %v3836
    %v3989 = vunpack.c.h.b16 %v3836
    %v3990 = vunpack.c.l.b16 %v3837
    %v3991 = vunpack.c.h.b16 %v3837
    %v3992 = vunpack.c.l.b16 %v3838
    %v3993 = vunpack.c.h.b16 %v3838
    %v3994 = vunpack.c.l.b16 %v3839
    %v3995 = vunpack.c.h.b16 %v3839
    %v3996 = vunpack.c.l.b16 %v3840
    %v3997 = vunpack.c.h.b16 %v3840
    %v3998 = vunpack.c.l.b16 %v3841
    %v3999 = vunpack.c.h.b16 %v3841
    %v4000 = vunpack.c.l.b16 %v3842
    %v4001 = vunpack.c.h.b16 %v3842
    %v4002 = vunpack.c.l.b16 %v3843
    %v4003 = vunpack.c.h.b16 %v3843
    %v4004 = vunpack.c.l.b16 %v3844
    %v4005 = vunpack.c.h.b16 %v3844
    %v4006 = vunpack.c.l.b16 %v3845
    %v4007 = vunpack.c.h.b16 %v3845
    %v4008 = vunpack.c.l.b16 %v3846
    %v4009 = vunpack.c.h.b16 %v3846
    %v4010 = vunpack.c.l.b16 %v3847
    %v4011 = vunpack.c.h.b16 %v3847
    %v4012 = vunpack.c.l.b16 %v3848
    %v4013 = vunpack.c.h.b16 %v3848
    %v4014 = vunpack.c.l.b16 %v3849
    %v4015 = vunpack.c.h.b16 %v3849
    %v4016 = vunpack.c.l.b16 %v3850
    %v4017 = vunpack.c.h.b16 %v3850
    %v4018 = vunpack.c.l.b16 %v3851
    %v4019 = vunpack.c.h.b16 %v3851
    %v4020 = vunpack.c.l.b16 %v3852
    %v4021 = vunpack.c.h.b16 %v3852
    %v4022 = vunpack.c.l.b16 %v3853
    %v4023 = vunpack.c.h.b16 %v3853
    %v4024 = vunpack.c.l.b16 %v3854
    %v4025 = vunpack.c.h.b16 %v3854
    %v4026 = vunpack.c.l.b16 %v3855
    %v4027 = vunpack.c.h.b16 %v3855
    %v4028 = vunpack.c.l.b16 %v3856
    %v4029 = vunpack.c.h.b16 %v3856
    %v4030 = vunpack.c.l.b16 %v3857
    %v4031 = vunpack.c.h.b16 %v3857
    %v4032 = vunpack.c.l.b16 %v3858
    %v4033 = vunpack.c.h.b16 %v3858
    %v4034 = vunpack.c.l.b16 %v3859
    %v4035 = vunpack.c.h.b16 %v3859
    %v4036 = vunpack.c.l.b16 %v3860
    %v4037 = vunpack.c.h.b16 %v3860
    %v4038 = vunpack.c.l.b16 %v3861
    %v4039 = vunpack.c.h.b16 %v3861
    %v4040 = vunpack.c.l.b16 %v3862
    %v4041 = vunpack.c.h.b16 %v3862
    %v4042 = vunpack.c.l.b16 %v3863
    %v4043 = vunpack.c.h.b16 %v3863
    %v4044 = vunpack.c.l.b16 %v3864
    %v4045 = vunpack.c.h.b16 %v3864
    %v4046 = vunpack.c.l.b16 %v3865
    %v4047 = vunpack.c.h.b16 %v3865
    %v4048 = vunpack.c.l.b16 %v3866
    %v4049 = vunpack.c.h.b16 %v3866
    %v4050 = vunpack.c.l.b16 %v3867
    %v4051 = vunpack.c.h.b16 %v3867
    %v4052 = vunpack.c.l.b16 %v3868
    %v4053 = vunpack.c.h.b16 %v3868
    %v4054 = vunpack.c.l.b16 %v3869
    %v4055 = vunpack.c.h.b16 %v3869
    %v4056 = vunpack.c.l.b16 %v3870
    %v4057 = vunpack.c.h.b16 %v3870
    %v4058 = vunpack.c.l.b16 %v3871
    %v4059 = vunpack.c.h.b16 %v3871
    %v4060 = vunpack.c.l.b16 %v3872
    %v4061 = vunpack.c.h.b16 %v3872
    %v4062 = vunpack.c.l.b16 %v3873
    %v4063 = vunpack.c.h.b16 %v3873
    %v4064 = vunpack.c.l.b16 %v3874
    %v4065 = vunpack.c.h.b16 %v3874
    %v4066 = vunpack.c.l.b16 %v3875
    %v4067 = vunpack.c.h.b16 %v3875
    %v4068 = vpack.c.b16 %v3974, %v3972
    %v4069 = vpack.c.b16 %v3975, %v3973
    %v4070 = vpack.c.b16 %v3978, %v3976
    %v4071 = vpack.c.b16 %v3979, %v3977
    %v4072 = vpack.c.b16 %v3982, %v3980
    %v4073 = vpack.c.b16 %v3983, %v3981
    %v4074 = vpack.c.b16 %v3986, %v3984
    %v4075 = vpack.c.b16 %v3987, %v3985
    %v4076 = vpack.c.b16 %v3990, %v3988
    %v4077 = vpack.c.b16 %v3991, %v3989
    %v4078 = vpack.c.b16 %v3994, %v3992
    %v4079 = vpack.c.b16 %v3995, %v3993
    %v4080 = vpack.c.b16 %v3998, %v3996
    %v4081 = vpack.c.b16 %v3999, %v3997
    %v4082 = vpack.c.b16 %v4002, %v4000
    %v4083 = vpack.c.b16 %v4003, %v4001
    %v4084 = vpack.c.b16 %v4006, %v4004
    %v4085 = vpack.c.b16 %v4007, %v4005
    %v4086 = vpack.c.b16 %v4010, %v4008
    %v4087 = vpack.c.b16 %v4011, %v4009
    %v4088 = vpack.c.b16 %v4014, %v4012
    %v4089 = vpack.c.b16 %v4015, %v4013
    %v4090 = vpack.c.b16 %v4018, %v4016
    %v4091 = vpack.c.b16 %v4019, %v4017
    %v4092 = vpack.c.b16 %v4022, %v4020
    %v4093 = vpack.c.b16 %v4023, %v4021
    %v4094 = vpack.c.b16 %v4026, %v4024
    %v4095 = vpack.c.b16 %v4027, %v4025
    %v4096 = vpack.c.b16 %v4030, %v4028
    %v4097 = vpack.c.b16 %v4031, %v4029
    %v4098 = vpack.c.b16 %v4034, %v4032
    %v4099 = vpack.c.b16 %v4035, %v4033
    %v4100 = vpack.c.b16 %v4038, %v4036
    %v4101 = vpack.c.b16 %v4039, %v4037
    %v4102 = vpack.c.b16 %v4042, %v4040
    %v4103 = vpack.c.b16 %v4043, %v4041
    %v4104 = vpack.c.b16 %v4046, %v4044
    %v4105 = vpack.c.b16 %v4047, %v4045
    %v4106 = vpack.c.b16 %v4050, %v4048
    %v4107 = vpack.c.b16 %v4051, %v4049
    %v4108 = vpack.c.b16 %v4054, %v4052
    %v4109 = vpack.c.b16 %v4055, %v4053
    %v4110 = vpack.c.b16 %v4058, %v4056
    %v4111 = vpack.c.b16 %v4059, %v4057
    %v4112 = vpack.c.b16 %v4062, %v4060
    %v4113 = vpack.c.b16 %v4063, %v4061
    %v4114 = vpack.c.b16 %v4066, %v4064
    %v4115 = vpack.c.b16 %v4067, %v4065
    %4164 = vmatprep.subr.bf16.mxu0 %v4069
    %4165 = vmatpush1.bf16.msra.mxu0 %v4068
    %4166 = vmatprep.subr.bf16.mxu0 %v4071
    %4167 = vmatpush1.bf16.msra.mxu0 %v4070
    %4168 = vmatprep.subr.bf16.mxu0 %v4073
    %4169 = vmatpush1.bf16.msra.mxu0 %v4072
    %4170 = vmatprep.subr.bf16.mxu0 %v4075
    %4171 = vmatpush1.bf16.msra.mxu0 %v4074
    %4172 = vmatprep.subr.bf16.mxu0 %v4077
    %4173 = vmatpush1.bf16.msra.mxu0 %v4076
    %4174 = vmatprep.subr.bf16.mxu0 %v4079
    %4175 = vmatpush1.bf16.msra.mxu0 %v4078
    %4176 = vmatprep.subr.bf16.mxu0 %v4081
    %4177 = vmatpush1.bf16.msra.mxu0 %v4080
    %4178 = vmatprep.subr.bf16.mxu0 %v4083
    %4179 = vmatpush1.bf16.msra.mxu0 %v4082
    %4180 = vmatprep.subr.bf16.mxu0 %v4085
    %4181 = vmatpush1.bf16.msra.mxu0 %v4084
    %4182 = vmatprep.subr.bf16.mxu0 %v4087
    %4183 = vmatpush1.bf16.msra.mxu0 %v4086
    %4184 = vmatprep.subr.bf16.mxu0 %v4089
    %4185 = vmatpush1.bf16.msra.mxu0 %v4088
    %4186 = vmatprep.subr.bf16.mxu0 %v4091
    %4187 = vmatpush1.bf16.msra.mxu0 %v4090
    %4188 = vmatprep.subr.bf16.mxu0 %v4093
    %4189 = vmatpush1.bf16.msra.mxu0 %v4092
    %4190 = vmatprep.subr.bf16.mxu0 %v4095
    %4191 = vmatpush1.bf16.msra.mxu0 %v4094
    %4192 = vmatprep.subr.bf16.mxu0 %v4097
    %4193 = vmatpush1.bf16.msra.mxu0 %v4096
    %4194 = vmatprep.subr.bf16.mxu0 %v4099
    %4195 = vmatpush1.bf16.msra.mxu0 %v4098
    %4196 = vmatprep.mubr.bf16.mxu0 %v3877
    %4197 = vmatmul.mubr.bf16.gmra.mrb[0].mxu0 %v3876
    %v4198 = vpop.f32.mrb[0].mxu0
    %v4199 = vadd.f32 0.0, %v4198
    %v4200 = vpop.f32.mrb[0].mxu0
    %v4201 = vadd.f32 0.0, %v4200
    %v4202 = vpop.f32.mrb[0].mxu0
    %v4203 = vadd.f32 0.0, %v4202
    %v4204 = vpop.f32.mrb[0].mxu0
    %v4205 = vadd.f32 0.0, %v4204
    %4206 = vmatprep.mubr.bf16.mxu0 %v3880
    %4207 = vmatmul.mubr.bf16.gmra.mrb[0].mxu0 %v3879
    %v4208 = vpop.f32.mrb[0].mxu0
    %v4209 = vadd.f32 0.0, %v4208
    %v4210 = vpop.f32.mrb[0].mxu0
    %v4211 = vadd.f32 0.0, %v4210
    %v4212 = vpop.f32.mrb[0].mxu0
    %v4213 = vadd.f32 0.0, %v4212
    %v4214 = vpop.f32.mrb[0].mxu0
    %v4215 = vadd.f32 0.0, %v4214
    %4216 = vmatprep.mubr.bf16.mxu0 %v3883
    %4217 = vmatmul.mubr.bf16.gmra.mrb[0].mxu0 %v3882
    %v4218 = vpop.f32.mrb[0].mxu0
    %v4219 = vadd.f32 0.0, %v4218
    %v4220 = vpop.f32.mrb[0].mxu0
    %v4221 = vadd.f32 0.0, %v4220
    %v4222 = vpop.f32.mrb[0].mxu0
    %v4223 = vadd.f32 0.0, %v4222
    %v4224 = vpop.f32.mrb[0].mxu0
    %v4225 = vadd.f32 0.0, %v4224
    %4226 = vmatprep.mubr.bf16.mxu0 %v3886
    %4227 = vmatmul.mubr.bf16.gmra.mrb[0].mxu0 %v3885
    %v4228 = vpop.f32.mrb[0].mxu0
    %v4229 = vadd.f32 0.0, %v4228
    %v4230 = vpop.f32.mrb[0].mxu0
    %v4231 = vadd.f32 0.0, %v4230
    %v4232 = vpop.f32.mrb[0].mxu0
    %v4233 = vadd.f32 0.0, %v4232
    %v4234 = vpop.f32.mrb[0].mxu0
    %v4235 = vadd.f32 0.0, %v4234
    %4236 = vmatprep.mubr.bf16.mxu0 %v3889
    %4237 = vmatmul.mubr.bf16.gmra.mrb[0].mxu0 %v3888
    %v4238 = vpop.f32.mrb[0].mxu0
    %v4239 = vadd.f32 0.0, %v4238
    %v4240 = vpop.f32.mrb[0].mxu0
    %v4241 = vadd.f32 0.0, %v4240
    %v4242 = vpop.f32.mrb[0].mxu0
    %v4243 = vadd.f32 0.0, %v4242
    %v4244 = vpop.f32.mrb[0].mxu0
    %v4245 = vadd.f32 0.0, %v4244
    %4246 = vmatprep.mubr.bf16.mxu0 %v3892
    %4247 = vmatmul.mubr.bf16.gmra.mrb[0].mxu0 %v3891
    %v4248 = vpop.f32.mrb[0].mxu0
    %v4249 = vadd.f32 0.0, %v4248
    %v4250 = vpop.f32.mrb[0].mxu0
    %v4251 = vadd.f32 0.0, %v4250
    %v4252 = vpop.f32.mrb[0].mxu0
    %v4253 = vadd.f32 0.0, %v4252
    %v4254 = vpop.f32.mrb[0].mxu0
    %v4255 = vadd.f32 0.0, %v4254
    %4256 = vmatprep.mubr.bf16.mxu0 %v3895
    %4257 = vmatmul.mubr.bf16.gmra.mrb[0].mxu0 %v3894
    %v4258 = vpop.f32.mrb[0].mxu0
    %v4259 = vadd.f32 0.0, %v4258
    %v4260 = vpop.f32.mrb[0].mxu0
    %v4261 = vadd.f32 0.0, %v4260
    %v4262 = vpop.f32.mrb[0].mxu0
    %v4263 = vadd.f32 0.0, %v4262
    %v4264 = vpop.f32.mrb[0].mxu0
    %v4265 = vadd.f32 0.0, %v4264
    %4266 = vmatprep.mubr.bf16.mxu0 %v3898
    %4267 = vmatmul.mubr.bf16.gmra.mrb[0].mxu0 %v3897
    %v4268 = vpop.f32.mrb[0].mxu0
    %v4269 = vadd.f32 0.0, %v4268
    %v4270 = vpop.f32.mrb[0].mxu0
    %v4271 = vadd.f32 0.0, %v4270
    %v4272 = vpop.f32.mrb[0].mxu0
    %v4273 = vadd.f32 0.0, %v4272
    %v4274 = vpop.f32.mrb[0].mxu0
    %v4275 = vadd.f32 0.0, %v4274
    %4276 = vdwg.mxu0
    %4277 = vmatprep.subr.bf16.mxu0 %v4101
    %4278 = vmatpush1.bf16.msra.mxu0 %v4100
    %4279 = vmatprep.subr.bf16.mxu0 %v4103
    %4280 = vmatpush1.bf16.msra.mxu0 %v4102
    %4281 = vmatprep.subr.bf16.mxu0 %v4105
    %4282 = vmatpush1.bf16.msra.mxu0 %v4104
    %4283 = vmatprep.subr.bf16.mxu0 %v4107
    %4284 = vmatpush1.bf16.msra.mxu0 %v4106
    %4285 = vmatprep.subr.bf16.mxu0 %v4109
    %4286 = vmatpush1.bf16.msra.mxu0 %v4108
    %4287 = vmatprep.subr.bf16.mxu0 %v4111
    %4288 = vmatpush1.bf16.msra.mxu0 %v4110
    %4289 = vmatprep.subr.bf16.mxu0 %v4113
    %4290 = vmatpush1.bf16.msra.mxu0 %v4112
    %4291 = vmatprep.subr.bf16.mxu0 %v4115
    %4292 = vmatpush1.bf16.msra.mxu0 %v4114
    %4293 = vmatprep.subr.bf16.mxu0 0
    %4294 = vmatpush1.bf16.msra.mxu0 0
    %4295 = vmatprep.subr.bf16.mxu0 0
    %4296 = vmatpush1.bf16.msra.mxu0 0
    %4297 = vmatprep.subr.bf16.mxu0 0
    %4298 = vmatpush1.bf16.msra.mxu0 0
    %4299 = vmatprep.subr.bf16.mxu0 0
    %4300 = vmatpush1.bf16.msra.mxu0 0
    %4301 = vmatprep.subr.bf16.mxu0 0
    %4302 = vmatpush1.bf16.msra.mxu0 0
    %4303 = vmatprep.subr.bf16.mxu0 0
    %4304 = vmatpush1.bf16.msra.mxu0 0
    %4305 = vmatprep.subr.bf16.mxu0 0
    %4306 = vmatpush1.bf16.msra.mxu0 0
    %4307 = vmatprep.subr.bf16.mxu0 0
    %4308 = vmatpush1.bf16.msra.mxu0 0
    %4309 = vmatprep.mubr.bf16.mxu0 0
    %4310 = vmatmul.mubr.bf16.gmra.mrb[0].mxu0 %v3878
    %v4311 = vpop.f32.mrb[0].mxu0
    %v4312 = vadd.f32 %v4199, %v4311
    %v4313 = vpop.f32.mrb[0].mxu0
    %v4314 = vadd.f32 %v4201, %v4313
    %v4315 = vpop.f32.mrb[0].mxu0
    %v4316 = vadd.f32 %v4203, %v4315
    %v4317 = vpop.f32.mrb[0].mxu0
    %v4318 = vadd.f32 %v4205, %v4317
    %4319 = vmatprep.mubr.bf16.mxu0 0
    %4320 = vmatmul.mubr.bf16.gmra.mrb[0].mxu0 %v3881
    %v4321 = vpop.f32.mrb[0].mxu0
    %v4322 = vadd.f32 %v4209, %v4321
    %v4323 = vpop.f32.mrb[0].mxu0
    %v4324 = vadd.f32 %v4211, %v4323
    %v4325 = vpop.f32.mrb[0].mxu0
    %v4326 = vadd.f32 %v4213, %v4325
    %v4327 = vpop.f32.mrb[0].mxu0
    %v4328 = vadd.f32 %v4215, %v4327
    %4329 = vmatprep.mubr.bf16.mxu0 0
    %4330 = vmatmul.mubr.bf16.gmra.mrb[0].mxu0 %v3884
    %v4331 = vpop.f32.mrb[0].mxu0
    %v4332 = vadd.f32 %v4219, %v4331
    %v4333 = vpop.f32.mrb[0].mxu0
    %v4334 = vadd.f32 %v4221, %v4333
    %v4335 = vpop.f32.mrb[0].mxu0
    %v4336 = vadd.f32 %v4223, %v4335
    %v4337 = vpop.f32.mrb[0].mxu0
    %v4338 = vadd.f32 %v4225, %v4337
    %4339 = vmatprep.mubr.bf16.mxu0 0
    %4340 = vmatmul.mubr.bf16.gmra.mrb[0].mxu0 %v3887
    %v4341 = vpop.f32.mrb[0].mxu0
    %v4342 = vadd.f32 %v4229, %v4341
    %v4343 = vpop.f32.mrb[0].mxu0
    %v4344 = vadd.f32 %v4231, %v4343
    %v4345 = vpop.f32.mrb[0].mxu0
    %v4346 = vadd.f32 %v4233, %v4345
    %v4347 = vpop.f32.mrb[0].mxu0
    %v4348 = vadd.f32 %v4235, %v4347
    %4349 = vmatprep.mubr.bf16.mxu0 0
    %4350 = vmatmul.mubr.bf16.gmra.mrb[0].mxu0 %v3890
    %v4351 = vpop.f32.mrb[0].mxu0
    %v4352 = vadd.f32 %v4239, %v4351
    %v4353 = vpop.f32.mrb[0].mxu0
    %v4354 = vadd.f32 %v4241, %v4353
    %v4355 = vpop.f32.mrb[0].mxu0
    %v4356 = vadd.f32 %v4243, %v4355
    %v4357 = vpop.f32.mrb[0].mxu0
    %v4358 = vadd.f32 %v4245, %v4357
    %4359 = vmatprep.mubr.bf16.mxu0 0
    %4360 = vmatmul.mubr.bf16.gmra.mrb[0].mxu0 %v3893
    %v4361 = vpop.f32.mrb[0].mxu0
    %v4362 = vadd.f32 %v4249, %v4361
    %v4363 = vpop.f32.mrb[0].mxu0
    %v4364 = vadd.f32 %v4251, %v4363
    %v4365 = vpop.f32.mrb[0].mxu0
    %v4366 = vadd.f32 %v4253, %v4365
    %v4367 = vpop.f32.mrb[0].mxu0
    %v4368 = vadd.f32 %v4255, %v4367
    %4369 = vmatprep.mubr.bf16.mxu0 0
    %4370 = vmatmul.mubr.bf16.gmra.mrb[0].mxu0 %v3896
    %v4371 = vpop.f32.mrb[0].mxu0
    %v4372 = vadd.f32 %v4259, %v4371
    %v4373 = vpop.f32.mrb[0].mxu0
    %v4374 = vadd.f32 %v4261, %v4373
    %v4375 = vpop.f32.mrb[0].mxu0
    %v4376 = vadd.f32 %v4263, %v4375
    %v4377 = vpop.f32.mrb[0].mxu0
    %v4378 = vadd.f32 %v4265, %v4377
    %4379 = vmatprep.mubr.bf16.mxu0 0
    %4380 = vmatmul.mubr.bf16.gmra.mrb[0].mxu0 %v3899
    %v4381 = vpop.f32.mrb[0].mxu0
    %v4382 = vadd.f32 %v4269, %v4381
    %v4383 = vpop.f32.mrb[0].mxu0
    %v4384 = vadd.f32 %v4271, %v4383
    %v4385 = vpop.f32.mrb[0].mxu0
    %v4386 = vadd.f32 %v4273, %v4385
    %v4387 = vpop.f32.mrb[0].mxu0
    %v4388 = vadd.f32 %v4275, %v4387
    %4389 = vdwg.mxu0
    %v4390 = vpack.c.b16 %v3190, %v3188
    %v4391 = vpack.c.b16 %v3414, %v3412
    %v4392 = vpack.c.b16 %v3415, %v3413
    %v4393 = vpack.c.b16 %v3194, %v3192
    %v4394 = vpack.c.b16 %v3418, %v3416
    %v4395 = vpack.c.b16 %v3419, %v3417
    %v4396 = vpack.c.b16 %v3198, %v3196
    %v4397 = vpack.c.b16 %v3422, %v3420
    %v4398 = vpack.c.b16 %v3423, %v3421
    %v4399 = vpack.c.b16 %v3202, %v3200
    %v4400 = vpack.c.b16 %v3426, %v3424
    %v4401 = vpack.c.b16 %v3427, %v3425
    %v4402 = vpack.c.b16 %v3206, %v3204
    %v4403 = vpack.c.b16 %v3430, %v3428
    %v4404 = vpack.c.b16 %v3431, %v3429
    %v4405 = vpack.c.b16 %v3210, %v3208
    %v4406 = vpack.c.b16 %v3434, %v3432
    %v4407 = vpack.c.b16 %v3435, %v3433
    %v4408 = vpack.c.b16 %v3214, %v3212
    %v4409 = vpack.c.b16 %v3438, %v3436
    %v4410 = vpack.c.b16 %v3439, %v3437
    %v4411 = vpack.c.b16 %v3218, %v3216
    %v4412 = vpack.c.b16 %v3442, %v3440
    %v4413 = vpack.c.b16 %v3443, %v3441
    %v4486 = vunpack.c.l.b16 %v3444
    %v4487 = vunpack.c.h.b16 %v3444
    %v4488 = vunpack.c.l.b16 %v3445
    %v4489 = vunpack.c.h.b16 %v3445
    %v4490 = vunpack.c.l.b16 %v3446
    %v4491 = vunpack.c.h.b16 %v3446
    %v4492 = vunpack.c.l.b16 %v3447
    %v4493 = vunpack.c.h.b16 %v3447
    %v4494 = vunpack.c.l.b16 %v3448
    %v4495 = vunpack.c.h.b16 %v3448
    %v4496 = vunpack.c.l.b16 %v3449
    %v4497 = vunpack.c.h.b16 %v3449
    %v4498 = vunpack.c.l.b16 %v3450
    %v4499 = vunpack.c.h.b16 %v3450
    %v4500 = vunpack.c.l.b16 %v3451
    %v4501 = vunpack.c.h.b16 %v3451
    %v4502 = vunpack.c.l.b16 %v3452
    %v4503 = vunpack.c.h.b16 %v3452
    %v4504 = vunpack.c.l.b16 %v3453
    %v4505 = vunpack.c.h.b16 %v3453
    %v4506 = vunpack.c.l.b16 %v3454
    %v4507 = vunpack.c.h.b16 %v3454
    %v4508 = vunpack.c.l.b16 %v3455
    %v4509 = vunpack.c.h.b16 %v3455
    %v4510 = vunpack.c.l.b16 %v3456
    %v4511 = vunpack.c.h.b16 %v3456
    %v4512 = vunpack.c.l.b16 %v3457
    %v4513 = vunpack.c.h.b16 %v3457
    %v4514 = vunpack.c.l.b16 %v3458
    %v4515 = vunpack.c.h.b16 %v3458
    %v4516 = vunpack.c.l.b16 %v3459
    %v4517 = vunpack.c.h.b16 %v3459
    %v4518 = vunpack.c.l.b16 %v3460
    %v4519 = vunpack.c.h.b16 %v3460
    %v4520 = vunpack.c.l.b16 %v3461
    %v4521 = vunpack.c.h.b16 %v3461
    %v4522 = vunpack.c.l.b16 %v3462
    %v4523 = vunpack.c.h.b16 %v3462
    %v4524 = vunpack.c.l.b16 %v3463
    %v4525 = vunpack.c.h.b16 %v3463
    %v4526 = vunpack.c.l.b16 %v3464
    %v4527 = vunpack.c.h.b16 %v3464
    %v4528 = vunpack.c.l.b16 %v3465
    %v4529 = vunpack.c.h.b16 %v3465
    %v4530 = vunpack.c.l.b16 %v3466
    %v4531 = vunpack.c.h.b16 %v3466
    %v4532 = vunpack.c.l.b16 %v3467
    %v4533 = vunpack.c.h.b16 %v3467
    %v4534 = vunpack.c.l.b16 %v3468
    %v4535 = vunpack.c.h.b16 %v3468
    %v4536 = vunpack.c.l.b16 %v3469
    %v4537 = vunpack.c.h.b16 %v3469
    %v4538 = vunpack.c.l.b16 %v3470
    %v4539 = vunpack.c.h.b16 %v3470
    %v4540 = vunpack.c.l.b16 %v3471
    %v4541 = vunpack.c.h.b16 %v3471
    %v4542 = vunpack.c.l.b16 %v3472
    %v4543 = vunpack.c.h.b16 %v3472
    %v4544 = vunpack.c.l.b16 %v3473
    %v4545 = vunpack.c.h.b16 %v3473
    %v4546 = vunpack.c.l.b16 %v3474
    %v4547 = vunpack.c.h.b16 %v3474
    %v4548 = vunpack.c.l.b16 %v3475
    %v4549 = vunpack.c.h.b16 %v3475
    %v4550 = vunpack.c.l.b16 %v3476
    %v4551 = vunpack.c.h.b16 %v3476
    %v4552 = vunpack.c.l.b16 %v3477
    %v4553 = vunpack.c.h.b16 %v3477
    %v4554 = vunpack.c.l.b16 %v3478
    %v4555 = vunpack.c.h.b16 %v3478
    %v4556 = vunpack.c.l.b16 %v3479
    %v4557 = vunpack.c.h.b16 %v3479
    %v4558 = vunpack.c.l.b16 %v3480
    %v4559 = vunpack.c.h.b16 %v3480
    %v4560 = vunpack.c.l.b16 %v3481
    %v4561 = vunpack.c.h.b16 %v3481
    %v4562 = vunpack.c.l.b16 %v3482
    %v4563 = vunpack.c.h.b16 %v3482
    %v4564 = vunpack.c.l.b16 %v3483
    %v4565 = vunpack.c.h.b16 %v3483
    %v4566 = vunpack.c.l.b16 %v3484
    %v4567 = vunpack.c.h.b16 %v3484
    %v4568 = vunpack.c.l.b16 %v3485
    %v4569 = vunpack.c.h.b16 %v3485
    %v4570 = vunpack.c.l.b16 %v3486
    %v4571 = vunpack.c.h.b16 %v3486
    %v4572 = vunpack.c.l.b16 %v3487
    %v4573 = vunpack.c.h.b16 %v3487
    %v4574 = vunpack.c.l.b16 %v3488
    %v4575 = vunpack.c.h.b16 %v3488
    %v4576 = vunpack.c.l.b16 %v3489
    %v4577 = vunpack.c.h.b16 %v3489
    %v4578 = vunpack.c.l.b16 %v3490
    %v4579 = vunpack.c.h.b16 %v3490
    %v4580 = vunpack.c.l.b16 %v3491
    %v4581 = vunpack.c.h.b16 %v3491
    %v4582 = vpack.c.b16 %v4488, %v4486
    %v4583 = vpack.c.b16 %v4489, %v4487
    %v4584 = vpack.c.b16 %v4492, %v4490
    %v4585 = vpack.c.b16 %v4493, %v4491
    %v4586 = vpack.c.b16 %v4496, %v4494
    %v4587 = vpack.c.b16 %v4497, %v4495
    %v4588 = vpack.c.b16 %v4500, %v4498
    %v4589 = vpack.c.b16 %v4501, %v4499
    %v4590 = vpack.c.b16 %v4504, %v4502
    %v4591 = vpack.c.b16 %v4505, %v4503
    %v4592 = vpack.c.b16 %v4508, %v4506
    %v4593 = vpack.c.b16 %v4509, %v4507
    %v4594 = vpack.c.b16 %v4512, %v4510
    %v4595 = vpack.c.b16 %v4513, %v4511
    %v4596 = vpack.c.b16 %v4516, %v4514
    %v4597 = vpack.c.b16 %v4517, %v4515
    %v4598 = vpack.c.b16 %v4520, %v4518
    %v4599 = vpack.c.b16 %v4521, %v4519
    %v4600 = vpack.c.b16 %v4524, %v4522
    %v4601 = vpack.c.b16 %v4525, %v4523
    %v4602 = vpack.c.b16 %v4528, %v4526
    %v4603 = vpack.c.b16 %v4529, %v4527
    %v4604 = vpack.c.b16 %v4532, %v4530
    %v4605 = vpack.c.b16 %v4533, %v4531
    %v4606 = vpack.c.b16 %v4536, %v4534
    %v4607 = vpack.c.b16 %v4537, %v4535
    %v4608 = vpack.c.b16 %v4540, %v4538
    %v4609 = vpack.c.b16 %v4541, %v4539
    %v4610 = vpack.c.b16 %v4544, %v4542
    %v4611 = vpack.c.b16 %v4545, %v4543
    %v4612 = vpack.c.b16 %v4548, %v4546
    %v4613 = vpack.c.b16 %v4549, %v4547
    %v4614 = vpack.c.b16 %v4552, %v4550
    %v4615 = vpack.c.b16 %v4553, %v4551
    %v4616 = vpack.c.b16 %v4556, %v4554
    %v4617 = vpack.c.b16 %v4557, %v4555
    %v4618 = vpack.c.b16 %v4560, %v4558
    %v4619 = vpack.c.b16 %v4561, %v4559
    %v4620 = vpack.c.b16 %v4564, %v4562
    %v4621 = vpack.c.b16 %v4565, %v4563
    %v4622 = vpack.c.b16 %v4568, %v4566
    %v4623 = vpack.c.b16 %v4569, %v4567
    %v4624 = vpack.c.b16 %v4572, %v4570
    %v4625 = vpack.c.b16 %v4573, %v4571
    %v4626 = vpack.c.b16 %v4576, %v4574
    %v4627 = vpack.c.b16 %v4577, %v4575
    %v4628 = vpack.c.b16 %v4580, %v4578
    %v4629 = vpack.c.b16 %v4581, %v4579
    %4678 = vmatprep.subr.bf16.mxu0 %v4583
    %4679 = vmatpush1.bf16.msra.mxu0 %v4582
    %4680 = vmatprep.subr.bf16.mxu0 %v4585
    %4681 = vmatpush1.bf16.msra.mxu0 %v4584
    %4682 = vmatprep.subr.bf16.mxu0 %v4587
    %4683 = vmatpush1.bf16.msra.mxu0 %v4586
    %4684 = vmatprep.subr.bf16.mxu0 %v4589
    %4685 = vmatpush1.bf16.msra.mxu0 %v4588
    %4686 = vmatprep.subr.bf16.mxu0 %v4591
    %4687 = vmatpush1.bf16.msra.mxu0 %v4590
    %4688 = vmatprep.subr.bf16.mxu0 %v4593
    %4689 = vmatpush1.bf16.msra.mxu0 %v4592
    %4690 = vmatprep.subr.bf16.mxu0 %v4595
    %4691 = vmatpush1.bf16.msra.mxu0 %v4594
    %4692 = vmatprep.subr.bf16.mxu0 %v4597
    %4693 = vmatpush1.bf16.msra.mxu0 %v4596
    %4694 = vmatprep.subr.bf16.mxu0 %v4599
    %4695 = vmatpush1.bf16.msra.mxu0 %v4598
    %4696 = vmatprep.subr.bf16.mxu0 %v4601
    %4697 = vmatpush1.bf16.msra.mxu0 %v4600
    %4698 = vmatprep.subr.bf16.mxu0 %v4603
    %4699 = vmatpush1.bf16.msra.mxu0 %v4602
    %4700 = vmatprep.subr.bf16.mxu0 %v4605
    %4701 = vmatpush1.bf16.msra.mxu0 %v4604
    %4702 = vmatprep.subr.bf16.mxu0 %v4607
    %4703 = vmatpush1.bf16.msra.mxu0 %v4606
    %4704 = vmatprep.subr.bf16.mxu0 %v4609
    %4705 = vmatpush1.bf16.msra.mxu0 %v4608
    %4706 = vmatprep.subr.bf16.mxu0 %v4611
    %4707 = vmatpush1.bf16.msra.mxu0 %v4610
    %4708 = vmatprep.subr.bf16.mxu0 %v4613
    %4709 = vmatpush1.bf16.msra.mxu0 %v4612
    %4710 = vmatprep.mubr.bf16.mxu0 %v4391
    %4711 = vmatmul.mubr.bf16.gmra.mrb[0].mxu0 %v4390
    %v4712 = vpop.f32.mrb[0].mxu0
    %v4713 = vadd.f32 %v4312, %v4712
    %v4714 = vpop.f32.mrb[0].mxu0
    %v4715 = vadd.f32 %v4314, %v4714
    %v4716 = vpop.f32.mrb[0].mxu0
    %v4717 = vadd.f32 %v4316, %v4716
    %v4718 = vpop.f32.mrb[0].mxu0
    %v4719 = vadd.f32 %v4318, %v4718
    %4720 = vmatprep.mubr.bf16.mxu0 %v4394
    %4721 = vmatmul.mubr.bf16.gmra.mrb[0].mxu0 %v4393
    %v4722 = vpop.f32.mrb[0].mxu0
    %v4723 = vadd.f32 %v4322, %v4722
    %v4724 = vpop.f32.mrb[0].mxu0
    %v4725 = vadd.f32 %v4324, %v4724
    %v4726 = vpop.f32.mrb[0].mxu0
    %v4727 = vadd.f32 %v4326, %v4726
    %v4728 = vpop.f32.mrb[0].mxu0
    %v4729 = vadd.f32 %v4328, %v4728
    %4730 = vmatprep.mubr.bf16.mxu0 %v4397
    %4731 = vmatmul.mubr.bf16.gmra.mrb[0].mxu0 %v4396
    %v4732 = vpop.f32.mrb[0].mxu0
    %v4733 = vadd.f32 %v4332, %v4732
    %v4734 = vpop.f32.mrb[0].mxu0
    %v4735 = vadd.f32 %v4334, %v4734
    %v4736 = vpop.f32.mrb[0].mxu0
    %v4737 = vadd.f32 %v4336, %v4736
    %v4738 = vpop.f32.mrb[0].mxu0
    %v4739 = vadd.f32 %v4338, %v4738
    %4740 = vmatprep.mubr.bf16.mxu0 %v4400
    %4741 = vmatmul.mubr.bf16.gmra.mrb[0].mxu0 %v4399
    %v4742 = vpop.f32.mrb[0].mxu0
    %v4743 = vadd.f32 %v4342, %v4742
    %v4744 = vpop.f32.mrb[0].mxu0
    %v4745 = vadd.f32 %v4344, %v4744
    %v4746 = vpop.f32.mrb[0].mxu0
    %v4747 = vadd.f32 %v4346, %v4746
    %v4748 = vpop.f32.mrb[0].mxu0
    %v4749 = vadd.f32 %v4348, %v4748
    %4750 = vmatprep.mubr.bf16.mxu0 %v4403
    %4751 = vmatmul.mubr.bf16.gmra.mrb[0].mxu0 %v4402
    %v4752 = vpop.f32.mrb[0].mxu0
    %v4753 = vadd.f32 %v4352, %v4752
    %v4754 = vpop.f32.mrb[0].mxu0
    %v4755 = vadd.f32 %v4354, %v4754
    %v4756 = vpop.f32.mrb[0].mxu0
    %v4757 = vadd.f32 %v4356, %v4756
    %v4758 = vpop.f32.mrb[0].mxu0
    %v4759 = vadd.f32 %v4358, %v4758
    %4760 = vmatprep.mubr.bf16.mxu0 %v4406
    %4761 = vmatmul.mubr.bf16.gmra.mrb[0].mxu0 %v4405
    %v4762 = vpop.f32.mrb[0].mxu0
    %v4763 = vadd.f32 %v4362, %v4762
    %v4764 = vpop.f32.mrb[0].mxu0
    %v4765 = vadd.f32 %v4364, %v4764
    %v4766 = vpop.f32.mrb[0].mxu0
    %v4767 = vadd.f32 %v4366, %v4766
    %v4768 = vpop.f32.mrb[0].mxu0
    %v4769 = vadd.f32 %v4368, %v4768
    %4770 = vmatprep.mubr.bf16.mxu0 %v4409
    %4771 = vmatmul.mubr.bf16.gmra.mrb[0].mxu0 %v4408
    %v4772 = vpop.f32.mrb[0].mxu0
    %v4773 = vadd.f32 %v4372, %v4772
    %v4774 = vpop.f32.mrb[0].mxu0
    %v4775 = vadd.f32 %v4374, %v4774
    %v4776 = vpop.f32.mrb[0].mxu0
    %v4777 = vadd.f32 %v4376, %v4776
    %v4778 = vpop.f32.mrb[0].mxu0
    %v4779 = vadd.f32 %v4378, %v4778
    %4780 = vmatprep.mubr.bf16.mxu0 %v4412
    %4781 = vmatmul.mubr.bf16.gmra.mrb[0].mxu0 %v4411
    %v4782 = vpop.f32.mrb[0].mxu0
    %v4783 = vadd.f32 %v4382, %v4782
    %v4784 = vpop.f32.mrb[0].mxu0
    %v4785 = vadd.f32 %v4384, %v4784
    %v4786 = vpop.f32.mrb[0].mxu0
    %v4787 = vadd.f32 %v4386, %v4786
    %v4788 = vpop.f32.mrb[0].mxu0
    %v4789 = vadd.f32 %v4388, %v4788
    %4790 = vdwg.mxu0
    %4791 = vmatprep.subr.bf16.mxu0 %v4615
    %4792 = vmatpush1.bf16.msra.mxu0 %v4614
    %4793 = vmatprep.subr.bf16.mxu0 %v4617
    %4794 = vmatpush1.bf16.msra.mxu0 %v4616
    %4795 = vmatprep.subr.bf16.mxu0 %v4619
    %4796 = vmatpush1.bf16.msra.mxu0 %v4618
    %4797 = vmatprep.subr.bf16.mxu0 %v4621
    %4798 = vmatpush1.bf16.msra.mxu0 %v4620
    %4799 = vmatprep.subr.bf16.mxu0 %v4623
    %4800 = vmatpush1.bf16.msra.mxu0 %v4622
    %4801 = vmatprep.subr.bf16.mxu0 %v4625
    %4802 = vmatpush1.bf16.msra.mxu0 %v4624
    %4803 = vmatprep.subr.bf16.mxu0 %v4627
    %4804 = vmatpush1.bf16.msra.mxu0 %v4626
    %4805 = vmatprep.subr.bf16.mxu0 %v4629
    %4806 = vmatpush1.bf16.msra.mxu0 %v4628
    %4807 = vmatprep.subr.bf16.mxu0 0
    %4808 = vmatpush1.bf16.msra.mxu0 0
    %4809 = vmatprep.subr.bf16.mxu0 0
    %4810 = vmatpush1.bf16.msra.mxu0 0
    %4811 = vmatprep.subr.bf16.mxu0 0
    %4812 = vmatpush1.bf16.msra.mxu0 0
    %4813 = vmatprep.subr.bf16.mxu0 0
    %4814 = vmatpush1.bf16.msra.mxu0 0
    %4815 = vmatprep.subr.bf16.mxu0 0
    %4816 = vmatpush1.bf16.msra.mxu0 0
    %4817 = vmatprep.subr.bf16.mxu0 0
    %4818 = vmatpush1.bf16.msra.mxu0 0
    %4819 = vmatprep.subr.bf16.mxu0 0
    %4820 = vmatpush1.bf16.msra.mxu0 0
    %4821 = vmatprep.subr.bf16.mxu0 0
    %4822 = vmatpush1.bf16.msra.mxu0 0
    %4823 = vmatprep.mubr.bf16.mxu0 0
    %4824 = vmatmul.mubr.bf16.gmra.mrb[0].mxu0 %v4392
    %v4825 = vpop.f32.mrb[0].mxu0
    %v4826 = vadd.f32 %v4713, %v4825
    %v4827 = vpop.f32.mrb[0].mxu0
    %v4828 = vadd.f32 %v4715, %v4827
    %v4829 = vpop.f32.mrb[0].mxu0
    %v4830 = vadd.f32 %v4717, %v4829
    %v4831 = vpop.f32.mrb[0].mxu0
    %v4832 = vadd.f32 %v4719, %v4831
    %4833 = vmatprep.mubr.bf16.mxu0 0
    %4834 = vmatmul.mubr.bf16.gmra.mrb[0].mxu0 %v4395
    %v4835 = vpop.f32.mrb[0].mxu0
    %v4836 = vadd.f32 %v4723, %v4835
    %v4837 = vpop.f32.mrb[0].mxu0
    %v4838 = vadd.f32 %v4725, %v4837
    %v4839 = vpop.f32.mrb[0].mxu0
    %v4840 = vadd.f32 %v4727, %v4839
    %v4841 = vpop.f32.mrb[0].mxu0
    %v4842 = vadd.f32 %v4729, %v4841
    %4843 = vmatprep.mubr.bf16.mxu0 0
    %4844 = vmatmul.mubr.bf16.gmra.mrb[0].mxu0 %v4398
    %v4845 = vpop.f32.mrb[0].mxu0
    %v4846 = vadd.f32 %v4733, %v4845
    %v4847 = vpop.f32.mrb[0].mxu0
    %v4848 = vadd.f32 %v4735, %v4847
    %v4849 = vpop.f32.mrb[0].mxu0
    %v4850 = vadd.f32 %v4737, %v4849
    %v4851 = vpop.f32.mrb[0].mxu0
    %v4852 = vadd.f32 %v4739, %v4851
    %4853 = vmatprep.mubr.bf16.mxu0 0
    %4854 = vmatmul.mubr.bf16.gmra.mrb[0].mxu0 %v4401
    %v4855 = vpop.f32.mrb[0].mxu0
    %v4856 = vadd.f32 %v4743, %v4855
    %v4857 = vpop.f32.mrb[0].mxu0
    %v4858 = vadd.f32 %v4745, %v4857
    %v4859 = vpop.f32.mrb[0].mxu0
    %v4860 = vadd.f32 %v4747, %v4859
    %v4861 = vpop.f32.mrb[0].mxu0
    %v4862 = vadd.f32 %v4749, %v4861
    %4863 = vmatprep.mubr.bf16.mxu0 0
    %4864 = vmatmul.mubr.bf16.gmra.mrb[0].mxu0 %v4404
    %v4865 = vpop.f32.mrb[0].mxu0
    %v4866 = vadd.f32 %v4753, %v4865
    %v4867 = vpop.f32.mrb[0].mxu0
    %v4868 = vadd.f32 %v4755, %v4867
    %v4869 = vpop.f32.mrb[0].mxu0
    %v4870 = vadd.f32 %v4757, %v4869
    %v4871 = vpop.f32.mrb[0].mxu0
    %v4872 = vadd.f32 %v4759, %v4871
    %4873 = vmatprep.mubr.bf16.mxu0 0
    %4874 = vmatmul.mubr.bf16.gmra.mrb[0].mxu0 %v4407
    %v4875 = vpop.f32.mrb[0].mxu0
    %v4876 = vadd.f32 %v4763, %v4875
    %v4877 = vpop.f32.mrb[0].mxu0
    %v4878 = vadd.f32 %v4765, %v4877
    %v4879 = vpop.f32.mrb[0].mxu0
    %v4880 = vadd.f32 %v4767, %v4879
    %v4881 = vpop.f32.mrb[0].mxu0
    %v4882 = vadd.f32 %v4769, %v4881
    %4883 = vmatprep.mubr.bf16.mxu0 0
    %4884 = vmatmul.mubr.bf16.gmra.mrb[0].mxu0 %v4410
    %v4885 = vpop.f32.mrb[0].mxu0
    %v4886 = vadd.f32 %v4773, %v4885
    %v4887 = vpop.f32.mrb[0].mxu0
    %v4888 = vadd.f32 %v4775, %v4887
    %v4889 = vpop.f32.mrb[0].mxu0
    %v4890 = vadd.f32 %v4777, %v4889
    %v4891 = vpop.f32.mrb[0].mxu0
    %v4892 = vadd.f32 %v4779, %v4891
    %4893 = vmatprep.mubr.bf16.mxu0 0
    %4894 = vmatmul.mubr.bf16.gmra.mrb[0].mxu0 %v4413
    %v4895 = vpop.f32.mrb[0].mxu0
    %v4896 = vadd.f32 %v4783, %v4895
    %v4897 = vpop.f32.mrb[0].mxu0
    %v4898 = vadd.f32 %v4785, %v4897
    %v4899 = vpop.f32.mrb[0].mxu0
    %v4900 = vadd.f32 %v4787, %v4899
    %v4901 = vpop.f32.mrb[0].mxu0
    %v4902 = vadd.f32 %v4789, %v4901
    %4903 = vdwg.mxu0
    %v4904 = vld [vmem:[%s1995] sm:$0xf]
    %v4905 = vld [vmem:[%s1995 + $0x10] sm:$0xf]
    %v4906 = vld [vmem:[%s1995 + $0x20] sm:$0xf]
    %v4907 = vld [vmem:[%s1995 + $0x30] sm:$0xf]
    %v4908 = vld [vmem:[%s1995 + $0x40] sm:$0xf]
    %v4909 = vld [vmem:[%s1995 + $0x50] sm:$0xf]
    %v4910 = vld [vmem:[%s1995 + $0x60] sm:$0xf]
    %v4911 = vld [vmem:[%s1995 + $0x70] sm:$0xf]
    %v4912 = vld [vmem:[%s1995 + $0xa0] sm:$0xf]
    %v4913 = vld [vmem:[%s1995 + $0xb0] sm:$0xf]
    %v4914 = vld [vmem:[%s1995 + $0xc0] sm:$0xf]
    %v4915 = vld [vmem:[%s1995 + $0xd0] sm:$0xf]
    %v4916 = vld [vmem:[%s1995 + $0xe0] sm:$0xf]
    %v4917 = vld [vmem:[%s1995 + $0xf0] sm:$0xf]
    %v4918 = vld [vmem:[%s1995 + $0x100] sm:$0xf]
    %v4919 = vld [vmem:[%s1995 + $0x110] sm:$0xf]
    %v4920 = vld [vmem:[%s1995 + $0x8] sm:$0x1]
    %v4921 = vld [vmem:[%s1995 + $0x18] sm:$0x1]
    %v4922 = vld [vmem:[%s1995 + $0x28] sm:$0x1]
    %v4923 = vld [vmem:[%s1995 + $0x38] sm:$0x1]
    %v4924 = vld [vmem:[%s1995 + $0x48] sm:$0x1]
    %v4925 = vld [vmem:[%s1995 + $0x58] sm:$0x1]
    %v4926 = vld [vmem:[%s1995 + $0x68] sm:$0x1]
    %v4927 = vld [vmem:[%s1995 + $0x78] sm:$0x1]
    %v4928 = vld [vmem:[%s1995 + $0xa8] sm:$0x1]
    %v4929 = vld [vmem:[%s1995 + $0xb8] sm:$0x1]
    %v4930 = vld [vmem:[%s1995 + $0xc8] sm:$0x1]
    %v4931 = vld [vmem:[%s1995 + $0xd8] sm:$0x1]
    %v4932 = vld [vmem:[%s1995 + $0xe8] sm:$0x1]
    %v4933 = vld [vmem:[%s1995 + $0xf8] sm:$0x1]
    %v4934 = vld [vmem:[%s1995 + $0x108] sm:$0x1]
    %v4935 = vld [vmem:[%s1995 + $0x118] sm:$0x1]
    %v4936 = vld [vmem:[%s1995] sm:$0xe]
    %v4937 = vld [vmem:[%s1995 + $0x10] sm:$0xe]
    %v4938 = vld [vmem:[%s1995 + $0x20] sm:$0xe]
    %v4939 = vld [vmem:[%s1995 + $0x30] sm:$0xe]
    %v4940 = vld [vmem:[%s1995 + $0x40] sm:$0xe]
    %v4941 = vld [vmem:[%s1995 + $0x50] sm:$0xe]
    %v4942 = vld [vmem:[%s1995 + $0x60] sm:$0xe]
    %v4943 = vld [vmem:[%s1995 + $0x70] sm:$0xe]
    %v4944 = vld [vmem:[%s1995 + $0xa0] sm:$0xe]
    %v4945 = vld [vmem:[%s1995 + $0xb0] sm:$0xe]
    %v4946 = vld [vmem:[%s1995 + $0xc0] sm:$0xe]
    %v4947 = vld [vmem:[%s1995 + $0xd0] sm:$0xe]
    %v4948 = vld [vmem:[%s1995 + $0xe0] sm:$0xe]
    %v4949 = vld [vmem:[%s1995 + $0xf0] sm:$0xe]
    %v4950 = vld [vmem:[%s1995 + $0x100] sm:$0xe]
    %v4951 = vld [vmem:[%s1995 + $0x110] sm:$0xe]
    %v4984 = vunpack.c.l.b16 %v4904
    %v4985 = vunpack.c.l.b16 %v4920
    %v4986 = vunpack.c.l.b16 %v4905
    %v4987 = vunpack.c.l.b16 %v4921
    %v4988 = vunpack.c.l.b16 %v4906
    %v4989 = vunpack.c.l.b16 %v4922
    %v4990 = vunpack.c.l.b16 %v4907
    %v4991 = vunpack.c.l.b16 %v4923
    %v4992 = vunpack.c.l.b16 %v4908
    %v4993 = vunpack.c.l.b16 %v4924
    %v4994 = vunpack.c.l.b16 %v4909
    %v4995 = vunpack.c.l.b16 %v4925
    %v4996 = vunpack.c.l.b16 %v4910
    %v4997 = vunpack.c.l.b16 %v4926
    %v4998 = vunpack.c.l.b16 %v4911
    %v4999 = vunpack.c.l.b16 %v4927
    %v5000 = vunpack.c.l.b16 %v4912
    %v5001 = vunpack.c.l.b16 %v4928
    %v5002 = vunpack.c.l.b16 %v4913
    %v5003 = vunpack.c.l.b16 %v4929
    %v5004 = vunpack.c.l.b16 %v4914
    %v5005 = vunpack.c.l.b16 %v4930
    %v5006 = vunpack.c.l.b16 %v4915
    %v5007 = vunpack.c.l.b16 %v4931
    %v5008 = vunpack.c.l.b16 %v4916
    %v5009 = vunpack.c.l.b16 %v4932
    %v5010 = vunpack.c.l.b16 %v4917
    %v5011 = vunpack.c.l.b16 %v4933
    %v5012 = vunpack.c.l.b16 %v4918
    %v5013 = vunpack.c.l.b16 %v4934
    %v5014 = vunpack.c.l.b16 %v4919
    %v5015 = vunpack.c.l.b16 %v4935
    %v5016 = vpack.c.b16 %v4985, %v4984
    %v5017 = vpack.c.b16 %v4987, %v4986
    %v5018 = vpack.c.b16 %v4989, %v4988
    %v5019 = vpack.c.b16 %v4991, %v4990
    %v5020 = vpack.c.b16 %v4993, %v4992
    %v5021 = vpack.c.b16 %v4995, %v4994
    %v5022 = vpack.c.b16 %v4997, %v4996
    %v5023 = vpack.c.b16 %v4999, %v4998
    %v5024 = vpack.c.b16 %v5001, %v5000
    %v5025 = vpack.c.b16 %v5003, %v5002
    %v5026 = vpack.c.b16 %v5005, %v5004
    %v5027 = vpack.c.b16 %v5007, %v5006
    %v5028 = vpack.c.b16 %v5009, %v5008
    %v5029 = vpack.c.b16 %v5011, %v5010
    %v5030 = vpack.c.b16 %v5013, %v5012
    %v5031 = vpack.c.b16 %v5015, %v5014
    %v5033 = vshrl.u32 %v5016, 16
    %v5035 = vshll.u32 %v5016, 16
    %v5037 = vrot.slane %v5035, 1
    %v5038 = vor.u32 %v5033, %v5037
    %v5040 = vshrl.u32 %v5017, 16
    %v5042 = vshll.u32 %v5017, 16
    %v5044 = vrot.slane %v5042, 1
    %v5045 = vor.u32 %v5040, %v5044
    %v5047 = vshrl.u32 %v5018, 16
    %v5049 = vshll.u32 %v5018, 16
    %v5051 = vrot.slane %v5049, 1
    %v5052 = vor.u32 %v5047, %v5051
    %v5054 = vshrl.u32 %v5019, 16
    %v5056 = vshll.u32 %v5019, 16
    %v5058 = vrot.slane %v5056, 1
    %v5059 = vor.u32 %v5054, %v5058
    %v5061 = vshrl.u32 %v5020, 16
    %v5063 = vshll.u32 %v5020, 16
    %v5065 = vrot.slane %v5063, 1
    %v5066 = vor.u32 %v5061, %v5065
    %v5068 = vshrl.u32 %v5021, 16
    %v5070 = vshll.u32 %v5021, 16
    %v5072 = vrot.slane %v5070, 1
    %v5073 = vor.u32 %v5068, %v5072
    %v5075 = vshrl.u32 %v5022, 16
    %v5077 = vshll.u32 %v5022, 16
    %v5079 = vrot.slane %v5077, 1
    %v5080 = vor.u32 %v5075, %v5079
    %v5082 = vshrl.u32 %v5023, 16
    %v5084 = vshll.u32 %v5023, 16
    %v5086 = vrot.slane %v5084, 1
    %v5087 = vor.u32 %v5082, %v5086
    %v5089 = vshrl.u32 %v5024, 16
    %v5091 = vshll.u32 %v5024, 16
    %v5093 = vrot.slane %v5091, 1
    %v5094 = vor.u32 %v5089, %v5093
    %v5096 = vshrl.u32 %v5025, 16
    %v5098 = vshll.u32 %v5025, 16
    %v5100 = vrot.slane %v5098, 1
    %v5101 = vor.u32 %v5096, %v5100
    %v5103 = vshrl.u32 %v5026, 16
    %v5105 = vshll.u32 %v5026, 16
    %v5107 = vrot.slane %v5105, 1
    %v5108 = vor.u32 %v5103, %v5107
    %v5110 = vshrl.u32 %v5027, 16
    %v5112 = vshll.u32 %v5027, 16
    %v5114 = vrot.slane %v5112, 1
    %v5115 = vor.u32 %v5110, %v5114
    %v5117 = vshrl.u32 %v5028, 16
    %v5119 = vshll.u32 %v5028, 16
    %v5121 = vrot.slane %v5119, 1
    %v5122 = vor.u32 %v5117, %v5121
    %v5124 = vshrl.u32 %v5029, 16
    %v5126 = vshll.u32 %v5029, 16
    %v5128 = vrot.slane %v5126, 1
    %v5129 = vor.u32 %v5124, %v5128
    %v5131 = vshrl.u32 %v5030, 16
    %v5133 = vshll.u32 %v5030, 16
    %v5135 = vrot.slane %v5133, 1
    %v5136 = vor.u32 %v5131, %v5135
    %v5138 = vshrl.u32 %v5031, 16
    %v5140 = vshll.u32 %v5031, 16
    %v5142 = vrot.slane %v5140, 1
    %v5143 = vor.u32 %v5138, %v5142
    %v5160 = vunpack.c.l.b16 %v4936
    %v5161 = vunpack.c.l.b16 %v4937
    %v5162 = vunpack.c.l.b16 %v4938
    %v5163 = vunpack.c.l.b16 %v4939
    %v5164 = vunpack.c.l.b16 %v4940
    %v5165 = vunpack.c.l.b16 %v4941
    %v5166 = vunpack.c.l.b16 %v4942
    %v5167 = vunpack.c.l.b16 %v4943
    %v5168 = vunpack.c.l.b16 %v4944
    %v5169 = vunpack.c.l.b16 %v4945
    %v5170 = vunpack.c.l.b16 %v4946
    %v5171 = vunpack.c.l.b16 %v4947
    %v5172 = vunpack.c.l.b16 %v4948
    %v5173 = vunpack.c.l.b16 %v4949
    %v5174 = vunpack.c.l.b16 %v4950
    %v5175 = vunpack.c.l.b16 %v4951
    %v5176 = vpack.c.b16 %v4985, %v5160
    %v5177 = vpack.c.b16 %v4987, %v5161
    %v5178 = vpack.c.b16 %v4989, %v5162
    %v5179 = vpack.c.b16 %v4991, %v5163
    %v5180 = vpack.c.b16 %v4993, %v5164
    %v5181 = vpack.c.b16 %v4995, %v5165
    %v5182 = vpack.c.b16 %v4997, %v5166
    %v5183 = vpack.c.b16 %v4999, %v5167
    %v5184 = vpack.c.b16 %v5001, %v5168
    %v5185 = vpack.c.b16 %v5003, %v5169
    %v5186 = vpack.c.b16 %v5005, %v5170
    %v5187 = vpack.c.b16 %v5007, %v5171
    %v5188 = vpack.c.b16 %v5009, %v5172
    %v5189 = vpack.c.b16 %v5011, %v5173
    %v5190 = vpack.c.b16 %v5013, %v5174
    %v5191 = vpack.c.b16 %v5015, %v5175
    %v5192 = vrot.slane %v5176, 1
    %v5193 = vrot.slane %v5177, 1
    %v5194 = vrot.slane %v5178, 1
    %v5195 = vrot.slane %v5179, 1
    %v5196 = vrot.slane %v5180, 1
    %v5197 = vrot.slane %v5181, 1
    %v5198 = vrot.slane %v5182, 1
    %v5199 = vrot.slane %v5183, 1
    %v5200 = vrot.slane %v5184, 1
    %v5201 = vrot.slane %v5185, 1
    %v5202 = vrot.slane %v5186, 1
    %v5203 = vrot.slane %v5187, 1
    %v5204 = vrot.slane %v5188, 1
    %v5205 = vrot.slane %v5189, 1
    %v5206 = vrot.slane %v5190, 1
    %v5207 = vrot.slane %v5191, 1
    %v5208 = vunpack.c.l.b16 %v5038
    %v5209 = vunpack.c.l.b16 %v5192
    %v5210 = vunpack.c.l.b16 %v5045
    %v5211 = vunpack.c.l.b16 %v5193
    %v5212 = vunpack.c.l.b16 %v5052
    %v5213 = vunpack.c.l.b16 %v5194
    %v5214 = vunpack.c.l.b16 %v5059
    %v5215 = vunpack.c.l.b16 %v5195
    %v5216 = vunpack.c.l.b16 %v5066
    %v5217 = vunpack.c.l.b16 %v5196
    %v5218 = vunpack.c.l.b16 %v5073
    %v5219 = vunpack.c.l.b16 %v5197
    %v5220 = vunpack.c.l.b16 %v5080
    %v5221 = vunpack.c.l.b16 %v5198
    %v5222 = vunpack.c.l.b16 %v5087
    %v5223 = vunpack.c.l.b16 %v5199
    %v5224 = vunpack.c.l.b16 %v5094
    %v5225 = vunpack.c.l.b16 %v5200
    %v5226 = vunpack.c.l.b16 %v5101
    %v5227 = vunpack.c.l.b16 %v5201
    %v5228 = vunpack.c.l.b16 %v5108
    %v5229 = vunpack.c.l.b16 %v5202
    %v5230 = vunpack.c.l.b16 %v5115
    %v5231 = vunpack.c.l.b16 %v5203
    %v5232 = vunpack.c.l.b16 %v5122
    %v5233 = vunpack.c.l.b16 %v5204
    %v5234 = vunpack.c.l.b16 %v5129
    %v5235 = vunpack.c.l.b16 %v5205
    %v5236 = vunpack.c.l.b16 %v5136
    %v5237 = vunpack.c.l.b16 %v5206
    %v5238 = vunpack.c.l.b16 %v5143
    %v5239 = vunpack.c.l.b16 %v5207
    %v5240 = vld [vmem:[#allocation8 + $0x300] sm:$0xff]
    %v5241 = vld [vmem:[#allocation8 + $0x308] sm:$0xff]
    %v5242 = vld [vmem:[#allocation8 + $0x310] sm:$0xff]
    %v5243 = vld [vmem:[#allocation8 + $0x318] sm:$0xff]
    %v5244 = vld [vmem:[#allocation8 + $0x320] sm:$0xff]
    %v5245 = vld [vmem:[#allocation8 + $0x328] sm:$0xff]
    %v5246 = vld [vmem:[#allocation8 + $0x330] sm:$0xff]
    %v5247 = vld [vmem:[#allocation8 + $0x338] sm:$0xff]
    %v5248 = vld [vmem:[#allocation8 + $0x340] sm:$0xff]
    %v5249 = vld [vmem:[#allocation8 + $0x348] sm:$0xff]
    %v5250 = vld [vmem:[#allocation8 + $0x350] sm:$0xff]
    %v5251 = vld [vmem:[#allocation8 + $0x358] sm:$0xff]
    %v5252 = vld [vmem:[#allocation8 + $0x360] sm:$0xff]
    %v5253 = vld [vmem:[#allocation8 + $0x368] sm:$0xff]
    %v5254 = vld [vmem:[#allocation8 + $0x370] sm:$0xff]
    %v5255 = vld [vmem:[#allocation8 + $0x378] sm:$0xff]
    %v5256 = vld [vmem:[#allocation8 + $0x380] sm:$0xff]
    %v5257 = vld [vmem:[#allocation8 + $0x388] sm:$0xff]
    %v5258 = vld [vmem:[#allocation8 + $0x390] sm:$0xff]
    %v5259 = vld [vmem:[#allocation8 + $0x398] sm:$0xff]
    %v5260 = vld [vmem:[#allocation8 + $0x3a0] sm:$0xff]
    %v5261 = vld [vmem:[#allocation8 + $0x3a8] sm:$0xff]
    %v5262 = vld [vmem:[#allocation8 + $0x3b0] sm:$0xff]
    %v5263 = vld [vmem:[#allocation8 + $0x3b8] sm:$0xff]
    %v5264 = vld [vmem:[#allocation8 + $0x3c0] sm:$0xff]
    %v5265 = vld [vmem:[#allocation8 + $0x3c8] sm:$0xff]
    %v5266 = vld [vmem:[#allocation8 + $0x3d0] sm:$0xff]
    %v5267 = vld [vmem:[#allocation8 + $0x3d8] sm:$0xff]
    %v5268 = vld [vmem:[#allocation8 + $0x3e0] sm:$0xff]
    %v5269 = vld [vmem:[#allocation8 + $0x3e8] sm:$0xff]
    %v5270 = vld [vmem:[#allocation8 + $0x3f0] sm:$0xff]
    %v5271 = vld [vmem:[#allocation8 + $0x3f8] sm:$0xff]
    %v5272 = vld [vmem:[#allocation8 + $0x400] sm:$0xff]
    %v5273 = vld [vmem:[#allocation8 + $0x408] sm:$0xff]
    %v5274 = vld [vmem:[#allocation8 + $0x410] sm:$0xff]
    %v5275 = vld [vmem:[#allocation8 + $0x418] sm:$0xff]
    %v5276 = vld [vmem:[#allocation8 + $0x420] sm:$0xff]
    %v5277 = vld [vmem:[#allocation8 + $0x428] sm:$0xff]
    %v5278 = vld [vmem:[#allocation8 + $0x430] sm:$0xff]
    %v5279 = vld [vmem:[#allocation8 + $0x438] sm:$0xff]
    %v5280 = vld [vmem:[#allocation8 + $0x440] sm:$0xff]
    %v5281 = vld [vmem:[#allocation8 + $0x448] sm:$0xff]
    %v5282 = vld [vmem:[#allocation8 + $0x450] sm:$0xff]
    %v5283 = vld [vmem:[#allocation8 + $0x458] sm:$0xff]
    %v5284 = vld [vmem:[#allocation8 + $0x460] sm:$0xff]
    %v5285 = vld [vmem:[#allocation8 + $0x468] sm:$0xff]
    %v5286 = vld [vmem:[#allocation8 + $0x470] sm:$0xff]
    %v5287 = vld [vmem:[#allocation8 + $0x478] sm:$0xff]
    %v5288 = vpack.c.b16 %v4986, %v4984
    %v5289 = vpack.c.b16 %v5210, %v5208
    %v5290 = vpack.c.b16 %v5211, %v5209
    %v5291 = vpack.c.b16 %v4990, %v4988
    %v5292 = vpack.c.b16 %v5214, %v5212
    %v5293 = vpack.c.b16 %v5215, %v5213
    %v5294 = vpack.c.b16 %v4994, %v4992
    %v5295 = vpack.c.b16 %v5218, %v5216
    %v5296 = vpack.c.b16 %v5219, %v5217
    %v5297 = vpack.c.b16 %v4998, %v4996
    %v5298 = vpack.c.b16 %v5222, %v5220
    %v5299 = vpack.c.b16 %v5223, %v5221
    %v5300 = vpack.c.b16 %v5002, %v5000
    %v5301 = vpack.c.b16 %v5226, %v5224
    %v5302 = vpack.c.b16 %v5227, %v5225
    %v5303 = vpack.c.b16 %v5006, %v5004
    %v5304 = vpack.c.b16 %v5230, %v5228
    %v5305 = vpack.c.b16 %v5231, %v5229
    %v5306 = vpack.c.b16 %v5010, %v5008
    %v5307 = vpack.c.b16 %v5234, %v5232
    %v5308 = vpack.c.b16 %v5235, %v5233
    %v5309 = vpack.c.b16 %v5014, %v5012
    %v5310 = vpack.c.b16 %v5238, %v5236
    %v5311 = vpack.c.b16 %v5239, %v5237
    %v5384 = vunpack.c.l.b16 %v5240
    %v5385 = vunpack.c.h.b16 %v5240
    %v5386 = vunpack.c.l.b16 %v5241
    %v5387 = vunpack.c.h.b16 %v5241
    %v5388 = vunpack.c.l.b16 %v5242
    %v5389 = vunpack.c.h.b16 %v5242
    %v5390 = vunpack.c.l.b16 %v5243
    %v5391 = vunpack.c.h.b16 %v5243
    %v5392 = vunpack.c.l.b16 %v5244
    %v5393 = vunpack.c.h.b16 %v5244
    %v5394 = vunpack.c.l.b16 %v5245
    %v5395 = vunpack.c.h.b16 %v5245
    %v5396 = vunpack.c.l.b16 %v5246
    %v5397 = vunpack.c.h.b16 %v5246
    %v5398 = vunpack.c.l.b16 %v5247
    %v5399 = vunpack.c.h.b16 %v5247
    %v5400 = vunpack.c.l.b16 %v5248
    %v5401 = vunpack.c.h.b16 %v5248
    %v5402 = vunpack.c.l.b16 %v5249
    %v5403 = vunpack.c.h.b16 %v5249
    %v5404 = vunpack.c.l.b16 %v5250
    %v5405 = vunpack.c.h.b16 %v5250
    %v5406 = vunpack.c.l.b16 %v5251
    %v5407 = vunpack.c.h.b16 %v5251
    %v5408 = vunpack.c.l.b16 %v5252
    %v5409 = vunpack.c.h.b16 %v5252
    %v5410 = vunpack.c.l.b16 %v5253
    %v5411 = vunpack.c.h.b16 %v5253
    %v5412 = vunpack.c.l.b16 %v5254
    %v5413 = vunpack.c.h.b16 %v5254
    %v5414 = vunpack.c.l.b16 %v5255
    %v5415 = vunpack.c.h.b16 %v5255
    %v5416 = vunpack.c.l.b16 %v5256
    %v5417 = vunpack.c.h.b16 %v5256
    %v5418 = vunpack.c.l.b16 %v5257
    %v5419 = vunpack.c.h.b16 %v5257
    %v5420 = vunpack.c.l.b16 %v5258
    %v5421 = vunpack.c.h.b16 %v5258
    %v5422 = vunpack.c.l.b16 %v5259
    %v5423 = vunpack.c.h.b16 %v5259
    %v5424 = vunpack.c.l.b16 %v5260
    %v5425 = vunpack.c.h.b16 %v5260
    %v5426 = vunpack.c.l.b16 %v5261
    %v5427 = vunpack.c.h.b16 %v5261
    %v5428 = vunpack.c.l.b16 %v5262
    %v5429 = vunpack.c.h.b16 %v5262
    %v5430 = vunpack.c.l.b16 %v5263
    %v5431 = vunpack.c.h.b16 %v5263
    %v5432 = vunpack.c.l.b16 %v5264
    %v5433 = vunpack.c.h.b16 %v5264
    %v5434 = vunpack.c.l.b16 %v5265
    %v5435 = vunpack.c.h.b16 %v5265
    %v5436 = vunpack.c.l.b16 %v5266
    %v5437 = vunpack.c.h.b16 %v5266
    %v5438 = vunpack.c.l.b16 %v5267
    %v5439 = vunpack.c.h.b16 %v5267
    %v5440 = vunpack.c.l.b16 %v5268
    %v5441 = vunpack.c.h.b16 %v5268
    %v5442 = vunpack.c.l.b16 %v5269
    %v5443 = vunpack.c.h.b16 %v5269
    %v5444 = vunpack.c.l.b16 %v5270
    %v5445 = vunpack.c.h.b16 %v5270
    %v5446 = vunpack.c.l.b16 %v5271
    %v5447 = vunpack.c.h.b16 %v5271
    %v5448 = vunpack.c.l.b16 %v5272
    %v5449 = vunpack.c.h.b16 %v5272
    %v5450 = vunpack.c.l.b16 %v5273
    %v5451 = vunpack.c.h.b16 %v5273
    %v5452 = vunpack.c.l.b16 %v5274
    %v5453 = vunpack.c.h.b16 %v5274
    %v5454 = vunpack.c.l.b16 %v5275
    %v5455 = vunpack.c.h.b16 %v5275
    %v5456 = vunpack.c.l.b16 %v5276
    %v5457 = vunpack.c.h.b16 %v5276
    %v5458 = vunpack.c.l.b16 %v5277
    %v5459 = vunpack.c.h.b16 %v5277
    %v5460 = vunpack.c.l.b16 %v5278
    %v5461 = vunpack.c.h.b16 %v5278
    %v5462 = vunpack.c.l.b16 %v5279
    %v5463 = vunpack.c.h.b16 %v5279
    %v5464 = vunpack.c.l.b16 %v5280
    %v5465 = vunpack.c.h.b16 %v5280
    %v5466 = vunpack.c.l.b16 %v5281
    %v5467 = vunpack.c.h.b16 %v5281
    %v5468 = vunpack.c.l.b16 %v5282
    %v5469 = vunpack.c.h.b16 %v5282
    %v5470 = vunpack.c.l.b16 %v5283
    %v5471 = vunpack.c.h.b16 %v5283
    %v5472 = vunpack.c.l.b16 %v5284
    %v5473 = vunpack.c.h.b16 %v5284
    %v5474 = vunpack.c.l.b16 %v5285
    %v5475 = vunpack.c.h.b16 %v5285
    %v5476 = vunpack.c.l.b16 %v5286
    %v5477 = vunpack.c.h.b16 %v5286
    %v5478 = vunpack.c.l.b16 %v5287
    %v5479 = vunpack.c.h.b16 %v5287
    %v5480 = vpack.c.b16 %v5386, %v5384
    %v5481 = vpack.c.b16 %v5387, %v5385
    %v5482 = vpack.c.b16 %v5390, %v5388
    %v5483 = vpack.c.b16 %v5391, %v5389
    %v5484 = vpack.c.b16 %v5394, %v5392
    %v5485 = vpack.c.b16 %v5395, %v5393
    %v5486 = vpack.c.b16 %v5398, %v5396
    %v5487 = vpack.c.b16 %v5399, %v5397
    %v5488 = vpack.c.b16 %v5402, %v5400
    %v5489 = vpack.c.b16 %v5403, %v5401
    %v5490 = vpack.c.b16 %v5406, %v5404
    %v5491 = vpack.c.b16 %v5407, %v5405
    %v5492 = vpack.c.b16 %v5410, %v5408
    %v5493 = vpack.c.b16 %v5411, %v5409
    %v5494 = vpack.c.b16 %v5414, %v5412
    %v5495 = vpack.c.b16 %v5415, %v5413
    %v5496 = vpack.c.b16 %v5418, %v5416
    %v5497 = vpack.c.b16 %v5419, %v5417
    %v5498 = vpack.c.b16 %v5422, %v5420
    %v5499 = vpack.c.b16 %v5423, %v5421
    %v5500 = vpack.c.b16 %v5426, %v5424
    %v5501 = vpack.c.b16 %v5427, %v5425
    %v5502 = vpack.c.b16 %v5430, %v5428
    %v5503 = vpack.c.b16 %v5431, %v5429
    %v5504 = vpack.c.b16 %v5434, %v5432
    %v5505 = vpack.c.b16 %v5435, %v5433
    %v5506 = vpack.c.b16 %v5438, %v5436
    %v5507 = vpack.c.b16 %v5439, %v5437
    %v5508 = vpack.c.b16 %v5442, %v5440
    %v5509 = vpack.c.b16 %v5443, %v5441
    %v5510 = vpack.c.b16 %v5446, %v5444
    %v5511 = vpack.c.b16 %v5447, %v5445
    %v5512 = vpack.c.b16 %v5450, %v5448
    %v5513 = vpack.c.b16 %v5451, %v5449
    %v5514 = vpack.c.b16 %v5454, %v5452
    %v5515 = vpack.c.b16 %v5455, %v5453
    %v5516 = vpack.c.b16 %v5458, %v5456
    %v5517 = vpack.c.b16 %v5459, %v5457
    %v5518 = vpack.c.b16 %v5462, %v5460
    %v5519 = vpack.c.b16 %v5463, %v5461
    %v5520 = vpack.c.b16 %v5466, %v5464
    %v5521 = vpack.c.b16 %v5467, %v5465
    %v5522 = vpack.c.b16 %v5470, %v5468
    %v5523 = vpack.c.b16 %v5471, %v5469
    %v5524 = vpack.c.b16 %v5474, %v5472
    %v5525 = vpack.c.b16 %v5475, %v5473
    %v5526 = vpack.c.b16 %v5478, %v5476
    %v5527 = vpack.c.b16 %v5479, %v5477
    %5576 = vmatprep.subr.bf16.mxu0 %v5481
    %5577 = vmatpush1.bf16.msra.mxu0 %v5480
    %5578 = vmatprep.subr.bf16.mxu0 %v5483
    %5579 = vmatpush1.bf16.msra.mxu0 %v5482
    %5580 = vmatprep.subr.bf16.mxu0 %v5485
    %5581 = vmatpush1.bf16.msra.mxu0 %v5484
    %5582 = vmatprep.subr.bf16.mxu0 %v5487
    %5583 = vmatpush1.bf16.msra.mxu0 %v5486
    %5584 = vmatprep.subr.bf16.mxu0 %v5489
    %5585 = vmatpush1.bf16.msra.mxu0 %v5488
    %5586 = vmatprep.subr.bf16.mxu0 %v5491
    %5587 = vmatpush1.bf16.msra.mxu0 %v5490
    %5588 = vmatprep.subr.bf16.mxu0 %v5493
    %5589 = vmatpush1.bf16.msra.mxu0 %v5492
    %5590 = vmatprep.subr.bf16.mxu0 %v5495
    %5591 = vmatpush1.bf16.msra.mxu0 %v5494
    %5592 = vmatprep.subr.bf16.mxu0 %v5497
    %5593 = vmatpush1.bf16.msra.mxu0 %v5496
    %5594 = vmatprep.subr.bf16.mxu0 %v5499
    %5595 = vmatpush1.bf16.msra.mxu0 %v5498
    %5596 = vmatprep.subr.bf16.mxu0 %v5501
    %5597 = vmatpush1.bf16.msra.mxu0 %v5500
    %5598 = vmatprep.subr.bf16.mxu0 %v5503
    %5599 = vmatpush1.bf16.msra.mxu0 %v5502
    %5600 = vmatprep.subr.bf16.mxu0 %v5505
    %5601 = vmatpush1.bf16.msra.mxu0 %v5504
    %5602 = vmatprep.subr.bf16.mxu0 %v5507
    %5603 = vmatpush1.bf16.msra.mxu0 %v5506
    %5604 = vmatprep.subr.bf16.mxu0 %v5509
    %5605 = vmatpush1.bf16.msra.mxu0 %v5508
    %5606 = vmatprep.subr.bf16.mxu0 %v5511
    %5607 = vmatpush1.bf16.msra.mxu0 %v5510
    %5608 = vmatprep.mubr.bf16.mxu0 %v5289
    %5609 = vmatmul.mubr.bf16.gmra.mrb[0].mxu0 %v5288
    %v5610 = vpop.f32.mrb[0].mxu0
    %v5611 = vadd.f32 0.0, %v5610
    %v5612 = vpop.f32.mrb[0].mxu0
    %v5613 = vadd.f32 0.0, %v5612
    %v5614 = vpop.f32.mrb[0].mxu0
    %v5615 = vadd.f32 0.0, %v5614
    %v5616 = vpop.f32.mrb[0].mxu0
    %v5617 = vadd.f32 0.0, %v5616
    %5618 = vmatprep.mubr.bf16.mxu0 %v5292
    %5619 = vmatmul.mubr.bf16.gmra.mrb[0].mxu0 %v5291
    %v5620 = vpop.f32.mrb[0].mxu0
    %v5621 = vadd.f32 0.0, %v5620
    %v5622 = vpop.f32.mrb[0].mxu0
    %v5623 = vadd.f32 0.0, %v5622
    %v5624 = vpop.f32.mrb[0].mxu0
    %v5625 = vadd.f32 0.0, %v5624
    %v5626 = vpop.f32.mrb[0].mxu0
    %v5627 = vadd.f32 0.0, %v5626
    %5628 = vmatprep.mubr.bf16.mxu0 %v5295
    %5629 = vmatmul.mubr.bf16.gmra.mrb[0].mxu0 %v5294
    %v5630 = vpop.f32.mrb[0].mxu0
    %v5631 = vadd.f32 0.0, %v5630
    %v5632 = vpop.f32.mrb[0].mxu0
    %v5633 = vadd.f32 0.0, %v5632
    %v5634 = vpop.f32.mrb[0].mxu0
    %v5635 = vadd.f32 0.0, %v5634
    %v5636 = vpop.f32.mrb[0].mxu0
    %v5637 = vadd.f32 0.0, %v5636
    %5638 = vmatprep.mubr.bf16.mxu0 %v5298
    %5639 = vmatmul.mubr.bf16.gmra.mrb[0].mxu0 %v5297
    %v5640 = vpop.f32.mrb[0].mxu0
    %v5641 = vadd.f32 0.0, %v5640
    %v5642 = vpop.f32.mrb[0].mxu0
    %v5643 = vadd.f32 0.0, %v5642
    %v5644 = vpop.f32.mrb[0].mxu0
    %v5645 = vadd.f32 0.0, %v5644
    %v5646 = vpop.f32.mrb[0].mxu0
    %v5647 = vadd.f32 0.0, %v5646
    %5648 = vmatprep.mubr.bf16.mxu0 %v5301
    %5649 = vmatmul.mubr.bf16.gmra.mrb[0].mxu0 %v5300
    %v5650 = vpop.f32.mrb[0].mxu0
    %v5651 = vadd.f32 0.0, %v5650
    %v5652 = vpop.f32.mrb[0].mxu0
    %v5653 = vadd.f32 0.0, %v5652
    %v5654 = vpop.f32.mrb[0].mxu0
    %v5655 = vadd.f32 0.0, %v5654
    %v5656 = vpop.f32.mrb[0].mxu0
    %v5657 = vadd.f32 0.0, %v5656
    %5658 = vmatprep.mubr.bf16.mxu0 %v5304
    %5659 = vmatmul.mubr.bf16.gmra.mrb[0].mxu0 %v5303
    %v5660 = vpop.f32.mrb[0].mxu0
    %v5661 = vadd.f32 0.0, %v5660
    %v5662 = vpop.f32.mrb[0].mxu0
    %v5663 = vadd.f32 0.0, %v5662
    %v5664 = vpop.f32.mrb[0].mxu0
    %v5665 = vadd.f32 0.0, %v5664
    %v5666 = vpop.f32.mrb[0].mxu0
    %v5667 = vadd.f32 0.0, %v5666
    %5668 = vmatprep.mubr.bf16.mxu0 %v5307
    %5669 = vmatmul.mubr.bf16.gmra.mrb[0].mxu0 %v5306
    %v5670 = vpop.f32.mrb[0].mxu0
    %v5671 = vadd.f32 0.0, %v5670
    %v5672 = vpop.f32.mrb[0].mxu0
    %v5673 = vadd.f32 0.0, %v5672
    %v5674 = vpop.f32.mrb[0].mxu0
    %v5675 = vadd.f32 0.0, %v5674
    %v5676 = vpop.f32.mrb[0].mxu0
    %v5677 = vadd.f32 0.0, %v5676
    %5678 = vmatprep.mubr.bf16.mxu0 %v5310
    %5679 = vmatmul.mubr.bf16.gmra.mrb[0].mxu0 %v5309
    %v5680 = vpop.f32.mrb[0].mxu0
    %v5681 = vadd.f32 0.0, %v5680
    %v5682 = vpop.f32.mrb[0].mxu0
    %v5683 = vadd.f32 0.0, %v5682
    %v5684 = vpop.f32.mrb[0].mxu0
    %v5685 = vadd.f32 0.0, %v5684
    %v5686 = vpop.f32.mrb[0].mxu0
    %v5687 = vadd.f32 0.0, %v5686
    %5688 = vdwg.mxu0
    %5689 = vmatprep.subr.bf16.mxu0 %v5513
    %5690 = vmatpush1.bf16.msra.mxu0 %v5512
    %5691 = vmatprep.subr.bf16.mxu0 %v5515
    %5692 = vmatpush1.bf16.msra.mxu0 %v5514
    %5693 = vmatprep.subr.bf16.mxu0 %v5517
    %5694 = vmatpush1.bf16.msra.mxu0 %v5516
    %5695 = vmatprep.subr.bf16.mxu0 %v5519
    %5696 = vmatpush1.bf16.msra.mxu0 %v5518
    %5697 = vmatprep.subr.bf16.mxu0 %v5521
    %5698 = vmatpush1.bf16.msra.mxu0 %v5520
    %5699 = vmatprep.subr.bf16.mxu0 %v5523
    %5700 = vmatpush1.bf16.msra.mxu0 %v5522
    %5701 = vmatprep.subr.bf16.mxu0 %v5525
    %5702 = vmatpush1.bf16.msra.mxu0 %v5524
    %5703 = vmatprep.subr.bf16.mxu0 %v5527
    %5704 = vmatpush1.bf16.msra.mxu0 %v5526
    %5705 = vmatprep.subr.bf16.mxu0 0
    %5706 = vmatpush1.bf16.msra.mxu0 0
    %5707 = vmatprep.subr.bf16.mxu0 0
    %5708 = vmatpush1.bf16.msra.mxu0 0
    %5709 = vmatprep.subr.bf16.mxu0 0
    %5710 = vmatpush1.bf16.msra.mxu0 0
    %5711 = vmatprep.subr.bf16.mxu0 0
    %5712 = vmatpush1.bf16.msra.mxu0 0
    %5713 = vmatprep.subr.bf16.mxu0 0
    %5714 = vmatpush1.bf16.msra.mxu0 0
    %5715 = vmatprep.subr.bf16.mxu0 0
    %5716 = vmatpush1.bf16.msra.mxu0 0
    %5717 = vmatprep.subr.bf16.mxu0 0
    %5718 = vmatpush1.bf16.msra.mxu0 0
    %5719 = vmatprep.subr.bf16.mxu0 0
    %5720 = vmatpush1.bf16.msra.mxu0 0
    %5721 = vmatprep.mubr.bf16.mxu0 0
    %5722 = vmatmul.mubr.bf16.gmra.mrb[0].mxu0 %v5290
    %v5723 = vpop.f32.mrb[0].mxu0
    %v5724 = vadd.f32 %v5611, %v5723
    %v5725 = vpop.f32.mrb[0].mxu0
    %v5726 = vadd.f32 %v5613, %v5725
    %v5727 = vpop.f32.mrb[0].mxu0
    %v5728 = vadd.f32 %v5615, %v5727
    %v5729 = vpop.f32.mrb[0].mxu0
    %v5730 = vadd.f32 %v5617, %v5729
    %5731 = vmatprep.mubr.bf16.mxu0 0
    %5732 = vmatmul.mubr.bf16.gmra.mrb[0].mxu0 %v5293
    %v5733 = vpop.f32.mrb[0].mxu0
    %v5734 = vadd.f32 %v5621, %v5733
    %v5735 = vpop.f32.mrb[0].mxu0
    %v5736 = vadd.f32 %v5623, %v5735
    %v5737 = vpop.f32.mrb[0].mxu0
    %v5738 = vadd.f32 %v5625, %v5737
    %v5739 = vpop.f32.mrb[0].mxu0
    %v5740 = vadd.f32 %v5627, %v5739
    %5741 = vmatprep.mubr.bf16.mxu0 0
    %5742 = vmatmul.mubr.bf16.gmra.mrb[0].mxu0 %v5296
    %v5743 = vpop.f32.mrb[0].mxu0
    %v5744 = vadd.f32 %v5631, %v5743
    %v5745 = vpop.f32.mrb[0].mxu0
    %v5746 = vadd.f32 %v5633, %v5745
    %v5747 = vpop.f32.mrb[0].mxu0
    %v5748 = vadd.f32 %v5635, %v5747
    %v5749 = vpop.f32.mrb[0].mxu0
    %v5750 = vadd.f32 %v5637, %v5749
    %5751 = vmatprep.mubr.bf16.mxu0 0
    %5752 = vmatmul.mubr.bf16.gmra.mrb[0].mxu0 %v5299
    %v5753 = vpop.f32.mrb[0].mxu0
    %v5754 = vadd.f32 %v5641, %v5753
    %v5755 = vpop.f32.mrb[0].mxu0
    %v5756 = vadd.f32 %v5643, %v5755
    %v5757 = vpop.f32.mrb[0].mxu0
    %v5758 = vadd.f32 %v5645, %v5757
    %v5759 = vpop.f32.mrb[0].mxu0
    %v5760 = vadd.f32 %v5647, %v5759
    %5761 = vmatprep.mubr.bf16.mxu0 0
    %5762 = vmatmul.mubr.bf16.gmra.mrb[0].mxu0 %v5302
    %v5763 = vpop.f32.mrb[0].mxu0
    %v5764 = vadd.f32 %v5651, %v5763
    %v5765 = vpop.f32.mrb[0].mxu0
    %v5766 = vadd.f32 %v5653, %v5765
    %v5767 = vpop.f32.mrb[0].mxu0
    %v5768 = vadd.f32 %v5655, %v5767
    %v5769 = vpop.f32.mrb[0].mxu0
    %v5770 = vadd.f32 %v5657, %v5769
    %5771 = vmatprep.mubr.bf16.mxu0 0
    %5772 = vmatmul.mubr.bf16.gmra.mrb[0].mxu0 %v5305
    %v5773 = vpop.f32.mrb[0].mxu0
    %v5774 = vadd.f32 %v5661, %v5773
    %v5775 = vpop.f32.mrb[0].mxu0
    %v5776 = vadd.f32 %v5663, %v5775
    %v5777 = vpop.f32.mrb[0].mxu0
    %v5778 = vadd.f32 %v5665, %v5777
    %v5779 = vpop.f32.mrb[0].mxu0
    %v5780 = vadd.f32 %v5667, %v5779
    %5781 = vmatprep.mubr.bf16.mxu0 0
    %5782 = vmatmul.mubr.bf16.gmra.mrb[0].mxu0 %v5308
    %v5783 = vpop.f32.mrb[0].mxu0
    %v5784 = vadd.f32 %v5671, %v5783
    %v5785 = vpop.f32.mrb[0].mxu0
    %v5786 = vadd.f32 %v5673, %v5785
    %v5787 = vpop.f32.mrb[0].mxu0
    %v5788 = vadd.f32 %v5675, %v5787
    %v5789 = vpop.f32.mrb[0].mxu0
    %v5790 = vadd.f32 %v5677, %v5789
    %5791 = vmatprep.mubr.bf16.mxu0 0
    %5792 = vmatmul.mubr.bf16.gmra.mrb[0].mxu0 %v5311
    %v5793 = vpop.f32.mrb[0].mxu0
    %v5794 = vadd.f32 %v5681, %v5793
    %v5795 = vpop.f32.mrb[0].mxu0
    %v5796 = vadd.f32 %v5683, %v5795
    %v5797 = vpop.f32.mrb[0].mxu0
    %v5798 = vadd.f32 %v5685, %v5797
    %v5799 = vpop.f32.mrb[0].mxu0
    %v5800 = vadd.f32 %v5687, %v5799
    %5801 = vdwg.mxu0
    %v5802 = vadd.f32 %v4826, %v5724
    %v5803 = vadd.f32 %v4828, %v5726
    %v5804 = vadd.f32 %v4830, %v5728
    %v5805 = vadd.f32 %v4832, %v5730
    %v5806 = vadd.f32 %v4836, %v5734
    %v5807 = vadd.f32 %v4838, %v5736
    %v5808 = vadd.f32 %v4840, %v5738
    %v5809 = vadd.f32 %v4842, %v5740
    %v5810 = vadd.f32 %v4846, %v5744
    %v5811 = vadd.f32 %v4848, %v5746
    %v5812 = vadd.f32 %v4850, %v5748
    %v5813 = vadd.f32 %v4852, %v5750
    %v5814 = vadd.f32 %v4856, %v5754
    %v5815 = vadd.f32 %v4858, %v5756
    %v5816 = vadd.f32 %v4860, %v5758
    %v5817 = vadd.f32 %v4862, %v5760
    %v5818 = vadd.f32 %v4866, %v5764
    %v5819 = vadd.f32 %v4868, %v5766
    %v5820 = vadd.f32 %v4870, %v5768
    %v5821 = vadd.f32 %v4872, %v5770
    %v5822 = vadd.f32 %v4876, %v5774
    %v5823 = vadd.f32 %v4878, %v5776
    %v5824 = vadd.f32 %v4880, %v5778
    %v5825 = vadd.f32 %v4882, %v5780
    %v5826 = vadd.f32 %v4886, %v5784
    %v5827 = vadd.f32 %v4888, %v5786
    %v5828 = vadd.f32 %v4890, %v5788
    %v5829 = vadd.f32 %v4892, %v5790
    %v5830 = vadd.f32 %v4896, %v5794
    %v5831 = vadd.f32 %v4898, %v5796
    %v5832 = vadd.f32 %v4900, %v5798
    %v5833 = vadd.f32 %v4902, %v5800
    %v5834 = vld [vmem:[#allocation9] sm:$0x3]
    %v5836 = vlaneseq
    %v5837 = vshrl.u32 %v5836, 7
    %v5838 = vsub.s32 0, %v5837
    %v5839 = vrot.slane %v5834, %v5838
    %v5840 = vlaneseq
    %v5841 = vshrl.u32 %v5840, 7
    %v5842 = vsub.s32 1, %v5841
    %v5843 = vrot.slane %v5834, %v5842
    %v5846 = vadd.f32 %v5802, %v5839
    %v5847 = vadd.f32 %v5803, %v5843
    %v5848 = vadd.f32 %v5804, %v5839
    %v5849 = vadd.f32 %v5805, %v5843
    %v5850 = vadd.f32 %v5806, %v5839
    %v5851 = vadd.f32 %v5807, %v5843
    %v5852 = vadd.f32 %v5808, %v5839
    %v5853 = vadd.f32 %v5809, %v5843
    %v5854 = vadd.f32 %v5810, %v5839
    %v5855 = vadd.f32 %v5811, %v5843
    %v5856 = vadd.f32 %v5812, %v5839
    %v5857 = vadd.f32 %v5813, %v5843
    %v5858 = vadd.f32 %v5814, %v5839
    %v5859 = vadd.f32 %v5815, %v5843
    %v5860 = vadd.f32 %v5816, %v5839
    %v5861 = vadd.f32 %v5817, %v5843
    %v5862 = vadd.f32 %v5818, %v5839
    %v5863 = vadd.f32 %v5819, %v5843
    %v5864 = vadd.f32 %v5820, %v5839
    %v5865 = vadd.f32 %v5821, %v5843
    %v5866 = vadd.f32 %v5822, %v5839
    %v5867 = vadd.f32 %v5823, %v5843
    %v5868 = vadd.f32 %v5824, %v5839
    %v5869 = vadd.f32 %v5825, %v5843
    %v5870 = vadd.f32 %v5826, %v5839
    %v5871 = vadd.f32 %v5827, %v5843
    %v5872 = vadd.f32 %v5828, %v5839
    %v5873 = vadd.f32 %v5829, %v5843
    %v5874 = vadd.f32 %v5830, %v5839
    %v5875 = vadd.f32 %v5831, %v5843
    %v5876 = vadd.f32 %v5832, %v5839
    %v5877 = vadd.f32 %v5833, %v5843
    %v5878 = vpack.c.bf16 %v5848, %v5846
    %v5879 = vpack.c.bf16 %v5849, %v5847
    %v5880 = vpack.c.bf16 %v5852, %v5850
    %v5881 = vpack.c.bf16 %v5853, %v5851
    %v5882 = vpack.c.bf16 %v5856, %v5854
    %v5883 = vpack.c.bf16 %v5857, %v5855
    %v5884 = vpack.c.bf16 %v5860, %v5858
    %v5885 = vpack.c.bf16 %v5861, %v5859
    %v5886 = vpack.c.bf16 %v5864, %v5862
    %v5887 = vpack.c.bf16 %v5865, %v5863
    %v5888 = vpack.c.bf16 %v5868, %v5866
    %v5889 = vpack.c.bf16 %v5869, %v5867
    %v5890 = vpack.c.bf16 %v5872, %v5870
    %v5891 = vpack.c.bf16 %v5873, %v5871
    %v5892 = vpack.c.bf16 %v5876, %v5874
    %v5893 = vpack.c.bf16 %v5877, %v5875
    %v5910 = vunpack.c.l.b16 %v5878
    %v5911 = vunpack.c.l.b16 %v5879
    %v5912 = vunpack.c.h.b16 %v5878
    %v5913 = vunpack.c.h.b16 %v5879
    %v5914 = vunpack.c.l.b16 %v5880
    %v5915 = vunpack.c.l.b16 %v5881
    %v5916 = vunpack.c.h.b16 %v5880
    %v5917 = vunpack.c.h.b16 %v5881
    %v5918 = vunpack.c.l.b16 %v5882
    %v5919 = vunpack.c.l.b16 %v5883
    %v5920 = vunpack.c.h.b16 %v5882
    %v5921 = vunpack.c.h.b16 %v5883
    %v5922 = vunpack.c.l.b16 %v5884
    %v5923 = vunpack.c.l.b16 %v5885
    %v5924 = vunpack.c.h.b16 %v5884
    %v5925 = vunpack.c.h.b16 %v5885
    %v5926 = vunpack.c.l.b16 %v5886
    %v5927 = vunpack.c.l.b16 %v5887
    %v5928 = vunpack.c.h.b16 %v5886
    %v5929 = vunpack.c.h.b16 %v5887
    %v5930 = vunpack.c.l.b16 %v5888
    %v5931 = vunpack.c.l.b16 %v5889
    %v5932 = vunpack.c.h.b16 %v5888
    %v5933 = vunpack.c.h.b16 %v5889
    %v5934 = vunpack.c.l.b16 %v5890
    %v5935 = vunpack.c.l.b16 %v5891
    %v5936 = vunpack.c.h.b16 %v5890
    %v5937 = vunpack.c.h.b16 %v5891
    %v5938 = vunpack.c.l.b16 %v5892
    %v5939 = vunpack.c.l.b16 %v5893
    %v5940 = vunpack.c.h.b16 %v5892
    %v5941 = vunpack.c.h.b16 %v5893
    %v5942 = vpack.c.b16 %v5911, %v5910
    %v5943 = vpack.c.b16 %v5913, %v5912
    %v5944 = vpack.c.b16 %v5915, %v5914
    %v5945 = vpack.c.b16 %v5917, %v5916
    %v5946 = vpack.c.b16 %v5919, %v5918
    %v5947 = vpack.c.b16 %v5921, %v5920
    %v5948 = vpack.c.b16 %v5923, %v5922
    %v5949 = vpack.c.b16 %v5925, %v5924
    %v5950 = vpack.c.b16 %v5927, %v5926
    %v5951 = vpack.c.b16 %v5929, %v5928
    %v5952 = vpack.c.b16 %v5931, %v5930
    %v5953 = vpack.c.b16 %v5933, %v5932
    %v5954 = vpack.c.b16 %v5935, %v5934
    %v5955 = vpack.c.b16 %v5937, %v5936
    %v5956 = vpack.c.b16 %v5939, %v5938
    %v5957 = vpack.c.b16 %v5941, %v5940
    %v5959 = vshrl.u32 %v5942, 16
    %v5961 = vrot.slane %v5959, 7
    %v5962 = vshll.u32 %v5942, 16
    %v5964 = vor.u32 %v5961, %v5962
    %v5965 = vrot.slane %v5961, 4
    %v5967 = vshrl.u32 %v5943, 16
    %v5969 = vrot.slane %v5967, 7
    %v5970 = vshll.u32 %v5943, 16
    %v5972 = vor.u32 %v5969, %v5970
    %v5973 = vrot.slane %v5969, 4
    %v5975 = vshrl.u32 %v5944, 16
    %v5977 = vrot.slane %v5975, 7
    %v5978 = vshll.u32 %v5944, 16
    %v5980 = vor.u32 %v5977, %v5978
    %v5981 = vrot.slane %v5977, 4
    %v5983 = vshrl.u32 %v5945, 16
    %v5985 = vrot.slane %v5983, 7
    %v5986 = vshll.u32 %v5945, 16
    %v5988 = vor.u32 %v5985, %v5986
    %v5989 = vrot.slane %v5985, 4
    %v5991 = vshrl.u32 %v5946, 16
    %v5993 = vrot.slane %v5991, 7
    %v5994 = vshll.u32 %v5946, 16
    %v5996 = vor.u32 %v5993, %v5994
    %v5997 = vrot.slane %v5993, 4
    %v5999 = vshrl.u32 %v5947, 16
    %v6001 = vrot.slane %v5999, 7
    %v6002 = vshll.u32 %v5947, 16
    %v6004 = vor.u32 %v6001, %v6002
    %v6005 = vrot.slane %v6001, 4
    %v6007 = vshrl.u32 %v5948, 16
    %v6009 = vrot.slane %v6007, 7
    %v6010 = vshll.u32 %v5948, 16
    %v6012 = vor.u32 %v6009, %v6010
    %v6013 = vrot.slane %v6009, 4
    %v6015 = vshrl.u32 %v5949, 16
    %v6017 = vrot.slane %v6015, 7
    %v6018 = vshll.u32 %v5949, 16
    %v6020 = vor.u32 %v6017, %v6018
    %v6021 = vrot.slane %v6017, 4
    %v6023 = vshrl.u32 %v5950, 16
    %v6025 = vrot.slane %v6023, 7
    %v6026 = vshll.u32 %v5950, 16
    %v6028 = vor.u32 %v6025, %v6026
    %v6029 = vrot.slane %v6025, 4
    %v6031 = vshrl.u32 %v5951, 16
    %v6033 = vrot.slane %v6031, 7
    %v6034 = vshll.u32 %v5951, 16
    %v6036 = vor.u32 %v6033, %v6034
    %v6037 = vrot.slane %v6033, 4
    %v6039 = vshrl.u32 %v5952, 16
    %v6041 = vrot.slane %v6039, 7
    %v6042 = vshll.u32 %v5952, 16
    %v6044 = vor.u32 %v6041, %v6042
    %v6045 = vrot.slane %v6041, 4
    %v6047 = vshrl.u32 %v5953, 16
    %v6049 = vrot.slane %v6047, 7
    %v6050 = vshll.u32 %v5953, 16
    %v6052 = vor.u32 %v6049, %v6050
    %v6053 = vrot.slane %v6049, 4
    %v6055 = vshrl.u32 %v5954, 16
    %v6057 = vrot.slane %v6055, 7
    %v6058 = vshll.u32 %v5954, 16
    %v6060 = vor.u32 %v6057, %v6058
    %v6061 = vrot.slane %v6057, 4
    %v6063 = vshrl.u32 %v5955, 16
    %v6065 = vrot.slane %v6063, 7
    %v6066 = vshll.u32 %v5955, 16
    %v6068 = vor.u32 %v6065, %v6066
    %v6069 = vrot.slane %v6065, 4
    %v6071 = vshrl.u32 %v5956, 16
    %v6073 = vrot.slane %v6071, 7
    %v6074 = vshll.u32 %v5956, 16
    %v6076 = vor.u32 %v6073, %v6074
    %v6077 = vrot.slane %v6073, 4
    %v6079 = vshrl.u32 %v5957, 16
    %v6081 = vrot.slane %v6079, 7
    %v6082 = vshll.u32 %v5957, 16
    %v6084 = vor.u32 %v6081, %v6082
    %v6085 = vrot.slane %v6081, 4
    %vm6118 = vcmask 1047556
    %vm6119 = vsmask.f32 7954
    %vm6120 = vmand %vm6118, %vm6119
    %vm6121 = vmor %vm6120, %vm355
    %v6122 = vld [vmem:[%s352] sm:$0xff]
    %v6123 = vsel %vm6121, %v5964, %v6122
    %6124 = vst [vmem:[%s352] sm:$0xff] %v6123
    %vm6125 = vcmask 1044484
    %vm6126 = vsmask.f32 4352
    %vm6127 = vmand %vm6125, %vm6126
    %vm6128 = vmor %vm6127, %vm361
    %v6129 = vld [vmem:[%s352 + $0x8] sm:$0x11]
    %v6130 = vsel %vm6128, %v5965, %v6129
    %6131 = vst [vmem:[%s352 + $0x8] sm:$0x11] %v6130
    %v6132 = vld [vmem:[%s352 + $0x10] sm:$0xff]
    %v6133 = vsel %vm6121, %v5972, %v6132
    %6134 = vst [vmem:[%s352 + $0x10] sm:$0xff] %v6133
    %v6135 = vld [vmem:[%s352 + $0x18] sm:$0x11]
    %v6136 = vsel %vm6128, %v5973, %v6135
    %6137 = vst [vmem:[%s352 + $0x18] sm:$0x11] %v6136
    %v6138 = vld [vmem:[%s352 + $0x20] sm:$0xff]
    %v6139 = vsel %vm6121, %v5980, %v6138
    %6140 = vst [vmem:[%s352 + $0x20] sm:$0xff] %v6139
    %v6141 = vld [vmem:[%s352 + $0x28] sm:$0x11]
    %v6142 = vsel %vm6128, %v5981, %v6141
    %6143 = vst [vmem:[%s352 + $0x28] sm:$0x11] %v6142
    %v6144 = vld [vmem:[%s352 + $0x30] sm:$0xff]
    %v6145 = vsel %vm6121, %v5988, %v6144
    %6146 = vst [vmem:[%s352 + $0x30] sm:$0xff] %v6145
    %v6147 = vld [vmem:[%s352 + $0x38] sm:$0x11]
    %v6148 = vsel %vm6128, %v5989, %v6147
    %6149 = vst [vmem:[%s352 + $0x38] sm:$0x11] %v6148
    %v6150 = vld [vmem:[%s352 + $0x40] sm:$0xff]
    %v6151 = vsel %vm6121, %v5996, %v6150
    %6152 = vst [vmem:[%s352 + $0x40] sm:$0xff] %v6151
    %v6153 = vld [vmem:[%s352 + $0x48] sm:$0x11]
    %v6154 = vsel %vm6128, %v5997, %v6153
    %6155 = vst [vmem:[%s352 + $0x48] sm:$0x11] %v6154
    %v6156 = vld [vmem:[%s352 + $0x50] sm:$0xff]
    %v6157 = vsel %vm6121, %v6004, %v6156
    %6158 = vst [vmem:[%s352 + $0x50] sm:$0xff] %v6157
    %v6159 = vld [vmem:[%s352 + $0x58] sm:$0x11]
    %v6160 = vsel %vm6128, %v6005, %v6159
    %6161 = vst [vmem:[%s352 + $0x58] sm:$0x11] %v6160
    %v6162 = vld [vmem:[%s352 + $0x60] sm:$0xff]
    %v6163 = vsel %vm6121, %v6012, %v6162
    %6164 = vst [vmem:[%s352 + $0x60] sm:$0xff] %v6163
    %v6165 = vld [vmem:[%s352 + $0x68] sm:$0x11]
    %v6166 = vsel %vm6128, %v6013, %v6165
    %6167 = vst [vmem:[%s352 + $0x68] sm:$0x11] %v6166
    %v6168 = vld [vmem:[%s352 + $0x70] sm:$0xff]
    %v6169 = vsel %vm6121, %v6020, %v6168
    %6170 = vst [vmem:[%s352 + $0x70] sm:$0xff] %v6169
    %v6171 = vld [vmem:[%s352 + $0x78] sm:$0x11]
    %v6172 = vsel %vm6128, %v6021, %v6171
    %6173 = vst [vmem:[%s352 + $0x78] sm:$0x11] %v6172
    %v6174 = vld [vmem:[%s352 + $0xa0] sm:$0xff]
    %v6175 = vsel %vm6121, %v6028, %v6174
    %6176 = vst [vmem:[%s352 + $0xa0] sm:$0xff] %v6175
    %v6177 = vld [vmem:[%s352 + $0xa8] sm:$0x11]
    %v6178 = vsel %vm6128, %v6029, %v6177
    %6179 = vst [vmem:[%s352 + $0xa8] sm:$0x11] %v6178
    %v6180 = vld [vmem:[%s352 + $0xb0] sm:$0xff]
    %v6181 = vsel %vm6121, %v6036, %v6180
    %6182 = vst [vmem:[%s352 + $0xb0] sm:$0xff] %v6181
    %v6183 = vld [vmem:[%s352 + $0xb8] sm:$0x11]
    %v6184 = vsel %vm6128, %v6037, %v6183
    %6185 = vst [vmem:[%s352 + $0xb8] sm:$0x11] %v6184
    %v6186 = vld [vmem:[%s352 + $0xc0] sm:$0xff]
    %v6187 = vsel %vm6121, %v6044, %v6186
    %6188 = vst [vmem:[%s352 + $0xc0] sm:$0xff] %v6187
    %v6189 = vld [vmem:[%s352 + $0xc8] sm:$0x11]
    %v6190 = vsel %vm6128, %v6045, %v6189
    %6191 = vst [vmem:[%s352 + $0xc8] sm:$0x11] %v6190
    %v6192 = vld [vmem:[%s352 + $0xd0] sm:$0xff]
    %v6193 = vsel %vm6121, %v6052, %v6192
    %6194 = vst [vmem:[%s352 + $0xd0] sm:$0xff] %v6193
    %v6195 = vld [vmem:[%s352 + $0xd8] sm:$0x11]
    %v6196 = vsel %vm6128, %v6053, %v6195
    %6197 = vst [vmem:[%s352 + $0xd8] sm:$0x11] %v6196
    %v6198 = vld [vmem:[%s352 + $0xe0] sm:$0xff]
    %v6199 = vsel %vm6121, %v6060, %v6198
    %6200 = vst [vmem:[%s352 + $0xe0] sm:$0xff] %v6199
    %v6201 = vld [vmem:[%s352 + $0xe8] sm:$0x11]
    %v6202 = vsel %vm6128, %v6061, %v6201
    %6203 = vst [vmem:[%s352 + $0xe8] sm:$0x11] %v6202
    %v6204 = vld [vmem:[%s352 + $0xf0] sm:$0xff]
    %v6205 = vsel %vm6121, %v6068, %v6204
    %6206 = vst [vmem:[%s352 + $0xf0] sm:$0xff] %v6205
    %v6207 = vld [vmem:[%s352 + $0xf8] sm:$0x11]
    %v6208 = vsel %vm6128, %v6069, %v6207
    %6209 = vst [vmem:[%s352 + $0xf8] sm:$0x11] %v6208
    %v6210 = vld [vmem:[%s352 + $0x100] sm:$0xff]
    %v6211 = vsel %vm6121, %v6076, %v6210
    %6212 = vst [vmem:[%s352 + $0x100] sm:$0xff] %v6211
    %v6213 = vld [vmem:[%s352 + $0x108] sm:$0x11]
    %v6214 = vsel %vm6128, %v6077, %v6213
    %6215 = vst [vmem:[%s352 + $0x108] sm:$0x11] %v6214
    %v6216 = vld [vmem:[%s352 + $0x110] sm:$0xff]
    %v6217 = vsel %vm6121, %v6084, %v6216
    %6218 = vst [vmem:[%s352 + $0x110] sm:$0xff] %v6217
    %v6219 = vld [vmem:[%s352 + $0x118] sm:$0x11]
    %v6220 = vsel %vm6128, %v6085, %v6219
    %6221 = vst [vmem:[%s352 + $0x118] sm:$0x11] %v6220
    %v6222 = vld [vmem:[#allocation2] sm:$0xff]
    %v6223 = vld [vmem:[#allocation2 + $0x10] sm:$0xff]
    %v6224 = vld [vmem:[#allocation2 + $0x20] sm:$0xff]
    %v6225 = vld [vmem:[#allocation2 + $0x30] sm:$0xff]
    %v6226 = vld [vmem:[#allocation2 + $0x40] sm:$0xff]
    %v6227 = vld [vmem:[#allocation2 + $0x50] sm:$0xff]
    %v6228 = vld [vmem:[#allocation2 + $0x60] sm:$0xff]
    %v6229 = vld [vmem:[#allocation2 + $0x70] sm:$0xff]
    %v6230 = vld [vmem:[#allocation2 + $0xa0] sm:$0xff]
    %v6231 = vld [vmem:[#allocation2 + $0xb0] sm:$0xff]
    %v6232 = vld [vmem:[#allocation2 + $0xc0] sm:$0xff]
    %v6233 = vld [vmem:[#allocation2 + $0xd0] sm:$0xff]
    %v6234 = vld [vmem:[#allocation2 + $0xe0] sm:$0xff]
    %v6235 = vld [vmem:[#allocation2 + $0xf0] sm:$0xff]
    %v6236 = vld [vmem:[#allocation2 + $0x100] sm:$0xff]
    %v6237 = vld [vmem:[#allocation2 + $0x110] sm:$0xff]
    %v6238 = vld [vmem:[#allocation2 + $0x8] sm:$0x11]
    %v6239 = vld [vmem:[#allocation2 + $0x18] sm:$0x11]
    %v6240 = vld [vmem:[#allocation2 + $0x28] sm:$0x11]
    %v6241 = vld [vmem:[#allocation2 + $0x38] sm:$0x11]
    %v6242 = vld [vmem:[#allocation2 + $0x48] sm:$0x11]
    %v6243 = vld [vmem:[#allocation2 + $0x58] sm:$0x11]
    %v6244 = vld [vmem:[#allocation2 + $0x68] sm:$0x11]
    %v6245 = vld [vmem:[#allocation2 + $0x78] sm:$0x11]
    %v6246 = vld [vmem:[#allocation2 + $0xa8] sm:$0x11]
    %v6247 = vld [vmem:[#allocation2 + $0xb8] sm:$0x11]
    %v6248 = vld [vmem:[#allocation2 + $0xc8] sm:$0x11]
    %v6249 = vld [vmem:[#allocation2 + $0xd8] sm:$0x11]
    %v6250 = vld [vmem:[#allocation2 + $0xe8] sm:$0x11]
    %v6251 = vld [vmem:[#allocation2 + $0xf8] sm:$0x11]
    %v6252 = vld [vmem:[#allocation2 + $0x108] sm:$0x11]
    %v6253 = vld [vmem:[#allocation2 + $0x118] sm:$0x11]
    %v6254 = vld [vmem:[#allocation2] sm:$0xee]
    %v6255 = vld [vmem:[#allocation2 + $0x10] sm:$0xee]
    %v6256 = vld [vmem:[#allocation2 + $0x20] sm:$0xee]
    %v6257 = vld [vmem:[#allocation2 + $0x30] sm:$0xee]
    %v6258 = vld [vmem:[#allocation2 + $0x40] sm:$0xee]
    %v6259 = vld [vmem:[#allocation2 + $0x50] sm:$0xee]
    %v6260 = vld [vmem:[#allocation2 + $0x60] sm:$0xee]
    %v6261 = vld [vmem:[#allocation2 + $0x70] sm:$0xee]
    %v6262 = vld [vmem:[#allocation2 + $0xa0] sm:$0xee]
    %v6263 = vld [vmem:[#allocation2 + $0xb0] sm:$0xee]
    %v6264 = vld [vmem:[#allocation2 + $0xc0] sm:$0xee]
    %v6265 = vld [vmem:[#allocation2 + $0xd0] sm:$0xee]
    %v6266 = vld [vmem:[#allocation2 + $0xe0] sm:$0xee]
    %v6267 = vld [vmem:[#allocation2 + $0xf0] sm:$0xee]
    %v6268 = vld [vmem:[#allocation2 + $0x100] sm:$0xee]
    %v6269 = vld [vmem:[#allocation2 + $0x110] sm:$0xee]
    %v6286 = vunpack.c.l.b16 %v6222
    %v6287 = vunpack.c.h.b16 %v6222
    %v6288 = vunpack.c.l.b16 %v6223
    %v6289 = vunpack.c.h.b16 %v6223
    %v6290 = vunpack.c.l.b16 %v6224
    %v6291 = vunpack.c.h.b16 %v6224
    %v6292 = vunpack.c.l.b16 %v6225
    %v6293 = vunpack.c.h.b16 %v6225
    %v6294 = vunpack.c.l.b16 %v6226
    %v6295 = vunpack.c.h.b16 %v6226
    %v6296 = vunpack.c.l.b16 %v6227
    %v6297 = vunpack.c.h.b16 %v6227
    %v6298 = vunpack.c.l.b16 %v6228
    %v6299 = vunpack.c.h.b16 %v6228
    %v6300 = vunpack.c.l.b16 %v6229
    %v6301 = vunpack.c.h.b16 %v6229
    %v6302 = vunpack.c.l.b16 %v6230
    %v6303 = vunpack.c.h.b16 %v6230
    %v6304 = vunpack.c.l.b16 %v6231
    %v6305 = vunpack.c.h.b16 %v6231
    %v6306 = vunpack.c.l.b16 %v6232
    %v6307 = vunpack.c.h.b16 %v6232
    %v6308 = vunpack.c.l.b16 %v6233
    %v6309 = vunpack.c.h.b16 %v6233
    %v6310 = vunpack.c.l.b16 %v6234
    %v6311 = vunpack.c.h.b16 %v6234
    %v6312 = vunpack.c.l.b16 %v6235
    %v6313 = vunpack.c.h.b16 %v6235
    %v6314 = vunpack.c.l.b16 %v6236
    %v6315 = vunpack.c.h.b16 %v6236
    %v6316 = vunpack.c.l.b16 %v6237
    %v6317 = vunpack.c.h.b16 %v6237
    %v6334 = vunpack.c.l.b16 %v6238
    %v6335 = vunpack.c.h.b16 %v6238
    %v6336 = vunpack.c.l.b16 %v6239
    %v6337 = vunpack.c.h.b16 %v6239
    %v6338 = vunpack.c.l.b16 %v6240
    %v6339 = vunpack.c.h.b16 %v6240
    %v6340 = vunpack.c.l.b16 %v6241
    %v6341 = vunpack.c.h.b16 %v6241
    %v6342 = vunpack.c.l.b16 %v6242
    %v6343 = vunpack.c.h.b16 %v6242
    %v6344 = vunpack.c.l.b16 %v6243
    %v6345 = vunpack.c.h.b16 %v6243
    %v6346 = vunpack.c.l.b16 %v6244
    %v6347 = vunpack.c.h.b16 %v6244
    %v6348 = vunpack.c.l.b16 %v6245
    %v6349 = vunpack.c.h.b16 %v6245
    %v6350 = vunpack.c.l.b16 %v6246
    %v6351 = vunpack.c.h.b16 %v6246
    %v6352 = vunpack.c.l.b16 %v6247
    %v6353 = vunpack.c.h.b16 %v6247
    %v6354 = vunpack.c.l.b16 %v6248
    %v6355 = vunpack.c.h.b16 %v6248
    %v6356 = vunpack.c.l.b16 %v6249
    %v6357 = vunpack.c.h.b16 %v6249
    %v6358 = vunpack.c.l.b16 %v6250
    %v6359 = vunpack.c.h.b16 %v6250
    %v6360 = vunpack.c.l.b16 %v6251
    %v6361 = vunpack.c.h.b16 %v6251
    %v6362 = vunpack.c.l.b16 %v6252
    %v6363 = vunpack.c.h.b16 %v6252
    %v6364 = vunpack.c.l.b16 %v6253
    %v6365 = vunpack.c.h.b16 %v6253
    %v6366 = vpack.c.b16 %v6334, %v6286
    %v6367 = vpack.c.b16 %v6335, %v6287
    %v6368 = vpack.c.b16 %v6336, %v6288
    %v6369 = vpack.c.b16 %v6337, %v6289
    %v6370 = vpack.c.b16 %v6338, %v6290
    %v6371 = vpack.c.b16 %v6339, %v6291
    %v6372 = vpack.c.b16 %v6340, %v6292
    %v6373 = vpack.c.b16 %v6341, %v6293
    %v6374 = vpack.c.b16 %v6342, %v6294
    %v6375 = vpack.c.b16 %v6343, %v6295
    %v6376 = vpack.c.b16 %v6344, %v6296
    %v6377 = vpack.c.b16 %v6345, %v6297
    %v6378 = vpack.c.b16 %v6346, %v6298
    %v6379 = vpack.c.b16 %v6347, %v6299
    %v6380 = vpack.c.b16 %v6348, %v6300
    %v6381 = vpack.c.b16 %v6349, %v6301
    %v6382 = vpack.c.b16 %v6350, %v6302
    %v6383 = vpack.c.b16 %v6351, %v6303
    %v6384 = vpack.c.b16 %v6352, %v6304
    %v6385 = vpack.c.b16 %v6353, %v6305
    %v6386 = vpack.c.b16 %v6354, %v6306
    %v6387 = vpack.c.b16 %v6355, %v6307
    %v6388 = vpack.c.b16 %v6356, %v6308
    %v6389 = vpack.c.b16 %v6357, %v6309
    %v6390 = vpack.c.b16 %v6358, %v6310
    %v6391 = vpack.c.b16 %v6359, %v6311
    %v6392 = vpack.c.b16 %v6360, %v6312
    %v6393 = vpack.c.b16 %v6361, %v6313
    %v6394 = vpack.c.b16 %v6362, %v6314
    %v6395 = vpack.c.b16 %v6363, %v6315
    %v6396 = vpack.c.b16 %v6364, %v6316
    %v6397 = vpack.c.b16 %v6365, %v6317
    %v6399 = vshrl.u32 %v6366, 16
    %v6401 = vshll.u32 %v6366, 16
    %v6403 = vrot.slane %v6401, 1
    %v6404 = vor.u32 %v6399, %v6403
    %v6406 = vshrl.u32 %v6367, 16
    %v6408 = vshll.u32 %v6367, 16
    %v6410 = vrot.slane %v6408, 1
    %v6411 = vor.u32 %v6406, %v6410
    %v6413 = vshrl.u32 %v6368, 16
    %v6415 = vshll.u32 %v6368, 16
    %v6417 = vrot.slane %v6415, 1
    %v6418 = vor.u32 %v6413, %v6417
    %v6420 = vshrl.u32 %v6369, 16
    %v6422 = vshll.u32 %v6369, 16
    %v6424 = vrot.slane %v6422, 1
    %v6425 = vor.u32 %v6420, %v6424
    %v6427 = vshrl.u32 %v6370, 16
    %v6429 = vshll.u32 %v6370, 16
    %v6431 = vrot.slane %v6429, 1
    %v6432 = vor.u32 %v6427, %v6431
    %v6434 = vshrl.u32 %v6371, 16
    %v6436 = vshll.u32 %v6371, 16
    %v6438 = vrot.slane %v6436, 1
    %v6439 = vor.u32 %v6434, %v6438
    %v6441 = vshrl.u32 %v6372, 16
    %v6443 = vshll.u32 %v6372, 16
    %v6445 = vrot.slane %v6443, 1
    %v6446 = vor.u32 %v6441, %v6445
    %v6448 = vshrl.u32 %v6373, 16
    %v6450 = vshll.u32 %v6373, 16
    %v6452 = vrot.slane %v6450, 1
    %v6453 = vor.u32 %v6448, %v6452
    %v6455 = vshrl.u32 %v6374, 16
    %v6457 = vshll.u32 %v6374, 16
    %v6459 = vrot.slane %v6457, 1
    %v6460 = vor.u32 %v6455, %v6459
    %v6462 = vshrl.u32 %v6375, 16
    %v6464 = vshll.u32 %v6375, 16
    %v6466 = vrot.slane %v6464, 1
    %v6467 = vor.u32 %v6462, %v6466
    %v6469 = vshrl.u32 %v6376, 16
    %v6471 = vshll.u32 %v6376, 16
    %v6473 = vrot.slane %v6471, 1
    %v6474 = vor.u32 %v6469, %v6473
    %v6476 = vshrl.u32 %v6377, 16
    %v6478 = vshll.u32 %v6377, 16
    %v6480 = vrot.slane %v6478, 1
    %v6481 = vor.u32 %v6476, %v6480
    %v6483 = vshrl.u32 %v6378, 16
    %v6485 = vshll.u32 %v6378, 16
    %v6487 = vrot.slane %v6485, 1
    %v6488 = vor.u32 %v6483, %v6487
    %v6490 = vshrl.u32 %v6379, 16
    %v6492 = vshll.u32 %v6379, 16
    %v6494 = vrot.slane %v6492, 1
    %v6495 = vor.u32 %v6490, %v6494
    %v6497 = vshrl.u32 %v6380, 16
    %v6499 = vshll.u32 %v6380, 16
    %v6501 = vrot.slane %v6499, 1
    %v6502 = vor.u32 %v6497, %v6501
    %v6504 = vshrl.u32 %v6381, 16
    %v6506 = vshll.u32 %v6381, 16
    %v6508 = vrot.slane %v6506, 1
    %v6509 = vor.u32 %v6504, %v6508
    %v6511 = vshrl.u32 %v6382, 16
    %v6513 = vshll.u32 %v6382, 16
    %v6515 = vrot.slane %v6513, 1
    %v6516 = vor.u32 %v6511, %v6515
    %v6518 = vshrl.u32 %v6383, 16
    %v6520 = vshll.u32 %v6383, 16
    %v6522 = vrot.slane %v6520, 1
    %v6523 = vor.u32 %v6518, %v6522
    %v6525 = vshrl.u32 %v6384, 16
    %v6527 = vshll.u32 %v6384, 16
    %v6529 = vrot.slane %v6527, 1
    %v6530 = vor.u32 %v6525, %v6529
    %v6532 = vshrl.u32 %v6385, 16
    %v6534 = vshll.u32 %v6385, 16
    %v6536 = vrot.slane %v6534, 1
    %v6537 = vor.u32 %v6532, %v6536
    %v6539 = vshrl.u32 %v6386, 16
    %v6541 = vshll.u32 %v6386, 16
    %v6543 = vrot.slane %v6541, 1
    %v6544 = vor.u32 %v6539, %v6543
    %v6546 = vshrl.u32 %v6387, 16
    %v6548 = vshll.u32 %v6387, 16
    %v6550 = vrot.slane %v6548, 1
    %v6551 = vor.u32 %v6546, %v6550
    %v6553 = vshrl.u32 %v6388, 16
    %v6555 = vshll.u32 %v6388, 16
    %v6557 = vrot.slane %v6555, 1
    %v6558 = vor.u32 %v6553, %v6557
    %v6560 = vshrl.u32 %v6389, 16
    %v6562 = vshll.u32 %v6389, 16
    %v6564 = vrot.slane %v6562, 1
    %v6565 = vor.u32 %v6560, %v6564
    %v6567 = vshrl.u32 %v6390, 16
    %v6569 = vshll.u32 %v6390, 16
    %v6571 = vrot.slane %v6569, 1
    %v6572 = vor.u32 %v6567, %v6571
    %v6574 = vshrl.u32 %v6391, 16
    %v6576 = vshll.u32 %v6391, 16
    %v6578 = vrot.slane %v6576, 1
    %v6579 = vor.u32 %v6574, %v6578
    %v6581 = vshrl.u32 %v6392, 16
    %v6583 = vshll.u32 %v6392, 16
    %v6585 = vrot.slane %v6583, 1
    %v6586 = vor.u32 %v6581, %v6585
    %v6588 = vshrl.u32 %v6393, 16
    %v6590 = vshll.u32 %v6393, 16
    %v6592 = vrot.slane %v6590, 1
    %v6593 = vor.u32 %v6588, %v6592
    %v6595 = vshrl.u32 %v6394, 16
    %v6597 = vshll.u32 %v6394, 16
    %v6599 = vrot.slane %v6597, 1
    %v6600 = vor.u32 %v6595, %v6599
    %v6602 = vshrl.u32 %v6395, 16
    %v6604 = vshll.u32 %v6395, 16
    %v6606 = vrot.slane %v6604, 1
    %v6607 = vor.u32 %v6602, %v6606
    %v6609 = vshrl.u32 %v6396, 16
    %v6611 = vshll.u32 %v6396, 16
    %v6613 = vrot.slane %v6611, 1
    %v6614 = vor.u32 %v6609, %v6613
    %v6616 = vshrl.u32 %v6397, 16
    %v6618 = vshll.u32 %v6397, 16
    %v6620 = vrot.slane %v6618, 1
    %v6621 = vor.u32 %v6616, %v6620
    %v6638 = vunpack.c.l.b16 %v6254
    %v6639 = vunpack.c.h.b16 %v6254
    %v6640 = vunpack.c.l.b16 %v6255
    %v6641 = vunpack.c.h.b16 %v6255
    %v6642 = vunpack.c.l.b16 %v6256
    %v6643 = vunpack.c.h.b16 %v6256
    %v6644 = vunpack.c.l.b16 %v6257
    %v6645 = vunpack.c.h.b16 %v6257
    %v6646 = vunpack.c.l.b16 %v6258
    %v6647 = vunpack.c.h.b16 %v6258
    %v6648 = vunpack.c.l.b16 %v6259
    %v6649 = vunpack.c.h.b16 %v6259
    %v6650 = vunpack.c.l.b16 %v6260
    %v6651 = vunpack.c.h.b16 %v6260
    %v6652 = vunpack.c.l.b16 %v6261
    %v6653 = vunpack.c.h.b16 %v6261
    %v6654 = vunpack.c.l.b16 %v6262
    %v6655 = vunpack.c.h.b16 %v6262
    %v6656 = vunpack.c.l.b16 %v6263
    %v6657 = vunpack.c.h.b16 %v6263
    %v6658 = vunpack.c.l.b16 %v6264
    %v6659 = vunpack.c.h.b16 %v6264
    %v6660 = vunpack.c.l.b16 %v6265
    %v6661 = vunpack.c.h.b16 %v6265
    %v6662 = vunpack.c.l.b16 %v6266
    %v6663 = vunpack.c.h.b16 %v6266
    %v6664 = vunpack.c.l.b16 %v6267
    %v6665 = vunpack.c.h.b16 %v6267
    %v6666 = vunpack.c.l.b16 %v6268
    %v6667 = vunpack.c.h.b16 %v6268
    %v6668 = vunpack.c.l.b16 %v6269
    %v6669 = vunpack.c.h.b16 %v6269
    %v6670 = vpack.c.b16 %v6334, %v6638
    %v6671 = vpack.c.b16 %v6335, %v6639
    %v6672 = vpack.c.b16 %v6336, %v6640
    %v6673 = vpack.c.b16 %v6337, %v6641
    %v6674 = vpack.c.b16 %v6338, %v6642
    %v6675 = vpack.c.b16 %v6339, %v6643
    %v6676 = vpack.c.b16 %v6340, %v6644
    %v6677 = vpack.c.b16 %v6341, %v6645
    %v6678 = vpack.c.b16 %v6342, %v6646
    %v6679 = vpack.c.b16 %v6343, %v6647
    %v6680 = vpack.c.b16 %v6344, %v6648
    %v6681 = vpack.c.b16 %v6345, %v6649
    %v6682 = vpack.c.b16 %v6346, %v6650
    %v6683 = vpack.c.b16 %v6347, %v6651
    %v6684 = vpack.c.b16 %v6348, %v6652
    %v6685 = vpack.c.b16 %v6349, %v6653
    %v6686 = vpack.c.b16 %v6350, %v6654
    %v6687 = vpack.c.b16 %v6351, %v6655
    %v6688 = vpack.c.b16 %v6352, %v6656
    %v6689 = vpack.c.b16 %v6353, %v6657
    %v6690 = vpack.c.b16 %v6354, %v6658
    %v6691 = vpack.c.b16 %v6355, %v6659
    %v6692 = vpack.c.b16 %v6356, %v6660
    %v6693 = vpack.c.b16 %v6357, %v6661
    %v6694 = vpack.c.b16 %v6358, %v6662
    %v6695 = vpack.c.b16 %v6359, %v6663
    %v6696 = vpack.c.b16 %v6360, %v6664
    %v6697 = vpack.c.b16 %v6361, %v6665
    %v6698 = vpack.c.b16 %v6362, %v6666
    %v6699 = vpack.c.b16 %v6363, %v6667
    %v6700 = vpack.c.b16 %v6364, %v6668
    %v6701 = vpack.c.b16 %v6365, %v6669
    %v6702 = vrot.slane %v6670, 1
    %v6703 = vrot.slane %v6671, 1
    %v6704 = vrot.slane %v6672, 1
    %v6705 = vrot.slane %v6673, 1
    %v6706 = vrot.slane %v6674, 1
    %v6707 = vrot.slane %v6675, 1
    %v6708 = vrot.slane %v6676, 1
    %v6709 = vrot.slane %v6677, 1
    %v6710 = vrot.slane %v6678, 1
    %v6711 = vrot.slane %v6679, 1
    %v6712 = vrot.slane %v6680, 1
    %v6713 = vrot.slane %v6681, 1
    %v6714 = vrot.slane %v6682, 1
    %v6715 = vrot.slane %v6683, 1
    %v6716 = vrot.slane %v6684, 1
    %v6717 = vrot.slane %v6685, 1
    %v6718 = vrot.slane %v6686, 1
    %v6719 = vrot.slane %v6687, 1
    %v6720 = vrot.slane %v6688, 1
    %v6721 = vrot.slane %v6689, 1
    %v6722 = vrot.slane %v6690, 1
    %v6723 = vrot.slane %v6691, 1
    %v6724 = vrot.slane %v6692, 1
    %v6725 = vrot.slane %v6693, 1
    %v6726 = vrot.slane %v6694, 1
    %v6727 = vrot.slane %v6695, 1
    %v6728 = vrot.slane %v6696, 1
    %v6729 = vrot.slane %v6697, 1
    %v6730 = vrot.slane %v6698, 1
    %v6731 = vrot.slane %v6699, 1
    %v6732 = vrot.slane %v6700, 1
    %v6733 = vrot.slane %v6701, 1
    %v6734 = vunpack.c.l.b16 %v6404
    %v6735 = vunpack.c.l.b16 %v6411
    %v6736 = vunpack.c.l.b16 %v6702
    %v6737 = vunpack.c.l.b16 %v6703
    %v6738 = vunpack.c.l.b16 %v6418
    %v6739 = vunpack.c.l.b16 %v6425
    %v6740 = vunpack.c.l.b16 %v6704
    %v6741 = vunpack.c.l.b16 %v6705
    %v6742 = vunpack.c.l.b16 %v6432
    %v6743 = vunpack.c.l.b16 %v6439
    %v6744 = vunpack.c.l.b16 %v6706
    %v6745 = vunpack.c.l.b16 %v6707
    %v6746 = vunpack.c.l.b16 %v6446
    %v6747 = vunpack.c.l.b16 %v6453
    %v6748 = vunpack.c.l.b16 %v6708
    %v6749 = vunpack.c.l.b16 %v6709
    %v6750 = vunpack.c.l.b16 %v6460
    %v6751 = vunpack.c.l.b16 %v6467
    %v6752 = vunpack.c.l.b16 %v6710
    %v6753 = vunpack.c.l.b16 %v6711
    %v6754 = vunpack.c.l.b16 %v6474
    %v6755 = vunpack.c.l.b16 %v6481
    %v6756 = vunpack.c.l.b16 %v6712
    %v6757 = vunpack.c.l.b16 %v6713
    %v6758 = vunpack.c.l.b16 %v6488
    %v6759 = vunpack.c.l.b16 %v6495
    %v6760 = vunpack.c.l.b16 %v6714
    %v6761 = vunpack.c.l.b16 %v6715
    %v6762 = vunpack.c.l.b16 %v6502
    %v6763 = vunpack.c.l.b16 %v6509
    %v6764 = vunpack.c.l.b16 %v6716
    %v6765 = vunpack.c.l.b16 %v6717
    %v6766 = vunpack.c.l.b16 %v6516
    %v6767 = vunpack.c.l.b16 %v6523
    %v6768 = vunpack.c.l.b16 %v6718
    %v6769 = vunpack.c.l.b16 %v6719
    %v6770 = vunpack.c.l.b16 %v6530
    %v6771 = vunpack.c.l.b16 %v6537
    %v6772 = vunpack.c.l.b16 %v6720
    %v6773 = vunpack.c.l.b16 %v6721
    %v6774 = vunpack.c.l.b16 %v6544
    %v6775 = vunpack.c.l.b16 %v6551
    %v6776 = vunpack.c.l.b16 %v6722
    %v6777 = vunpack.c.l.b16 %v6723
    %v6778 = vunpack.c.l.b16 %v6558
    %v6779 = vunpack.c.l.b16 %v6565
    %v6780 = vunpack.c.l.b16 %v6724
    %v6781 = vunpack.c.l.b16 %v6725
    %v6782 = vunpack.c.l.b16 %v6572
    %v6783 = vunpack.c.l.b16 %v6579
    %v6784 = vunpack.c.l.b16 %v6726
    %v6785 = vunpack.c.l.b16 %v6727
    %v6786 = vunpack.c.l.b16 %v6586
    %v6787 = vunpack.c.l.b16 %v6593
    %v6788 = vunpack.c.l.b16 %v6728
    %v6789 = vunpack.c.l.b16 %v6729
    %v6790 = vunpack.c.l.b16 %v6600
    %v6791 = vunpack.c.l.b16 %v6607
    %v6792 = vunpack.c.l.b16 %v6730
    %v6793 = vunpack.c.l.b16 %v6731
    %v6794 = vunpack.c.l.b16 %v6614
    %v6795 = vunpack.c.l.b16 %v6621
    %v6796 = vunpack.c.l.b16 %v6732
    %v6797 = vunpack.c.l.b16 %v6733
    %v6798 = vld [vmem:[#allocation11] sm:$0xff]
    %v6799 = vld [vmem:[#allocation11 + $0x8] sm:$0xff]
    %v6800 = vld [vmem:[#allocation11 + $0x10] sm:$0xff]
    %v6801 = vld [vmem:[#allocation11 + $0x18] sm:$0xff]
    %v6802 = vld [vmem:[#allocation11 + $0x20] sm:$0xff]
    %v6803 = vld [vmem:[#allocation11 + $0x28] sm:$0xff]
    %v6804 = vld [vmem:[#allocation11 + $0x30] sm:$0xff]
    %v6805 = vld [vmem:[#allocation11 + $0x38] sm:$0xff]
    %v6806 = vld [vmem:[#allocation11 + $0x40] sm:$0xff]
    %v6807 = vld [vmem:[#allocation11 + $0x48] sm:$0xff]
    %v6808 = vld [vmem:[#allocation11 + $0x50] sm:$0xff]
    %v6809 = vld [vmem:[#allocation11 + $0x58] sm:$0xff]
    %v6810 = vld [vmem:[#allocation11 + $0x60] sm:$0xff]
    %v6811 = vld [vmem:[#allocation11 + $0x68] sm:$0xff]
    %v6812 = vld [vmem:[#allocation11 + $0x70] sm:$0xff]
    %v6813 = vld [vmem:[#allocation11 + $0x78] sm:$0xff]
    %v6814 = vld [vmem:[#allocation11 + $0x80] sm:$0xff]
    %v6815 = vld [vmem:[#allocation11 + $0x88] sm:$0xff]
    %v6816 = vld [vmem:[#allocation11 + $0x90] sm:$0xff]
    %v6817 = vld [vmem:[#allocation11 + $0x98] sm:$0xff]
    %v6818 = vld [vmem:[#allocation11 + $0xa0] sm:$0xff]
    %v6819 = vld [vmem:[#allocation11 + $0xa8] sm:$0xff]
    %v6820 = vld [vmem:[#allocation11 + $0xb0] sm:$0xff]
    %v6821 = vld [vmem:[#allocation11 + $0xb8] sm:$0xff]
    %v6822 = vld [vmem:[#allocation11 + $0xc0] sm:$0xff]
    %v6823 = vld [vmem:[#allocation11 + $0xc8] sm:$0xff]
    %v6824 = vld [vmem:[#allocation11 + $0xd0] sm:$0xff]
    %v6825 = vld [vmem:[#allocation11 + $0xd8] sm:$0xff]
    %v6826 = vld [vmem:[#allocation11 + $0xe0] sm:$0xff]
    %v6827 = vld [vmem:[#allocation11 + $0xe8] sm:$0xff]
    %v6828 = vld [vmem:[#allocation11 + $0xf0] sm:$0xff]
    %v6829 = vld [vmem:[#allocation11 + $0xf8] sm:$0xff]
    %v6830 = vld [vmem:[#allocation11 + $0x100] sm:$0xff]
    %v6831 = vld [vmem:[#allocation11 + $0x108] sm:$0xff]
    %v6832 = vld [vmem:[#allocation11 + $0x110] sm:$0xff]
    %v6833 = vld [vmem:[#allocation11 + $0x118] sm:$0xff]
    %v6834 = vld [vmem:[#allocation11 + $0x120] sm:$0xff]
    %v6835 = vld [vmem:[#allocation11 + $0x128] sm:$0xff]
    %v6836 = vld [vmem:[#allocation11 + $0x130] sm:$0xff]
    %v6837 = vld [vmem:[#allocation11 + $0x138] sm:$0xff]
    %v6838 = vld [vmem:[#allocation11 + $0x140] sm:$0xff]
    %v6839 = vld [vmem:[#allocation11 + $0x148] sm:$0xff]
    %v6840 = vld [vmem:[#allocation11 + $0x150] sm:$0xff]
    %v6841 = vld [vmem:[#allocation11 + $0x158] sm:$0xff]
    %v6842 = vld [vmem:[#allocation11 + $0x160] sm:$0xff]
    %v6843 = vld [vmem:[#allocation11 + $0x168] sm:$0xff]
    %v6844 = vld [vmem:[#allocation11 + $0x170] sm:$0xff]
    %v6845 = vld [vmem:[#allocation11 + $0x178] sm:$0xff]
    %v6846 = vld [vmem:[#allocation11 + $0x180] sm:$0xff]
    %v6847 = vld [vmem:[#allocation11 + $0x188] sm:$0xff]
    %v6848 = vld [vmem:[#allocation11 + $0x190] sm:$0xff]
    %v6849 = vld [vmem:[#allocation11 + $0x198] sm:$0xff]
    %v6850 = vld [vmem:[#allocation11 + $0x1a0] sm:$0xff]
    %v6851 = vld [vmem:[#allocation11 + $0x1a8] sm:$0xff]
    %v6852 = vld [vmem:[#allocation11 + $0x1b0] sm:$0xff]
    %v6853 = vld [vmem:[#allocation11 + $0x1b8] sm:$0xff]
    %v6854 = vld [vmem:[#allocation11 + $0x1c0] sm:$0xff]
    %v6855 = vld [vmem:[#allocation11 + $0x1c8] sm:$0xff]
    %v6856 = vld [vmem:[#allocation11 + $0x1d0] sm:$0xff]
    %v6857 = vld [vmem:[#allocation11 + $0x1d8] sm:$0xff]
    %v6858 = vld [vmem:[#allocation11 + $0x1e0] sm:$0xff]
    %v6859 = vld [vmem:[#allocation11 + $0x1e8] sm:$0xff]
    %v6860 = vld [vmem:[#allocation11 + $0x1f0] sm:$0xff]
    %v6861 = vld [vmem:[#allocation11 + $0x1f8] sm:$0xff]
    %v6862 = vld [vmem:[#allocation11 + $0x200] sm:$0xff]
    %v6863 = vld [vmem:[#allocation11 + $0x208] sm:$0xff]
    %v6864 = vld [vmem:[#allocation11 + $0x210] sm:$0xff]
    %v6865 = vld [vmem:[#allocation11 + $0x218] sm:$0xff]
    %v6866 = vld [vmem:[#allocation11 + $0x220] sm:$0xff]
    %v6867 = vld [vmem:[#allocation11 + $0x228] sm:$0xff]
    %v6868 = vld [vmem:[#allocation11 + $0x230] sm:$0xff]
    %v6869 = vld [vmem:[#allocation11 + $0x238] sm:$0xff]
    %v6870 = vld [vmem:[#allocation11 + $0x240] sm:$0xff]
    %v6871 = vld [vmem:[#allocation11 + $0x248] sm:$0xff]
    %v6872 = vld [vmem:[#allocation11 + $0x250] sm:$0xff]
    %v6873 = vld [vmem:[#allocation11 + $0x258] sm:$0xff]
    %v6874 = vld [vmem:[#allocation11 + $0x260] sm:$0xff]
    %v6875 = vld [vmem:[#allocation11 + $0x268] sm:$0xff]
    %v6876 = vld [vmem:[#allocation11 + $0x270] sm:$0xff]
    %v6877 = vld [vmem:[#allocation11 + $0x278] sm:$0xff]
    %v6878 = vld [vmem:[#allocation11 + $0x280] sm:$0xff]
    %v6879 = vld [vmem:[#allocation11 + $0x288] sm:$0xff]
    %v6880 = vld [vmem:[#allocation11 + $0x290] sm:$0xff]
    %v6881 = vld [vmem:[#allocation11 + $0x298] sm:$0xff]
    %v6882 = vld [vmem:[#allocation11 + $0x2a0] sm:$0xff]
    %v6883 = vld [vmem:[#allocation11 + $0x2a8] sm:$0xff]
    %v6884 = vld [vmem:[#allocation11 + $0x2b0] sm:$0xff]
    %v6885 = vld [vmem:[#allocation11 + $0x2b8] sm:$0xff]
    %v6886 = vld [vmem:[#allocation11 + $0x2c0] sm:$0xff]
    %v6887 = vld [vmem:[#allocation11 + $0x2c8] sm:$0xff]
    %v6888 = vld [vmem:[#allocation11 + $0x2d0] sm:$0xff]
    %v6889 = vld [vmem:[#allocation11 + $0x2d8] sm:$0xff]
    %v6890 = vld [vmem:[#allocation11 + $0x2e0] sm:$0xff]
    %v6891 = vld [vmem:[#allocation11 + $0x2e8] sm:$0xff]
    %v6892 = vld [vmem:[#allocation11 + $0x2f0] sm:$0xff]
    %v6893 = vld [vmem:[#allocation11 + $0x2f8] sm:$0xff]
    %v6894 = vld [vmem:[%s352] sm:$0xff]
    %v6895 = vld [vmem:[%s352 + $0x10] sm:$0xff]
    %v6896 = vld [vmem:[%s352 + $0x20] sm:$0xff]
    %v6897 = vld [vmem:[%s352 + $0x30] sm:$0xff]
    %v6898 = vld [vmem:[%s352 + $0x40] sm:$0xff]
    %v6899 = vld [vmem:[%s352 + $0x50] sm:$0xff]
    %v6900 = vld [vmem:[%s352 + $0x60] sm:$0xff]
    %v6901 = vld [vmem:[%s352 + $0x70] sm:$0xff]
    %v6902 = vld [vmem:[%s352 + $0xa0] sm:$0xff]
    %v6903 = vld [vmem:[%s352 + $0xb0] sm:$0xff]
    %v6904 = vld [vmem:[%s352 + $0xc0] sm:$0xff]
    %v6905 = vld [vmem:[%s352 + $0xd0] sm:$0xff]
    %v6906 = vld [vmem:[%s352 + $0xe0] sm:$0xff]
    %v6907 = vld [vmem:[%s352 + $0xf0] sm:$0xff]
    %v6908 = vld [vmem:[%s352 + $0x100] sm:$0xff]
    %v6909 = vld [vmem:[%s352 + $0x110] sm:$0xff]
    %v6910 = vld [vmem:[%s352 + $0x8] sm:$0x11]
    %v6911 = vld [vmem:[%s352 + $0x18] sm:$0x11]
    %v6912 = vld [vmem:[%s352 + $0x28] sm:$0x11]
    %v6913 = vld [vmem:[%s352 + $0x38] sm:$0x11]
    %v6914 = vld [vmem:[%s352 + $0x48] sm:$0x11]
    %v6915 = vld [vmem:[%s352 + $0x58] sm:$0x11]
    %v6916 = vld [vmem:[%s352 + $0x68] sm:$0x11]
    %v6917 = vld [vmem:[%s352 + $0x78] sm:$0x11]
    %v6918 = vld [vmem:[%s352 + $0xa8] sm:$0x11]
    %v6919 = vld [vmem:[%s352 + $0xb8] sm:$0x11]
    %v6920 = vld [vmem:[%s352 + $0xc8] sm:$0x11]
    %v6921 = vld [vmem:[%s352 + $0xd8] sm:$0x11]
    %v6922 = vld [vmem:[%s352 + $0xe8] sm:$0x11]
    %v6923 = vld [vmem:[%s352 + $0xf8] sm:$0x11]
    %v6924 = vld [vmem:[%s352 + $0x108] sm:$0x11]
    %v6925 = vld [vmem:[%s352 + $0x118] sm:$0x11]
    %v6926 = vld [vmem:[%s352] sm:$0xee]
    %v6927 = vld [vmem:[%s352 + $0x10] sm:$0xee]
    %v6928 = vld [vmem:[%s352 + $0x20] sm:$0xee]
    %v6929 = vld [vmem:[%s352 + $0x30] sm:$0xee]
    %v6930 = vld [vmem:[%s352 + $0x40] sm:$0xee]
    %v6931 = vld [vmem:[%s352 + $0x50] sm:$0xee]
    %v6932 = vld [vmem:[%s352 + $0x60] sm:$0xee]
    %v6933 = vld [vmem:[%s352 + $0x70] sm:$0xee]
    %v6934 = vld [vmem:[%s352 + $0xa0] sm:$0xee]
    %v6935 = vld [vmem:[%s352 + $0xb0] sm:$0xee]
    %v6936 = vld [vmem:[%s352 + $0xc0] sm:$0xee]
    %v6937 = vld [vmem:[%s352 + $0xd0] sm:$0xee]
    %v6938 = vld [vmem:[%s352 + $0xe0] sm:$0xee]
    %v6939 = vld [vmem:[%s352 + $0xf0] sm:$0xee]
    %v6940 = vld [vmem:[%s352 + $0x100] sm:$0xee]
    %v6941 = vld [vmem:[%s352 + $0x110] sm:$0xee]
    %v6958 = vunpack.c.l.b16 %v6894
    %v6959 = vunpack.c.h.b16 %v6894
    %v6960 = vunpack.c.l.b16 %v6895
    %v6961 = vunpack.c.h.b16 %v6895
    %v6962 = vunpack.c.l.b16 %v6896
    %v6963 = vunpack.c.h.b16 %v6896
    %v6964 = vunpack.c.l.b16 %v6897
    %v6965 = vunpack.c.h.b16 %v6897
    %v6966 = vunpack.c.l.b16 %v6898
    %v6967 = vunpack.c.h.b16 %v6898
    %v6968 = vunpack.c.l.b16 %v6899
    %v6969 = vunpack.c.h.b16 %v6899
    %v6970 = vunpack.c.l.b16 %v6900
    %v6971 = vunpack.c.h.b16 %v6900
    %v6972 = vunpack.c.l.b16 %v6901
    %v6973 = vunpack.c.h.b16 %v6901
    %v6974 = vunpack.c.l.b16 %v6902
    %v6975 = vunpack.c.h.b16 %v6902
    %v6976 = vunpack.c.l.b16 %v6903
    %v6977 = vunpack.c.h.b16 %v6903
    %v6978 = vunpack.c.l.b16 %v6904
    %v6979 = vunpack.c.h.b16 %v6904
    %v6980 = vunpack.c.l.b16 %v6905
    %v6981 = vunpack.c.h.b16 %v6905
    %v6982 = vunpack.c.l.b16 %v6906
    %v6983 = vunpack.c.h.b16 %v6906
    %v6984 = vunpack.c.l.b16 %v6907
    %v6985 = vunpack.c.h.b16 %v6907
    %v6986 = vunpack.c.l.b16 %v6908
    %v6987 = vunpack.c.h.b16 %v6908
    %v6988 = vunpack.c.l.b16 %v6909
    %v6989 = vunpack.c.h.b16 %v6909
    %v7006 = vunpack.c.l.b16 %v6910
    %v7007 = vunpack.c.h.b16 %v6910
    %v7008 = vunpack.c.l.b16 %v6911
    %v7009 = vunpack.c.h.b16 %v6911
    %v7010 = vunpack.c.l.b16 %v6912
    %v7011 = vunpack.c.h.b16 %v6912
    %v7012 = vunpack.c.l.b16 %v6913
    %v7013 = vunpack.c.h.b16 %v6913
    %v7014 = vunpack.c.l.b16 %v6914
    %v7015 = vunpack.c.h.b16 %v6914
    %v7016 = vunpack.c.l.b16 %v6915
    %v7017 = vunpack.c.h.b16 %v6915
    %v7018 = vunpack.c.l.b16 %v6916
    %v7019 = vunpack.c.h.b16 %v6916
    %v7020 = vunpack.c.l.b16 %v6917
    %v7021 = vunpack.c.h.b16 %v6917
    %v7022 = vunpack.c.l.b16 %v6918
    %v7023 = vunpack.c.h.b16 %v6918
    %v7024 = vunpack.c.l.b16 %v6919
    %v7025 = vunpack.c.h.b16 %v6919
    %v7026 = vunpack.c.l.b16 %v6920
    %v7027 = vunpack.c.h.b16 %v6920
    %v7028 = vunpack.c.l.b16 %v6921
    %v7029 = vunpack.c.h.b16 %v6921
    %v7030 = vunpack.c.l.b16 %v6922
    %v7031 = vunpack.c.h.b16 %v6922
    %v7032 = vunpack.c.l.b16 %v6923
    %v7033 = vunpack.c.h.b16 %v6923
    %v7034 = vunpack.c.l.b16 %v6924
    %v7035 = vunpack.c.h.b16 %v6924
    %v7036 = vunpack.c.l.b16 %v6925
    %v7037 = vunpack.c.h.b16 %v6925
    %v7038 = vpack.c.b16 %v7006, %v6958
    %v7039 = vpack.c.b16 %v7007, %v6959
    %v7040 = vpack.c.b16 %v7008, %v6960
    %v7041 = vpack.c.b16 %v7009, %v6961
    %v7042 = vpack.c.b16 %v7010, %v6962
    %v7043 = vpack.c.b16 %v7011, %v6963
    %v7044 = vpack.c.b16 %v7012, %v6964
    %v7045 = vpack.c.b16 %v7013, %v6965
    %v7046 = vpack.c.b16 %v7014, %v6966
    %v7047 = vpack.c.b16 %v7015, %v6967
    %v7048 = vpack.c.b16 %v7016, %v6968
    %v7049 = vpack.c.b16 %v7017, %v6969
    %v7050 = vpack.c.b16 %v7018, %v6970
    %v7051 = vpack.c.b16 %v7019, %v6971
    %v7052 = vpack.c.b16 %v7020, %v6972
    %v7053 = vpack.c.b16 %v7021, %v6973
    %v7054 = vpack.c.b16 %v7022, %v6974
    %v7055 = vpack.c.b16 %v7023, %v6975
    %v7056 = vpack.c.b16 %v7024, %v6976
    %v7057 = vpack.c.b16 %v7025, %v6977
    %v7058 = vpack.c.b16 %v7026, %v6978
    %v7059 = vpack.c.b16 %v7027, %v6979
    %v7060 = vpack.c.b16 %v7028, %v6980
    %v7061 = vpack.c.b16 %v7029, %v6981
    %v7062 = vpack.c.b16 %v7030, %v6982
    %v7063 = vpack.c.b16 %v7031, %v6983
    %v7064 = vpack.c.b16 %v7032, %v6984
    %v7065 = vpack.c.b16 %v7033, %v6985
    %v7066 = vpack.c.b16 %v7034, %v6986
    %v7067 = vpack.c.b16 %v7035, %v6987
    %v7068 = vpack.c.b16 %v7036, %v6988
    %v7069 = vpack.c.b16 %v7037, %v6989
    %v7071 = vshrl.u32 %v7038, 16
    %v7073 = vshll.u32 %v7038, 16
    %v7075 = vrot.slane %v7073, 1
    %v7076 = vor.u32 %v7071, %v7075
    %v7078 = vshrl.u32 %v7039, 16
    %v7080 = vshll.u32 %v7039, 16
    %v7082 = vrot.slane %v7080, 1
    %v7083 = vor.u32 %v7078, %v7082
    %v7085 = vshrl.u32 %v7040, 16
    %v7087 = vshll.u32 %v7040, 16
    %v7089 = vrot.slane %v7087, 1
    %v7090 = vor.u32 %v7085, %v7089
    %v7092 = vshrl.u32 %v7041, 16
    %v7094 = vshll.u32 %v7041, 16
    %v7096 = vrot.slane %v7094, 1
    %v7097 = vor.u32 %v7092, %v7096
    %v7099 = vshrl.u32 %v7042, 16
    %v7101 = vshll.u32 %v7042, 16
    %v7103 = vrot.slane %v7101, 1
    %v7104 = vor.u32 %v7099, %v7103
    %v7106 = vshrl.u32 %v7043, 16
    %v7108 = vshll.u32 %v7043, 16
    %v7110 = vrot.slane %v7108, 1
    %v7111 = vor.u32 %v7106, %v7110
    %v7113 = vshrl.u32 %v7044, 16
    %v7115 = vshll.u32 %v7044, 16
    %v7117 = vrot.slane %v7115, 1
    %v7118 = vor.u32 %v7113, %v7117
    %v7120 = vshrl.u32 %v7045, 16
    %v7122 = vshll.u32 %v7045, 16
    %v7124 = vrot.slane %v7122, 1
    %v7125 = vor.u32 %v7120, %v7124
    %v7127 = vshrl.u32 %v7046, 16
    %v7129 = vshll.u32 %v7046, 16
    %v7131 = vrot.slane %v7129, 1
    %v7132 = vor.u32 %v7127, %v7131
    %v7134 = vshrl.u32 %v7047, 16
    %v7136 = vshll.u32 %v7047, 16
    %v7138 = vrot.slane %v7136, 1
    %v7139 = vor.u32 %v7134, %v7138
    %v7141 = vshrl.u32 %v7048, 16
    %v7143 = vshll.u32 %v7048, 16
    %v7145 = vrot.slane %v7143, 1
    %v7146 = vor.u32 %v7141, %v7145
    %v7148 = vshrl.u32 %v7049, 16
    %v7150 = vshll.u32 %v7049, 16
    %v7152 = vrot.slane %v7150, 1
    %v7153 = vor.u32 %v7148, %v7152
    %v7155 = vshrl.u32 %v7050, 16
    %v7157 = vshll.u32 %v7050, 16
    %v7159 = vrot.slane %v7157, 1
    %v7160 = vor.u32 %v7155, %v7159
    %v7162 = vshrl.u32 %v7051, 16
    %v7164 = vshll.u32 %v7051, 16
    %v7166 = vrot.slane %v7164, 1
    %v7167 = vor.u32 %v7162, %v7166
    %v7169 = vshrl.u32 %v7052, 16
    %v7171 = vshll.u32 %v7052, 16
    %v7173 = vrot.slane %v7171, 1
    %v7174 = vor.u32 %v7169, %v7173
    %v7176 = vshrl.u32 %v7053, 16
    %v7178 = vshll.u32 %v7053, 16
    %v7180 = vrot.slane %v7178, 1
    %v7181 = vor.u32 %v7176, %v7180
    %v7183 = vshrl.u32 %v7054, 16
    %v7185 = vshll.u32 %v7054, 16
    %v7187 = vrot.slane %v7185, 1
    %v7188 = vor.u32 %v7183, %v7187
    %v7190 = vshrl.u32 %v7055, 16
    %v7192 = vshll.u32 %v7055, 16
    %v7194 = vrot.slane %v7192, 1
    %v7195 = vor.u32 %v7190, %v7194
    %v7197 = vshrl.u32 %v7056, 16
    %v7199 = vshll.u32 %v7056, 16
    %v7201 = vrot.slane %v7199, 1
    %v7202 = vor.u32 %v7197, %v7201
    %v7204 = vshrl.u32 %v7057, 16
    %v7206 = vshll.u32 %v7057, 16
    %v7208 = vrot.slane %v7206, 1
    %v7209 = vor.u32 %v7204, %v7208
    %v7211 = vshrl.u32 %v7058, 16
    %v7213 = vshll.u32 %v7058, 16
    %v7215 = vrot.slane %v7213, 1
    %v7216 = vor.u32 %v7211, %v7215
    %v7218 = vshrl.u32 %v7059, 16
    %v7220 = vshll.u32 %v7059, 16
    %v7222 = vrot.slane %v7220, 1
    %v7223 = vor.u32 %v7218, %v7222
    %v7225 = vshrl.u32 %v7060, 16
    %v7227 = vshll.u32 %v7060, 16
    %v7229 = vrot.slane %v7227, 1
    %v7230 = vor.u32 %v7225, %v7229
    %v7232 = vshrl.u32 %v7061, 16
    %v7234 = vshll.u32 %v7061, 16
    %v7236 = vrot.slane %v7234, 1
    %v7237 = vor.u32 %v7232, %v7236
    %v7239 = vshrl.u32 %v7062, 16
    %v7241 = vshll.u32 %v7062, 16
    %v7243 = vrot.slane %v7241, 1
    %v7244 = vor.u32 %v7239, %v7243
    %v7246 = vshrl.u32 %v7063, 16
    %v7248 = vshll.u32 %v7063, 16
    %v7250 = vrot.slane %v7248, 1
    %v7251 = vor.u32 %v7246, %v7250
    %v7253 = vshrl.u32 %v7064, 16
    %v7255 = vshll.u32 %v7064, 16
    %v7257 = vrot.slane %v7255, 1
    %v7258 = vor.u32 %v7253, %v7257
    %v7260 = vshrl.u32 %v7065, 16
    %v7262 = vshll.u32 %v7065, 16
    %v7264 = vrot.slane %v7262, 1
    %v7265 = vor.u32 %v7260, %v7264
    %v7267 = vshrl.u32 %v7066, 16
    %v7269 = vshll.u32 %v7066, 16
    %v7271 = vrot.slane %v7269, 1
    %v7272 = vor.u32 %v7267, %v7271
    %v7274 = vshrl.u32 %v7067, 16
    %v7276 = vshll.u32 %v7067, 16
    %v7278 = vrot.slane %v7276, 1
    %v7279 = vor.u32 %v7274, %v7278
    %v7281 = vshrl.u32 %v7068, 16
    %v7283 = vshll.u32 %v7068, 16
    %v7285 = vrot.slane %v7283, 1
    %v7286 = vor.u32 %v7281, %v7285
    %v7288 = vshrl.u32 %v7069, 16
    %v7290 = vshll.u32 %v7069, 16
    %v7292 = vrot.slane %v7290, 1
    %v7293 = vor.u32 %v7288, %v7292
    %v7310 = vunpack.c.l.b16 %v6926
    %v7311 = vunpack.c.h.b16 %v6926
    %v7312 = vunpack.c.l.b16 %v6927
    %v7313 = vunpack.c.h.b16 %v6927
    %v7314 = vunpack.c.l.b16 %v6928
    %v7315 = vunpack.c.h.b16 %v6928
    %v7316 = vunpack.c.l.b16 %v6929
    %v7317 = vunpack.c.h.b16 %v6929
    %v7318 = vunpack.c.l.b16 %v6930
    %v7319 = vunpack.c.h.b16 %v6930
    %v7320 = vunpack.c.l.b16 %v6931
    %v7321 = vunpack.c.h.b16 %v6931
    %v7322 = vunpack.c.l.b16 %v6932
    %v7323 = vunpack.c.h.b16 %v6932
    %v7324 = vunpack.c.l.b16 %v6933
    %v7325 = vunpack.c.h.b16 %v6933
    %v7326 = vunpack.c.l.b16 %v6934
    %v7327 = vunpack.c.h.b16 %v6934
    %v7328 = vunpack.c.l.b16 %v6935
    %v7329 = vunpack.c.h.b16 %v6935
    %v7330 = vunpack.c.l.b16 %v6936
    %v7331 = vunpack.c.h.b16 %v6936
    %v7332 = vunpack.c.l.b16 %v6937
    %v7333 = vunpack.c.h.b16 %v6937
    %v7334 = vunpack.c.l.b16 %v6938
    %v7335 = vunpack.c.h.b16 %v6938
    %v7336 = vunpack.c.l.b16 %v6939
    %v7337 = vunpack.c.h.b16 %v6939
    %v7338 = vunpack.c.l.b16 %v6940
    %v7339 = vunpack.c.h.b16 %v6940
    %v7340 = vunpack.c.l.b16 %v6941
    %v7341 = vunpack.c.h.b16 %v6941
    %v7342 = vpack.c.b16 %v7006, %v7310
    %v7343 = vpack.c.b16 %v7007, %v7311
    %v7344 = vpack.c.b16 %v7008, %v7312
    %v7345 = vpack.c.b16 %v7009, %v7313
    %v7346 = vpack.c.b16 %v7010, %v7314
    %v7347 = vpack.c.b16 %v7011, %v7315
    %v7348 = vpack.c.b16 %v7012, %v7316
    %v7349 = vpack.c.b16 %v7013, %v7317
    %v7350 = vpack.c.b16 %v7014, %v7318
    %v7351 = vpack.c.b16 %v7015, %v7319
    %v7352 = vpack.c.b16 %v7016, %v7320
    %v7353 = vpack.c.b16 %v7017, %v7321
    %v7354 = vpack.c.b16 %v7018, %v7322
    %v7355 = vpack.c.b16 %v7019, %v7323
    %v7356 = vpack.c.b16 %v7020, %v7324
    %v7357 = vpack.c.b16 %v7021, %v7325
    %v7358 = vpack.c.b16 %v7022, %v7326
    %v7359 = vpack.c.b16 %v7023, %v7327
    %v7360 = vpack.c.b16 %v7024, %v7328
    %v7361 = vpack.c.b16 %v7025, %v7329
    %v7362 = vpack.c.b16 %v7026, %v7330
    %v7363 = vpack.c.b16 %v7027, %v7331
    %v7364 = vpack.c.b16 %v7028, %v7332
    %v7365 = vpack.c.b16 %v7029, %v7333
    %v7366 = vpack.c.b16 %v7030, %v7334
    %v7367 = vpack.c.b16 %v7031, %v7335
    %v7368 = vpack.c.b16 %v7032, %v7336
    %v7369 = vpack.c.b16 %v7033, %v7337
    %v7370 = vpack.c.b16 %v7034, %v7338
    %v7371 = vpack.c.b16 %v7035, %v7339
    %v7372 = vpack.c.b16 %v7036, %v7340
    %v7373 = vpack.c.b16 %v7037, %v7341
    %v7374 = vrot.slane %v7342, 1
    %v7375 = vrot.slane %v7343, 1
    %v7376 = vrot.slane %v7344, 1
    %v7377 = vrot.slane %v7345, 1
    %v7378 = vrot.slane %v7346, 1
    %v7379 = vrot.slane %v7347, 1
    %v7380 = vrot.slane %v7348, 1
    %v7381 = vrot.slane %v7349, 1
    %v7382 = vrot.slane %v7350, 1
    %v7383 = vrot.slane %v7351, 1
    %v7384 = vrot.slane %v7352, 1
    %v7385 = vrot.slane %v7353, 1
    %v7386 = vrot.slane %v7354, 1
    %v7387 = vrot.slane %v7355, 1
    %v7388 = vrot.slane %v7356, 1
    %v7389 = vrot.slane %v7357, 1
    %v7390 = vrot.slane %v7358, 1
    %v7391 = vrot.slane %v7359, 1
    %v7392 = vrot.slane %v7360, 1
    %v7393 = vrot.slane %v7361, 1
    %v7394 = vrot.slane %v7362, 1
    %v7395 = vrot.slane %v7363, 1
    %v7396 = vrot.slane %v7364, 1
    %v7397 = vrot.slane %v7365, 1
    %v7398 = vrot.slane %v7366, 1
    %v7399 = vrot.slane %v7367, 1
    %v7400 = vrot.slane %v7368, 1
    %v7401 = vrot.slane %v7369, 1
    %v7402 = vrot.slane %v7370, 1
    %v7403 = vrot.slane %v7371, 1
    %v7404 = vrot.slane %v7372, 1
    %v7405 = vrot.slane %v7373, 1
    %v7406 = vunpack.c.l.b16 %v7076
    %v7407 = vunpack.c.l.b16 %v7083
    %v7408 = vunpack.c.l.b16 %v7374
    %v7409 = vunpack.c.l.b16 %v7375
    %v7410 = vunpack.c.l.b16 %v7090
    %v7411 = vunpack.c.l.b16 %v7097
    %v7412 = vunpack.c.l.b16 %v7376
    %v7413 = vunpack.c.l.b16 %v7377
    %v7414 = vunpack.c.l.b16 %v7104
    %v7415 = vunpack.c.l.b16 %v7111
    %v7416 = vunpack.c.l.b16 %v7378
    %v7417 = vunpack.c.l.b16 %v7379
    %v7418 = vunpack.c.l.b16 %v7118
    %v7419 = vunpack.c.l.b16 %v7125
    %v7420 = vunpack.c.l.b16 %v7380
    %v7421 = vunpack.c.l.b16 %v7381
    %v7422 = vunpack.c.l.b16 %v7132
    %v7423 = vunpack.c.l.b16 %v7139
    %v7424 = vunpack.c.l.b16 %v7382
    %v7425 = vunpack.c.l.b16 %v7383
    %v7426 = vunpack.c.l.b16 %v7146
    %v7427 = vunpack.c.l.b16 %v7153
    %v7428 = vunpack.c.l.b16 %v7384
    %v7429 = vunpack.c.l.b16 %v7385
    %v7430 = vunpack.c.l.b16 %v7160
    %v7431 = vunpack.c.l.b16 %v7167
    %v7432 = vunpack.c.l.b16 %v7386
    %v7433 = vunpack.c.l.b16 %v7387
    %v7434 = vunpack.c.l.b16 %v7174
    %v7435 = vunpack.c.l.b16 %v7181
    %v7436 = vunpack.c.l.b16 %v7388
    %v7437 = vunpack.c.l.b16 %v7389
    %v7438 = vunpack.c.l.b16 %v7188
    %v7439 = vunpack.c.l.b16 %v7195
    %v7440 = vunpack.c.l.b16 %v7390
    %v7441 = vunpack.c.l.b16 %v7391
    %v7442 = vunpack.c.l.b16 %v7202
    %v7443 = vunpack.c.l.b16 %v7209
    %v7444 = vunpack.c.l.b16 %v7392
    %v7445 = vunpack.c.l.b16 %v7393
    %v7446 = vunpack.c.l.b16 %v7216
    %v7447 = vunpack.c.l.b16 %v7223
    %v7448 = vunpack.c.l.b16 %v7394
    %v7449 = vunpack.c.l.b16 %v7395
    %v7450 = vunpack.c.l.b16 %v7230
    %v7451 = vunpack.c.l.b16 %v7237
    %v7452 = vunpack.c.l.b16 %v7396
    %v7453 = vunpack.c.l.b16 %v7397
    %v7454 = vunpack.c.l.b16 %v7244
    %v7455 = vunpack.c.l.b16 %v7251
    %v7456 = vunpack.c.l.b16 %v7398
    %v7457 = vunpack.c.l.b16 %v7399
    %v7458 = vunpack.c.l.b16 %v7258
    %v7459 = vunpack.c.l.b16 %v7265
    %v7460 = vunpack.c.l.b16 %v7400
    %v7461 = vunpack.c.l.b16 %v7401
    %v7462 = vunpack.c.l.b16 %v7272
    %v7463 = vunpack.c.l.b16 %v7279
    %v7464 = vunpack.c.l.b16 %v7402
    %v7465 = vunpack.c.l.b16 %v7403
    %v7466 = vunpack.c.l.b16 %v7286
    %v7467 = vunpack.c.l.b16 %v7293
    %v7468 = vunpack.c.l.b16 %v7404
    %v7469 = vunpack.c.l.b16 %v7405
    %v7470 = vld [vmem:[#allocation11 + $0x300] sm:$0xff]
    %v7471 = vld [vmem:[#allocation11 + $0x308] sm:$0xff]
    %v7472 = vld [vmem:[#allocation11 + $0x310] sm:$0xff]
    %v7473 = vld [vmem:[#allocation11 + $0x318] sm:$0xff]
    %v7474 = vld [vmem:[#allocation11 + $0x320] sm:$0xff]
    %v7475 = vld [vmem:[#allocation11 + $0x328] sm:$0xff]
    %v7476 = vld [vmem:[#allocation11 + $0x330] sm:$0xff]
    %v7477 = vld [vmem:[#allocation11 + $0x338] sm:$0xff]
    %v7478 = vld [vmem:[#allocation11 + $0x340] sm:$0xff]
    %v7479 = vld [vmem:[#allocation11 + $0x348] sm:$0xff]
    %v7480 = vld [vmem:[#allocation11 + $0x350] sm:$0xff]
    %v7481 = vld [vmem:[#allocation11 + $0x358] sm:$0xff]
    %v7482 = vld [vmem:[#allocation11 + $0x360] sm:$0xff]
    %v7483 = vld [vmem:[#allocation11 + $0x368] sm:$0xff]
    %v7484 = vld [vmem:[#allocation11 + $0x370] sm:$0xff]
    %v7485 = vld [vmem:[#allocation11 + $0x378] sm:$0xff]
    %v7486 = vld [vmem:[#allocation11 + $0x380] sm:$0xff]
    %v7487 = vld [vmem:[#allocation11 + $0x388] sm:$0xff]
    %v7488 = vld [vmem:[#allocation11 + $0x390] sm:$0xff]
    %v7489 = vld [vmem:[#allocation11 + $0x398] sm:$0xff]
    %v7490 = vld [vmem:[#allocation11 + $0x3a0] sm:$0xff]
    %v7491 = vld [vmem:[#allocation11 + $0x3a8] sm:$0xff]
    %v7492 = vld [vmem:[#allocation11 + $0x3b0] sm:$0xff]
    %v7493 = vld [vmem:[#allocation11 + $0x3b8] sm:$0xff]
    %v7494 = vld [vmem:[#allocation11 + $0x3c0] sm:$0xff]
    %v7495 = vld [vmem:[#allocation11 + $0x3c8] sm:$0xff]
    %v7496 = vld [vmem:[#allocation11 + $0x3d0] sm:$0xff]
    %v7497 = vld [vmem:[#allocation11 + $0x3d8] sm:$0xff]
    %v7498 = vld [vmem:[#allocation11 + $0x3e0] sm:$0xff]
    %v7499 = vld [vmem:[#allocation11 + $0x3e8] sm:$0xff]
    %v7500 = vld [vmem:[#allocation11 + $0x3f0] sm:$0xff]
    %v7501 = vld [vmem:[#allocation11 + $0x3f8] sm:$0xff]
    %v7502 = vld [vmem:[#allocation11 + $0x400] sm:$0xff]
    %v7503 = vld [vmem:[#allocation11 + $0x408] sm:$0xff]
    %v7504 = vld [vmem:[#allocation11 + $0x410] sm:$0xff]
    %v7505 = vld [vmem:[#allocation11 + $0x418] sm:$0xff]
    %v7506 = vld [vmem:[#allocation11 + $0x420] sm:$0xff]
    %v7507 = vld [vmem:[#allocation11 + $0x428] sm:$0xff]
    %v7508 = vld [vmem:[#allocation11 + $0x430] sm:$0xff]
    %v7509 = vld [vmem:[#allocation11 + $0x438] sm:$0xff]
    %v7510 = vld [vmem:[#allocation11 + $0x440] sm:$0xff]
    %v7511 = vld [vmem:[#allocation11 + $0x448] sm:$0xff]
    %v7512 = vld [vmem:[#allocation11 + $0x450] sm:$0xff]
    %v7513 = vld [vmem:[#allocation11 + $0x458] sm:$0xff]
    %v7514 = vld [vmem:[#allocation11 + $0x460] sm:$0xff]
    %v7515 = vld [vmem:[#allocation11 + $0x468] sm:$0xff]
    %v7516 = vld [vmem:[#allocation11 + $0x470] sm:$0xff]
    %v7517 = vld [vmem:[#allocation11 + $0x478] sm:$0xff]
    %v7518 = vld [vmem:[#allocation11 + $0x480] sm:$0xff]
    %v7519 = vld [vmem:[#allocation11 + $0x488] sm:$0xff]
    %v7520 = vld [vmem:[#allocation11 + $0x490] sm:$0xff]
    %v7521 = vld [vmem:[#allocation11 + $0x498] sm:$0xff]
    %v7522 = vld [vmem:[#allocation11 + $0x4a0] sm:$0xff]
    %v7523 = vld [vmem:[#allocation11 + $0x4a8] sm:$0xff]
    %v7524 = vld [vmem:[#allocation11 + $0x4b0] sm:$0xff]
    %v7525 = vld [vmem:[#allocation11 + $0x4b8] sm:$0xff]
    %v7526 = vld [vmem:[#allocation11 + $0x4c0] sm:$0xff]
    %v7527 = vld [vmem:[#allocation11 + $0x4c8] sm:$0xff]
    %v7528 = vld [vmem:[#allocation11 + $0x4d0] sm:$0xff]
    %v7529 = vld [vmem:[#allocation11 + $0x4d8] sm:$0xff]
    %v7530 = vld [vmem:[#allocation11 + $0x4e0] sm:$0xff]
    %v7531 = vld [vmem:[#allocation11 + $0x4e8] sm:$0xff]
    %v7532 = vld [vmem:[#allocation11 + $0x4f0] sm:$0xff]
    %v7533 = vld [vmem:[#allocation11 + $0x4f8] sm:$0xff]
    %v7534 = vld [vmem:[#allocation11 + $0x500] sm:$0xff]
    %v7535 = vld [vmem:[#allocation11 + $0x508] sm:$0xff]
    %v7536 = vld [vmem:[#allocation11 + $0x510] sm:$0xff]
    %v7537 = vld [vmem:[#allocation11 + $0x518] sm:$0xff]
    %v7538 = vld [vmem:[#allocation11 + $0x520] sm:$0xff]
    %v7539 = vld [vmem:[#allocation11 + $0x528] sm:$0xff]
    %v7540 = vld [vmem:[#allocation11 + $0x530] sm:$0xff]
    %v7541 = vld [vmem:[#allocation11 + $0x538] sm:$0xff]
    %v7542 = vld [vmem:[#allocation11 + $0x540] sm:$0xff]
    %v7543 = vld [vmem:[#allocation11 + $0x548] sm:$0xff]
    %v7544 = vld [vmem:[#allocation11 + $0x550] sm:$0xff]
    %v7545 = vld [vmem:[#allocation11 + $0x558] sm:$0xff]
    %v7546 = vld [vmem:[#allocation11 + $0x560] sm:$0xff]
    %v7547 = vld [vmem:[#allocation11 + $0x568] sm:$0xff]
    %v7548 = vld [vmem:[#allocation11 + $0x570] sm:$0xff]
    %v7549 = vld [vmem:[#allocation11 + $0x578] sm:$0xff]
    %v7550 = vld [vmem:[#allocation11 + $0x580] sm:$0xff]
    %v7551 = vld [vmem:[#allocation11 + $0x588] sm:$0xff]
    %v7552 = vld [vmem:[#allocation11 + $0x590] sm:$0xff]
    %v7553 = vld [vmem:[#allocation11 + $0x598] sm:$0xff]
    %v7554 = vld [vmem:[#allocation11 + $0x5a0] sm:$0xff]
    %v7555 = vld [vmem:[#allocation11 + $0x5a8] sm:$0xff]
    %v7556 = vld [vmem:[#allocation11 + $0x5b0] sm:$0xff]
    %v7557 = vld [vmem:[#allocation11 + $0x5b8] sm:$0xff]
    %v7558 = vld [vmem:[#allocation11 + $0x5c0] sm:$0xff]
    %v7559 = vld [vmem:[#allocation11 + $0x5c8] sm:$0xff]
    %v7560 = vld [vmem:[#allocation11 + $0x5d0] sm:$0xff]
    %v7561 = vld [vmem:[#allocation11 + $0x5d8] sm:$0xff]
    %v7562 = vld [vmem:[#allocation11 + $0x5e0] sm:$0xff]
    %v7563 = vld [vmem:[#allocation11 + $0x5e8] sm:$0xff]
    %v7564 = vld [vmem:[#allocation11 + $0x5f0] sm:$0xff]
    %v7565 = vld [vmem:[#allocation11 + $0x5f8] sm:$0xff]
    %v7566 = vpack.c.b16 %v6960, %v6958
    %v7567 = vpack.c.b16 %v6961, %v6959
    %v7568 = vpack.c.b16 %v7410, %v7406
    %v7569 = vpack.c.b16 %v7411, %v7407
    %v7570 = vpack.c.b16 %v7412, %v7408
    %v7571 = vpack.c.b16 %v7413, %v7409
    %v7572 = vpack.c.b16 %v6964, %v6962
    %v7573 = vpack.c.b16 %v6965, %v6963
    %v7574 = vpack.c.b16 %v7418, %v7414
    %v7575 = vpack.c.b16 %v7419, %v7415
    %v7576 = vpack.c.b16 %v7420, %v7416
    %v7577 = vpack.c.b16 %v7421, %v7417
    %v7578 = vpack.c.b16 %v6968, %v6966
    %v7579 = vpack.c.b16 %v6969, %v6967
    %v7580 = vpack.c.b16 %v7426, %v7422
    %v7581 = vpack.c.b16 %v7427, %v7423
    %v7582 = vpack.c.b16 %v7428, %v7424
    %v7583 = vpack.c.b16 %v7429, %v7425
    %v7584 = vpack.c.b16 %v6972, %v6970
    %v7585 = vpack.c.b16 %v6973, %v6971
    %v7586 = vpack.c.b16 %v7434, %v7430
    %v7587 = vpack.c.b16 %v7435, %v7431
    %v7588 = vpack.c.b16 %v7436, %v7432
    %v7589 = vpack.c.b16 %v7437, %v7433
    %v7590 = vpack.c.b16 %v6976, %v6974
    %v7591 = vpack.c.b16 %v6977, %v6975
    %v7592 = vpack.c.b16 %v7442, %v7438
    %v7593 = vpack.c.b16 %v7443, %v7439
    %v7594 = vpack.c.b16 %v7444, %v7440
    %v7595 = vpack.c.b16 %v7445, %v7441
    %v7596 = vpack.c.b16 %v6980, %v6978
    %v7597 = vpack.c.b16 %v6981, %v6979
    %v7598 = vpack.c.b16 %v7450, %v7446
    %v7599 = vpack.c.b16 %v7451, %v7447
    %v7600 = vpack.c.b16 %v7452, %v7448
    %v7601 = vpack.c.b16 %v7453, %v7449
    %v7602 = vpack.c.b16 %v6984, %v6982
    %v7603 = vpack.c.b16 %v6985, %v6983
    %v7604 = vpack.c.b16 %v7458, %v7454
    %v7605 = vpack.c.b16 %v7459, %v7455
    %v7606 = vpack.c.b16 %v7460, %v7456
    %v7607 = vpack.c.b16 %v7461, %v7457
    %v7608 = vpack.c.b16 %v6988, %v6986
    %v7609 = vpack.c.b16 %v6989, %v6987
    %v7610 = vpack.c.b16 %v7466, %v7462
    %v7611 = vpack.c.b16 %v7467, %v7463
    %v7612 = vpack.c.b16 %v7468, %v7464
    %v7613 = vpack.c.b16 %v7469, %v7465
    %v7758 = vunpack.c.l.b16 %v7470
    %v7759 = vunpack.c.h.b16 %v7470
    %v7760 = vunpack.c.l.b16 %v7471
    %v7761 = vunpack.c.h.b16 %v7471
    %v7762 = vunpack.c.l.b16 %v7472
    %v7763 = vunpack.c.h.b16 %v7472
    %v7764 = vunpack.c.l.b16 %v7473
    %v7765 = vunpack.c.h.b16 %v7473
    %v7766 = vunpack.c.l.b16 %v7474
    %v7767 = vunpack.c.h.b16 %v7474
    %v7768 = vunpack.c.l.b16 %v7475
    %v7769 = vunpack.c.h.b16 %v7475
    %v7770 = vunpack.c.l.b16 %v7476
    %v7771 = vunpack.c.h.b16 %v7476
    %v7772 = vunpack.c.l.b16 %v7477
    %v7773 = vunpack.c.h.b16 %v7477
    %v7774 = vunpack.c.l.b16 %v7478
    %v7775 = vunpack.c.h.b16 %v7478
    %v7776 = vunpack.c.l.b16 %v7479
    %v7777 = vunpack.c.h.b16 %v7479
    %v7778 = vunpack.c.l.b16 %v7480
    %v7779 = vunpack.c.h.b16 %v7480
    %v7780 = vunpack.c.l.b16 %v7481
    %v7781 = vunpack.c.h.b16 %v7481
    %v7782 = vunpack.c.l.b16 %v7482
    %v7783 = vunpack.c.h.b16 %v7482
    %v7784 = vunpack.c.l.b16 %v7483
    %v7785 = vunpack.c.h.b16 %v7483
    %v7786 = vunpack.c.l.b16 %v7484
    %v7787 = vunpack.c.h.b16 %v7484
    %v7788 = vunpack.c.l.b16 %v7485
    %v7789 = vunpack.c.h.b16 %v7485
    %v7790 = vunpack.c.l.b16 %v7486
    %v7791 = vunpack.c.h.b16 %v7486
    %v7792 = vunpack.c.l.b16 %v7487
    %v7793 = vunpack.c.h.b16 %v7487
    %v7794 = vunpack.c.l.b16 %v7488
    %v7795 = vunpack.c.h.b16 %v7488
    %v7796 = vunpack.c.l.b16 %v7489
    %v7797 = vunpack.c.h.b16 %v7489
    %v7798 = vunpack.c.l.b16 %v7490
    %v7799 = vunpack.c.h.b16 %v7490
    %v7800 = vunpack.c.l.b16 %v7491
    %v7801 = vunpack.c.h.b16 %v7491
    %v7802 = vunpack.c.l.b16 %v7492
    %v7803 = vunpack.c.h.b16 %v7492
    %v7804 = vunpack.c.l.b16 %v7493
    %v7805 = vunpack.c.h.b16 %v7493
    %v7806 = vunpack.c.l.b16 %v7494
    %v7807 = vunpack.c.h.b16 %v7494
    %v7808 = vunpack.c.l.b16 %v7495
    %v7809 = vunpack.c.h.b16 %v7495
    %v7810 = vunpack.c.l.b16 %v7496
    %v7811 = vunpack.c.h.b16 %v7496
    %v7812 = vunpack.c.l.b16 %v7497
    %v7813 = vunpack.c.h.b16 %v7497
    %v7814 = vunpack.c.l.b16 %v7498
    %v7815 = vunpack.c.h.b16 %v7498
    %v7816 = vunpack.c.l.b16 %v7499
    %v7817 = vunpack.c.h.b16 %v7499
    %v7818 = vunpack.c.l.b16 %v7500
    %v7819 = vunpack.c.h.b16 %v7500
    %v7820 = vunpack.c.l.b16 %v7501
    %v7821 = vunpack.c.h.b16 %v7501
    %v7822 = vunpack.c.l.b16 %v7502
    %v7823 = vunpack.c.h.b16 %v7502
    %v7824 = vunpack.c.l.b16 %v7503
    %v7825 = vunpack.c.h.b16 %v7503
    %v7826 = vunpack.c.l.b16 %v7504
    %v7827 = vunpack.c.h.b16 %v7504
    %v7828 = vunpack.c.l.b16 %v7505
    %v7829 = vunpack.c.h.b16 %v7505
    %v7830 = vunpack.c.l.b16 %v7506
    %v7831 = vunpack.c.h.b16 %v7506
    %v7832 = vunpack.c.l.b16 %v7507
    %v7833 = vunpack.c.h.b16 %v7507
    %v7834 = vunpack.c.l.b16 %v7508
    %v7835 = vunpack.c.h.b16 %v7508
    %v7836 = vunpack.c.l.b16 %v7509
    %v7837 = vunpack.c.h.b16 %v7509
    %v7838 = vunpack.c.l.b16 %v7510
    %v7839 = vunpack.c.h.b16 %v7510
    %v7840 = vunpack.c.l.b16 %v7511
    %v7841 = vunpack.c.h.b16 %v7511
    %v7842 = vunpack.c.l.b16 %v7512
    %v7843 = vunpack.c.h.b16 %v7512
    %v7844 = vunpack.c.l.b16 %v7513
    %v7845 = vunpack.c.h.b16 %v7513
    %v7846 = vunpack.c.l.b16 %v7514
    %v7847 = vunpack.c.h.b16 %v7514
    %v7848 = vunpack.c.l.b16 %v7515
    %v7849 = vunpack.c.h.b16 %v7515
    %v7850 = vunpack.c.l.b16 %v7516
    %v7851 = vunpack.c.h.b16 %v7516
    %v7852 = vunpack.c.l.b16 %v7517
    %v7853 = vunpack.c.h.b16 %v7517
    %v7854 = vunpack.c.l.b16 %v7518
    %v7855 = vunpack.c.h.b16 %v7518
    %v7856 = vunpack.c.l.b16 %v7519
    %v7857 = vunpack.c.h.b16 %v7519
    %v7858 = vunpack.c.l.b16 %v7520
    %v7859 = vunpack.c.h.b16 %v7520
    %v7860 = vunpack.c.l.b16 %v7521
    %v7861 = vunpack.c.h.b16 %v7521
    %v7862 = vunpack.c.l.b16 %v7522
    %v7863 = vunpack.c.h.b16 %v7522
    %v7864 = vunpack.c.l.b16 %v7523
    %v7865 = vunpack.c.h.b16 %v7523
    %v7866 = vunpack.c.l.b16 %v7524
    %v7867 = vunpack.c.h.b16 %v7524
    %v7868 = vunpack.c.l.b16 %v7525
    %v7869 = vunpack.c.h.b16 %v7525
    %v7870 = vunpack.c.l.b16 %v7526
    %v7871 = vunpack.c.h.b16 %v7526
    %v7872 = vunpack.c.l.b16 %v7527
    %v7873 = vunpack.c.h.b16 %v7527
    %v7874 = vunpack.c.l.b16 %v7528
    %v7875 = vunpack.c.h.b16 %v7528
    %v7876 = vunpack.c.l.b16 %v7529
    %v7877 = vunpack.c.h.b16 %v7529
    %v7878 = vunpack.c.l.b16 %v7530
    %v7879 = vunpack.c.h.b16 %v7530
    %v7880 = vunpack.c.l.b16 %v7531
    %v7881 = vunpack.c.h.b16 %v7531
    %v7882 = vunpack.c.l.b16 %v7532
    %v7883 = vunpack.c.h.b16 %v7532
    %v7884 = vunpack.c.l.b16 %v7533
    %v7885 = vunpack.c.h.b16 %v7533
    %v7886 = vunpack.c.l.b16 %v7534
    %v7887 = vunpack.c.h.b16 %v7534
    %v7888 = vunpack.c.l.b16 %v7535
    %v7889 = vunpack.c.h.b16 %v7535
    %v7890 = vunpack.c.l.b16 %v7536
    %v7891 = vunpack.c.h.b16 %v7536
    %v7892 = vunpack.c.l.b16 %v7537
    %v7893 = vunpack.c.h.b16 %v7537
    %v7894 = vunpack.c.l.b16 %v7538
    %v7895 = vunpack.c.h.b16 %v7538
    %v7896 = vunpack.c.l.b16 %v7539
    %v7897 = vunpack.c.h.b16 %v7539
    %v7898 = vunpack.c.l.b16 %v7540
    %v7899 = vunpack.c.h.b16 %v7540
    %v7900 = vunpack.c.l.b16 %v7541
    %v7901 = vunpack.c.h.b16 %v7541
    %v7902 = vunpack.c.l.b16 %v7542
    %v7903 = vunpack.c.h.b16 %v7542
    %v7904 = vunpack.c.l.b16 %v7543
    %v7905 = vunpack.c.h.b16 %v7543
    %v7906 = vunpack.c.l.b16 %v7544
    %v7907 = vunpack.c.h.b16 %v7544
    %v7908 = vunpack.c.l.b16 %v7545
    %v7909 = vunpack.c.h.b16 %v7545
    %v7910 = vunpack.c.l.b16 %v7546
    %v7911 = vunpack.c.h.b16 %v7546
    %v7912 = vunpack.c.l.b16 %v7547
    %v7913 = vunpack.c.h.b16 %v7547
    %v7914 = vunpack.c.l.b16 %v7548
    %v7915 = vunpack.c.h.b16 %v7548
    %v7916 = vunpack.c.l.b16 %v7549
    %v7917 = vunpack.c.h.b16 %v7549
    %v7918 = vunpack.c.l.b16 %v7550
    %v7919 = vunpack.c.h.b16 %v7550
    %v7920 = vunpack.c.l.b16 %v7551
    %v7921 = vunpack.c.h.b16 %v7551
    %v7922 = vunpack.c.l.b16 %v7552
    %v7923 = vunpack.c.h.b16 %v7552
    %v7924 = vunpack.c.l.b16 %v7553
    %v7925 = vunpack.c.h.b16 %v7553
    %v7926 = vunpack.c.l.b16 %v7554
    %v7927 = vunpack.c.h.b16 %v7554
    %v7928 = vunpack.c.l.b16 %v7555
    %v7929 = vunpack.c.h.b16 %v7555
    %v7930 = vunpack.c.l.b16 %v7556
    %v7931 = vunpack.c.h.b16 %v7556
    %v7932 = vunpack.c.l.b16 %v7557
    %v7933 = vunpack.c.h.b16 %v7557
    %v7934 = vunpack.c.l.b16 %v7558
    %v7935 = vunpack.c.h.b16 %v7558
    %v7936 = vunpack.c.l.b16 %v7559
    %v7937 = vunpack.c.h.b16 %v7559
    %v7938 = vunpack.c.l.b16 %v7560
    %v7939 = vunpack.c.h.b16 %v7560
    %v7940 = vunpack.c.l.b16 %v7561
    %v7941 = vunpack.c.h.b16 %v7561
    %v7942 = vunpack.c.l.b16 %v7562
    %v7943 = vunpack.c.h.b16 %v7562
    %v7944 = vunpack.c.l.b16 %v7563
    %v7945 = vunpack.c.h.b16 %v7563
    %v7946 = vunpack.c.l.b16 %v7564
    %v7947 = vunpack.c.h.b16 %v7564
    %v7948 = vunpack.c.l.b16 %v7565
    %v7949 = vunpack.c.h.b16 %v7565
    %v7950 = vpack.c.b16 %v7760, %v7758
    %v7951 = vpack.c.b16 %v7761, %v7759
    %v7952 = vpack.c.b16 %v7764, %v7762
    %v7953 = vpack.c.b16 %v7765, %v7763
    %v7954 = vpack.c.b16 %v7768, %v7766
    %v7955 = vpack.c.b16 %v7769, %v7767
    %v7956 = vpack.c.b16 %v7772, %v7770
    %v7957 = vpack.c.b16 %v7773, %v7771
    %v7958 = vpack.c.b16 %v7776, %v7774
    %v7959 = vpack.c.b16 %v7777, %v7775
    %v7960 = vpack.c.b16 %v7780, %v7778
    %v7961 = vpack.c.b16 %v7781, %v7779
    %v7962 = vpack.c.b16 %v7784, %v7782
    %v7963 = vpack.c.b16 %v7785, %v7783
    %v7964 = vpack.c.b16 %v7788, %v7786
    %v7965 = vpack.c.b16 %v7789, %v7787
    %v7966 = vpack.c.b16 %v7792, %v7790
    %v7967 = vpack.c.b16 %v7793, %v7791
    %v7968 = vpack.c.b16 %v7796, %v7794
    %v7969 = vpack.c.b16 %v7797, %v7795
    %v7970 = vpack.c.b16 %v7800, %v7798
    %v7971 = vpack.c.b16 %v7801, %v7799
    %v7972 = vpack.c.b16 %v7804, %v7802
    %v7973 = vpack.c.b16 %v7805, %v7803
    %v7974 = vpack.c.b16 %v7808, %v7806
    %v7975 = vpack.c.b16 %v7809, %v7807
    %v7976 = vpack.c.b16 %v7812, %v7810
    %v7977 = vpack.c.b16 %v7813, %v7811
    %v7978 = vpack.c.b16 %v7816, %v7814
    %v7979 = vpack.c.b16 %v7817, %v7815
    %v7980 = vpack.c.b16 %v7820, %v7818
    %v7981 = vpack.c.b16 %v7821, %v7819
    %v7982 = vpack.c.b16 %v7824, %v7822
    %v7983 = vpack.c.b16 %v7825, %v7823
    %v7984 = vpack.c.b16 %v7828, %v7826
    %v7985 = vpack.c.b16 %v7829, %v7827
    %v7986 = vpack.c.b16 %v7832, %v7830
    %v7987 = vpack.c.b16 %v7833, %v7831
    %v7988 = vpack.c.b16 %v7836, %v7834
    %v7989 = vpack.c.b16 %v7837, %v7835
    %v7990 = vpack.c.b16 %v7840, %v7838
    %v7991 = vpack.c.b16 %v7841, %v7839
    %v7992 = vpack.c.b16 %v7844, %v7842
    %v7993 = vpack.c.b16 %v7845, %v7843
    %v7994 = vpack.c.b16 %v7848, %v7846
    %v7995 = vpack.c.b16 %v7849, %v7847
    %v7996 = vpack.c.b16 %v7852, %v7850
    %v7997 = vpack.c.b16 %v7853, %v7851
    %v7998 = vpack.c.b16 %v7856, %v7854
    %v7999 = vpack.c.b16 %v7857, %v7855
    %v8000 = vpack.c.b16 %v7860, %v7858
    %v8001 = vpack.c.b16 %v7861, %v7859
    %v8002 = vpack.c.b16 %v7864, %v7862
    %v8003 = vpack.c.b16 %v7865, %v7863
    %v8004 = vpack.c.b16 %v7868, %v7866
    %v8005 = vpack.c.b16 %v7869, %v7867
    %v8006 = vpack.c.b16 %v7872, %v7870
    %v8007 = vpack.c.b16 %v7873, %v7871
    %v8008 = vpack.c.b16 %v7876, %v7874
    %v8009 = vpack.c.b16 %v7877, %v7875
    %v8010 = vpack.c.b16 %v7880, %v7878
    %v8011 = vpack.c.b16 %v7881, %v7879
    %v8012 = vpack.c.b16 %v7884, %v7882
    %v8013 = vpack.c.b16 %v7885, %v7883
    %v8014 = vpack.c.b16 %v7888, %v7886
    %v8015 = vpack.c.b16 %v7889, %v7887
    %v8016 = vpack.c.b16 %v7892, %v7890
    %v8017 = vpack.c.b16 %v7893, %v7891
    %v8018 = vpack.c.b16 %v7896, %v7894
    %v8019 = vpack.c.b16 %v7897, %v7895
    %v8020 = vpack.c.b16 %v7900, %v7898
    %v8021 = vpack.c.b16 %v7901, %v7899
    %v8022 = vpack.c.b16 %v7904, %v7902
    %v8023 = vpack.c.b16 %v7905, %v7903
    %v8024 = vpack.c.b16 %v7908, %v7906
    %v8025 = vpack.c.b16 %v7909, %v7907
    %v8026 = vpack.c.b16 %v7912, %v7910
    %v8027 = vpack.c.b16 %v7913, %v7911
    %v8028 = vpack.c.b16 %v7916, %v7914
    %v8029 = vpack.c.b16 %v7917, %v7915
    %v8030 = vpack.c.b16 %v7920, %v7918
    %v8031 = vpack.c.b16 %v7921, %v7919
    %v8032 = vpack.c.b16 %v7924, %v7922
    %v8033 = vpack.c.b16 %v7925, %v7923
    %v8034 = vpack.c.b16 %v7928, %v7926
    %v8035 = vpack.c.b16 %v7929, %v7927
    %v8036 = vpack.c.b16 %v7932, %v7930
    %v8037 = vpack.c.b16 %v7933, %v7931
    %v8038 = vpack.c.b16 %v7936, %v7934
    %v8039 = vpack.c.b16 %v7937, %v7935
    %v8040 = vpack.c.b16 %v7940, %v7938
    %v8041 = vpack.c.b16 %v7941, %v7939
    %v8042 = vpack.c.b16 %v7944, %v7942
    %v8043 = vpack.c.b16 %v7945, %v7943
    %v8044 = vpack.c.b16 %v7948, %v7946
    %v8045 = vpack.c.b16 %v7949, %v7947
    %8142 = vmatprep.subr.bf16.mxu0 %v7951
    %8143 = vmatpush1.bf16.msra.mxu0 %v7950
    %8144 = vmatprep.subr.bf16.mxu0 %v7953
    %8145 = vmatpush1.bf16.msra.mxu0 %v7952
    %8146 = vmatprep.subr.bf16.mxu0 %v7955
    %8147 = vmatpush1.bf16.msra.mxu0 %v7954
    %8148 = vmatprep.subr.bf16.mxu0 %v7957
    %8149 = vmatpush1.bf16.msra.mxu0 %v7956
    %8150 = vmatprep.subr.bf16.mxu0 %v7959
    %8151 = vmatpush1.bf16.msra.mxu0 %v7958
    %8152 = vmatprep.subr.bf16.mxu0 %v7961
    %8153 = vmatpush1.bf16.msra.mxu0 %v7960
    %8154 = vmatprep.subr.bf16.mxu0 %v7963
    %8155 = vmatpush1.bf16.msra.mxu0 %v7962
    %8156 = vmatprep.subr.bf16.mxu0 %v7965
    %8157 = vmatpush1.bf16.msra.mxu0 %v7964
    %8158 = vmatprep.subr.bf16.mxu0 %v7967
    %8159 = vmatpush1.bf16.msra.mxu0 %v7966
    %8160 = vmatprep.subr.bf16.mxu0 %v7969
    %8161 = vmatpush1.bf16.msra.mxu0 %v7968
    %8162 = vmatprep.subr.bf16.mxu0 %v7971
    %8163 = vmatpush1.bf16.msra.mxu0 %v7970
    %8164 = vmatprep.subr.bf16.mxu0 %v7973
    %8165 = vmatpush1.bf16.msra.mxu0 %v7972
    %8166 = vmatprep.subr.bf16.mxu0 %v7975
    %8167 = vmatpush1.bf16.msra.mxu0 %v7974
    %8168 = vmatprep.subr.bf16.mxu0 %v7977
    %8169 = vmatpush1.bf16.msra.mxu0 %v7976
    %8170 = vmatprep.subr.bf16.mxu0 %v7979
    %8171 = vmatpush1.bf16.msra.mxu0 %v7978
    %8172 = vmatprep.subr.bf16.mxu0 %v7981
    %8173 = vmatpush1.bf16.msra.mxu0 %v7980
    %8174 = vmatprep.mubr.bf16.mxu0 %v7567
    %8175 = vmatmul.mubr.bf16.gmra.mrb[0].mxu0 %v7566
    %v8176 = vpop.f32.mrb[0].mxu0
    %v8177 = vadd.f32 0.0, %v8176
    %v8178 = vpop.f32.mrb[0].mxu0
    %v8179 = vadd.f32 0.0, %v8178
    %v8180 = vpop.f32.mrb[0].mxu0
    %v8181 = vadd.f32 0.0, %v8180
    %v8182 = vpop.f32.mrb[0].mxu0
    %v8183 = vadd.f32 0.0, %v8182
    %8184 = vmatprep.mubr.bf16.mxu0 %v7573
    %8185 = vmatmul.mubr.bf16.gmra.mrb[0].mxu0 %v7572
    %v8186 = vpop.f32.mrb[0].mxu0
    %v8187 = vadd.f32 0.0, %v8186
    %v8188 = vpop.f32.mrb[0].mxu0
    %v8189 = vadd.f32 0.0, %v8188
    %v8190 = vpop.f32.mrb[0].mxu0
    %v8191 = vadd.f32 0.0, %v8190
    %v8192 = vpop.f32.mrb[0].mxu0
    %v8193 = vadd.f32 0.0, %v8192
    %8194 = vmatprep.mubr.bf16.mxu0 %v7579
    %8195 = vmatmul.mubr.bf16.gmra.mrb[0].mxu0 %v7578
    %v8196 = vpop.f32.mrb[0].mxu0
    %v8197 = vadd.f32 0.0, %v8196
    %v8198 = vpop.f32.mrb[0].mxu0
    %v8199 = vadd.f32 0.0, %v8198
    %v8200 = vpop.f32.mrb[0].mxu0
    %v8201 = vadd.f32 0.0, %v8200
    %v8202 = vpop.f32.mrb[0].mxu0
    %v8203 = vadd.f32 0.0, %v8202
    %8204 = vmatprep.mubr.bf16.mxu0 %v7585
    %8205 = vmatmul.mubr.bf16.gmra.mrb[0].mxu0 %v7584
    %v8206 = vpop.f32.mrb[0].mxu0
    %v8207 = vadd.f32 0.0, %v8206
    %v8208 = vpop.f32.mrb[0].mxu0
    %v8209 = vadd.f32 0.0, %v8208
    %v8210 = vpop.f32.mrb[0].mxu0
    %v8211 = vadd.f32 0.0, %v8210
    %v8212 = vpop.f32.mrb[0].mxu0
    %v8213 = vadd.f32 0.0, %v8212
    %8214 = vmatprep.mubr.bf16.mxu0 %v7591
    %8215 = vmatmul.mubr.bf16.gmra.mrb[0].mxu0 %v7590
    %v8216 = vpop.f32.mrb[0].mxu0
    %v8217 = vadd.f32 0.0, %v8216
    %v8218 = vpop.f32.mrb[0].mxu0
    %v8219 = vadd.f32 0.0, %v8218
    %v8220 = vpop.f32.mrb[0].mxu0
    %v8221 = vadd.f32 0.0, %v8220
    %v8222 = vpop.f32.mrb[0].mxu0
    %v8223 = vadd.f32 0.0, %v8222
    %8224 = vmatprep.mubr.bf16.mxu0 %v7597
    %8225 = vmatmul.mubr.bf16.gmra.mrb[0].mxu0 %v7596
    %v8226 = vpop.f32.mrb[0].mxu0
    %v8227 = vadd.f32 0.0, %v8226
    %v8228 = vpop.f32.mrb[0].mxu0
    %v8229 = vadd.f32 0.0, %v8228
    %v8230 = vpop.f32.mrb[0].mxu0
    %v8231 = vadd.f32 0.0, %v8230
    %v8232 = vpop.f32.mrb[0].mxu0
    %v8233 = vadd.f32 0.0, %v8232
    %8234 = vmatprep.mubr.bf16.mxu0 %v7603
    %8235 = vmatmul.mubr.bf16.gmra.mrb[0].mxu0 %v7602
    %v8236 = vpop.f32.mrb[0].mxu0
    %v8237 = vadd.f32 0.0, %v8236
    %v8238 = vpop.f32.mrb[0].mxu0
    %v8239 = vadd.f32 0.0, %v8238
    %v8240 = vpop.f32.mrb[0].mxu0
    %v8241 = vadd.f32 0.0, %v8240
    %v8242 = vpop.f32.mrb[0].mxu0
    %v8243 = vadd.f32 0.0, %v8242
    %8244 = vmatprep.mubr.bf16.mxu0 %v7609
    %8245 = vmatmul.mubr.bf16.gmra.mrb[0].mxu0 %v7608
    %v8246 = vpop.f32.mrb[0].mxu0
    %v8247 = vadd.f32 0.0, %v8246
    %v8248 = vpop.f32.mrb[0].mxu0
    %v8249 = vadd.f32 0.0, %v8248
    %v8250 = vpop.f32.mrb[0].mxu0
    %v8251 = vadd.f32 0.0, %v8250
    %v8252 = vpop.f32.mrb[0].mxu0
    %v8253 = vadd.f32 0.0, %v8252
    %8254 = vdwg.mxu0
    %8255 = vmatprep.subr.bf16.mxu0 %v7983
    %8256 = vmatpush1.bf16.msra.mxu0 %v7982
    %8257 = vmatprep.subr.bf16.mxu0 %v7985
    %8258 = vmatpush1.bf16.msra.mxu0 %v7984
    %8259 = vmatprep.subr.bf16.mxu0 %v7987
    %8260 = vmatpush1.bf16.msra.mxu0 %v7986
    %8261 = vmatprep.subr.bf16.mxu0 %v7989
    %8262 = vmatpush1.bf16.msra.mxu0 %v7988
    %8263 = vmatprep.subr.bf16.mxu0 %v7991
    %8264 = vmatpush1.bf16.msra.mxu0 %v7990
    %8265 = vmatprep.subr.bf16.mxu0 %v7993
    %8266 = vmatpush1.bf16.msra.mxu0 %v7992
    %8267 = vmatprep.subr.bf16.mxu0 %v7995
    %8268 = vmatpush1.bf16.msra.mxu0 %v7994
    %8269 = vmatprep.subr.bf16.mxu0 %v7997
    %8270 = vmatpush1.bf16.msra.mxu0 %v7996
    %8271 = vmatprep.subr.bf16.mxu0 %v7999
    %8272 = vmatpush1.bf16.msra.mxu0 %v7998
    %8273 = vmatprep.subr.bf16.mxu0 %v8001
    %8274 = vmatpush1.bf16.msra.mxu0 %v8000
    %8275 = vmatprep.subr.bf16.mxu0 %v8003
    %8276 = vmatpush1.bf16.msra.mxu0 %v8002
    %8277 = vmatprep.subr.bf16.mxu0 %v8005
    %8278 = vmatpush1.bf16.msra.mxu0 %v8004
    %8279 = vmatprep.subr.bf16.mxu0 %v8007
    %8280 = vmatpush1.bf16.msra.mxu0 %v8006
    %8281 = vmatprep.subr.bf16.mxu0 %v8009
    %8282 = vmatpush1.bf16.msra.mxu0 %v8008
    %8283 = vmatprep.subr.bf16.mxu0 %v8011
    %8284 = vmatpush1.bf16.msra.mxu0 %v8010
    %8285 = vmatprep.subr.bf16.mxu0 %v8013
    %8286 = vmatpush1.bf16.msra.mxu0 %v8012
    %8287 = vmatprep.mubr.bf16.mxu0 %v7569
    %8288 = vmatmul.mubr.bf16.gmra.mrb[0].mxu0 %v7568
    %v8289 = vpop.f32.mrb[0].mxu0
    %v8290 = vadd.f32 %v8177, %v8289
    %v8291 = vpop.f32.mrb[0].mxu0
    %v8292 = vadd.f32 %v8179, %v8291
    %v8293 = vpop.f32.mrb[0].mxu0
    %v8294 = vadd.f32 %v8181, %v8293
    %v8295 = vpop.f32.mrb[0].mxu0
    %v8296 = vadd.f32 %v8183, %v8295
    %8297 = vmatprep.mubr.bf16.mxu0 %v7575
    %8298 = vmatmul.mubr.bf16.gmra.mrb[0].mxu0 %v7574
    %v8299 = vpop.f32.mrb[0].mxu0
    %v8300 = vadd.f32 %v8187, %v8299
    %v8301 = vpop.f32.mrb[0].mxu0
    %v8302 = vadd.f32 %v8189, %v8301
    %v8303 = vpop.f32.mrb[0].mxu0
    %v8304 = vadd.f32 %v8191, %v8303
    %v8305 = vpop.f32.mrb[0].mxu0
    %v8306 = vadd.f32 %v8193, %v8305
    %8307 = vmatprep.mubr.bf16.mxu0 %v7581
    %8308 = vmatmul.mubr.bf16.gmra.mrb[0].mxu0 %v7580
    %v8309 = vpop.f32.mrb[0].mxu0
    %v8310 = vadd.f32 %v8197, %v8309
    %v8311 = vpop.f32.mrb[0].mxu0
    %v8312 = vadd.f32 %v8199, %v8311
    %v8313 = vpop.f32.mrb[0].mxu0
    %v8314 = vadd.f32 %v8201, %v8313
    %v8315 = vpop.f32.mrb[0].mxu0
    %v8316 = vadd.f32 %v8203, %v8315
    %8317 = vmatprep.mubr.bf16.mxu0 %v7587
    %8318 = vmatmul.mubr.bf16.gmra.mrb[0].mxu0 %v7586
    %v8319 = vpop.f32.mrb[0].mxu0
    %v8320 = vadd.f32 %v8207, %v8319
    %v8321 = vpop.f32.mrb[0].mxu0
    %v8322 = vadd.f32 %v8209, %v8321
    %v8323 = vpop.f32.mrb[0].mxu0
    %v8324 = vadd.f32 %v8211, %v8323
    %v8325 = vpop.f32.mrb[0].mxu0
    %v8326 = vadd.f32 %v8213, %v8325
    %8327 = vmatprep.mubr.bf16.mxu0 %v7593
    %8328 = vmatmul.mubr.bf16.gmra.mrb[0].mxu0 %v7592
    %v8329 = vpop.f32.mrb[0].mxu0
    %v8330 = vadd.f32 %v8217, %v8329
    %v8331 = vpop.f32.mrb[0].mxu0
    %v8332 = vadd.f32 %v8219, %v8331
    %v8333 = vpop.f32.mrb[0].mxu0
    %v8334 = vadd.f32 %v8221, %v8333
    %v8335 = vpop.f32.mrb[0].mxu0
    %v8336 = vadd.f32 %v8223, %v8335
    %8337 = vmatprep.mubr.bf16.mxu0 %v7599
    %8338 = vmatmul.mubr.bf16.gmra.mrb[0].mxu0 %v7598
    %v8339 = vpop.f32.mrb[0].mxu0
    %v8340 = vadd.f32 %v8227, %v8339
    %v8341 = vpop.f32.mrb[0].mxu0
    %v8342 = vadd.f32 %v8229, %v8341
    %v8343 = vpop.f32.mrb[0].mxu0
    %v8344 = vadd.f32 %v8231, %v8343
    %v8345 = vpop.f32.mrb[0].mxu0
    %v8346 = vadd.f32 %v8233, %v8345
    %8347 = vmatprep.mubr.bf16.mxu0 %v7605
    %8348 = vmatmul.mubr.bf16.gmra.mrb[0].mxu0 %v7604
    %v8349 = vpop.f32.mrb[0].mxu0
    %v8350 = vadd.f32 %v8237, %v8349
    %v8351 = vpop.f32.mrb[0].mxu0
    %v8352 = vadd.f32 %v8239, %v8351
    %v8353 = vpop.f32.mrb[0].mxu0
    %v8354 = vadd.f32 %v8241, %v8353
    %v8355 = vpop.f32.mrb[0].mxu0
    %v8356 = vadd.f32 %v8243, %v8355
    %8357 = vmatprep.mubr.bf16.mxu0 %v7611
    %8358 = vmatmul.mubr.bf16.gmra.mrb[0].mxu0 %v7610
    %v8359 = vpop.f32.mrb[0].mxu0
    %v8360 = vadd.f32 %v8247, %v8359
    %v8361 = vpop.f32.mrb[0].mxu0
    %v8362 = vadd.f32 %v8249, %v8361
    %v8363 = vpop.f32.mrb[0].mxu0
    %v8364 = vadd.f32 %v8251, %v8363
    %v8365 = vpop.f32.mrb[0].mxu0
    %v8366 = vadd.f32 %v8253, %v8365
    %8367 = vdwg.mxu0
    %8368 = vmatprep.subr.bf16.mxu0 %v8015
    %8369 = vmatpush1.bf16.msra.mxu0 %v8014
    %8370 = vmatprep.subr.bf16.mxu0 %v8017
    %8371 = vmatpush1.bf16.msra.mxu0 %v8016
    %8372 = vmatprep.subr.bf16.mxu0 %v8019
    %8373 = vmatpush1.bf16.msra.mxu0 %v8018
    %8374 = vmatprep.subr.bf16.mxu0 %v8021
    %8375 = vmatpush1.bf16.msra.mxu0 %v8020
    %8376 = vmatprep.subr.bf16.mxu0 %v8023
    %8377 = vmatpush1.bf16.msra.mxu0 %v8022
    %8378 = vmatprep.subr.bf16.mxu0 %v8025
    %8379 = vmatpush1.bf16.msra.mxu0 %v8024
    %8380 = vmatprep.subr.bf16.mxu0 %v8027
    %8381 = vmatpush1.bf16.msra.mxu0 %v8026
    %8382 = vmatprep.subr.bf16.mxu0 %v8029
    %8383 = vmatpush1.bf16.msra.mxu0 %v8028
    %8384 = vmatprep.subr.bf16.mxu0 %v8031
    %8385 = vmatpush1.bf16.msra.mxu0 %v8030
    %8386 = vmatprep.subr.bf16.mxu0 %v8033
    %8387 = vmatpush1.bf16.msra.mxu0 %v8032
    %8388 = vmatprep.subr.bf16.mxu0 %v8035
    %8389 = vmatpush1.bf16.msra.mxu0 %v8034
    %8390 = vmatprep.subr.bf16.mxu0 %v8037
    %8391 = vmatpush1.bf16.msra.mxu0 %v8036
    %8392 = vmatprep.subr.bf16.mxu0 %v8039
    %8393 = vmatpush1.bf16.msra.mxu0 %v8038
    %8394 = vmatprep.subr.bf16.mxu0 %v8041
    %8395 = vmatpush1.bf16.msra.mxu0 %v8040
    %8396 = vmatprep.subr.bf16.mxu0 %v8043
    %8397 = vmatpush1.bf16.msra.mxu0 %v8042
    %8398 = vmatprep.subr.bf16.mxu0 %v8045
    %8399 = vmatpush1.bf16.msra.mxu0 %v8044
    %8400 = vmatprep.mubr.bf16.mxu0 %v7571
    %8401 = vmatmul.mubr.bf16.gmra.mrb[0].mxu0 %v7570
    %v8402 = vpop.f32.mrb[0].mxu0
    %v8403 = vadd.f32 %v8290, %v8402
    %v8404 = vpop.f32.mrb[0].mxu0
    %v8405 = vadd.f32 %v8292, %v8404
    %v8406 = vpop.f32.mrb[0].mxu0
    %v8407 = vadd.f32 %v8294, %v8406
    %v8408 = vpop.f32.mrb[0].mxu0
    %v8409 = vadd.f32 %v8296, %v8408
    %8410 = vmatprep.mubr.bf16.mxu0 %v7577
    %8411 = vmatmul.mubr.bf16.gmra.mrb[0].mxu0 %v7576
    %v8412 = vpop.f32.mrb[0].mxu0
    %v8413 = vadd.f32 %v8300, %v8412
    %v8414 = vpop.f32.mrb[0].mxu0
    %v8415 = vadd.f32 %v8302, %v8414
    %v8416 = vpop.f32.mrb[0].mxu0
    %v8417 = vadd.f32 %v8304, %v8416
    %v8418 = vpop.f32.mrb[0].mxu0
    %v8419 = vadd.f32 %v8306, %v8418
    %8420 = vmatprep.mubr.bf16.mxu0 %v7583
    %8421 = vmatmul.mubr.bf16.gmra.mrb[0].mxu0 %v7582
    %v8422 = vpop.f32.mrb[0].mxu0
    %v8423 = vadd.f32 %v8310, %v8422
    %v8424 = vpop.f32.mrb[0].mxu0
    %v8425 = vadd.f32 %v8312, %v8424
    %v8426 = vpop.f32.mrb[0].mxu0
    %v8427 = vadd.f32 %v8314, %v8426
    %v8428 = vpop.f32.mrb[0].mxu0
    %v8429 = vadd.f32 %v8316, %v8428
    %8430 = vmatprep.mubr.bf16.mxu0 %v7589
    %8431 = vmatmul.mubr.bf16.gmra.mrb[0].mxu0 %v7588
    %v8432 = vpop.f32.mrb[0].mxu0
    %v8433 = vadd.f32 %v8320, %v8432
    %v8434 = vpop.f32.mrb[0].mxu0
    %v8435 = vadd.f32 %v8322, %v8434
    %v8436 = vpop.f32.mrb[0].mxu0
    %v8437 = vadd.f32 %v8324, %v8436
    %v8438 = vpop.f32.mrb[0].mxu0
    %v8439 = vadd.f32 %v8326, %v8438
    %8440 = vmatprep.mubr.bf16.mxu0 %v7595
    %8441 = vmatmul.mubr.bf16.gmra.mrb[0].mxu0 %v7594
    %v8442 = vpop.f32.mrb[0].mxu0
    %v8443 = vadd.f32 %v8330, %v8442
    %v8444 = vpop.f32.mrb[0].mxu0
    %v8445 = vadd.f32 %v8332, %v8444
    %v8446 = vpop.f32.mrb[0].mxu0
    %v8447 = vadd.f32 %v8334, %v8446
    %v8448 = vpop.f32.mrb[0].mxu0
    %v8449 = vadd.f32 %v8336, %v8448
    %8450 = vmatprep.mubr.bf16.mxu0 %v7601
    %8451 = vmatmul.mubr.bf16.gmra.mrb[0].mxu0 %v7600
    %v8452 = vpop.f32.mrb[0].mxu0
    %v8453 = vadd.f32 %v8340, %v8452
    %v8454 = vpop.f32.mrb[0].mxu0
    %v8455 = vadd.f32 %v8342, %v8454
    %v8456 = vpop.f32.mrb[0].mxu0
    %v8457 = vadd.f32 %v8344, %v8456
    %v8458 = vpop.f32.mrb[0].mxu0
    %v8459 = vadd.f32 %v8346, %v8458
    %8460 = vmatprep.mubr.bf16.mxu0 %v7607
    %8461 = vmatmul.mubr.bf16.gmra.mrb[0].mxu0 %v7606
    %v8462 = vpop.f32.mrb[0].mxu0
    %v8463 = vadd.f32 %v8350, %v8462
    %v8464 = vpop.f32.mrb[0].mxu0
    %v8465 = vadd.f32 %v8352, %v8464
    %v8466 = vpop.f32.mrb[0].mxu0
    %v8467 = vadd.f32 %v8354, %v8466
    %v8468 = vpop.f32.mrb[0].mxu0
    %v8469 = vadd.f32 %v8356, %v8468
    %8470 = vmatprep.mubr.bf16.mxu0 %v7613
    %8471 = vmatmul.mubr.bf16.gmra.mrb[0].mxu0 %v7612
    %v8472 = vpop.f32.mrb[0].mxu0
    %v8473 = vadd.f32 %v8360, %v8472
    %v8474 = vpop.f32.mrb[0].mxu0
    %v8475 = vadd.f32 %v8362, %v8474
    %v8476 = vpop.f32.mrb[0].mxu0
    %v8477 = vadd.f32 %v8364, %v8476
    %v8478 = vpop.f32.mrb[0].mxu0
    %v8479 = vadd.f32 %v8366, %v8478
    %8480 = vdwg.mxu0
    %v8481 = vpack.c.b16 %v6288, %v6286
    %v8482 = vpack.c.b16 %v6289, %v6287
    %v8483 = vpack.c.b16 %v6738, %v6734
    %v8484 = vpack.c.b16 %v6739, %v6735
    %v8485 = vpack.c.b16 %v6740, %v6736
    %v8486 = vpack.c.b16 %v6741, %v6737
    %v8487 = vpack.c.b16 %v6292, %v6290
    %v8488 = vpack.c.b16 %v6293, %v6291
    %v8489 = vpack.c.b16 %v6746, %v6742
    %v8490 = vpack.c.b16 %v6747, %v6743
    %v8491 = vpack.c.b16 %v6748, %v6744
    %v8492 = vpack.c.b16 %v6749, %v6745
    %v8493 = vpack.c.b16 %v6296, %v6294
    %v8494 = vpack.c.b16 %v6297, %v6295
    %v8495 = vpack.c.b16 %v6754, %v6750
    %v8496 = vpack.c.b16 %v6755, %v6751
    %v8497 = vpack.c.b16 %v6756, %v6752
    %v8498 = vpack.c.b16 %v6757, %v6753
    %v8499 = vpack.c.b16 %v6300, %v6298
    %v8500 = vpack.c.b16 %v6301, %v6299
    %v8501 = vpack.c.b16 %v6762, %v6758
    %v8502 = vpack.c.b16 %v6763, %v6759
    %v8503 = vpack.c.b16 %v6764, %v6760
    %v8504 = vpack.c.b16 %v6765, %v6761
    %v8505 = vpack.c.b16 %v6304, %v6302
    %v8506 = vpack.c.b16 %v6305, %v6303
    %v8507 = vpack.c.b16 %v6770, %v6766
    %v8508 = vpack.c.b16 %v6771, %v6767
    %v8509 = vpack.c.b16 %v6772, %v6768
    %v8510 = vpack.c.b16 %v6773, %v6769
    %v8511 = vpack.c.b16 %v6308, %v6306
    %v8512 = vpack.c.b16 %v6309, %v6307
    %v8513 = vpack.c.b16 %v6778, %v6774
    %v8514 = vpack.c.b16 %v6779, %v6775
    %v8515 = vpack.c.b16 %v6780, %v6776
    %v8516 = vpack.c.b16 %v6781, %v6777
    %v8517 = vpack.c.b16 %v6312, %v6310
    %v8518 = vpack.c.b16 %v6313, %v6311
    %v8519 = vpack.c.b16 %v6786, %v6782
    %v8520 = vpack.c.b16 %v6787, %v6783
    %v8521 = vpack.c.b16 %v6788, %v6784
    %v8522 = vpack.c.b16 %v6789, %v6785
    %v8523 = vpack.c.b16 %v6316, %v6314
    %v8524 = vpack.c.b16 %v6317, %v6315
    %v8525 = vpack.c.b16 %v6794, %v6790
    %v8526 = vpack.c.b16 %v6795, %v6791
    %v8527 = vpack.c.b16 %v6796, %v6792
    %v8528 = vpack.c.b16 %v6797, %v6793
    %v8673 = vunpack.c.l.b16 %v6798
    %v8674 = vunpack.c.h.b16 %v6798
    %v8675 = vunpack.c.l.b16 %v6799
    %v8676 = vunpack.c.h.b16 %v6799
    %v8677 = vunpack.c.l.b16 %v6800
    %v8678 = vunpack.c.h.b16 %v6800
    %v8679 = vunpack.c.l.b16 %v6801
    %v8680 = vunpack.c.h.b16 %v6801
    %v8681 = vunpack.c.l.b16 %v6802
    %v8682 = vunpack.c.h.b16 %v6802
    %v8683 = vunpack.c.l.b16 %v6803
    %v8684 = vunpack.c.h.b16 %v6803
    %v8685 = vunpack.c.l.b16 %v6804
    %v8686 = vunpack.c.h.b16 %v6804
    %v8687 = vunpack.c.l.b16 %v6805
    %v8688 = vunpack.c.h.b16 %v6805
    %v8689 = vunpack.c.l.b16 %v6806
    %v8690 = vunpack.c.h.b16 %v6806
    %v8691 = vunpack.c.l.b16 %v6807
    %v8692 = vunpack.c.h.b16 %v6807
    %v8693 = vunpack.c.l.b16 %v6808
    %v8694 = vunpack.c.h.b16 %v6808
    %v8695 = vunpack.c.l.b16 %v6809
    %v8696 = vunpack.c.h.b16 %v6809
    %v8697 = vunpack.c.l.b16 %v6810
    %v8698 = vunpack.c.h.b16 %v6810
    %v8699 = vunpack.c.l.b16 %v6811
    %v8700 = vunpack.c.h.b16 %v6811
    %v8701 = vunpack.c.l.b16 %v6812
    %v8702 = vunpack.c.h.b16 %v6812
    %v8703 = vunpack.c.l.b16 %v6813
    %v8704 = vunpack.c.h.b16 %v6813
    %v8705 = vunpack.c.l.b16 %v6814
    %v8706 = vunpack.c.h.b16 %v6814
    %v8707 = vunpack.c.l.b16 %v6815
    %v8708 = vunpack.c.h.b16 %v6815
    %v8709 = vunpack.c.l.b16 %v6816
    %v8710 = vunpack.c.h.b16 %v6816
    %v8711 = vunpack.c.l.b16 %v6817
    %v8712 = vunpack.c.h.b16 %v6817
    %v8713 = vunpack.c.l.b16 %v6818
    %v8714 = vunpack.c.h.b16 %v6818
    %v8715 = vunpack.c.l.b16 %v6819
    %v8716 = vunpack.c.h.b16 %v6819
    %v8717 = vunpack.c.l.b16 %v6820
    %v8718 = vunpack.c.h.b16 %v6820
    %v8719 = vunpack.c.l.b16 %v6821
    %v8720 = vunpack.c.h.b16 %v6821
    %v8721 = vunpack.c.l.b16 %v6822
    %v8722 = vunpack.c.h.b16 %v6822
    %v8723 = vunpack.c.l.b16 %v6823
    %v8724 = vunpack.c.h.b16 %v6823
    %v8725 = vunpack.c.l.b16 %v6824
    %v8726 = vunpack.c.h.b16 %v6824
    %v8727 = vunpack.c.l.b16 %v6825
    %v8728 = vunpack.c.h.b16 %v6825
    %v8729 = vunpack.c.l.b16 %v6826
    %v8730 = vunpack.c.h.b16 %v6826
    %v8731 = vunpack.c.l.b16 %v6827
    %v8732 = vunpack.c.h.b16 %v6827
    %v8733 = vunpack.c.l.b16 %v6828
    %v8734 = vunpack.c.h.b16 %v6828
    %v8735 = vunpack.c.l.b16 %v6829
    %v8736 = vunpack.c.h.b16 %v6829
    %v8737 = vunpack.c.l.b16 %v6830
    %v8738 = vunpack.c.h.b16 %v6830
    %v8739 = vunpack.c.l.b16 %v6831
    %v8740 = vunpack.c.h.b16 %v6831
    %v8741 = vunpack.c.l.b16 %v6832
    %v8742 = vunpack.c.h.b16 %v6832
    %v8743 = vunpack.c.l.b16 %v6833
    %v8744 = vunpack.c.h.b16 %v6833
    %v8745 = vunpack.c.l.b16 %v6834
    %v8746 = vunpack.c.h.b16 %v6834
    %v8747 = vunpack.c.l.b16 %v6835
    %v8748 = vunpack.c.h.b16 %v6835
    %v8749 = vunpack.c.l.b16 %v6836
    %v8750 = vunpack.c.h.b16 %v6836
    %v8751 = vunpack.c.l.b16 %v6837
    %v8752 = vunpack.c.h.b16 %v6837
    %v8753 = vunpack.c.l.b16 %v6838
    %v8754 = vunpack.c.h.b16 %v6838
    %v8755 = vunpack.c.l.b16 %v6839
    %v8756 = vunpack.c.h.b16 %v6839
    %v8757 = vunpack.c.l.b16 %v6840
    %v8758 = vunpack.c.h.b16 %v6840
    %v8759 = vunpack.c.l.b16 %v6841
    %v8760 = vunpack.c.h.b16 %v6841
    %v8761 = vunpack.c.l.b16 %v6842
    %v8762 = vunpack.c.h.b16 %v6842
    %v8763 = vunpack.c.l.b16 %v6843
    %v8764 = vunpack.c.h.b16 %v6843
    %v8765 = vunpack.c.l.b16 %v6844
    %v8766 = vunpack.c.h.b16 %v6844
    %v8767 = vunpack.c.l.b16 %v6845
    %v8768 = vunpack.c.h.b16 %v6845
    %v8769 = vunpack.c.l.b16 %v6846
    %v8770 = vunpack.c.h.b16 %v6846
    %v8771 = vunpack.c.l.b16 %v6847
    %v8772 = vunpack.c.h.b16 %v6847
    %v8773 = vunpack.c.l.b16 %v6848
    %v8774 = vunpack.c.h.b16 %v6848
    %v8775 = vunpack.c.l.b16 %v6849
    %v8776 = vunpack.c.h.b16 %v6849
    %v8777 = vunpack.c.l.b16 %v6850
    %v8778 = vunpack.c.h.b16 %v6850
    %v8779 = vunpack.c.l.b16 %v6851
    %v8780 = vunpack.c.h.b16 %v6851
    %v8781 = vunpack.c.l.b16 %v6852
    %v8782 = vunpack.c.h.b16 %v6852
    %v8783 = vunpack.c.l.b16 %v6853
    %v8784 = vunpack.c.h.b16 %v6853
    %v8785 = vunpack.c.l.b16 %v6854
    %v8786 = vunpack.c.h.b16 %v6854
    %v8787 = vunpack.c.l.b16 %v6855
    %v8788 = vunpack.c.h.b16 %v6855
    %v8789 = vunpack.c.l.b16 %v6856
    %v8790 = vunpack.c.h.b16 %v6856
    %v8791 = vunpack.c.l.b16 %v6857
    %v8792 = vunpack.c.h.b16 %v6857
    %v8793 = vunpack.c.l.b16 %v6858
    %v8794 = vunpack.c.h.b16 %v6858
    %v8795 = vunpack.c.l.b16 %v6859
    %v8796 = vunpack.c.h.b16 %v6859
    %v8797 = vunpack.c.l.b16 %v6860
    %v8798 = vunpack.c.h.b16 %v6860
    %v8799 = vunpack.c.l.b16 %v6861
    %v8800 = vunpack.c.h.b16 %v6861
    %v8801 = vunpack.c.l.b16 %v6862
    %v8802 = vunpack.c.h.b16 %v6862
    %v8803 = vunpack.c.l.b16 %v6863
    %v8804 = vunpack.c.h.b16 %v6863
    %v8805 = vunpack.c.l.b16 %v6864
    %v8806 = vunpack.c.h.b16 %v6864
    %v8807 = vunpack.c.l.b16 %v6865
    %v8808 = vunpack.c.h.b16 %v6865
    %v8809 = vunpack.c.l.b16 %v6866
    %v8810 = vunpack.c.h.b16 %v6866
    %v8811 = vunpack.c.l.b16 %v6867
    %v8812 = vunpack.c.h.b16 %v6867
    %v8813 = vunpack.c.l.b16 %v6868
    %v8814 = vunpack.c.h.b16 %v6868
    %v8815 = vunpack.c.l.b16 %v6869
    %v8816 = vunpack.c.h.b16 %v6869
    %v8817 = vunpack.c.l.b16 %v6870
    %v8818 = vunpack.c.h.b16 %v6870
    %v8819 = vunpack.c.l.b16 %v6871
    %v8820 = vunpack.c.h.b16 %v6871
    %v8821 = vunpack.c.l.b16 %v6872
    %v8822 = vunpack.c.h.b16 %v6872
    %v8823 = vunpack.c.l.b16 %v6873
    %v8824 = vunpack.c.h.b16 %v6873
    %v8825 = vunpack.c.l.b16 %v6874
    %v8826 = vunpack.c.h.b16 %v6874
    %v8827 = vunpack.c.l.b16 %v6875
    %v8828 = vunpack.c.h.b16 %v6875
    %v8829 = vunpack.c.l.b16 %v6876
    %v8830 = vunpack.c.h.b16 %v6876
    %v8831 = vunpack.c.l.b16 %v6877
    %v8832 = vunpack.c.h.b16 %v6877
    %v8833 = vunpack.c.l.b16 %v6878
    %v8834 = vunpack.c.h.b16 %v6878
    %v8835 = vunpack.c.l.b16 %v6879
    %v8836 = vunpack.c.h.b16 %v6879
    %v8837 = vunpack.c.l.b16 %v6880
    %v8838 = vunpack.c.h.b16 %v6880
    %v8839 = vunpack.c.l.b16 %v6881
    %v8840 = vunpack.c.h.b16 %v6881
    %v8841 = vunpack.c.l.b16 %v6882
    %v8842 = vunpack.c.h.b16 %v6882
    %v8843 = vunpack.c.l.b16 %v6883
    %v8844 = vunpack.c.h.b16 %v6883
    %v8845 = vunpack.c.l.b16 %v6884
    %v8846 = vunpack.c.h.b16 %v6884
    %v8847 = vunpack.c.l.b16 %v6885
    %v8848 = vunpack.c.h.b16 %v6885
    %v8849 = vunpack.c.l.b16 %v6886
    %v8850 = vunpack.c.h.b16 %v6886
    %v8851 = vunpack.c.l.b16 %v6887
    %v8852 = vunpack.c.h.b16 %v6887
    %v8853 = vunpack.c.l.b16 %v6888
    %v8854 = vunpack.c.h.b16 %v6888
    %v8855 = vunpack.c.l.b16 %v6889
    %v8856 = vunpack.c.h.b16 %v6889
    %v8857 = vunpack.c.l.b16 %v6890
    %v8858 = vunpack.c.h.b16 %v6890
    %v8859 = vunpack.c.l.b16 %v6891
    %v8860 = vunpack.c.h.b16 %v6891
    %v8861 = vunpack.c.l.b16 %v6892
    %v8862 = vunpack.c.h.b16 %v6892
    %v8863 = vunpack.c.l.b16 %v6893
    %v8864 = vunpack.c.h.b16 %v6893
    %v8865 = vpack.c.b16 %v8675, %v8673
    %v8866 = vpack.c.b16 %v8676, %v8674
    %v8867 = vpack.c.b16 %v8679, %v8677
    %v8868 = vpack.c.b16 %v8680, %v8678
    %v8869 = vpack.c.b16 %v8683, %v8681
    %v8870 = vpack.c.b16 %v8684, %v8682
    %v8871 = vpack.c.b16 %v8687, %v8685
    %v8872 = vpack.c.b16 %v8688, %v8686
    %v8873 = vpack.c.b16 %v8691, %v8689
    %v8874 = vpack.c.b16 %v8692, %v8690
    %v8875 = vpack.c.b16 %v8695, %v8693
    %v8876 = vpack.c.b16 %v8696, %v8694
    %v8877 = vpack.c.b16 %v8699, %v8697
    %v8878 = vpack.c.b16 %v8700, %v8698
    %v8879 = vpack.c.b16 %v8703, %v8701
    %v8880 = vpack.c.b16 %v8704, %v8702
    %v8881 = vpack.c.b16 %v8707, %v8705
    %v8882 = vpack.c.b16 %v8708, %v8706
    %v8883 = vpack.c.b16 %v8711, %v8709
    %v8884 = vpack.c.b16 %v8712, %v8710
    %v8885 = vpack.c.b16 %v8715, %v8713
    %v8886 = vpack.c.b16 %v8716, %v8714
    %v8887 = vpack.c.b16 %v8719, %v8717
    %v8888 = vpack.c.b16 %v8720, %v8718
    %v8889 = vpack.c.b16 %v8723, %v8721
    %v8890 = vpack.c.b16 %v8724, %v8722
    %v8891 = vpack.c.b16 %v8727, %v8725
    %v8892 = vpack.c.b16 %v8728, %v8726
    %v8893 = vpack.c.b16 %v8731, %v8729
    %v8894 = vpack.c.b16 %v8732, %v8730
    %v8895 = vpack.c.b16 %v8735, %v8733
    %v8896 = vpack.c.b16 %v8736, %v8734
    %v8897 = vpack.c.b16 %v8739, %v8737
    %v8898 = vpack.c.b16 %v8740, %v8738
    %v8899 = vpack.c.b16 %v8743, %v8741
    %v8900 = vpack.c.b16 %v8744, %v8742
    %v8901 = vpack.c.b16 %v8747, %v8745
    %v8902 = vpack.c.b16 %v8748, %v8746
    %v8903 = vpack.c.b16 %v8751, %v8749
    %v8904 = vpack.c.b16 %v8752, %v8750
    %v8905 = vpack.c.b16 %v8755, %v8753
    %v8906 = vpack.c.b16 %v8756, %v8754
    %v8907 = vpack.c.b16 %v8759, %v8757
    %v8908 = vpack.c.b16 %v8760, %v8758
    %v8909 = vpack.c.b16 %v8763, %v8761
    %v8910 = vpack.c.b16 %v8764, %v8762
    %v8911 = vpack.c.b16 %v8767, %v8765
    %v8912 = vpack.c.b16 %v8768, %v8766
    %v8913 = vpack.c.b16 %v8771, %v8769
    %v8914 = vpack.c.b16 %v8772, %v8770
    %v8915 = vpack.c.b16 %v8775, %v8773
    %v8916 = vpack.c.b16 %v8776, %v8774
    %v8917 = vpack.c.b16 %v8779, %v8777
    %v8918 = vpack.c.b16 %v8780, %v8778
    %v8919 = vpack.c.b16 %v8783, %v8781
    %v8920 = vpack.c.b16 %v8784, %v8782
    %v8921 = vpack.c.b16 %v8787, %v8785
    %v8922 = vpack.c.b16 %v8788, %v8786
    %v8923 = vpack.c.b16 %v8791, %v8789
    %v8924 = vpack.c.b16 %v8792, %v8790
    %v8925 = vpack.c.b16 %v8795, %v8793
    %v8926 = vpack.c.b16 %v8796, %v8794
    %v8927 = vpack.c.b16 %v8799, %v8797
    %v8928 = vpack.c.b16 %v8800, %v8798
    %v8929 = vpack.c.b16 %v8803, %v8801
    %v8930 = vpack.c.b16 %v8804, %v8802
    %v8931 = vpack.c.b16 %v8807, %v8805
    %v8932 = vpack.c.b16 %v8808, %v8806
    %v8933 = vpack.c.b16 %v8811, %v8809
    %v8934 = vpack.c.b16 %v8812, %v8810
    %v8935 = vpack.c.b16 %v8815, %v8813
    %v8936 = vpack.c.b16 %v8816, %v8814
    %v8937 = vpack.c.b16 %v8819, %v8817
    %v8938 = vpack.c.b16 %v8820, %v8818
    %v8939 = vpack.c.b16 %v8823, %v8821
    %v8940 = vpack.c.b16 %v8824, %v8822
    %v8941 = vpack.c.b16 %v8827, %v8825
    %v8942 = vpack.c.b16 %v8828, %v8826
    %v8943 = vpack.c.b16 %v8831, %v8829
    %v8944 = vpack.c.b16 %v8832, %v8830
    %v8945 = vpack.c.b16 %v8835, %v8833
    %v8946 = vpack.c.b16 %v8836, %v8834
    %v8947 = vpack.c.b16 %v8839, %v8837
    %v8948 = vpack.c.b16 %v8840, %v8838
    %v8949 = vpack.c.b16 %v8843, %v8841
    %v8950 = vpack.c.b16 %v8844, %v8842
    %v8951 = vpack.c.b16 %v8847, %v8845
    %v8952 = vpack.c.b16 %v8848, %v8846
    %v8953 = vpack.c.b16 %v8851, %v8849
    %v8954 = vpack.c.b16 %v8852, %v8850
    %v8955 = vpack.c.b16 %v8855, %v8853
    %v8956 = vpack.c.b16 %v8856, %v8854
    %v8957 = vpack.c.b16 %v8859, %v8857
    %v8958 = vpack.c.b16 %v8860, %v8858
    %v8959 = vpack.c.b16 %v8863, %v8861
    %v8960 = vpack.c.b16 %v8864, %v8862
    %9057 = vmatprep.subr.bf16.mxu0 %v8866
    %9058 = vmatpush1.bf16.msra.mxu0 %v8865
    %9059 = vmatprep.subr.bf16.mxu0 %v8868
    %9060 = vmatpush1.bf16.msra.mxu0 %v8867
    %9061 = vmatprep.subr.bf16.mxu0 %v8870
    %9062 = vmatpush1.bf16.msra.mxu0 %v8869
    %9063 = vmatprep.subr.bf16.mxu0 %v8872
    %9064 = vmatpush1.bf16.msra.mxu0 %v8871
    %9065 = vmatprep.subr.bf16.mxu0 %v8874
    %9066 = vmatpush1.bf16.msra.mxu0 %v8873
    %9067 = vmatprep.subr.bf16.mxu0 %v8876
    %9068 = vmatpush1.bf16.msra.mxu0 %v8875
    %9069 = vmatprep.subr.bf16.mxu0 %v8878
    %9070 = vmatpush1.bf16.msra.mxu0 %v8877
    %9071 = vmatprep.subr.bf16.mxu0 %v8880
    %9072 = vmatpush1.bf16.msra.mxu0 %v8879
    %9073 = vmatprep.subr.bf16.mxu0 %v8882
    %9074 = vmatpush1.bf16.msra.mxu0 %v8881
    %9075 = vmatprep.subr.bf16.mxu0 %v8884
    %9076 = vmatpush1.bf16.msra.mxu0 %v8883
    %9077 = vmatprep.subr.bf16.mxu0 %v8886
    %9078 = vmatpush1.bf16.msra.mxu0 %v8885
    %9079 = vmatprep.subr.bf16.mxu0 %v8888
    %9080 = vmatpush1.bf16.msra.mxu0 %v8887
    %9081 = vmatprep.subr.bf16.mxu0 %v8890
    %9082 = vmatpush1.bf16.msra.mxu0 %v8889
    %9083 = vmatprep.subr.bf16.mxu0 %v8892
    %9084 = vmatpush1.bf16.msra.mxu0 %v8891
    %9085 = vmatprep.subr.bf16.mxu0 %v8894
    %9086 = vmatpush1.bf16.msra.mxu0 %v8893
    %9087 = vmatprep.subr.bf16.mxu0 %v8896
    %9088 = vmatpush1.bf16.msra.mxu0 %v8895
    %9089 = vmatprep.mubr.bf16.mxu0 %v8482
    %9090 = vmatmul.mubr.bf16.gmra.mrb[0].mxu0 %v8481
    %v9091 = vpop.f32.mrb[0].mxu0
    %v9092 = vadd.f32 %v8403, %v9091
    %v9093 = vpop.f32.mrb[0].mxu0
    %v9094 = vadd.f32 %v8405, %v9093
    %v9095 = vpop.f32.mrb[0].mxu0
    %v9096 = vadd.f32 %v8407, %v9095
    %v9097 = vpop.f32.mrb[0].mxu0
    %v9098 = vadd.f32 %v8409, %v9097
    %9099 = vmatprep.mubr.bf16.mxu0 %v8488
    %9100 = vmatmul.mubr.bf16.gmra.mrb[0].mxu0 %v8487
    %v9101 = vpop.f32.mrb[0].mxu0
    %v9102 = vadd.f32 %v8413, %v9101
    %v9103 = vpop.f32.mrb[0].mxu0
    %v9104 = vadd.f32 %v8415, %v9103
    %v9105 = vpop.f32.mrb[0].mxu0
    %v9106 = vadd.f32 %v8417, %v9105
    %v9107 = vpop.f32.mrb[0].mxu0
    %v9108 = vadd.f32 %v8419, %v9107
    %9109 = vmatprep.mubr.bf16.mxu0 %v8494
    %9110 = vmatmul.mubr.bf16.gmra.mrb[0].mxu0 %v8493
    %v9111 = vpop.f32.mrb[0].mxu0
    %v9112 = vadd.f32 %v8423, %v9111
    %v9113 = vpop.f32.mrb[0].mxu0
    %v9114 = vadd.f32 %v8425, %v9113
    %v9115 = vpop.f32.mrb[0].mxu0
    %v9116 = vadd.f32 %v8427, %v9115
    %v9117 = vpop.f32.mrb[0].mxu0
    %v9118 = vadd.f32 %v8429, %v9117
    %9119 = vmatprep.mubr.bf16.mxu0 %v8500
    %9120 = vmatmul.mubr.bf16.gmra.mrb[0].mxu0 %v8499
    %v9121 = vpop.f32.mrb[0].mxu0
    %v9122 = vadd.f32 %v8433, %v9121
    %v9123 = vpop.f32.mrb[0].mxu0
    %v9124 = vadd.f32 %v8435, %v9123
    %v9125 = vpop.f32.mrb[0].mxu0
    %v9126 = vadd.f32 %v8437, %v9125
    %v9127 = vpop.f32.mrb[0].mxu0
    %v9128 = vadd.f32 %v8439, %v9127
    %9129 = vmatprep.mubr.bf16.mxu0 %v8506
    %9130 = vmatmul.mubr.bf16.gmra.mrb[0].mxu0 %v8505
    %v9131 = vpop.f32.mrb[0].mxu0
    %v9132 = vadd.f32 %v8443, %v9131
    %v9133 = vpop.f32.mrb[0].mxu0
    %v9134 = vadd.f32 %v8445, %v9133
    %v9135 = vpop.f32.mrb[0].mxu0
    %v9136 = vadd.f32 %v8447, %v9135
    %v9137 = vpop.f32.mrb[0].mxu0
    %v9138 = vadd.f32 %v8449, %v9137
    %9139 = vmatprep.mubr.bf16.mxu0 %v8512
    %9140 = vmatmul.mubr.bf16.gmra.mrb[0].mxu0 %v8511
    %v9141 = vpop.f32.mrb[0].mxu0
    %v9142 = vadd.f32 %v8453, %v9141
    %v9143 = vpop.f32.mrb[0].mxu0
    %v9144 = vadd.f32 %v8455, %v9143
    %v9145 = vpop.f32.mrb[0].mxu0
    %v9146 = vadd.f32 %v8457, %v9145
    %v9147 = vpop.f32.mrb[0].mxu0
    %v9148 = vadd.f32 %v8459, %v9147
    %9149 = vmatprep.mubr.bf16.mxu0 %v8518
    %9150 = vmatmul.mubr.bf16.gmra.mrb[0].mxu0 %v8517
    %v9151 = vpop.f32.mrb[0].mxu0
    %v9152 = vadd.f32 %v8463, %v9151
    %v9153 = vpop.f32.mrb[0].mxu0
    %v9154 = vadd.f32 %v8465, %v9153
    %v9155 = vpop.f32.mrb[0].mxu0
    %v9156 = vadd.f32 %v8467, %v9155
    %v9157 = vpop.f32.mrb[0].mxu0
    %v9158 = vadd.f32 %v8469, %v9157
    %9159 = vmatprep.mubr.bf16.mxu0 %v8524
    %9160 = vmatmul.mubr.bf16.gmra.mrb[0].mxu0 %v8523
    %v9161 = vpop.f32.mrb[0].mxu0
    %v9162 = vadd.f32 %v8473, %v9161
    %v9163 = vpop.f32.mrb[0].mxu0
    %v9164 = vadd.f32 %v8475, %v9163
    %v9165 = vpop.f32.mrb[0].mxu0
    %v9166 = vadd.f32 %v8477, %v9165
    %v9167 = vpop.f32.mrb[0].mxu0
    %v9168 = vadd.f32 %v8479, %v9167
    %9169 = vdwg.mxu0
    %9170 = vmatprep.subr.bf16.mxu0 %v8898
    %9171 = vmatpush1.bf16.msra.mxu0 %v8897
    %9172 = vmatprep.subr.bf16.mxu0 %v8900
    %9173 = vmatpush1.bf16.msra.mxu0 %v8899
    %9174 = vmatprep.subr.bf16.mxu0 %v8902
    %9175 = vmatpush1.bf16.msra.mxu0 %v8901
    %9176 = vmatprep.subr.bf16.mxu0 %v8904
    %9177 = vmatpush1.bf16.msra.mxu0 %v8903
    %9178 = vmatprep.subr.bf16.mxu0 %v8906
    %9179 = vmatpush1.bf16.msra.mxu0 %v8905
    %9180 = vmatprep.subr.bf16.mxu0 %v8908
    %9181 = vmatpush1.bf16.msra.mxu0 %v8907
    %9182 = vmatprep.subr.bf16.mxu0 %v8910
    %9183 = vmatpush1.bf16.msra.mxu0 %v8909
    %9184 = vmatprep.subr.bf16.mxu0 %v8912
    %9185 = vmatpush1.bf16.msra.mxu0 %v8911
    %9186 = vmatprep.subr.bf16.mxu0 %v8914
    %9187 = vmatpush1.bf16.msra.mxu0 %v8913
    %9188 = vmatprep.subr.bf16.mxu0 %v8916
    %9189 = vmatpush1.bf16.msra.mxu0 %v8915
    %9190 = vmatprep.subr.bf16.mxu0 %v8918
    %9191 = vmatpush1.bf16.msra.mxu0 %v8917
    %9192 = vmatprep.subr.bf16.mxu0 %v8920
    %9193 = vmatpush1.bf16.msra.mxu0 %v8919
    %9194 = vmatprep.subr.bf16.mxu0 %v8922
    %9195 = vmatpush1.bf16.msra.mxu0 %v8921
    %9196 = vmatprep.subr.bf16.mxu0 %v8924
    %9197 = vmatpush1.bf16.msra.mxu0 %v8923
    %9198 = vmatprep.subr.bf16.mxu0 %v8926
    %9199 = vmatpush1.bf16.msra.mxu0 %v8925
    %9200 = vmatprep.subr.bf16.mxu0 %v8928
    %9201 = vmatpush1.bf16.msra.mxu0 %v8927
    %9202 = vmatprep.mubr.bf16.mxu0 %v8484
    %9203 = vmatmul.mubr.bf16.gmra.mrb[0].mxu0 %v8483
    %v9204 = vpop.f32.mrb[0].mxu0
    %v9205 = vadd.f32 %v9092, %v9204
    %v9206 = vpop.f32.mrb[0].mxu0
    %v9207 = vadd.f32 %v9094, %v9206
    %v9208 = vpop.f32.mrb[0].mxu0
    %v9209 = vadd.f32 %v9096, %v9208
    %v9210 = vpop.f32.mrb[0].mxu0
    %v9211 = vadd.f32 %v9098, %v9210
    %9212 = vmatprep.mubr.bf16.mxu0 %v8490
    %9213 = vmatmul.mubr.bf16.gmra.mrb[0].mxu0 %v8489
    %v9214 = vpop.f32.mrb[0].mxu0
    %v9215 = vadd.f32 %v9102, %v9214
    %v9216 = vpop.f32.mrb[0].mxu0
    %v9217 = vadd.f32 %v9104, %v9216
    %v9218 = vpop.f32.mrb[0].mxu0
    %v9219 = vadd.f32 %v9106, %v9218
    %v9220 = vpop.f32.mrb[0].mxu0
    %v9221 = vadd.f32 %v9108, %v9220
    %9222 = vmatprep.mubr.bf16.mxu0 %v8496
    %9223 = vmatmul.mubr.bf16.gmra.mrb[0].mxu0 %v8495
    %v9224 = vpop.f32.mrb[0].mxu0
    %v9225 = vadd.f32 %v9112, %v9224
    %v9226 = vpop.f32.mrb[0].mxu0
    %v9227 = vadd.f32 %v9114, %v9226
    %v9228 = vpop.f32.mrb[0].mxu0
    %v9229 = vadd.f32 %v9116, %v9228
    %v9230 = vpop.f32.mrb[0].mxu0
    %v9231 = vadd.f32 %v9118, %v9230
    %9232 = vmatprep.mubr.bf16.mxu0 %v8502
    %9233 = vmatmul.mubr.bf16.gmra.mrb[0].mxu0 %v8501
    %v9234 = vpop.f32.mrb[0].mxu0
    %v9235 = vadd.f32 %v9122, %v9234
    %v9236 = vpop.f32.mrb[0].mxu0
    %v9237 = vadd.f32 %v9124, %v9236
    %v9238 = vpop.f32.mrb[0].mxu0
    %v9239 = vadd.f32 %v9126, %v9238
    %v9240 = vpop.f32.mrb[0].mxu0
    %v9241 = vadd.f32 %v9128, %v9240
    %9242 = vmatprep.mubr.bf16.mxu0 %v8508
    %9243 = vmatmul.mubr.bf16.gmra.mrb[0].mxu0 %v8507
    %v9244 = vpop.f32.mrb[0].mxu0
    %v9245 = vadd.f32 %v9132, %v9244
    %v9246 = vpop.f32.mrb[0].mxu0
    %v9247 = vadd.f32 %v9134, %v9246
    %v9248 = vpop.f32.mrb[0].mxu0
    %v9249 = vadd.f32 %v9136, %v9248
    %v9250 = vpop.f32.mrb[0].mxu0
    %v9251 = vadd.f32 %v9138, %v9250
    %9252 = vmatprep.mubr.bf16.mxu0 %v8514
    %9253 = vmatmul.mubr.bf16.gmra.mrb[0].mxu0 %v8513
    %v9254 = vpop.f32.mrb[0].mxu0
    %v9255 = vadd.f32 %v9142, %v9254
    %v9256 = vpop.f32.mrb[0].mxu0
    %v9257 = vadd.f32 %v9144, %v9256
    %v9258 = vpop.f32.mrb[0].mxu0
    %v9259 = vadd.f32 %v9146, %v9258
    %v9260 = vpop.f32.mrb[0].mxu0
    %v9261 = vadd.f32 %v9148, %v9260
    %9262 = vmatprep.mubr.bf16.mxu0 %v8520
    %9263 = vmatmul.mubr.bf16.gmra.mrb[0].mxu0 %v8519
    %v9264 = vpop.f32.mrb[0].mxu0
    %v9265 = vadd.f32 %v9152, %v9264
    %v9266 = vpop.f32.mrb[0].mxu0
    %v9267 = vadd.f32 %v9154, %v9266
    %v9268 = vpop.f32.mrb[0].mxu0
    %v9269 = vadd.f32 %v9156, %v9268
    %v9270 = vpop.f32.mrb[0].mxu0
    %v9271 = vadd.f32 %v9158, %v9270
    %9272 = vmatprep.mubr.bf16.mxu0 %v8526
    %9273 = vmatmul.mubr.bf16.gmra.mrb[0].mxu0 %v8525
    %v9274 = vpop.f32.mrb[0].mxu0
    %v9275 = vadd.f32 %v9162, %v9274
    %v9276 = vpop.f32.mrb[0].mxu0
    %v9277 = vadd.f32 %v9164, %v9276
    %v9278 = vpop.f32.mrb[0].mxu0
    %v9279 = vadd.f32 %v9166, %v9278
    %v9280 = vpop.f32.mrb[0].mxu0
    %v9281 = vadd.f32 %v9168, %v9280
    %9282 = vdwg.mxu0
    %9283 = vmatprep.subr.bf16.mxu0 %v8930
    %9284 = vmatpush1.bf16.msra.mxu0 %v8929
    %9285 = vmatprep.subr.bf16.mxu0 %v8932
    %9286 = vmatpush1.bf16.msra.mxu0 %v8931
    %9287 = vmatprep.subr.bf16.mxu0 %v8934
    %9288 = vmatpush1.bf16.msra.mxu0 %v8933
    %9289 = vmatprep.subr.bf16.mxu0 %v8936
    %9290 = vmatpush1.bf16.msra.mxu0 %v8935
    %9291 = vmatprep.subr.bf16.mxu0 %v8938
    %9292 = vmatpush1.bf16.msra.mxu0 %v8937
    %9293 = vmatprep.subr.bf16.mxu0 %v8940
    %9294 = vmatpush1.bf16.msra.mxu0 %v8939
    %9295 = vmatprep.subr.bf16.mxu0 %v8942
    %9296 = vmatpush1.bf16.msra.mxu0 %v8941
    %9297 = vmatprep.subr.bf16.mxu0 %v8944
    %9298 = vmatpush1.bf16.msra.mxu0 %v8943
    %9299 = vmatprep.subr.bf16.mxu0 %v8946
    %9300 = vmatpush1.bf16.msra.mxu0 %v8945
    %9301 = vmatprep.subr.bf16.mxu0 %v8948
    %9302 = vmatpush1.bf16.msra.mxu0 %v8947
    %9303 = vmatprep.subr.bf16.mxu0 %v8950
    %9304 = vmatpush1.bf16.msra.mxu0 %v8949
    %9305 = vmatprep.subr.bf16.mxu0 %v8952
    %9306 = vmatpush1.bf16.msra.mxu0 %v8951
    %9307 = vmatprep.subr.bf16.mxu0 %v8954
    %9308 = vmatpush1.bf16.msra.mxu0 %v8953
    %9309 = vmatprep.subr.bf16.mxu0 %v8956
    %9310 = vmatpush1.bf16.msra.mxu0 %v8955
    %9311 = vmatprep.subr.bf16.mxu0 %v8958
    %9312 = vmatpush1.bf16.msra.mxu0 %v8957
    %9313 = vmatprep.subr.bf16.mxu0 %v8960
    %9314 = vmatpush1.bf16.msra.mxu0 %v8959
    %9315 = vmatprep.mubr.bf16.mxu0 %v8486
    %9316 = vmatmul.mubr.bf16.gmra.mrb[0].mxu0 %v8485
    %v9317 = vpop.f32.mrb[0].mxu0
    %v9318 = vadd.f32 %v9205, %v9317
    %v9319 = vpop.f32.mrb[0].mxu0
    %v9320 = vadd.f32 %v9207, %v9319
    %v9321 = vpop.f32.mrb[0].mxu0
    %v9322 = vadd.f32 %v9209, %v9321
    %v9323 = vpop.f32.mrb[0].mxu0
    %v9324 = vadd.f32 %v9211, %v9323
    %9325 = vmatprep.mubr.bf16.mxu0 %v8492
    %9326 = vmatmul.mubr.bf16.gmra.mrb[0].mxu0 %v8491
    %v9327 = vpop.f32.mrb[0].mxu0
    %v9328 = vadd.f32 %v9215, %v9327
    %v9329 = vpop.f32.mrb[0].mxu0
    %v9330 = vadd.f32 %v9217, %v9329
    %v9331 = vpop.f32.mrb[0].mxu0
    %v9332 = vadd.f32 %v9219, %v9331
    %v9333 = vpop.f32.mrb[0].mxu0
    %v9334 = vadd.f32 %v9221, %v9333
    %9335 = vmatprep.mubr.bf16.mxu0 %v8498
    %9336 = vmatmul.mubr.bf16.gmra.mrb[0].mxu0 %v8497
    %v9337 = vpop.f32.mrb[0].mxu0
    %v9338 = vadd.f32 %v9225, %v9337
    %v9339 = vpop.f32.mrb[0].mxu0
    %v9340 = vadd.f32 %v9227, %v9339
    %v9341 = vpop.f32.mrb[0].mxu0
    %v9342 = vadd.f32 %v9229, %v9341
    %v9343 = vpop.f32.mrb[0].mxu0
    %v9344 = vadd.f32 %v9231, %v9343
    %9345 = vmatprep.mubr.bf16.mxu0 %v8504
    %9346 = vmatmul.mubr.bf16.gmra.mrb[0].mxu0 %v8503
    %v9347 = vpop.f32.mrb[0].mxu0
    %v9348 = vadd.f32 %v9235, %v9347
    %v9349 = vpop.f32.mrb[0].mxu0
    %v9350 = vadd.f32 %v9237, %v9349
    %v9351 = vpop.f32.mrb[0].mxu0
    %v9352 = vadd.f32 %v9239, %v9351
    %v9353 = vpop.f32.mrb[0].mxu0
    %v9354 = vadd.f32 %v9241, %v9353
    %9355 = vmatprep.mubr.bf16.mxu0 %v8510
    %9356 = vmatmul.mubr.bf16.gmra.mrb[0].mxu0 %v8509
    %v9357 = vpop.f32.mrb[0].mxu0
    %v9358 = vadd.f32 %v9245, %v9357
    %v9359 = vpop.f32.mrb[0].mxu0
    %v9360 = vadd.f32 %v9247, %v9359
    %v9361 = vpop.f32.mrb[0].mxu0
    %v9362 = vadd.f32 %v9249, %v9361
    %v9363 = vpop.f32.mrb[0].mxu0
    %v9364 = vadd.f32 %v9251, %v9363
    %9365 = vmatprep.mubr.bf16.mxu0 %v8516
    %9366 = vmatmul.mubr.bf16.gmra.mrb[0].mxu0 %v8515
    %v9367 = vpop.f32.mrb[0].mxu0
    %v9368 = vadd.f32 %v9255, %v9367
    %v9369 = vpop.f32.mrb[0].mxu0
    %v9370 = vadd.f32 %v9257, %v9369
    %v9371 = vpop.f32.mrb[0].mxu0
    %v9372 = vadd.f32 %v9259, %v9371
    %v9373 = vpop.f32.mrb[0].mxu0
    %v9374 = vadd.f32 %v9261, %v9373
    %9375 = vmatprep.mubr.bf16.mxu0 %v8522
    %9376 = vmatmul.mubr.bf16.gmra.mrb[0].mxu0 %v8521
    %v9377 = vpop.f32.mrb[0].mxu0
    %v9378 = vadd.f32 %v9265, %v9377
    %v9379 = vpop.f32.mrb[0].mxu0
    %v9380 = vadd.f32 %v9267, %v9379
    %v9381 = vpop.f32.mrb[0].mxu0
    %v9382 = vadd.f32 %v9269, %v9381
    %v9383 = vpop.f32.mrb[0].mxu0
    %v9384 = vadd.f32 %v9271, %v9383
    %9385 = vmatprep.mubr.bf16.mxu0 %v8528
    %9386 = vmatmul.mubr.bf16.gmra.mrb[0].mxu0 %v8527
    %v9387 = vpop.f32.mrb[0].mxu0
    %v9388 = vadd.f32 %v9275, %v9387
    %v9389 = vpop.f32.mrb[0].mxu0
    %v9390 = vadd.f32 %v9277, %v9389
    %v9391 = vpop.f32.mrb[0].mxu0
    %v9392 = vadd.f32 %v9279, %v9391
    %v9393 = vpop.f32.mrb[0].mxu0
    %v9394 = vadd.f32 %v9281, %v9393
    %9395 = vdwg.mxu0
    %v9396 = vld [vmem:[%s1995] sm:$0xff]
    %v9397 = vld [vmem:[%s1995 + $0x10] sm:$0xff]
    %v9398 = vld [vmem:[%s1995 + $0x20] sm:$0xff]
    %v9399 = vld [vmem:[%s1995 + $0x30] sm:$0xff]
    %v9400 = vld [vmem:[%s1995 + $0x40] sm:$0xff]
    %v9401 = vld [vmem:[%s1995 + $0x50] sm:$0xff]
    %v9402 = vld [vmem:[%s1995 + $0x60] sm:$0xff]
    %v9403 = vld [vmem:[%s1995 + $0x70] sm:$0xff]
    %v9404 = vld [vmem:[%s1995 + $0xa0] sm:$0xff]
    %v9405 = vld [vmem:[%s1995 + $0xb0] sm:$0xff]
    %v9406 = vld [vmem:[%s1995 + $0xc0] sm:$0xff]
    %v9407 = vld [vmem:[%s1995 + $0xd0] sm:$0xff]
    %v9408 = vld [vmem:[%s1995 + $0xe0] sm:$0xff]
    %v9409 = vld [vmem:[%s1995 + $0xf0] sm:$0xff]
    %v9410 = vld [vmem:[%s1995 + $0x100] sm:$0xff]
    %v9411 = vld [vmem:[%s1995 + $0x110] sm:$0xff]
    %v9412 = vld [vmem:[%s1995 + $0x8] sm:$0x11]
    %v9413 = vld [vmem:[%s1995 + $0x18] sm:$0x11]
    %v9414 = vld [vmem:[%s1995 + $0x28] sm:$0x11]
    %v9415 = vld [vmem:[%s1995 + $0x38] sm:$0x11]
    %v9416 = vld [vmem:[%s1995 + $0x48] sm:$0x11]
    %v9417 = vld [vmem:[%s1995 + $0x58] sm:$0x11]
    %v9418 = vld [vmem:[%s1995 + $0x68] sm:$0x11]
    %v9419 = vld [vmem:[%s1995 + $0x78] sm:$0x11]
    %v9420 = vld [vmem:[%s1995 + $0xa8] sm:$0x11]
    %v9421 = vld [vmem:[%s1995 + $0xb8] sm:$0x11]
    %v9422 = vld [vmem:[%s1995 + $0xc8] sm:$0x11]
    %v9423 = vld [vmem:[%s1995 + $0xd8] sm:$0x11]
    %v9424 = vld [vmem:[%s1995 + $0xe8] sm:$0x11]
    %v9425 = vld [vmem:[%s1995 + $0xf8] sm:$0x11]
    %v9426 = vld [vmem:[%s1995 + $0x108] sm:$0x11]
    %v9427 = vld [vmem:[%s1995 + $0x118] sm:$0x11]
    %v9428 = vld [vmem:[%s1995] sm:$0xee]
    %v9429 = vld [vmem:[%s1995 + $0x10] sm:$0xee]
    %v9430 = vld [vmem:[%s1995 + $0x20] sm:$0xee]
    %v9431 = vld [vmem:[%s1995 + $0x30] sm:$0xee]
    %v9432 = vld [vmem:[%s1995 + $0x40] sm:$0xee]
    %v9433 = vld [vmem:[%s1995 + $0x50] sm:$0xee]
    %v9434 = vld [vmem:[%s1995 + $0x60] sm:$0xee]
    %v9435 = vld [vmem:[%s1995 + $0x70] sm:$0xee]
    %v9436 = vld [vmem:[%s1995 + $0xa0] sm:$0xee]
    %v9437 = vld [vmem:[%s1995 + $0xb0] sm:$0xee]
    %v9438 = vld [vmem:[%s1995 + $0xc0] sm:$0xee]
    %v9439 = vld [vmem:[%s1995 + $0xd0] sm:$0xee]
    %v9440 = vld [vmem:[%s1995 + $0xe0] sm:$0xee]
    %v9441 = vld [vmem:[%s1995 + $0xf0] sm:$0xee]
    %v9442 = vld [vmem:[%s1995 + $0x100] sm:$0xee]
    %v9443 = vld [vmem:[%s1995 + $0x110] sm:$0xee]
    %v9460 = vunpack.c.l.b16 %v9396
    %v9461 = vunpack.c.h.b16 %v9396
    %v9462 = vunpack.c.l.b16 %v9397
    %v9463 = vunpack.c.h.b16 %v9397
    %v9464 = vunpack.c.l.b16 %v9398
    %v9465 = vunpack.c.h.b16 %v9398
    %v9466 = vunpack.c.l.b16 %v9399
    %v9467 = vunpack.c.h.b16 %v9399
    %v9468 = vunpack.c.l.b16 %v9400
    %v9469 = vunpack.c.h.b16 %v9400
    %v9470 = vunpack.c.l.b16 %v9401
    %v9471 = vunpack.c.h.b16 %v9401
    %v9472 = vunpack.c.l.b16 %v9402
    %v9473 = vunpack.c.h.b16 %v9402
    %v9474 = vunpack.c.l.b16 %v9403
    %v9475 = vunpack.c.h.b16 %v9403
    %v9476 = vunpack.c.l.b16 %v9404
    %v9477 = vunpack.c.h.b16 %v9404
    %v9478 = vunpack.c.l.b16 %v9405
    %v9479 = vunpack.c.h.b16 %v9405
    %v9480 = vunpack.c.l.b16 %v9406
    %v9481 = vunpack.c.h.b16 %v9406
    %v9482 = vunpack.c.l.b16 %v9407
    %v9483 = vunpack.c.h.b16 %v9407
    %v9484 = vunpack.c.l.b16 %v9408
    %v9485 = vunpack.c.h.b16 %v9408
    %v9486 = vunpack.c.l.b16 %v9409
    %v9487 = vunpack.c.h.b16 %v9409
    %v9488 = vunpack.c.l.b16 %v9410
    %v9489 = vunpack.c.h.b16 %v9410
    %v9490 = vunpack.c.l.b16 %v9411
    %v9491 = vunpack.c.h.b16 %v9411
    %v9508 = vunpack.c.l.b16 %v9412
    %v9509 = vunpack.c.h.b16 %v9412
    %v9510 = vunpack.c.l.b16 %v9413
    %v9511 = vunpack.c.h.b16 %v9413
    %v9512 = vunpack.c.l.b16 %v9414
    %v9513 = vunpack.c.h.b16 %v9414
    %v9514 = vunpack.c.l.b16 %v9415
    %v9515 = vunpack.c.h.b16 %v9415
    %v9516 = vunpack.c.l.b16 %v9416
    %v9517 = vunpack.c.h.b16 %v9416
    %v9518 = vunpack.c.l.b16 %v9417
    %v9519 = vunpack.c.h.b16 %v9417
    %v9520 = vunpack.c.l.b16 %v9418
    %v9521 = vunpack.c.h.b16 %v9418
    %v9522 = vunpack.c.l.b16 %v9419
    %v9523 = vunpack.c.h.b16 %v9419
    %v9524 = vunpack.c.l.b16 %v9420
    %v9525 = vunpack.c.h.b16 %v9420
    %v9526 = vunpack.c.l.b16 %v9421
    %v9527 = vunpack.c.h.b16 %v9421
    %v9528 = vunpack.c.l.b16 %v9422
    %v9529 = vunpack.c.h.b16 %v9422
    %v9530 = vunpack.c.l.b16 %v9423
    %v9531 = vunpack.c.h.b16 %v9423
    %v9532 = vunpack.c.l.b16 %v9424
    %v9533 = vunpack.c.h.b16 %v9424
    %v9534 = vunpack.c.l.b16 %v9425
    %v9535 = vunpack.c.h.b16 %v9425
    %v9536 = vunpack.c.l.b16 %v9426
    %v9537 = vunpack.c.h.b16 %v9426
    %v9538 = vunpack.c.l.b16 %v9427
    %v9539 = vunpack.c.h.b16 %v9427
    %v9540 = vpack.c.b16 %v9508, %v9460
    %v9541 = vpack.c.b16 %v9509, %v9461
    %v9542 = vpack.c.b16 %v9510, %v9462
    %v9543 = vpack.c.b16 %v9511, %v9463
    %v9544 = vpack.c.b16 %v9512, %v9464
    %v9545 = vpack.c.b16 %v9513, %v9465
    %v9546 = vpack.c.b16 %v9514, %v9466
    %v9547 = vpack.c.b16 %v9515, %v9467
    %v9548 = vpack.c.b16 %v9516, %v9468
    %v9549 = vpack.c.b16 %v9517, %v9469
    %v9550 = vpack.c.b16 %v9518, %v9470
    %v9551 = vpack.c.b16 %v9519, %v9471
    %v9552 = vpack.c.b16 %v9520, %v9472
    %v9553 = vpack.c.b16 %v9521, %v9473
    %v9554 = vpack.c.b16 %v9522, %v9474
    %v9555 = vpack.c.b16 %v9523, %v9475
    %v9556 = vpack.c.b16 %v9524, %v9476
    %v9557 = vpack.c.b16 %v9525, %v9477
    %v9558 = vpack.c.b16 %v9526, %v9478
    %v9559 = vpack.c.b16 %v9527, %v9479
    %v9560 = vpack.c.b16 %v9528, %v9480
    %v9561 = vpack.c.b16 %v9529, %v9481
    %v9562 = vpack.c.b16 %v9530, %v9482
    %v9563 = vpack.c.b16 %v9531, %v9483
    %v9564 = vpack.c.b16 %v9532, %v9484
    %v9565 = vpack.c.b16 %v9533, %v9485
    %v9566 = vpack.c.b16 %v9534, %v9486
    %v9567 = vpack.c.b16 %v9535, %v9487
    %v9568 = vpack.c.b16 %v9536, %v9488
    %v9569 = vpack.c.b16 %v9537, %v9489
    %v9570 = vpack.c.b16 %v9538, %v9490
    %v9571 = vpack.c.b16 %v9539, %v9491
    %v9573 = vshrl.u32 %v9540, 16
    %v9575 = vshll.u32 %v9540, 16
    %v9577 = vrot.slane %v9575, 1
    %v9578 = vor.u32 %v9573, %v9577
    %v9580 = vshrl.u32 %v9541, 16
    %v9582 = vshll.u32 %v9541, 16
    %v9584 = vrot.slane %v9582, 1
    %v9585 = vor.u32 %v9580, %v9584
    %v9587 = vshrl.u32 %v9542, 16
    %v9589 = vshll.u32 %v9542, 16
    %v9591 = vrot.slane %v9589, 1
    %v9592 = vor.u32 %v9587, %v9591
    %v9594 = vshrl.u32 %v9543, 16
    %v9596 = vshll.u32 %v9543, 16
    %v9598 = vrot.slane %v9596, 1
    %v9599 = vor.u32 %v9594, %v9598
    %v9601 = vshrl.u32 %v9544, 16
    %v9603 = vshll.u32 %v9544, 16
    %v9605 = vrot.slane %v9603, 1
    %v9606 = vor.u32 %v9601, %v9605
    %v9608 = vshrl.u32 %v9545, 16
    %v9610 = vshll.u32 %v9545, 16
    %v9612 = vrot.slane %v9610, 1
    %v9613 = vor.u32 %v9608, %v9612
    %v9615 = vshrl.u32 %v9546, 16
    %v9617 = vshll.u32 %v9546, 16
    %v9619 = vrot.slane %v9617, 1
    %v9620 = vor.u32 %v9615, %v9619
    %v9622 = vshrl.u32 %v9547, 16
    %v9624 = vshll.u32 %v9547, 16
    %v9626 = vrot.slane %v9624, 1
    %v9627 = vor.u32 %v9622, %v9626
    %v9629 = vshrl.u32 %v9548, 16
    %v9631 = vshll.u32 %v9548, 16
    %v9633 = vrot.slane %v9631, 1
    %v9634 = vor.u32 %v9629, %v9633
    %v9636 = vshrl.u32 %v9549, 16
    %v9638 = vshll.u32 %v9549, 16
    %v9640 = vrot.slane %v9638, 1
    %v9641 = vor.u32 %v9636, %v9640
    %v9643 = vshrl.u32 %v9550, 16
    %v9645 = vshll.u32 %v9550, 16
    %v9647 = vrot.slane %v9645, 1
    %v9648 = vor.u32 %v9643, %v9647
    %v9650 = vshrl.u32 %v9551, 16
    %v9652 = vshll.u32 %v9551, 16
    %v9654 = vrot.slane %v9652, 1
    %v9655 = vor.u32 %v9650, %v9654
    %v9657 = vshrl.u32 %v9552, 16
    %v9659 = vshll.u32 %v9552, 16
    %v9661 = vrot.slane %v9659, 1
    %v9662 = vor.u32 %v9657, %v9661
    %v9664 = vshrl.u32 %v9553, 16
    %v9666 = vshll.u32 %v9553, 16
    %v9668 = vrot.slane %v9666, 1
    %v9669 = vor.u32 %v9664, %v9668
    %v9671 = vshrl.u32 %v9554, 16
    %v9673 = vshll.u32 %v9554, 16
    %v9675 = vrot.slane %v9673, 1
    %v9676 = vor.u32 %v9671, %v9675
    %v9678 = vshrl.u32 %v9555, 16
    %v9680 = vshll.u32 %v9555, 16
    %v9682 = vrot.slane %v9680, 1
    %v9683 = vor.u32 %v9678, %v9682
    %v9685 = vshrl.u32 %v9556, 16
    %v9687 = vshll.u32 %v9556, 16
    %v9689 = vrot.slane %v9687, 1
    %v9690 = vor.u32 %v9685, %v9689
    %v9692 = vshrl.u32 %v9557, 16
    %v9694 = vshll.u32 %v9557, 16
    %v9696 = vrot.slane %v9694, 1
    %v9697 = vor.u32 %v9692, %v9696
    %v9699 = vshrl.u32 %v9558, 16
    %v9701 = vshll.u32 %v9558, 16
    %v9703 = vrot.slane %v9701, 1
    %v9704 = vor.u32 %v9699, %v9703
    %v9706 = vshrl.u32 %v9559, 16
    %v9708 = vshll.u32 %v9559, 16
    %v9710 = vrot.slane %v9708, 1
    %v9711 = vor.u32 %v9706, %v9710
    %v9713 = vshrl.u32 %v9560, 16
    %v9715 = vshll.u32 %v9560, 16
    %v9717 = vrot.slane %v9715, 1
    %v9718 = vor.u32 %v9713, %v9717
    %v9720 = vshrl.u32 %v9561, 16
    %v9722 = vshll.u32 %v9561, 16
    %v9724 = vrot.slane %v9722, 1
    %v9725 = vor.u32 %v9720, %v9724
    %v9727 = vshrl.u32 %v9562, 16
    %v9729 = vshll.u32 %v9562, 16
    %v9731 = vrot.slane %v9729, 1
    %v9732 = vor.u32 %v9727, %v9731
    %v9734 = vshrl.u32 %v9563, 16
    %v9736 = vshll.u32 %v9563, 16
    %v9738 = vrot.slane %v9736, 1
    %v9739 = vor.u32 %v9734, %v9738
    %v9741 = vshrl.u32 %v9564, 16
    %v9743 = vshll.u32 %v9564, 16
    %v9745 = vrot.slane %v9743, 1
    %v9746 = vor.u32 %v9741, %v9745
    %v9748 = vshrl.u32 %v9565, 16
    %v9750 = vshll.u32 %v9565, 16
    %v9752 = vrot.slane %v9750, 1
    %v9753 = vor.u32 %v9748, %v9752
    %v9755 = vshrl.u32 %v9566, 16
    %v9757 = vshll.u32 %v9566, 16
    %v9759 = vrot.slane %v9757, 1
    %v9760 = vor.u32 %v9755, %v9759
    %v9762 = vshrl.u32 %v9567, 16
    %v9764 = vshll.u32 %v9567, 16
    %v9766 = vrot.slane %v9764, 1
    %v9767 = vor.u32 %v9762, %v9766
    %v9769 = vshrl.u32 %v9568, 16
    %v9771 = vshll.u32 %v9568, 16
    %v9773 = vrot.slane %v9771, 1
    %v9774 = vor.u32 %v9769, %v9773
    %v9776 = vshrl.u32 %v9569, 16
    %v9778 = vshll.u32 %v9569, 16
    %v9780 = vrot.slane %v9778, 1
    %v9781 = vor.u32 %v9776, %v9780
    %v9783 = vshrl.u32 %v9570, 16
    %v9785 = vshll.u32 %v9570, 16
    %v9787 = vrot.slane %v9785, 1
    %v9788 = vor.u32 %v9783, %v9787
    %v9790 = vshrl.u32 %v9571, 16
    %v9792 = vshll.u32 %v9571, 16
    %v9794 = vrot.slane %v9792, 1
    %v9795 = vor.u32 %v9790, %v9794
    %v9812 = vunpack.c.l.b16 %v9428
    %v9813 = vunpack.c.h.b16 %v9428
    %v9814 = vunpack.c.l.b16 %v9429
    %v9815 = vunpack.c.h.b16 %v9429
    %v9816 = vunpack.c.l.b16 %v9430
    %v9817 = vunpack.c.h.b16 %v9430
    %v9818 = vunpack.c.l.b16 %v9431
    %v9819 = vunpack.c.h.b16 %v9431
    %v9820 = vunpack.c.l.b16 %v9432
    %v9821 = vunpack.c.h.b16 %v9432
    %v9822 = vunpack.c.l.b16 %v9433
    %v9823 = vunpack.c.h.b16 %v9433
    %v9824 = vunpack.c.l.b16 %v9434
    %v9825 = vunpack.c.h.b16 %v9434
    %v9826 = vunpack.c.l.b16 %v9435
    %v9827 = vunpack.c.h.b16 %v9435
    %v9828 = vunpack.c.l.b16 %v9436
    %v9829 = vunpack.c.h.b16 %v9436
    %v9830 = vunpack.c.l.b16 %v9437
    %v9831 = vunpack.c.h.b16 %v9437
    %v9832 = vunpack.c.l.b16 %v9438
    %v9833 = vunpack.c.h.b16 %v9438
    %v9834 = vunpack.c.l.b16 %v9439
    %v9835 = vunpack.c.h.b16 %v9439
    %v9836 = vunpack.c.l.b16 %v9440
    %v9837 = vunpack.c.h.b16 %v9440
    %v9838 = vunpack.c.l.b16 %v9441
    %v9839 = vunpack.c.h.b16 %v9441
    %v9840 = vunpack.c.l.b16 %v9442
    %v9841 = vunpack.c.h.b16 %v9442
    %v9842 = vunpack.c.l.b16 %v9443
    %v9843 = vunpack.c.h.b16 %v9443
    %v9844 = vpack.c.b16 %v9508, %v9812
    %v9845 = vpack.c.b16 %v9509, %v9813
    %v9846 = vpack.c.b16 %v9510, %v9814
    %v9847 = vpack.c.b16 %v9511, %v9815
    %v9848 = vpack.c.b16 %v9512, %v9816
    %v9849 = vpack.c.b16 %v9513, %v9817
    %v9850 = vpack.c.b16 %v9514, %v9818
    %v9851 = vpack.c.b16 %v9515, %v9819
    %v9852 = vpack.c.b16 %v9516, %v9820
    %v9853 = vpack.c.b16 %v9517, %v9821
    %v9854 = vpack.c.b16 %v9518, %v9822
    %v9855 = vpack.c.b16 %v9519, %v9823
    %v9856 = vpack.c.b16 %v9520, %v9824
    %v9857 = vpack.c.b16 %v9521, %v9825
    %v9858 = vpack.c.b16 %v9522, %v9826
    %v9859 = vpack.c.b16 %v9523, %v9827
    %v9860 = vpack.c.b16 %v9524, %v9828
    %v9861 = vpack.c.b16 %v9525, %v9829
    %v9862 = vpack.c.b16 %v9526, %v9830
    %v9863 = vpack.c.b16 %v9527, %v9831
    %v9864 = vpack.c.b16 %v9528, %v9832
    %v9865 = vpack.c.b16 %v9529, %v9833
    %v9866 = vpack.c.b16 %v9530, %v9834
    %v9867 = vpack.c.b16 %v9531, %v9835
    %v9868 = vpack.c.b16 %v9532, %v9836
    %v9869 = vpack.c.b16 %v9533, %v9837
    %v9870 = vpack.c.b16 %v9534, %v9838
    %v9871 = vpack.c.b16 %v9535, %v9839
    %v9872 = vpack.c.b16 %v9536, %v9840
    %v9873 = vpack.c.b16 %v9537, %v9841
    %v9874 = vpack.c.b16 %v9538, %v9842
    %v9875 = vpack.c.b16 %v9539, %v9843
    %v9876 = vrot.slane %v9844, 1
    %v9877 = vrot.slane %v9845, 1
    %v9878 = vrot.slane %v9846, 1
    %v9879 = vrot.slane %v9847, 1
    %v9880 = vrot.slane %v9848, 1
    %v9881 = vrot.slane %v9849, 1
    %v9882 = vrot.slane %v9850, 1
    %v9883 = vrot.slane %v9851, 1
    %v9884 = vrot.slane %v9852, 1
    %v9885 = vrot.slane %v9853, 1
    %v9886 = vrot.slane %v9854, 1
    %v9887 = vrot.slane %v9855, 1
    %v9888 = vrot.slane %v9856, 1
    %v9889 = vrot.slane %v9857, 1
    %v9890 = vrot.slane %v9858, 1
    %v9891 = vrot.slane %v9859, 1
    %v9892 = vrot.slane %v9860, 1
    %v9893 = vrot.slane %v9861, 1
    %v9894 = vrot.slane %v9862, 1
    %v9895 = vrot.slane %v9863, 1
    %v9896 = vrot.slane %v9864, 1
    %v9897 = vrot.slane %v9865, 1
    %v9898 = vrot.slane %v9866, 1
    %v9899 = vrot.slane %v9867, 1
    %v9900 = vrot.slane %v9868, 1
    %v9901 = vrot.slane %v9869, 1
    %v9902 = vrot.slane %v9870, 1
    %v9903 = vrot.slane %v9871, 1
    %v9904 = vrot.slane %v9872, 1
    %v9905 = vrot.slane %v9873, 1
    %v9906 = vrot.slane %v9874, 1
    %v9907 = vrot.slane %v9875, 1
    %v9908 = vunpack.c.l.b16 %v9578
    %v9909 = vunpack.c.l.b16 %v9585
    %v9910 = vunpack.c.l.b16 %v9876
    %v9911 = vunpack.c.l.b16 %v9877
    %v9912 = vunpack.c.l.b16 %v9592
    %v9913 = vunpack.c.l.b16 %v9599
    %v9914 = vunpack.c.l.b16 %v9878
    %v9915 = vunpack.c.l.b16 %v9879
    %v9916 = vunpack.c.l.b16 %v9606
    %v9917 = vunpack.c.l.b16 %v9613
    %v9918 = vunpack.c.l.b16 %v9880
    %v9919 = vunpack.c.l.b16 %v9881
    %v9920 = vunpack.c.l.b16 %v9620
    %v9921 = vunpack.c.l.b16 %v9627
    %v9922 = vunpack.c.l.b16 %v9882
    %v9923 = vunpack.c.l.b16 %v9883
    %v9924 = vunpack.c.l.b16 %v9634
    %v9925 = vunpack.c.l.b16 %v9641
    %v9926 = vunpack.c.l.b16 %v9884
    %v9927 = vunpack.c.l.b16 %v9885
    %v9928 = vunpack.c.l.b16 %v9648
    %v9929 = vunpack.c.l.b16 %v9655
    %v9930 = vunpack.c.l.b16 %v9886
    %v9931 = vunpack.c.l.b16 %v9887
    %v9932 = vunpack.c.l.b16 %v9662
    %v9933 = vunpack.c.l.b16 %v9669
    %v9934 = vunpack.c.l.b16 %v9888
    %v9935 = vunpack.c.l.b16 %v9889
    %v9936 = vunpack.c.l.b16 %v9676
    %v9937 = vunpack.c.l.b16 %v9683
    %v9938 = vunpack.c.l.b16 %v9890
    %v9939 = vunpack.c.l.b16 %v9891
    %v9940 = vunpack.c.l.b16 %v9690
    %v9941 = vunpack.c.l.b16 %v9697
    %v9942 = vunpack.c.l.b16 %v9892
    %v9943 = vunpack.c.l.b16 %v9893
    %v9944 = vunpack.c.l.b16 %v9704
    %v9945 = vunpack.c.l.b16 %v9711
    %v9946 = vunpack.c.l.b16 %v9894
    %v9947 = vunpack.c.l.b16 %v9895
    %v9948 = vunpack.c.l.b16 %v9718
    %v9949 = vunpack.c.l.b16 %v9725
    %v9950 = vunpack.c.l.b16 %v9896
    %v9951 = vunpack.c.l.b16 %v9897
    %v9952 = vunpack.c.l.b16 %v9732
    %v9953 = vunpack.c.l.b16 %v9739
    %v9954 = vunpack.c.l.b16 %v9898
    %v9955 = vunpack.c.l.b16 %v9899
    %v9956 = vunpack.c.l.b16 %v9746
    %v9957 = vunpack.c.l.b16 %v9753
    %v9958 = vunpack.c.l.b16 %v9900
    %v9959 = vunpack.c.l.b16 %v9901
    %v9960 = vunpack.c.l.b16 %v9760
    %v9961 = vunpack.c.l.b16 %v9767
    %v9962 = vunpack.c.l.b16 %v9902
    %v9963 = vunpack.c.l.b16 %v9903
    %v9964 = vunpack.c.l.b16 %v9774
    %v9965 = vunpack.c.l.b16 %v9781
    %v9966 = vunpack.c.l.b16 %v9904
    %v9967 = vunpack.c.l.b16 %v9905
    %v9968 = vunpack.c.l.b16 %v9788
    %v9969 = vunpack.c.l.b16 %v9795
    %v9970 = vunpack.c.l.b16 %v9906
    %v9971 = vunpack.c.l.b16 %v9907
    %v9972 = vld [vmem:[#allocation11 + $0x600] sm:$0xff]
    %v9973 = vld [vmem:[#allocation11 + $0x608] sm:$0xff]
    %v9974 = vld [vmem:[#allocation11 + $0x610] sm:$0xff]
    %v9975 = vld [vmem:[#allocation11 + $0x618] sm:$0xff]
    %v9976 = vld [vmem:[#allocation11 + $0x620] sm:$0xff]
    %v9977 = vld [vmem:[#allocation11 + $0x628] sm:$0xff]
    %v9978 = vld [vmem:[#allocation11 + $0x630] sm:$0xff]
    %v9979 = vld [vmem:[#allocation11 + $0x638] sm:$0xff]
    %v9980 = vld [vmem:[#allocation11 + $0x640] sm:$0xff]
    %v9981 = vld [vmem:[#allocation11 + $0x648] sm:$0xff]
    %v9982 = vld [vmem:[#allocation11 + $0x650] sm:$0xff]
    %v9983 = vld [vmem:[#allocation11 + $0x658] sm:$0xff]
    %v9984 = vld [vmem:[#allocation11 + $0x660] sm:$0xff]
    %v9985 = vld [vmem:[#allocation11 + $0x668] sm:$0xff]
    %v9986 = vld [vmem:[#allocation11 + $0x670] sm:$0xff]
    %v9987 = vld [vmem:[#allocation11 + $0x678] sm:$0xff]
    %v9988 = vld [vmem:[#allocation11 + $0x680] sm:$0xff]
    %v9989 = vld [vmem:[#allocation11 + $0x688] sm:$0xff]
    %v9990 = vld [vmem:[#allocation11 + $0x690] sm:$0xff]
    %v9991 = vld [vmem:[#allocation11 + $0x698] sm:$0xff]
    %v9992 = vld [vmem:[#allocation11 + $0x6a0] sm:$0xff]
    %v9993 = vld [vmem:[#allocation11 + $0x6a8] sm:$0xff]
    %v9994 = vld [vmem:[#allocation11 + $0x6b0] sm:$0xff]
    %v9995 = vld [vmem:[#allocation11 + $0x6b8] sm:$0xff]
    %v9996 = vld [vmem:[#allocation11 + $0x6c0] sm:$0xff]
    %v9997 = vld [vmem:[#allocation11 + $0x6c8] sm:$0xff]
    %v9998 = vld [vmem:[#allocation11 + $0x6d0] sm:$0xff]
    %v9999 = vld [vmem:[#allocation11 + $0x6d8] sm:$0xff]
    %v10000 = vld [vmem:[#allocation11 + $0x6e0] sm:$0xff]
    %v10001 = vld [vmem:[#allocation11 + $0x6e8] sm:$0xff]
    %v10002 = vld [vmem:[#allocation11 + $0x6f0] sm:$0xff]
    %v10003 = vld [vmem:[#allocation11 + $0x6f8] sm:$0xff]
    %v10004 = vld [vmem:[#allocation11 + $0x700] sm:$0xff]
    %v10005 = vld [vmem:[#allocation11 + $0x708] sm:$0xff]
    %v10006 = vld [vmem:[#allocation11 + $0x710] sm:$0xff]
    %v10007 = vld [vmem:[#allocation11 + $0x718] sm:$0xff]
    %v10008 = vld [vmem:[#allocation11 + $0x720] sm:$0xff]
    %v10009 = vld [vmem:[#allocation11 + $0x728] sm:$0xff]
    %v10010 = vld [vmem:[#allocation11 + $0x730] sm:$0xff]
    %v10011 = vld [vmem:[#allocation11 + $0x738] sm:$0xff]
    %v10012 = vld [vmem:[#allocation11 + $0x740] sm:$0xff]
    %v10013 = vld [vmem:[#allocation11 + $0x748] sm:$0xff]
    %v10014 = vld [vmem:[#allocation11 + $0x750] sm:$0xff]
    %v10015 = vld [vmem:[#allocation11 + $0x758] sm:$0xff]
    %v10016 = vld [vmem:[#allocation11 + $0x760] sm:$0xff]
    %v10017 = vld [vmem:[#allocation11 + $0x768] sm:$0xff]
    %v10018 = vld [vmem:[#allocation11 + $0x770] sm:$0xff]
    %v10019 = vld [vmem:[#allocation11 + $0x778] sm:$0xff]
    %v10020 = vld [vmem:[#allocation11 + $0x780] sm:$0xff]
    %v10021 = vld [vmem:[#allocation11 + $0x788] sm:$0xff]
    %v10022 = vld [vmem:[#allocation11 + $0x790] sm:$0xff]
    %v10023 = vld [vmem:[#allocation11 + $0x798] sm:$0xff]
    %v10024 = vld [vmem:[#allocation11 + $0x7a0] sm:$0xff]
    %v10025 = vld [vmem:[#allocation11 + $0x7a8] sm:$0xff]
    %v10026 = vld [vmem:[#allocation11 + $0x7b0] sm:$0xff]
    %v10027 = vld [vmem:[#allocation11 + $0x7b8] sm:$0xff]
    %v10028 = vld [vmem:[#allocation11 + $0x7c0] sm:$0xff]
    %v10029 = vld [vmem:[#allocation11 + $0x7c8] sm:$0xff]
    %v10030 = vld [vmem:[#allocation11 + $0x7d0] sm:$0xff]
    %v10031 = vld [vmem:[#allocation11 + $0x7d8] sm:$0xff]
    %v10032 = vld [vmem:[#allocation11 + $0x7e0] sm:$0xff]
    %v10033 = vld [vmem:[#allocation11 + $0x7e8] sm:$0xff]
    %v10034 = vld [vmem:[#allocation11 + $0x7f0] sm:$0xff]
    %v10035 = vld [vmem:[#allocation11 + $0x7f8] sm:$0xff]
    %v10036 = vld [vmem:[#allocation11 + $0x800] sm:$0xff]
    %v10037 = vld [vmem:[#allocation11 + $0x808] sm:$0xff]
    %v10038 = vld [vmem:[#allocation11 + $0x810] sm:$0xff]
    %v10039 = vld [vmem:[#allocation11 + $0x818] sm:$0xff]
    %v10040 = vld [vmem:[#allocation11 + $0x820] sm:$0xff]
    %v10041 = vld [vmem:[#allocation11 + $0x828] sm:$0xff]
    %v10042 = vld [vmem:[#allocation11 + $0x830] sm:$0xff]
    %v10043 = vld [vmem:[#allocation11 + $0x838] sm:$0xff]
    %v10044 = vld [vmem:[#allocation11 + $0x840] sm:$0xff]
    %v10045 = vld [vmem:[#allocation11 + $0x848] sm:$0xff]
    %v10046 = vld [vmem:[#allocation11 + $0x850] sm:$0xff]
    %v10047 = vld [vmem:[#allocation11 + $0x858] sm:$0xff]
    %v10048 = vld [vmem:[#allocation11 + $0x860] sm:$0xff]
    %v10049 = vld [vmem:[#allocation11 + $0x868] sm:$0xff]
    %v10050 = vld [vmem:[#allocation11 + $0x870] sm:$0xff]
    %v10051 = vld [vmem:[#allocation11 + $0x878] sm:$0xff]
    %v10052 = vld [vmem:[#allocation11 + $0x880] sm:$0xff]
    %v10053 = vld [vmem:[#allocation11 + $0x888] sm:$0xff]
    %v10054 = vld [vmem:[#allocation11 + $0x890] sm:$0xff]
    %v10055 = vld [vmem:[#allocation11 + $0x898] sm:$0xff]
    %v10056 = vld [vmem:[#allocation11 + $0x8a0] sm:$0xff]
    %v10057 = vld [vmem:[#allocation11 + $0x8a8] sm:$0xff]
    %v10058 = vld [vmem:[#allocation11 + $0x8b0] sm:$0xff]
    %v10059 = vld [vmem:[#allocation11 + $0x8b8] sm:$0xff]
    %v10060 = vld [vmem:[#allocation11 + $0x8c0] sm:$0xff]
    %v10061 = vld [vmem:[#allocation11 + $0x8c8] sm:$0xff]
    %v10062 = vld [vmem:[#allocation11 + $0x8d0] sm:$0xff]
    %v10063 = vld [vmem:[#allocation11 + $0x8d8] sm:$0xff]
    %v10064 = vld [vmem:[#allocation11 + $0x8e0] sm:$0xff]
    %v10065 = vld [vmem:[#allocation11 + $0x8e8] sm:$0xff]
    %v10066 = vld [vmem:[#allocation11 + $0x8f0] sm:$0xff]
    %v10067 = vld [vmem:[#allocation11 + $0x8f8] sm:$0xff]
    %v10068 = vpack.c.b16 %v9462, %v9460
    %v10069 = vpack.c.b16 %v9463, %v9461
    %v10070 = vpack.c.b16 %v9912, %v9908
    %v10071 = vpack.c.b16 %v9913, %v9909
    %v10072 = vpack.c.b16 %v9914, %v9910
    %v10073 = vpack.c.b16 %v9915, %v9911
    %v10074 = vpack.c.b16 %v9466, %v9464
    %v10075 = vpack.c.b16 %v9467, %v9465
    %v10076 = vpack.c.b16 %v9920, %v9916
    %v10077 = vpack.c.b16 %v9921, %v9917
    %v10078 = vpack.c.b16 %v9922, %v9918
    %v10079 = vpack.c.b16 %v9923, %v9919
    %v10080 = vpack.c.b16 %v9470, %v9468
    %v10081 = vpack.c.b16 %v9471, %v9469
    %v10082 = vpack.c.b16 %v9928, %v9924
    %v10083 = vpack.c.b16 %v9929, %v9925
    %v10084 = vpack.c.b16 %v9930, %v9926
    %v10085 = vpack.c.b16 %v9931, %v9927
    %v10086 = vpack.c.b16 %v9474, %v9472
    %v10087 = vpack.c.b16 %v9475, %v9473
    %v10088 = vpack.c.b16 %v9936, %v9932
    %v10089 = vpack.c.b16 %v9937, %v9933
    %v10090 = vpack.c.b16 %v9938, %v9934
    %v10091 = vpack.c.b16 %v9939, %v9935
    %v10092 = vpack.c.b16 %v9478, %v9476
    %v10093 = vpack.c.b16 %v9479, %v9477
    %v10094 = vpack.c.b16 %v9944, %v9940
    %v10095 = vpack.c.b16 %v9945, %v9941
    %v10096 = vpack.c.b16 %v9946, %v9942
    %v10097 = vpack.c.b16 %v9947, %v9943
    %v10098 = vpack.c.b16 %v9482, %v9480
    %v10099 = vpack.c.b16 %v9483, %v9481
    %v10100 = vpack.c.b16 %v9952, %v9948
    %v10101 = vpack.c.b16 %v9953, %v9949
    %v10102 = vpack.c.b16 %v9954, %v9950
    %v10103 = vpack.c.b16 %v9955, %v9951
    %v10104 = vpack.c.b16 %v9486, %v9484
    %v10105 = vpack.c.b16 %v9487, %v9485
    %v10106 = vpack.c.b16 %v9960, %v9956
    %v10107 = vpack.c.b16 %v9961, %v9957
    %v10108 = vpack.c.b16 %v9962, %v9958
    %v10109 = vpack.c.b16 %v9963, %v9959
    %v10110 = vpack.c.b16 %v9490, %v9488
    %v10111 = vpack.c.b16 %v9491, %v9489
    %v10112 = vpack.c.b16 %v9968, %v9964
    %v10113 = vpack.c.b16 %v9969, %v9965
    %v10114 = vpack.c.b16 %v9970, %v9966
    %v10115 = vpack.c.b16 %v9971, %v9967
    %v10260 = vunpack.c.l.b16 %v9972
    %v10261 = vunpack.c.h.b16 %v9972
    %v10262 = vunpack.c.l.b16 %v9973
    %v10263 = vunpack.c.h.b16 %v9973
    %v10264 = vunpack.c.l.b16 %v9974
    %v10265 = vunpack.c.h.b16 %v9974
    %v10266 = vunpack.c.l.b16 %v9975
    %v10267 = vunpack.c.h.b16 %v9975
    %v10268 = vunpack.c.l.b16 %v9976
    %v10269 = vunpack.c.h.b16 %v9976
    %v10270 = vunpack.c.l.b16 %v9977
    %v10271 = vunpack.c.h.b16 %v9977
    %v10272 = vunpack.c.l.b16 %v9978
    %v10273 = vunpack.c.h.b16 %v9978
    %v10274 = vunpack.c.l.b16 %v9979
    %v10275 = vunpack.c.h.b16 %v9979
    %v10276 = vunpack.c.l.b16 %v9980
    %v10277 = vunpack.c.h.b16 %v9980
    %v10278 = vunpack.c.l.b16 %v9981
    %v10279 = vunpack.c.h.b16 %v9981
    %v10280 = vunpack.c.l.b16 %v9982
    %v10281 = vunpack.c.h.b16 %v9982
    %v10282 = vunpack.c.l.b16 %v9983
    %v10283 = vunpack.c.h.b16 %v9983
    %v10284 = vunpack.c.l.b16 %v9984
    %v10285 = vunpack.c.h.b16 %v9984
    %v10286 = vunpack.c.l.b16 %v9985
    %v10287 = vunpack.c.h.b16 %v9985
    %v10288 = vunpack.c.l.b16 %v9986
    %v10289 = vunpack.c.h.b16 %v9986
    %v10290 = vunpack.c.l.b16 %v9987
    %v10291 = vunpack.c.h.b16 %v9987
    %v10292 = vunpack.c.l.b16 %v9988
    %v10293 = vunpack.c.h.b16 %v9988
    %v10294 = vunpack.c.l.b16 %v9989
    %v10295 = vunpack.c.h.b16 %v9989
    %v10296 = vunpack.c.l.b16 %v9990
    %v10297 = vunpack.c.h.b16 %v9990
    %v10298 = vunpack.c.l.b16 %v9991
    %v10299 = vunpack.c.h.b16 %v9991
    %v10300 = vunpack.c.l.b16 %v9992
    %v10301 = vunpack.c.h.b16 %v9992
    %v10302 = vunpack.c.l.b16 %v9993
    %v10303 = vunpack.c.h.b16 %v9993
    %v10304 = vunpack.c.l.b16 %v9994
    %v10305 = vunpack.c.h.b16 %v9994
    %v10306 = vunpack.c.l.b16 %v9995
    %v10307 = vunpack.c.h.b16 %v9995
    %v10308 = vunpack.c.l.b16 %v9996
    %v10309 = vunpack.c.h.b16 %v9996
    %v10310 = vunpack.c.l.b16 %v9997
    %v10311 = vunpack.c.h.b16 %v9997
    %v10312 = vunpack.c.l.b16 %v9998
    %v10313 = vunpack.c.h.b16 %v9998
    %v10314 = vunpack.c.l.b16 %v9999
    %v10315 = vunpack.c.h.b16 %v9999
    %v10316 = vunpack.c.l.b16 %v10000
    %v10317 = vunpack.c.h.b16 %v10000
    %v10318 = vunpack.c.l.b16 %v10001
    %v10319 = vunpack.c.h.b16 %v10001
    %v10320 = vunpack.c.l.b16 %v10002
    %v10321 = vunpack.c.h.b16 %v10002
    %v10322 = vunpack.c.l.b16 %v10003
    %v10323 = vunpack.c.h.b16 %v10003
    %v10324 = vunpack.c.l.b16 %v10004
    %v10325 = vunpack.c.h.b16 %v10004
    %v10326 = vunpack.c.l.b16 %v10005
    %v10327 = vunpack.c.h.b16 %v10005
    %v10328 = vunpack.c.l.b16 %v10006
    %v10329 = vunpack.c.h.b16 %v10006
    %v10330 = vunpack.c.l.b16 %v10007
    %v10331 = vunpack.c.h.b16 %v10007
    %v10332 = vunpack.c.l.b16 %v10008
    %v10333 = vunpack.c.h.b16 %v10008
    %v10334 = vunpack.c.l.b16 %v10009
    %v10335 = vunpack.c.h.b16 %v10009
    %v10336 = vunpack.c.l.b16 %v10010
    %v10337 = vunpack.c.h.b16 %v10010
    %v10338 = vunpack.c.l.b16 %v10011
    %v10339 = vunpack.c.h.b16 %v10011
    %v10340 = vunpack.c.l.b16 %v10012
    %v10341 = vunpack.c.h.b16 %v10012
    %v10342 = vunpack.c.l.b16 %v10013
    %v10343 = vunpack.c.h.b16 %v10013
    %v10344 = vunpack.c.l.b16 %v10014
    %v10345 = vunpack.c.h.b16 %v10014
    %v10346 = vunpack.c.l.b16 %v10015
    %v10347 = vunpack.c.h.b16 %v10015
    %v10348 = vunpack.c.l.b16 %v10016
    %v10349 = vunpack.c.h.b16 %v10016
    %v10350 = vunpack.c.l.b16 %v10017
    %v10351 = vunpack.c.h.b16 %v10017
    %v10352 = vunpack.c.l.b16 %v10018
    %v10353 = vunpack.c.h.b16 %v10018
    %v10354 = vunpack.c.l.b16 %v10019
    %v10355 = vunpack.c.h.b16 %v10019
    %v10356 = vunpack.c.l.b16 %v10020
    %v10357 = vunpack.c.h.b16 %v10020
    %v10358 = vunpack.c.l.b16 %v10021
    %v10359 = vunpack.c.h.b16 %v10021
    %v10360 = vunpack.c.l.b16 %v10022
    %v10361 = vunpack.c.h.b16 %v10022
    %v10362 = vunpack.c.l.b16 %v10023
    %v10363 = vunpack.c.h.b16 %v10023
    %v10364 = vunpack.c.l.b16 %v10024
    %v10365 = vunpack.c.h.b16 %v10024
    %v10366 = vunpack.c.l.b16 %v10025
    %v10367 = vunpack.c.h.b16 %v10025
    %v10368 = vunpack.c.l.b16 %v10026
    %v10369 = vunpack.c.h.b16 %v10026
    %v10370 = vunpack.c.l.b16 %v10027
    %v10371 = vunpack.c.h.b16 %v10027
    %v10372 = vunpack.c.l.b16 %v10028
    %v10373 = vunpack.c.h.b16 %v10028
    %v10374 = vunpack.c.l.b16 %v10029
    %v10375 = vunpack.c.h.b16 %v10029
    %v10376 = vunpack.c.l.b16 %v10030
    %v10377 = vunpack.c.h.b16 %v10030
    %v10378 = vunpack.c.l.b16 %v10031
    %v10379 = vunpack.c.h.b16 %v10031
    %v10380 = vunpack.c.l.b16 %v10032
    %v10381 = vunpack.c.h.b16 %v10032
    %v10382 = vunpack.c.l.b16 %v10033
    %v10383 = vunpack.c.h.b16 %v10033
    %v10384 = vunpack.c.l.b16 %v10034
    %v10385 = vunpack.c.h.b16 %v10034
    %v10386 = vunpack.c.l.b16 %v10035
    %v10387 = vunpack.c.h.b16 %v10035
    %v10388 = vunpack.c.l.b16 %v10036
    %v10389 = vunpack.c.h.b16 %v10036
    %v10390 = vunpack.c.l.b16 %v10037
    %v10391 = vunpack.c.h.b16 %v10037
    %v10392 = vunpack.c.l.b16 %v10038
    %v10393 = vunpack.c.h.b16 %v10038
    %v10394 = vunpack.c.l.b16 %v10039
    %v10395 = vunpack.c.h.b16 %v10039
    %v10396 = vunpack.c.l.b16 %v10040
    %v10397 = vunpack.c.h.b16 %v10040
    %v10398 = vunpack.c.l.b16 %v10041
    %v10399 = vunpack.c.h.b16 %v10041
    %v10400 = vunpack.c.l.b16 %v10042
    %v10401 = vunpack.c.h.b16 %v10042
    %v10402 = vunpack.c.l.b16 %v10043
    %v10403 = vunpack.c.h.b16 %v10043
    %v10404 = vunpack.c.l.b16 %v10044
    %v10405 = vunpack.c.h.b16 %v10044
    %v10406 = vunpack.c.l.b16 %v10045
    %v10407 = vunpack.c.h.b16 %v10045
    %v10408 = vunpack.c.l.b16 %v10046
    %v10409 = vunpack.c.h.b16 %v10046
    %v10410 = vunpack.c.l.b16 %v10047
    %v10411 = vunpack.c.h.b16 %v10047
    %v10412 = vunpack.c.l.b16 %v10048
    %v10413 = vunpack.c.h.b16 %v10048
    %v10414 = vunpack.c.l.b16 %v10049
    %v10415 = vunpack.c.h.b16 %v10049
    %v10416 = vunpack.c.l.b16 %v10050
    %v10417 = vunpack.c.h.b16 %v10050
    %v10418 = vunpack.c.l.b16 %v10051
    %v10419 = vunpack.c.h.b16 %v10051
    %v10420 = vunpack.c.l.b16 %v10052
    %v10421 = vunpack.c.h.b16 %v10052
    %v10422 = vunpack.c.l.b16 %v10053
    %v10423 = vunpack.c.h.b16 %v10053
    %v10424 = vunpack.c.l.b16 %v10054
    %v10425 = vunpack.c.h.b16 %v10054
    %v10426 = vunpack.c.l.b16 %v10055
    %v10427 = vunpack.c.h.b16 %v10055
    %v10428 = vunpack.c.l.b16 %v10056
    %v10429 = vunpack.c.h.b16 %v10056
    %v10430 = vunpack.c.l.b16 %v10057
    %v10431 = vunpack.c.h.b16 %v10057
    %v10432 = vunpack.c.l.b16 %v10058
    %v10433 = vunpack.c.h.b16 %v10058
    %v10434 = vunpack.c.l.b16 %v10059
    %v10435 = vunpack.c.h.b16 %v10059
    %v10436 = vunpack.c.l.b16 %v10060
    %v10437 = vunpack.c.h.b16 %v10060
    %v10438 = vunpack.c.l.b16 %v10061
    %v10439 = vunpack.c.h.b16 %v10061
    %v10440 = vunpack.c.l.b16 %v10062
    %v10441 = vunpack.c.h.b16 %v10062
    %v10442 = vunpack.c.l.b16 %v10063
    %v10443 = vunpack.c.h.b16 %v10063
    %v10444 = vunpack.c.l.b16 %v10064
    %v10445 = vunpack.c.h.b16 %v10064
    %v10446 = vunpack.c.l.b16 %v10065
    %v10447 = vunpack.c.h.b16 %v10065
    %v10448 = vunpack.c.l.b16 %v10066
    %v10449 = vunpack.c.h.b16 %v10066
    %v10450 = vunpack.c.l.b16 %v10067
    %v10451 = vunpack.c.h.b16 %v10067
    %v10452 = vpack.c.b16 %v10262, %v10260
    %v10453 = vpack.c.b16 %v10263, %v10261
    %v10454 = vpack.c.b16 %v10266, %v10264
    %v10455 = vpack.c.b16 %v10267, %v10265
    %v10456 = vpack.c.b16 %v10270, %v10268
    %v10457 = vpack.c.b16 %v10271, %v10269
    %v10458 = vpack.c.b16 %v10274, %v10272
    %v10459 = vpack.c.b16 %v10275, %v10273
    %v10460 = vpack.c.b16 %v10278, %v10276
    %v10461 = vpack.c.b16 %v10279, %v10277
    %v10462 = vpack.c.b16 %v10282, %v10280
    %v10463 = vpack.c.b16 %v10283, %v10281
    %v10464 = vpack.c.b16 %v10286, %v10284
    %v10465 = vpack.c.b16 %v10287, %v10285
    %v10466 = vpack.c.b16 %v10290, %v10288
    %v10467 = vpack.c.b16 %v10291, %v10289
    %v10468 = vpack.c.b16 %v10294, %v10292
    %v10469 = vpack.c.b16 %v10295, %v10293
    %v10470 = vpack.c.b16 %v10298, %v10296
    %v10471 = vpack.c.b16 %v10299, %v10297
    %v10472 = vpack.c.b16 %v10302, %v10300
    %v10473 = vpack.c.b16 %v10303, %v10301
    %v10474 = vpack.c.b16 %v10306, %v10304
    %v10475 = vpack.c.b16 %v10307, %v10305
    %v10476 = vpack.c.b16 %v10310, %v10308
    %v10477 = vpack.c.b16 %v10311, %v10309
    %v10478 = vpack.c.b16 %v10314, %v10312
    %v10479 = vpack.c.b16 %v10315, %v10313
    %v10480 = vpack.c.b16 %v10318, %v10316
    %v10481 = vpack.c.b16 %v10319, %v10317
    %v10482 = vpack.c.b16 %v10322, %v10320
    %v10483 = vpack.c.b16 %v10323, %v10321
    %v10484 = vpack.c.b16 %v10326, %v10324
    %v10485 = vpack.c.b16 %v10327, %v10325
    %v10486 = vpack.c.b16 %v10330, %v10328
    %v10487 = vpack.c.b16 %v10331, %v10329
    %v10488 = vpack.c.b16 %v10334, %v10332
    %v10489 = vpack.c.b16 %v10335, %v10333
    %v10490 = vpack.c.b16 %v10338, %v10336
    %v10491 = vpack.c.b16 %v10339, %v10337
    %v10492 = vpack.c.b16 %v10342, %v10340
    %v10493 = vpack.c.b16 %v10343, %v10341
    %v10494 = vpack.c.b16 %v10346, %v10344
    %v10495 = vpack.c.b16 %v10347, %v10345
    %v10496 = vpack.c.b16 %v10350, %v10348
    %v10497 = vpack.c.b16 %v10351, %v10349
    %v10498 = vpack.c.b16 %v10354, %v10352
    %v10499 = vpack.c.b16 %v10355, %v10353
    %v10500 = vpack.c.b16 %v10358, %v10356
    %v10501 = vpack.c.b16 %v10359, %v10357
    %v10502 = vpack.c.b16 %v10362, %v10360
    %v10503 = vpack.c.b16 %v10363, %v10361
    %v10504 = vpack.c.b16 %v10366, %v10364
    %v10505 = vpack.c.b16 %v10367, %v10365
    %v10506 = vpack.c.b16 %v10370, %v10368
    %v10507 = vpack.c.b16 %v10371, %v10369
    %v10508 = vpack.c.b16 %v10374, %v10372
    %v10509 = vpack.c.b16 %v10375, %v10373
    %v10510 = vpack.c.b16 %v10378, %v10376
    %v10511 = vpack.c.b16 %v10379, %v10377
    %v10512 = vpack.c.b16 %v10382, %v10380
    %v10513 = vpack.c.b16 %v10383, %v10381
    %v10514 = vpack.c.b16 %v10386, %v10384
    %v10515 = vpack.c.b16 %v10387, %v10385
    %v10516 = vpack.c.b16 %v10390, %v10388
    %v10517 = vpack.c.b16 %v10391, %v10389
    %v10518 = vpack.c.b16 %v10394, %v10392
    %v10519 = vpack.c.b16 %v10395, %v10393
    %v10520 = vpack.c.b16 %v10398, %v10396
    %v10521 = vpack.c.b16 %v10399, %v10397
    %v10522 = vpack.c.b16 %v10402, %v10400
    %v10523 = vpack.c.b16 %v10403, %v10401
    %v10524 = vpack.c.b16 %v10406, %v10404
    %v10525 = vpack.c.b16 %v10407, %v10405
    %v10526 = vpack.c.b16 %v10410, %v10408
    %v10527 = vpack.c.b16 %v10411, %v10409
    %v10528 = vpack.c.b16 %v10414, %v10412
    %v10529 = vpack.c.b16 %v10415, %v10413
    %v10530 = vpack.c.b16 %v10418, %v10416
    %v10531 = vpack.c.b16 %v10419, %v10417
    %v10532 = vpack.c.b16 %v10422, %v10420
    %v10533 = vpack.c.b16 %v10423, %v10421
    %v10534 = vpack.c.b16 %v10426, %v10424
    %v10535 = vpack.c.b16 %v10427, %v10425
    %v10536 = vpack.c.b16 %v10430, %v10428
    %v10537 = vpack.c.b16 %v10431, %v10429
    %v10538 = vpack.c.b16 %v10434, %v10432
    %v10539 = vpack.c.b16 %v10435, %v10433
    %v10540 = vpack.c.b16 %v10438, %v10436
    %v10541 = vpack.c.b16 %v10439, %v10437
    %v10542 = vpack.c.b16 %v10442, %v10440
    %v10543 = vpack.c.b16 %v10443, %v10441
    %v10544 = vpack.c.b16 %v10446, %v10444
    %v10545 = vpack.c.b16 %v10447, %v10445
    %v10546 = vpack.c.b16 %v10450, %v10448
    %v10547 = vpack.c.b16 %v10451, %v10449
    %10644 = vmatprep.subr.bf16.mxu0 %v10453
    %10645 = vmatpush1.bf16.msra.mxu0 %v10452
    %10646 = vmatprep.subr.bf16.mxu0 %v10455
    %10647 = vmatpush1.bf16.msra.mxu0 %v10454
    %10648 = vmatprep.subr.bf16.mxu0 %v10457
    %10649 = vmatpush1.bf16.msra.mxu0 %v10456
    %10650 = vmatprep.subr.bf16.mxu0 %v10459
    %10651 = vmatpush1.bf16.msra.mxu0 %v10458
    %10652 = vmatprep.subr.bf16.mxu0 %v10461
    %10653 = vmatpush1.bf16.msra.mxu0 %v10460
    %10654 = vmatprep.subr.bf16.mxu0 %v10463
    %10655 = vmatpush1.bf16.msra.mxu0 %v10462
    %10656 = vmatprep.subr.bf16.mxu0 %v10465
    %10657 = vmatpush1.bf16.msra.mxu0 %v10464
    %10658 = vmatprep.subr.bf16.mxu0 %v10467
    %10659 = vmatpush1.bf16.msra.mxu0 %v10466
    %10660 = vmatprep.subr.bf16.mxu0 %v10469
    %10661 = vmatpush1.bf16.msra.mxu0 %v10468
    %10662 = vmatprep.subr.bf16.mxu0 %v10471
    %10663 = vmatpush1.bf16.msra.mxu0 %v10470
    %10664 = vmatprep.subr.bf16.mxu0 %v10473
    %10665 = vmatpush1.bf16.msra.mxu0 %v10472
    %10666 = vmatprep.subr.bf16.mxu0 %v10475
    %10667 = vmatpush1.bf16.msra.mxu0 %v10474
    %10668 = vmatprep.subr.bf16.mxu0 %v10477
    %10669 = vmatpush1.bf16.msra.mxu0 %v10476
    %10670 = vmatprep.subr.bf16.mxu0 %v10479
    %10671 = vmatpush1.bf16.msra.mxu0 %v10478
    %10672 = vmatprep.subr.bf16.mxu0 %v10481
    %10673 = vmatpush1.bf16.msra.mxu0 %v10480
    %10674 = vmatprep.subr.bf16.mxu0 %v10483
    %10675 = vmatpush1.bf16.msra.mxu0 %v10482
    %10676 = vmatprep.mubr.bf16.mxu0 %v10069
    %10677 = vmatmul.mubr.bf16.gmra.mrb[0].mxu0 %v10068
    %v10678 = vpop.f32.mrb[0].mxu0
    %v10679 = vadd.f32 0.0, %v10678
    %v10680 = vpop.f32.mrb[0].mxu0
    %v10681 = vadd.f32 0.0, %v10680
    %v10682 = vpop.f32.mrb[0].mxu0
    %v10683 = vadd.f32 0.0, %v10682
    %v10684 = vpop.f32.mrb[0].mxu0
    %v10685 = vadd.f32 0.0, %v10684
    %10686 = vmatprep.mubr.bf16.mxu0 %v10075
    %10687 = vmatmul.mubr.bf16.gmra.mrb[0].mxu0 %v10074
    %v10688 = vpop.f32.mrb[0].mxu0
    %v10689 = vadd.f32 0.0, %v10688
    %v10690 = vpop.f32.mrb[0].mxu0
    %v10691 = vadd.f32 0.0, %v10690
    %v10692 = vpop.f32.mrb[0].mxu0
    %v10693 = vadd.f32 0.0, %v10692
    %v10694 = vpop.f32.mrb[0].mxu0
    %v10695 = vadd.f32 0.0, %v10694
    %10696 = vmatprep.mubr.bf16.mxu0 %v10081
    %10697 = vmatmul.mubr.bf16.gmra.mrb[0].mxu0 %v10080
    %v10698 = vpop.f32.mrb[0].mxu0
    %v10699 = vadd.f32 0.0, %v10698
    %v10700 = vpop.f32.mrb[0].mxu0
    %v10701 = vadd.f32 0.0, %v10700
    %v10702 = vpop.f32.mrb[0].mxu0
    %v10703 = vadd.f32 0.0, %v10702
    %v10704 = vpop.f32.mrb[0].mxu0
    %v10705 = vadd.f32 0.0, %v10704
    %10706 = vmatprep.mubr.bf16.mxu0 %v10087
    %10707 = vmatmul.mubr.bf16.gmra.mrb[0].mxu0 %v10086
    %v10708 = vpop.f32.mrb[0].mxu0
    %v10709 = vadd.f32 0.0, %v10708
    %v10710 = vpop.f32.mrb[0].mxu0
    %v10711 = vadd.f32 0.0, %v10710
    %v10712 = vpop.f32.mrb[0].mxu0
    %v10713 = vadd.f32 0.0, %v10712
    %v10714 = vpop.f32.mrb[0].mxu0
    %v10715 = vadd.f32 0.0, %v10714
    %10716 = vmatprep.mubr.bf16.mxu0 %v10093
    %10717 = vmatmul.mubr.bf16.gmra.mrb[0].mxu0 %v10092
    %v10718 = vpop.f32.mrb[0].mxu0
    %v10719 = vadd.f32 0.0, %v10718
    %v10720 = vpop.f32.mrb[0].mxu0
    %v10721 = vadd.f32 0.0, %v10720
    %v10722 = vpop.f32.mrb[0].mxu0
    %v10723 = vadd.f32 0.0, %v10722
    %v10724 = vpop.f32.mrb[0].mxu0
    %v10725 = vadd.f32 0.0, %v10724
    %10726 = vmatprep.mubr.bf16.mxu0 %v10099
    %10727 = vmatmul.mubr.bf16.gmra.mrb[0].mxu0 %v10098
    %v10728 = vpop.f32.mrb[0].mxu0
    %v10729 = vadd.f32 0.0, %v10728
    %v10730 = vpop.f32.mrb[0].mxu0
    %v10731 = vadd.f32 0.0, %v10730
    %v10732 = vpop.f32.mrb[0].mxu0
    %v10733 = vadd.f32 0.0, %v10732
    %v10734 = vpop.f32.mrb[0].mxu0
    %v10735 = vadd.f32 0.0, %v10734
    %10736 = vmatprep.mubr.bf16.mxu0 %v10105
    %10737 = vmatmul.mubr.bf16.gmra.mrb[0].mxu0 %v10104
    %v10738 = vpop.f32.mrb[0].mxu0
    %v10739 = vadd.f32 0.0, %v10738
    %v10740 = vpop.f32.mrb[0].mxu0
    %v10741 = vadd.f32 0.0, %v10740
    %v10742 = vpop.f32.mrb[0].mxu0
    %v10743 = vadd.f32 0.0, %v10742
    %v10744 = vpop.f32.mrb[0].mxu0
    %v10745 = vadd.f32 0.0, %v10744
    %10746 = vmatprep.mubr.bf16.mxu0 %v10111
    %10747 = vmatmul.mubr.bf16.gmra.mrb[0].mxu0 %v10110
    %v10748 = vpop.f32.mrb[0].mxu0
    %v10749 = vadd.f32 0.0, %v10748
    %v10750 = vpop.f32.mrb[0].mxu0
    %v10751 = vadd.f32 0.0, %v10750
    %v10752 = vpop.f32.mrb[0].mxu0
    %v10753 = vadd.f32 0.0, %v10752
    %v10754 = vpop.f32.mrb[0].mxu0
    %v10755 = vadd.f32 0.0, %v10754
    %10756 = vdwg.mxu0
    %10757 = vmatprep.subr.bf16.mxu0 %v10485
    %10758 = vmatpush1.bf16.msra.mxu0 %v10484
    %10759 = vmatprep.subr.bf16.mxu0 %v10487
    %10760 = vmatpush1.bf16.msra.mxu0 %v10486
    %10761 = vmatprep.subr.bf16.mxu0 %v10489
    %10762 = vmatpush1.bf16.msra.mxu0 %v10488
    %10763 = vmatprep.subr.bf16.mxu0 %v10491
    %10764 = vmatpush1.bf16.msra.mxu0 %v10490
    %10765 = vmatprep.subr.bf16.mxu0 %v10493
    %10766 = vmatpush1.bf16.msra.mxu0 %v10492
    %10767 = vmatprep.subr.bf16.mxu0 %v10495
    %10768 = vmatpush1.bf16.msra.mxu0 %v10494
    %10769 = vmatprep.subr.bf16.mxu0 %v10497
    %10770 = vmatpush1.bf16.msra.mxu0 %v10496
    %10771 = vmatprep.subr.bf16.mxu0 %v10499
    %10772 = vmatpush1.bf16.msra.mxu0 %v10498
    %10773 = vmatprep.subr.bf16.mxu0 %v10501
    %10774 = vmatpush1.bf16.msra.mxu0 %v10500
    %10775 = vmatprep.subr.bf16.mxu0 %v10503
    %10776 = vmatpush1.bf16.msra.mxu0 %v10502
    %10777 = vmatprep.subr.bf16.mxu0 %v10505
    %10778 = vmatpush1.bf16.msra.mxu0 %v10504
    %10779 = vmatprep.subr.bf16.mxu0 %v10507
    %10780 = vmatpush1.bf16.msra.mxu0 %v10506
    %10781 = vmatprep.subr.bf16.mxu0 %v10509
    %10782 = vmatpush1.bf16.msra.mxu0 %v10508
    %10783 = vmatprep.subr.bf16.mxu0 %v10511
    %10784 = vmatpush1.bf16.msra.mxu0 %v10510
    %10785 = vmatprep.subr.bf16.mxu0 %v10513
    %10786 = vmatpush1.bf16.msra.mxu0 %v10512
    %10787 = vmatprep.subr.bf16.mxu0 %v10515
    %10788 = vmatpush1.bf16.msra.mxu0 %v10514
    %10789 = vmatprep.mubr.bf16.mxu0 %v10071
    %10790 = vmatmul.mubr.bf16.gmra.mrb[0].mxu0 %v10070
    %v10791 = vpop.f32.mrb[0].mxu0
    %v10792 = vadd.f32 %v10679, %v10791
    %v10793 = vpop.f32.mrb[0].mxu0
    %v10794 = vadd.f32 %v10681, %v10793
    %v10795 = vpop.f32.mrb[0].mxu0
    %v10796 = vadd.f32 %v10683, %v10795
    %v10797 = vpop.f32.mrb[0].mxu0
    %v10798 = vadd.f32 %v10685, %v10797
    %10799 = vmatprep.mubr.bf16.mxu0 %v10077
    %10800 = vmatmul.mubr.bf16.gmra.mrb[0].mxu0 %v10076
    %v10801 = vpop.f32.mrb[0].mxu0
    %v10802 = vadd.f32 %v10689, %v10801
    %v10803 = vpop.f32.mrb[0].mxu0
    %v10804 = vadd.f32 %v10691, %v10803
    %v10805 = vpop.f32.mrb[0].mxu0
    %v10806 = vadd.f32 %v10693, %v10805
    %v10807 = vpop.f32.mrb[0].mxu0
    %v10808 = vadd.f32 %v10695, %v10807
    %10809 = vmatprep.mubr.bf16.mxu0 %v10083
    %10810 = vmatmul.mubr.bf16.gmra.mrb[0].mxu0 %v10082
    %v10811 = vpop.f32.mrb[0].mxu0
    %v10812 = vadd.f32 %v10699, %v10811
    %v10813 = vpop.f32.mrb[0].mxu0
    %v10814 = vadd.f32 %v10701, %v10813
    %v10815 = vpop.f32.mrb[0].mxu0
    %v10816 = vadd.f32 %v10703, %v10815
    %v10817 = vpop.f32.mrb[0].mxu0
    %v10818 = vadd.f32 %v10705, %v10817
    %10819 = vmatprep.mubr.bf16.mxu0 %v10089
    %10820 = vmatmul.mubr.bf16.gmra.mrb[0].mxu0 %v10088
    %v10821 = vpop.f32.mrb[0].mxu0
    %v10822 = vadd.f32 %v10709, %v10821
    %v10823 = vpop.f32.mrb[0].mxu0
    %v10824 = vadd.f32 %v10711, %v10823
    %v10825 = vpop.f32.mrb[0].mxu0
    %v10826 = vadd.f32 %v10713, %v10825
    %v10827 = vpop.f32.mrb[0].mxu0
    %v10828 = vadd.f32 %v10715, %v10827
    %10829 = vmatprep.mubr.bf16.mxu0 %v10095
    %10830 = vmatmul.mubr.bf16.gmra.mrb[0].mxu0 %v10094
    %v10831 = vpop.f32.mrb[0].mxu0
    %v10832 = vadd.f32 %v10719, %v10831
    %v10833 = vpop.f32.mrb[0].mxu0
    %v10834 = vadd.f32 %v10721, %v10833
    %v10835 = vpop.f32.mrb[0].mxu0
    %v10836 = vadd.f32 %v10723, %v10835
    %v10837 = vpop.f32.mrb[0].mxu0
    %v10838 = vadd.f32 %v10725, %v10837
    %10839 = vmatprep.mubr.bf16.mxu0 %v10101
    %10840 = vmatmul.mubr.bf16.gmra.mrb[0].mxu0 %v10100
    %v10841 = vpop.f32.mrb[0].mxu0
    %v10842 = vadd.f32 %v10729, %v10841
    %v10843 = vpop.f32.mrb[0].mxu0
    %v10844 = vadd.f32 %v10731, %v10843
    %v10845 = vpop.f32.mrb[0].mxu0
    %v10846 = vadd.f32 %v10733, %v10845
    %v10847 = vpop.f32.mrb[0].mxu0
    %v10848 = vadd.f32 %v10735, %v10847
    %10849 = vmatprep.mubr.bf16.mxu0 %v10107
    %10850 = vmatmul.mubr.bf16.gmra.mrb[0].mxu0 %v10106
    %v10851 = vpop.f32.mrb[0].mxu0
    %v10852 = vadd.f32 %v10739, %v10851
    %v10853 = vpop.f32.mrb[0].mxu0
    %v10854 = vadd.f32 %v10741, %v10853
    %v10855 = vpop.f32.mrb[0].mxu0
    %v10856 = vadd.f32 %v10743, %v10855
    %v10857 = vpop.f32.mrb[0].mxu0
    %v10858 = vadd.f32 %v10745, %v10857
    %10859 = vmatprep.mubr.bf16.mxu0 %v10113
    %10860 = vmatmul.mubr.bf16.gmra.mrb[0].mxu0 %v10112
    %v10861 = vpop.f32.mrb[0].mxu0
    %v10862 = vadd.f32 %v10749, %v10861
    %v10863 = vpop.f32.mrb[0].mxu0
    %v10864 = vadd.f32 %v10751, %v10863
    %v10865 = vpop.f32.mrb[0].mxu0
    %v10866 = vadd.f32 %v10753, %v10865
    %v10867 = vpop.f32.mrb[0].mxu0
    %v10868 = vadd.f32 %v10755, %v10867
    %10869 = vdwg.mxu0
    %10870 = vmatprep.subr.bf16.mxu0 %v10517
    %10871 = vmatpush1.bf16.msra.mxu0 %v10516
    %10872 = vmatprep.subr.bf16.mxu0 %v10519
    %10873 = vmatpush1.bf16.msra.mxu0 %v10518
    %10874 = vmatprep.subr.bf16.mxu0 %v10521
    %10875 = vmatpush1.bf16.msra.mxu0 %v10520
    %10876 = vmatprep.subr.bf16.mxu0 %v10523
    %10877 = vmatpush1.bf16.msra.mxu0 %v10522
    %10878 = vmatprep.subr.bf16.mxu0 %v10525
    %10879 = vmatpush1.bf16.msra.mxu0 %v10524
    %10880 = vmatprep.subr.bf16.mxu0 %v10527
    %10881 = vmatpush1.bf16.msra.mxu0 %v10526
    %10882 = vmatprep.subr.bf16.mxu0 %v10529
    %10883 = vmatpush1.bf16.msra.mxu0 %v10528
    %10884 = vmatprep.subr.bf16.mxu0 %v10531
    %10885 = vmatpush1.bf16.msra.mxu0 %v10530
    %10886 = vmatprep.subr.bf16.mxu0 %v10533
    %10887 = vmatpush1.bf16.msra.mxu0 %v10532
    %10888 = vmatprep.subr.bf16.mxu0 %v10535
    %10889 = vmatpush1.bf16.msra.mxu0 %v10534
    %10890 = vmatprep.subr.bf16.mxu0 %v10537
    %10891 = vmatpush1.bf16.msra.mxu0 %v10536
    %10892 = vmatprep.subr.bf16.mxu0 %v10539
    %10893 = vmatpush1.bf16.msra.mxu0 %v10538
    %10894 = vmatprep.subr.bf16.mxu0 %v10541
    %10895 = vmatpush1.bf16.msra.mxu0 %v10540
    %10896 = vmatprep.subr.bf16.mxu0 %v10543
    %10897 = vmatpush1.bf16.msra.mxu0 %v10542
    %10898 = vmatprep.subr.bf16.mxu0 %v10545
    %10899 = vmatpush1.bf16.msra.mxu0 %v10544
    %10900 = vmatprep.subr.bf16.mxu0 %v10547
    %10901 = vmatpush1.bf16.msra.mxu0 %v10546
    %10902 = vmatprep.mubr.bf16.mxu0 %v10073
    %10903 = vmatmul.mubr.bf16.gmra.mrb[0].mxu0 %v10072
    %v10904 = vpop.f32.mrb[0].mxu0
    %v10905 = vadd.f32 %v10792, %v10904
    %v10906 = vpop.f32.mrb[0].mxu0
    %v10907 = vadd.f32 %v10794, %v10906
    %v10908 = vpop.f32.mrb[0].mxu0
    %v10909 = vadd.f32 %v10796, %v10908
    %v10910 = vpop.f32.mrb[0].mxu0
    %v10911 = vadd.f32 %v10798, %v10910
    %10912 = vmatprep.mubr.bf16.mxu0 %v10079
    %10913 = vmatmul.mubr.bf16.gmra.mrb[0].mxu0 %v10078
    %v10914 = vpop.f32.mrb[0].mxu0
    %v10915 = vadd.f32 %v10802, %v10914
    %v10916 = vpop.f32.mrb[0].mxu0
    %v10917 = vadd.f32 %v10804, %v10916
    %v10918 = vpop.f32.mrb[0].mxu0
    %v10919 = vadd.f32 %v10806, %v10918
    %v10920 = vpop.f32.mrb[0].mxu0
    %v10921 = vadd.f32 %v10808, %v10920
    %10922 = vmatprep.mubr.bf16.mxu0 %v10085
    %10923 = vmatmul.mubr.bf16.gmra.mrb[0].mxu0 %v10084
    %v10924 = vpop.f32.mrb[0].mxu0
    %v10925 = vadd.f32 %v10812, %v10924
    %v10926 = vpop.f32.mrb[0].mxu0
    %v10927 = vadd.f32 %v10814, %v10926
    %v10928 = vpop.f32.mrb[0].mxu0
    %v10929 = vadd.f32 %v10816, %v10928
    %v10930 = vpop.f32.mrb[0].mxu0
    %v10931 = vadd.f32 %v10818, %v10930
    %10932 = vmatprep.mubr.bf16.mxu0 %v10091
    %10933 = vmatmul.mubr.bf16.gmra.mrb[0].mxu0 %v10090
    %v10934 = vpop.f32.mrb[0].mxu0
    %v10935 = vadd.f32 %v10822, %v10934
    %v10936 = vpop.f32.mrb[0].mxu0
    %v10937 = vadd.f32 %v10824, %v10936
    %v10938 = vpop.f32.mrb[0].mxu0
    %v10939 = vadd.f32 %v10826, %v10938
    %v10940 = vpop.f32.mrb[0].mxu0
    %v10941 = vadd.f32 %v10828, %v10940
    %10942 = vmatprep.mubr.bf16.mxu0 %v10097
    %10943 = vmatmul.mubr.bf16.gmra.mrb[0].mxu0 %v10096
    %v10944 = vpop.f32.mrb[0].mxu0
    %v10945 = vadd.f32 %v10832, %v10944
    %v10946 = vpop.f32.mrb[0].mxu0
    %v10947 = vadd.f32 %v10834, %v10946
    %v10948 = vpop.f32.mrb[0].mxu0
    %v10949 = vadd.f32 %v10836, %v10948
    %v10950 = vpop.f32.mrb[0].mxu0
    %v10951 = vadd.f32 %v10838, %v10950
    %10952 = vmatprep.mubr.bf16.mxu0 %v10103
    %10953 = vmatmul.mubr.bf16.gmra.mrb[0].mxu0 %v10102
    %v10954 = vpop.f32.mrb[0].mxu0
    %v10955 = vadd.f32 %v10842, %v10954
    %v10956 = vpop.f32.mrb[0].mxu0
    %v10957 = vadd.f32 %v10844, %v10956
    %v10958 = vpop.f32.mrb[0].mxu0
    %v10959 = vadd.f32 %v10846, %v10958
    %v10960 = vpop.f32.mrb[0].mxu0
    %v10961 = vadd.f32 %v10848, %v10960
    %10962 = vmatprep.mubr.bf16.mxu0 %v10109
    %10963 = vmatmul.mubr.bf16.gmra.mrb[0].mxu0 %v10108
    %v10964 = vpop.f32.mrb[0].mxu0
    %v10965 = vadd.f32 %v10852, %v10964
    %v10966 = vpop.f32.mrb[0].mxu0
    %v10967 = vadd.f32 %v10854, %v10966
    %v10968 = vpop.f32.mrb[0].mxu0
    %v10969 = vadd.f32 %v10856, %v10968
    %v10970 = vpop.f32.mrb[0].mxu0
    %v10971 = vadd.f32 %v10858, %v10970
    %10972 = vmatprep.mubr.bf16.mxu0 %v10115
    %10973 = vmatmul.mubr.bf16.gmra.mrb[0].mxu0 %v10114
    %v10974 = vpop.f32.mrb[0].mxu0
    %v10975 = vadd.f32 %v10862, %v10974
    %v10976 = vpop.f32.mrb[0].mxu0
    %v10977 = vadd.f32 %v10864, %v10976
    %v10978 = vpop.f32.mrb[0].mxu0
    %v10979 = vadd.f32 %v10866, %v10978
    %v10980 = vpop.f32.mrb[0].mxu0
    %v10981 = vadd.f32 %v10868, %v10980
    %10982 = vdwg.mxu0
    %v10983 = vadd.f32 %v9318, %v10905
    %v10984 = vadd.f32 %v9320, %v10907
    %v10985 = vadd.f32 %v9322, %v10909
    %v10986 = vadd.f32 %v9324, %v10911
    %v10987 = vadd.f32 %v9328, %v10915
    %v10988 = vadd.f32 %v9330, %v10917
    %v10989 = vadd.f32 %v9332, %v10919
    %v10990 = vadd.f32 %v9334, %v10921
    %v10991 = vadd.f32 %v9338, %v10925
    %v10992 = vadd.f32 %v9340, %v10927
    %v10993 = vadd.f32 %v9342, %v10929
    %v10994 = vadd.f32 %v9344, %v10931
    %v10995 = vadd.f32 %v9348, %v10935
    %v10996 = vadd.f32 %v9350, %v10937
    %v10997 = vadd.f32 %v9352, %v10939
    %v10998 = vadd.f32 %v9354, %v10941
    %v10999 = vadd.f32 %v9358, %v10945
    %v11000 = vadd.f32 %v9360, %v10947
    %v11001 = vadd.f32 %v9362, %v10949
    %v11002 = vadd.f32 %v9364, %v10951
    %v11003 = vadd.f32 %v9368, %v10955
    %v11004 = vadd.f32 %v9370, %v10957
    %v11005 = vadd.f32 %v9372, %v10959
    %v11006 = vadd.f32 %v9374, %v10961
    %v11007 = vadd.f32 %v9378, %v10965
    %v11008 = vadd.f32 %v9380, %v10967
    %v11009 = vadd.f32 %v9382, %v10969
    %v11010 = vadd.f32 %v9384, %v10971
    %v11011 = vadd.f32 %v9388, %v10975
    %v11012 = vadd.f32 %v9390, %v10977
    %v11013 = vadd.f32 %v9392, %v10979
    %v11014 = vadd.f32 %v9394, %v10981
    %v11015 = vld [vmem:[#allocation12] sm:$0x3]
    %v11017 = vlaneseq
    %v11018 = vshrl.u32 %v11017, 7
    %v11019 = vsub.s32 0, %v11018
    %v11020 = vrot.slane %v11015, %v11019
    %v11021 = vlaneseq
    %v11022 = vshrl.u32 %v11021, 7
    %v11023 = vsub.s32 1, %v11022
    %v11024 = vrot.slane %v11015, %v11023
    %v11027 = vadd.f32 %v10983, %v11020
    %v11028 = vadd.f32 %v10984, %v11024
    %v11029 = vadd.f32 %v10985, %v11020
    %v11030 = vadd.f32 %v10986, %v11024
    %v11031 = vadd.f32 %v10987, %v11020
    %v11032 = vadd.f32 %v10988, %v11024
    %v11033 = vadd.f32 %v10989, %v11020
    %v11034 = vadd.f32 %v10990, %v11024
    %v11035 = vadd.f32 %v10991, %v11020
    %v11036 = vadd.f32 %v10992, %v11024
    %v11037 = vadd.f32 %v10993, %v11020
    %v11038 = vadd.f32 %v10994, %v11024
    %v11039 = vadd.f32 %v10995, %v11020
    %v11040 = vadd.f32 %v10996, %v11024
    %v11041 = vadd.f32 %v10997, %v11020
    %v11042 = vadd.f32 %v10998, %v11024
    %v11043 = vadd.f32 %v10999, %v11020
    %v11044 = vadd.f32 %v11000, %v11024
    %v11045 = vadd.f32 %v11001, %v11020
    %v11046 = vadd.f32 %v11002, %v11024
    %v11047 = vadd.f32 %v11003, %v11020
    %v11048 = vadd.f32 %v11004, %v11024
    %v11049 = vadd.f32 %v11005, %v11020
    %v11050 = vadd.f32 %v11006, %v11024
    %v11051 = vadd.f32 %v11007, %v11020
    %v11052 = vadd.f32 %v11008, %v11024
    %v11053 = vadd.f32 %v11009, %v11020
    %v11054 = vadd.f32 %v11010, %v11024
    %v11055 = vadd.f32 %v11011, %v11020
    %v11056 = vadd.f32 %v11012, %v11024
    %v11057 = vadd.f32 %v11013, %v11020
    %v11058 = vadd.f32 %v11014, %v11024
    %v11059 = vpack.c.bf16 %v11029, %v11027
    %v11060 = vpack.c.bf16 %v11030, %v11028
    %v11061 = vpack.c.bf16 %v11033, %v11031
    %v11062 = vpack.c.bf16 %v11034, %v11032
    %v11063 = vpack.c.bf16 %v11037, %v11035
    %v11064 = vpack.c.bf16 %v11038, %v11036
    %v11065 = vpack.c.bf16 %v11041, %v11039
    %v11066 = vpack.c.bf16 %v11042, %v11040
    %v11067 = vpack.c.bf16 %v11045, %v11043
    %v11068 = vpack.c.bf16 %v11046, %v11044
    %v11069 = vpack.c.bf16 %v11049, %v11047
    %v11070 = vpack.c.bf16 %v11050, %v11048
    %v11071 = vpack.c.bf16 %v11053, %v11051
    %v11072 = vpack.c.bf16 %v11054, %v11052
    %v11073 = vpack.c.bf16 %v11057, %v11055
    %v11074 = vpack.c.bf16 %v11058, %v11056
    %v11091 = vunpack.c.l.b16 %v11059
    %v11092 = vunpack.c.l.b16 %v11060
    %v11093 = vunpack.c.h.b16 %v11059
    %v11094 = vunpack.c.h.b16 %v11060
    %v11095 = vunpack.c.l.b16 %v11061
    %v11096 = vunpack.c.l.b16 %v11062
    %v11097 = vunpack.c.h.b16 %v11061
    %v11098 = vunpack.c.h.b16 %v11062
    %v11099 = vunpack.c.l.b16 %v11063
    %v11100 = vunpack.c.l.b16 %v11064
    %v11101 = vunpack.c.h.b16 %v11063
    %v11102 = vunpack.c.h.b16 %v11064
    %v11103 = vunpack.c.l.b16 %v11065
    %v11104 = vunpack.c.l.b16 %v11066
    %v11105 = vunpack.c.l.b16 %v11067
    %v11106 = vunpack.c.l.b16 %v11068
    %v11107 = vunpack.c.h.b16 %v11067
    %v11108 = vunpack.c.h.b16 %v11068
    %v11109 = vunpack.c.l.b16 %v11069
    %v11110 = vunpack.c.l.b16 %v11070
    %v11111 = vunpack.c.h.b16 %v11069
    %v11112 = vunpack.c.h.b16 %v11070
    %v11113 = vunpack.c.l.b16 %v11071
    %v11114 = vunpack.c.l.b16 %v11072
    %v11115 = vunpack.c.h.b16 %v11071
    %v11116 = vunpack.c.h.b16 %v11072
    %v11117 = vunpack.c.l.b16 %v11073
    %v11118 = vunpack.c.l.b16 %v11074
    %v11119 = vpack.c.b16 %v11092, %v11091
    %v11120 = vpack.c.b16 %v11094, %v11093
    %v11121 = vpack.c.b16 %v11096, %v11095
    %v11122 = vpack.c.b16 %v11098, %v11097
    %v11123 = vpack.c.b16 %v11100, %v11099
    %v11124 = vpack.c.b16 %v11102, %v11101
    %v11125 = vpack.c.b16 %v11104, %v11103
    %v11126 = vpack.c.b16 %v11106, %v11105
    %v11127 = vpack.c.b16 %v11108, %v11107
    %v11128 = vpack.c.b16 %v11110, %v11109
    %v11129 = vpack.c.b16 %v11112, %v11111
    %v11130 = vpack.c.b16 %v11114, %v11113
    %v11131 = vpack.c.b16 %v11116, %v11115
    %v11132 = vpack.c.b16 %v11118, %v11117
    %v11147 = vmax.bf16 %v11119, %v11121
    %v11148 = vmax.bf16 %v11147, %v11120
    %v11149 = vmax.bf16 %v11126, %v11128
    %v11150 = vmax.bf16 %v11149, %v11127
    %v11151 = vmax.bf16 %v11121, %v11123
    %v11152 = vmax.bf16 %v11151, %v11122
    %v11153 = vmax.bf16 %v11128, %v11130
    %v11154 = vmax.bf16 %v11153, %v11129
    %v11155 = vmax.bf16 %v11123, %v11125
    %v11156 = vmax.bf16 %v11155, %v11124
    %v11157 = vmax.bf16 %v11130, %v11132
    %v11158 = vmax.bf16 %v11157, %v11131
    %v11161 = vunpack.c.l.b16 %v11148
    %v11162 = vunpack.c.h.b16 %v11148
    %v11163 = vunpack.c.l.b16 %v11150
    %v11164 = vunpack.c.h.b16 %v11150
    %v11165 = vpack.c.b16 %v11161, %v11161
    %v11166 = vpack.c.b16 %v11162, %v11162
    %v11167 = vpack.c.b16 %v11163, %v11163
    %v11168 = vpack.c.b16 %v11164, %v11164
    %vm11173 = vcmask 1041408
    %vm11174 = vsmask.f32 1280
    %vm11175 = vmand %vm11173, %vm11174
    %v11176 = vsel %vm11175, %v11165, 4286644096
    %v11177 = vunpack.i.l.bf16 %v11176
    %v11178 = vunpack.i.h.bf16 %v11176
    %v11179 = vmax.f32 %v11177, %v11178
    %v11180 = vrot.slane %v11179, 4
    %v11181 = vmax.f32 %v11179, %v11180
    %v11182 = vrot.slane %v11181, 2
    %v11183 = vmax.f32 %v11181, %v11182
    %v11184 = vrot.slane %v11183, 1
    %v11185 = vmax.f32 %v11183, %v11184
    %v11186 = vpack.i.bf16 %v11185, %v11185
    %v11187 = vsel %vm11175, %v11166, 4286644096
    %v11188 = vunpack.i.l.bf16 %v11187
    %v11189 = vunpack.i.h.bf16 %v11187
    %v11190 = vmax.f32 %v11188, %v11189
    %v11191 = vrot.slane %v11190, 4
    %v11192 = vmax.f32 %v11190, %v11191
    %v11193 = vrot.slane %v11192, 2
    %v11194 = vmax.f32 %v11192, %v11193
    %v11195 = vrot.slane %v11194, 1
    %v11196 = vmax.f32 %v11194, %v11195
    %v11197 = vpack.i.bf16 %v11196, %v11196
    %v11198 = vsel %vm11175, %v11167, 4286644096
    %v11199 = vunpack.i.l.bf16 %v11198
    %v11200 = vunpack.i.h.bf16 %v11198
    %v11201 = vmax.f32 %v11199, %v11200
    %v11202 = vrot.slane %v11201, 4
    %v11203 = vmax.f32 %v11201, %v11202
    %v11204 = vrot.slane %v11203, 2
    %v11205 = vmax.f32 %v11203, %v11204
    %v11206 = vrot.slane %v11205, 1
    %v11207 = vmax.f32 %v11205, %v11206
    %v11208 = vpack.i.bf16 %v11207, %v11207
    %v11209 = vsel %vm11175, %v11168, 4286644096
    %v11210 = vunpack.i.l.bf16 %v11209
    %v11211 = vunpack.i.h.bf16 %v11209
    %v11212 = vmax.f32 %v11210, %v11211
    %v11213 = vrot.slane %v11212, 4
    %v11214 = vmax.f32 %v11212, %v11213
    %v11215 = vrot.slane %v11214, 2
    %v11216 = vmax.f32 %v11214, %v11215
    %v11217 = vrot.slane %v11216, 1
    %v11218 = vmax.f32 %v11216, %v11217
    %v11219 = vpack.i.bf16 %v11218, %v11218
    %vm11220 = vcmask 1042433
    %vm11221 = vsmask.f32 2304
    %vm11222 = vmand %vm11220, %vm11221
    %v11223 = vsel %vm11222, %v11165, 4286644096
    %v11224 = vunpack.i.l.bf16 %v11223
    %v11225 = vunpack.i.h.bf16 %v11223
    %v11226 = vmax.f32 %v11224, %v11225
    %v11227 = vrot.slane %v11226, 4
    %v11228 = vmax.f32 %v11226, %v11227
    %v11229 = vrot.slane %v11228, 2
    %v11230 = vmax.f32 %v11228, %v11229
    %v11231 = vrot.slane %v11230, 1
    %v11232 = vmax.f32 %v11230, %v11231
    %v11233 = vpack.i.bf16 %v11232, %v11232
    %v11234 = vsel %vm11222, %v11166, 4286644096
    %v11235 = vunpack.i.l.bf16 %v11234
    %v11236 = vunpack.i.h.bf16 %v11234
    %v11237 = vmax.f32 %v11235, %v11236
    %v11238 = vrot.slane %v11237, 4
    %v11239 = vmax.f32 %v11237, %v11238
    %v11240 = vrot.slane %v11239, 2
    %v11241 = vmax.f32 %v11239, %v11240
    %v11242 = vrot.slane %v11241, 1
    %v11243 = vmax.f32 %v11241, %v11242
    %v11244 = vpack.i.bf16 %v11243, %v11243
    %v11245 = vsel %vm11222, %v11167, 4286644096
    %v11246 = vunpack.i.l.bf16 %v11245
    %v11247 = vunpack.i.h.bf16 %v11245
    %v11248 = vmax.f32 %v11246, %v11247
    %v11249 = vrot.slane %v11248, 4
    %v11250 = vmax.f32 %v11248, %v11249
    %v11251 = vrot.slane %v11250, 2
    %v11252 = vmax.f32 %v11250, %v11251
    %v11253 = vrot.slane %v11252, 1
    %v11254 = vmax.f32 %v11252, %v11253
    %v11255 = vpack.i.bf16 %v11254, %v11254
    %v11256 = vsel %vm11222, %v11168, 4286644096
    %v11257 = vunpack.i.l.bf16 %v11256
    %v11258 = vunpack.i.h.bf16 %v11256
    %v11259 = vmax.f32 %v11257, %v11258
    %v11260 = vrot.slane %v11259, 4
    %v11261 = vmax.f32 %v11259, %v11260
    %v11262 = vrot.slane %v11261, 2
    %v11263 = vmax.f32 %v11261, %v11262
    %v11264 = vrot.slane %v11263, 1
    %v11265 = vmax.f32 %v11263, %v11264
    %v11266 = vpack.i.bf16 %v11265, %v11265
    %vm11267 = vcmask 1043458
    %vm11268 = vsmask.f32 3328
    %vm11269 = vmand %vm11267, %vm11268
    %v11270 = vsel %vm11269, %v11165, 4286644096
    %v11271 = vunpack.i.l.bf16 %v11270
    %v11272 = vunpack.i.h.bf16 %v11270
    %v11273 = vmax.f32 %v11271, %v11272
    %v11274 = vrot.slane %v11273, 4
    %v11275 = vmax.f32 %v11273, %v11274
    %v11276 = vrot.slane %v11275, 2
    %v11277 = vmax.f32 %v11275, %v11276
    %v11278 = vrot.slane %v11277, 1
    %v11279 = vmax.f32 %v11277, %v11278
    %v11280 = vpack.i.bf16 %v11279, %v11279
    %v11281 = vsel %vm11269, %v11166, 4286644096
    %v11282 = vunpack.i.l.bf16 %v11281
    %v11283 = vunpack.i.h.bf16 %v11281
    %v11284 = vmax.f32 %v11282, %v11283
    %v11285 = vrot.slane %v11284, 4
    %v11286 = vmax.f32 %v11284, %v11285
    %v11287 = vrot.slane %v11286, 2
    %v11288 = vmax.f32 %v11286, %v11287
    %v11289 = vrot.slane %v11288, 1
    %v11290 = vmax.f32 %v11288, %v11289
    %v11291 = vpack.i.bf16 %v11290, %v11290
    %v11292 = vsel %vm11269, %v11167, 4286644096
    %v11293 = vunpack.i.l.bf16 %v11292
    %v11294 = vunpack.i.h.bf16 %v11292
    %v11295 = vmax.f32 %v11293, %v11294
    %v11296 = vrot.slane %v11295, 4
    %v11297 = vmax.f32 %v11295, %v11296
    %v11298 = vrot.slane %v11297, 2
    %v11299 = vmax.f32 %v11297, %v11298
    %v11300 = vrot.slane %v11299, 1
    %v11301 = vmax.f32 %v11299, %v11300
    %v11302 = vpack.i.bf16 %v11301, %v11301
    %v11303 = vsel %vm11269, %v11168, 4286644096
    %v11304 = vunpack.i.l.bf16 %v11303
    %v11305 = vunpack.i.h.bf16 %v11303
    %v11306 = vmax.f32 %v11304, %v11305
    %v11307 = vrot.slane %v11306, 4
    %v11308 = vmax.f32 %v11306, %v11307
    %v11309 = vrot.slane %v11308, 2
    %v11310 = vmax.f32 %v11308, %v11309
    %v11311 = vrot.slane %v11310, 1
    %v11312 = vmax.f32 %v11310, %v11311
    %v11313 = vpack.i.bf16 %v11312, %v11312
    %v11316 = vunpack.c.l.b16 %v11152
    %v11317 = vunpack.c.h.b16 %v11152
    %v11318 = vunpack.c.l.b16 %v11154
    %v11319 = vunpack.c.h.b16 %v11154
    %v11320 = vpack.c.b16 %v11316, %v11316
    %v11321 = vpack.c.b16 %v11317, %v11317
    %v11322 = vpack.c.b16 %v11318, %v11318
    %v11323 = vpack.c.b16 %v11319, %v11319
    %v11328 = vsel %vm11175, %v11320, 4286644096
    %v11329 = vunpack.i.l.bf16 %v11328
    %v11330 = vunpack.i.h.bf16 %v11328
    %v11331 = vmax.f32 %v11329, %v11330
    %v11332 = vrot.slane %v11331, 4
    %v11333 = vmax.f32 %v11331, %v11332
    %v11334 = vrot.slane %v11333, 2
    %v11335 = vmax.f32 %v11333, %v11334
    %v11336 = vrot.slane %v11335, 1
    %v11337 = vmax.f32 %v11335, %v11336
    %v11338 = vpack.i.bf16 %v11337, %v11337
    %v11339 = vsel %vm11175, %v11321, 4286644096
    %v11340 = vunpack.i.l.bf16 %v11339
    %v11341 = vunpack.i.h.bf16 %v11339
    %v11342 = vmax.f32 %v11340, %v11341
    %v11343 = vrot.slane %v11342, 4
    %v11344 = vmax.f32 %v11342, %v11343
    %v11345 = vrot.slane %v11344, 2
    %v11346 = vmax.f32 %v11344, %v11345
    %v11347 = vrot.slane %v11346, 1
    %v11348 = vmax.f32 %v11346, %v11347
    %v11349 = vpack.i.bf16 %v11348, %v11348
    %v11350 = vsel %vm11175, %v11322, 4286644096
    %v11351 = vunpack.i.l.bf16 %v11350
    %v11352 = vunpack.i.h.bf16 %v11350
    %v11353 = vmax.f32 %v11351, %v11352
    %v11354 = vrot.slane %v11353, 4
    %v11355 = vmax.f32 %v11353, %v11354
    %v11356 = vrot.slane %v11355, 2
    %v11357 = vmax.f32 %v11355, %v11356
    %v11358 = vrot.slane %v11357, 1
    %v11359 = vmax.f32 %v11357, %v11358
    %v11360 = vpack.i.bf16 %v11359, %v11359
    %v11361 = vsel %vm11175, %v11323, 4286644096
    %v11362 = vunpack.i.l.bf16 %v11361
    %v11363 = vunpack.i.h.bf16 %v11361
    %v11364 = vmax.f32 %v11362, %v11363
    %v11365 = vrot.slane %v11364, 4
    %v11366 = vmax.f32 %v11364, %v11365
    %v11367 = vrot.slane %v11366, 2
    %v11368 = vmax.f32 %v11366, %v11367
    %v11369 = vrot.slane %v11368, 1
    %v11370 = vmax.f32 %v11368, %v11369
    %v11371 = vpack.i.bf16 %v11370, %v11370
    %v11372 = vsel %vm11222, %v11320, 4286644096
    %v11373 = vunpack.i.l.bf16 %v11372
    %v11374 = vunpack.i.h.bf16 %v11372
    %v11375 = vmax.f32 %v11373, %v11374
    %v11376 = vrot.slane %v11375, 4
    %v11377 = vmax.f32 %v11375, %v11376
    %v11378 = vrot.slane %v11377, 2
    %v11379 = vmax.f32 %v11377, %v11378
    %v11380 = vrot.slane %v11379, 1
    %v11381 = vmax.f32 %v11379, %v11380
    %v11382 = vpack.i.bf16 %v11381, %v11381
    %v11383 = vsel %vm11222, %v11321, 4286644096
    %v11384 = vunpack.i.l.bf16 %v11383
    %v11385 = vunpack.i.h.bf16 %v11383
    %v11386 = vmax.f32 %v11384, %v11385
    %v11387 = vrot.slane %v11386, 4
    %v11388 = vmax.f32 %v11386, %v11387
    %v11389 = vrot.slane %v11388, 2
    %v11390 = vmax.f32 %v11388, %v11389
    %v11391 = vrot.slane %v11390, 1
    %v11392 = vmax.f32 %v11390, %v11391
    %v11393 = vpack.i.bf16 %v11392, %v11392
    %v11394 = vsel %vm11222, %v11322, 4286644096
    %v11395 = vunpack.i.l.bf16 %v11394
    %v11396 = vunpack.i.h.bf16 %v11394
    %v11397 = vmax.f32 %v11395, %v11396
    %v11398 = vrot.slane %v11397, 4
    %v11399 = vmax.f32 %v11397, %v11398
    %v11400 = vrot.slane %v11399, 2
    %v11401 = vmax.f32 %v11399, %v11400
    %v11402 = vrot.slane %v11401, 1
    %v11403 = vmax.f32 %v11401, %v11402
    %v11404 = vpack.i.bf16 %v11403, %v11403
    %v11405 = vsel %vm11222, %v11323, 4286644096
    %v11406 = vunpack.i.l.bf16 %v11405
    %v11407 = vunpack.i.h.bf16 %v11405
    %v11408 = vmax.f32 %v11406, %v11407
    %v11409 = vrot.slane %v11408, 4
    %v11410 = vmax.f32 %v11408, %v11409
    %v11411 = vrot.slane %v11410, 2
    %v11412 = vmax.f32 %v11410, %v11411
    %v11413 = vrot.slane %v11412, 1
    %v11414 = vmax.f32 %v11412, %v11413
    %v11415 = vpack.i.bf16 %v11414, %v11414
    %v11416 = vsel %vm11269, %v11320, 4286644096
    %v11417 = vunpack.i.l.bf16 %v11416
    %v11418 = vunpack.i.h.bf16 %v11416
    %v11419 = vmax.f32 %v11417, %v11418
    %v11420 = vrot.slane %v11419, 4
    %v11421 = vmax.f32 %v11419, %v11420
    %v11422 = vrot.slane %v11421, 2
    %v11423 = vmax.f32 %v11421, %v11422
    %v11424 = vrot.slane %v11423, 1
    %v11425 = vmax.f32 %v11423, %v11424
    %v11426 = vpack.i.bf16 %v11425, %v11425
    %v11427 = vsel %vm11269, %v11321, 4286644096
    %v11428 = vunpack.i.l.bf16 %v11427
    %v11429 = vunpack.i.h.bf16 %v11427
    %v11430 = vmax.f32 %v11428, %v11429
    %v11431 = vrot.slane %v11430, 4
    %v11432 = vmax.f32 %v11430, %v11431
    %v11433 = vrot.slane %v11432, 2
    %v11434 = vmax.f32 %v11432, %v11433
    %v11435 = vrot.slane %v11434, 1
    %v11436 = vmax.f32 %v11434, %v11435
    %v11437 = vpack.i.bf16 %v11436, %v11436
    %v11438 = vsel %vm11269, %v11322, 4286644096
    %v11439 = vunpack.i.l.bf16 %v11438
    %v11440 = vunpack.i.h.bf16 %v11438
    %v11441 = vmax.f32 %v11439, %v11440
    %v11442 = vrot.slane %v11441, 4
    %v11443 = vmax.f32 %v11441, %v11442
    %v11444 = vrot.slane %v11443, 2
    %v11445 = vmax.f32 %v11443, %v11444
    %v11446 = vrot.slane %v11445, 1
    %v11447 = vmax.f32 %v11445, %v11446
    %v11448 = vpack.i.bf16 %v11447, %v11447
    %v11449 = vsel %vm11269, %v11323, 4286644096
    %v11450 = vunpack.i.l.bf16 %v11449
    %v11451 = vunpack.i.h.bf16 %v11449
    %v11452 = vmax.f32 %v11450, %v11451
    %v11453 = vrot.slane %v11452, 4
    %v11454 = vmax.f32 %v11452, %v11453
    %v11455 = vrot.slane %v11454, 2
    %v11456 = vmax.f32 %v11454, %v11455
    %v11457 = vrot.slane %v11456, 1
    %v11458 = vmax.f32 %v11456, %v11457
    %v11459 = vpack.i.bf16 %v11458, %v11458
    %v11462 = vunpack.c.l.b16 %v11156
    %v11463 = vunpack.c.h.b16 %v11156
    %v11464 = vunpack.c.l.b16 %v11158
    %v11465 = vunpack.c.h.b16 %v11158
    %v11466 = vpack.c.b16 %v11462, %v11462
    %v11467 = vpack.c.b16 %v11463, %v11463
    %v11468 = vpack.c.b16 %v11464, %v11464
    %v11469 = vpack.c.b16 %v11465, %v11465
    %v11474 = vsel %vm11175, %v11466, 4286644096
    %v11475 = vunpack.i.l.bf16 %v11474
    %v11476 = vunpack.i.h.bf16 %v11474
    %v11477 = vmax.f32 %v11475, %v11476
    %v11478 = vrot.slane %v11477, 4
    %v11479 = vmax.f32 %v11477, %v11478
    %v11480 = vrot.slane %v11479, 2
    %v11481 = vmax.f32 %v11479, %v11480
    %v11482 = vrot.slane %v11481, 1
    %v11483 = vmax.f32 %v11481, %v11482
    %v11484 = vpack.i.bf16 %v11483, %v11483
    %v11485 = vsel %vm11175, %v11467, 4286644096
    %v11486 = vunpack.i.l.bf16 %v11485
    %v11487 = vunpack.i.h.bf16 %v11485
    %v11488 = vmax.f32 %v11486, %v11487
    %v11489 = vrot.slane %v11488, 4
    %v11490 = vmax.f32 %v11488, %v11489
    %v11491 = vrot.slane %v11490, 2
    %v11492 = vmax.f32 %v11490, %v11491
    %v11493 = vrot.slane %v11492, 1
    %v11494 = vmax.f32 %v11492, %v11493
    %v11495 = vpack.i.bf16 %v11494, %v11494
    %v11496 = vsel %vm11175, %v11468, 4286644096
    %v11497 = vunpack.i.l.bf16 %v11496
    %v11498 = vunpack.i.h.bf16 %v11496
    %v11499 = vmax.f32 %v11497, %v11498
    %v11500 = vrot.slane %v11499, 4
    %v11501 = vmax.f32 %v11499, %v11500
    %v11502 = vrot.slane %v11501, 2
    %v11503 = vmax.f32 %v11501, %v11502
    %v11504 = vrot.slane %v11503, 1
    %v11505 = vmax.f32 %v11503, %v11504
    %v11506 = vpack.i.bf16 %v11505, %v11505
    %v11507 = vsel %vm11175, %v11469, 4286644096
    %v11508 = vunpack.i.l.bf16 %v11507
    %v11509 = vunpack.i.h.bf16 %v11507
    %v11510 = vmax.f32 %v11508, %v11509
    %v11511 = vrot.slane %v11510, 4
    %v11512 = vmax.f32 %v11510, %v11511
    %v11513 = vrot.slane %v11512, 2
    %v11514 = vmax.f32 %v11512, %v11513
    %v11515 = vrot.slane %v11514, 1
    %v11516 = vmax.f32 %v11514, %v11515
    %v11517 = vpack.i.bf16 %v11516, %v11516
    %v11518 = vsel %vm11222, %v11466, 4286644096
    %v11519 = vunpack.i.l.bf16 %v11518
    %v11520 = vunpack.i.h.bf16 %v11518
    %v11521 = vmax.f32 %v11519, %v11520
    %v11522 = vrot.slane %v11521, 4
    %v11523 = vmax.f32 %v11521, %v11522
    %v11524 = vrot.slane %v11523, 2
    %v11525 = vmax.f32 %v11523, %v11524
    %v11526 = vrot.slane %v11525, 1
    %v11527 = vmax.f32 %v11525, %v11526
    %v11528 = vpack.i.bf16 %v11527, %v11527
    %v11529 = vsel %vm11222, %v11467, 4286644096
    %v11530 = vunpack.i.l.bf16 %v11529
    %v11531 = vunpack.i.h.bf16 %v11529
    %v11532 = vmax.f32 %v11530, %v11531
    %v11533 = vrot.slane %v11532, 4
    %v11534 = vmax.f32 %v11532, %v11533
    %v11535 = vrot.slane %v11534, 2
    %v11536 = vmax.f32 %v11534, %v11535
    %v11537 = vrot.slane %v11536, 1
    %v11538 = vmax.f32 %v11536, %v11537
    %v11539 = vpack.i.bf16 %v11538, %v11538
    %v11540 = vsel %vm11222, %v11468, 4286644096
    %v11541 = vunpack.i.l.bf16 %v11540
    %v11542 = vunpack.i.h.bf16 %v11540
    %v11543 = vmax.f32 %v11541, %v11542
    %v11544 = vrot.slane %v11543, 4
    %v11545 = vmax.f32 %v11543, %v11544
    %v11546 = vrot.slane %v11545, 2
    %v11547 = vmax.f32 %v11545, %v11546
    %v11548 = vrot.slane %v11547, 1
    %v11549 = vmax.f32 %v11547, %v11548
    %v11550 = vpack.i.bf16 %v11549, %v11549
    %v11551 = vsel %vm11222, %v11469, 4286644096
    %v11552 = vunpack.i.l.bf16 %v11551
    %v11553 = vunpack.i.h.bf16 %v11551
    %v11554 = vmax.f32 %v11552, %v11553
    %v11555 = vrot.slane %v11554, 4
    %v11556 = vmax.f32 %v11554, %v11555
    %v11557 = vrot.slane %v11556, 2
    %v11558 = vmax.f32 %v11556, %v11557
    %v11559 = vrot.slane %v11558, 1
    %v11560 = vmax.f32 %v11558, %v11559
    %v11561 = vpack.i.bf16 %v11560, %v11560
    %v11562 = vsel %vm11269, %v11466, 4286644096
    %v11563 = vunpack.i.l.bf16 %v11562
    %v11564 = vunpack.i.h.bf16 %v11562
    %v11565 = vmax.f32 %v11563, %v11564
    %v11566 = vrot.slane %v11565, 4
    %v11567 = vmax.f32 %v11565, %v11566
    %v11568 = vrot.slane %v11567, 2
    %v11569 = vmax.f32 %v11567, %v11568
    %v11570 = vrot.slane %v11569, 1
    %v11571 = vmax.f32 %v11569, %v11570
    %v11572 = vpack.i.bf16 %v11571, %v11571
    %v11573 = vsel %vm11269, %v11467, 4286644096
    %v11574 = vunpack.i.l.bf16 %v11573
    %v11575 = vunpack.i.h.bf16 %v11573
    %v11576 = vmax.f32 %v11574, %v11575
    %v11577 = vrot.slane %v11576, 4
    %v11578 = vmax.f32 %v11576, %v11577
    %v11579 = vrot.slane %v11578, 2
    %v11580 = vmax.f32 %v11578, %v11579
    %v11581 = vrot.slane %v11580, 1
    %v11582 = vmax.f32 %v11580, %v11581
    %v11583 = vpack.i.bf16 %v11582, %v11582
    %v11584 = vsel %vm11269, %v11468, 4286644096
    %v11585 = vunpack.i.l.bf16 %v11584
    %v11586 = vunpack.i.h.bf16 %v11584
    %v11587 = vmax.f32 %v11585, %v11586
    %v11588 = vrot.slane %v11587, 4
    %v11589 = vmax.f32 %v11587, %v11588
    %v11590 = vrot.slane %v11589, 2
    %v11591 = vmax.f32 %v11589, %v11590
    %v11592 = vrot.slane %v11591, 1
    %v11593 = vmax.f32 %v11591, %v11592
    %v11594 = vpack.i.bf16 %v11593, %v11593
    %v11595 = vsel %vm11269, %v11469, 4286644096
    %v11596 = vunpack.i.l.bf16 %v11595
    %v11597 = vunpack.i.h.bf16 %v11595
    %v11598 = vmax.f32 %v11596, %v11597
    %v11599 = vrot.slane %v11598, 4
    %v11600 = vmax.f32 %v11598, %v11599
    %v11601 = vrot.slane %v11600, 2
    %v11602 = vmax.f32 %v11600, %v11601
    %v11603 = vrot.slane %v11602, 1
    %v11604 = vmax.f32 %v11602, %v11603
    %v11605 = vpack.i.bf16 %v11604, %v11604
    %v11610 = vunpack.c.l.b16 %v11186
    %v11611 = vunpack.c.l.b16 %v11197
    %v11612 = vunpack.c.l.b16 %v11208
    %v11613 = vunpack.c.l.b16 %v11219
    %vm11614 = vcmask 1041409
    %v11615 = vsel %vm11614, %v11612, %v11610
    %v11616 = vsel %vm11614, %v11613, %v11611
    %v11617 = vpack.c.b16 %v11615, %v11615
    %v11618 = vpack.c.b16 %v11616, %v11616
    %v11625 = vunpack.c.l.b16 %v11233
    %v11626 = vunpack.c.l.b16 %v11244
    %v11627 = vunpack.c.l.b16 %v11255
    %v11628 = vunpack.c.l.b16 %v11266
    %v11629 = vsel %vm11614, %v11627, %v11625
    %v11630 = vsel %vm11614, %v11628, %v11626
    %v11631 = vpack.c.b16 %v11629, %v11629
    %v11632 = vpack.c.b16 %v11630, %v11630
    %v11639 = vunpack.c.l.b16 %v11280
    %v11640 = vunpack.c.l.b16 %v11291
    %v11641 = vunpack.c.l.b16 %v11302
    %v11642 = vunpack.c.l.b16 %v11313
    %v11643 = vsel %vm11614, %v11641, %v11639
    %v11644 = vsel %vm11614, %v11642, %v11640
    %v11645 = vpack.c.b16 %v11643, %v11643
    %v11646 = vpack.c.b16 %v11644, %v11644
    %v11653 = vunpack.c.l.b16 %v11338
    %v11654 = vunpack.c.l.b16 %v11349
    %v11655 = vunpack.c.l.b16 %v11360
    %v11656 = vunpack.c.l.b16 %v11371
    %v11657 = vsel %vm11614, %v11655, %v11653
    %v11658 = vsel %vm11614, %v11656, %v11654
    %v11659 = vpack.c.b16 %v11657, %v11657
    %v11660 = vpack.c.b16 %v11658, %v11658
    %v11667 = vunpack.c.l.b16 %v11382
    %v11668 = vunpack.c.l.b16 %v11393
    %v11669 = vunpack.c.l.b16 %v11404
    %v11670 = vunpack.c.l.b16 %v11415
    %v11671 = vsel %vm11614, %v11669, %v11667
    %v11672 = vsel %vm11614, %v11670, %v11668
    %v11673 = vpack.c.b16 %v11671, %v11671
    %v11674 = vpack.c.b16 %v11672, %v11672
    %v11681 = vunpack.c.l.b16 %v11426
    %v11682 = vunpack.c.l.b16 %v11437
    %v11683 = vunpack.c.l.b16 %v11448
    %v11684 = vunpack.c.l.b16 %v11459
    %v11685 = vsel %vm11614, %v11683, %v11681
    %v11686 = vsel %vm11614, %v11684, %v11682
    %v11687 = vpack.c.b16 %v11685, %v11685
    %v11688 = vpack.c.b16 %v11686, %v11686
    %v11695 = vunpack.c.l.b16 %v11484
    %v11696 = vunpack.c.l.b16 %v11495
    %v11697 = vunpack.c.l.b16 %v11506
    %v11698 = vunpack.c.l.b16 %v11517
    %v11699 = vsel %vm11614, %v11697, %v11695
    %v11700 = vsel %vm11614, %v11698, %v11696
    %v11701 = vpack.c.b16 %v11699, %v11699
    %v11702 = vpack.c.b16 %v11700, %v11700
    %v11709 = vunpack.c.l.b16 %v11528
    %v11710 = vunpack.c.l.b16 %v11539
    %v11711 = vunpack.c.l.b16 %v11550
    %v11712 = vunpack.c.l.b16 %v11561
    %v11713 = vsel %vm11614, %v11711, %v11709
    %v11714 = vsel %vm11614, %v11712, %v11710
    %v11715 = vpack.c.b16 %v11713, %v11713
    %v11716 = vpack.c.b16 %v11714, %v11714
    %v11723 = vunpack.c.l.b16 %v11572
    %v11724 = vunpack.c.l.b16 %v11583
    %v11725 = vunpack.c.l.b16 %v11594
    %v11726 = vunpack.c.l.b16 %v11605
    %v11727 = vsel %vm11614, %v11725, %v11723
    %v11728 = vsel %vm11614, %v11726, %v11724
    %v11729 = vpack.c.b16 %v11727, %v11727
    %v11730 = vpack.c.b16 %v11728, %v11728
    %v11733 = vmax.bf16 %v11617, 0
    %v11734 = vmax.bf16 %v11618, 0
    %v11735 = vmax.bf16 %v11631, 0
    %v11736 = vmax.bf16 %v11632, 0
    %v11737 = vmax.bf16 %v11645, 0
    %v11738 = vmax.bf16 %v11646, 0
    %v11739 = vmax.bf16 %v11659, 0
    %v11740 = vmax.bf16 %v11660, 0
    %v11741 = vmax.bf16 %v11673, 0
    %v11742 = vmax.bf16 %v11674, 0
    %v11743 = vmax.bf16 %v11687, 0
    %v11744 = vmax.bf16 %v11688, 0
    %v11745 = vmax.bf16 %v11701, 0
    %v11746 = vmax.bf16 %v11702, 0
    %v11747 = vmax.bf16 %v11715, 0
    %v11748 = vmax.bf16 %v11716, 0
    %v11749 = vmax.bf16 %v11729, 0
    %v11750 = vmax.bf16 %v11730, 0
    %v11751 = vld [vmem:[#allocation14] sm:$0xf]
    %v11752 = vld [vmem:[#allocation14 + $0x4] sm:$0xf]
    %v11753 = vld [vmem:[#allocation14 + $0x8] sm:$0xf]
    %v11754 = vld [vmem:[#allocation14 + $0xc] sm:$0xf]
    %v11755 = vld [vmem:[#allocation14 + $0x10] sm:$0xf]
    %v11756 = vld [vmem:[#allocation14 + $0x14] sm:$0xf]
    %v11757 = vld [vmem:[#allocation14 + $0x18] sm:$0xf]
    %v11758 = vld [vmem:[#allocation14 + $0x1c] sm:$0xf]
    %v11759 = vld [vmem:[#allocation14 + $0x20] sm:$0xf]
    %v11760 = vld [vmem:[#allocation14 + $0x24] sm:$0xf]
    %v11761 = vld [vmem:[#allocation14 + $0x28] sm:$0xf]
    %v11762 = vld [vmem:[#allocation14 + $0x2c] sm:$0xf]
    %v11763 = vld [vmem:[#allocation14 + $0x30] sm:$0xf]
    %v11764 = vld [vmem:[#allocation14 + $0x34] sm:$0xf]
    %v11765 = vld [vmem:[#allocation14 + $0x38] sm:$0xf]
    %v11766 = vld [vmem:[#allocation14 + $0x3c] sm:$0xf]
    %v11767 = vld [vmem:[#allocation14 + $0x40] sm:$0xf]
    %v11768 = vld [vmem:[#allocation14 + $0x44] sm:$0xf]
    %v11769 = vld [vmem:[#allocation14 + $0x48] sm:$0xf]
    %v11770 = vld [vmem:[#allocation14 + $0x4c] sm:$0xf]
    %v11771 = vld [vmem:[#allocation14 + $0x50] sm:$0xf]
    %v11772 = vld [vmem:[#allocation14 + $0x54] sm:$0xf]
    %v11773 = vld [vmem:[#allocation14 + $0x58] sm:$0xf]
    %v11774 = vld [vmem:[#allocation14 + $0x5c] sm:$0xf]
    %v11775 = vld [vmem:[#allocation14 + $0x60] sm:$0xf]
    %v11776 = vld [vmem:[#allocation14 + $0x64] sm:$0xf]
    %v11777 = vld [vmem:[#allocation14 + $0x68] sm:$0xf]
    %v11778 = vld [vmem:[#allocation14 + $0x6c] sm:$0xf]
    %v11779 = vld [vmem:[#allocation14 + $0x70] sm:$0xf]
    %v11780 = vld [vmem:[#allocation14 + $0x74] sm:$0xf]
    %v11781 = vld [vmem:[#allocation14 + $0x78] sm:$0xf]
    %v11782 = vld [vmem:[#allocation14 + $0x7c] sm:$0xf]
    %v11783 = vld [vmem:[#allocation14 + $0x80] sm:$0xf]
    %v11784 = vld [vmem:[#allocation14 + $0x84] sm:$0xf]
    %v11785 = vld [vmem:[#allocation14 + $0x88] sm:$0xf]
    %v11786 = vld [vmem:[#allocation14 + $0x8c] sm:$0xf]
    %v11787 = vld [vmem:[#allocation14 + $0x90] sm:$0xf]
    %v11788 = vld [vmem:[#allocation14 + $0x94] sm:$0xf]
    %v11789 = vld [vmem:[#allocation14 + $0x98] sm:$0xf]
    %v11790 = vld [vmem:[#allocation14 + $0x9c] sm:$0xf]
    %v11791 = vld [vmem:[#allocation14 + $0xa0] sm:$0xf]
    %v11792 = vld [vmem:[#allocation14 + $0xa4] sm:$0xf]
    %v11793 = vld [vmem:[#allocation14 + $0xa8] sm:$0xf]
    %v11794 = vld [vmem:[#allocation14 + $0xac] sm:$0xf]
    %v11795 = vld [vmem:[#allocation14 + $0xb0] sm:$0xf]
    %v11796 = vld [vmem:[#allocation14 + $0xb4] sm:$0xf]
    %v11797 = vld [vmem:[#allocation14 + $0xb8] sm:$0xf]
    %v11798 = vld [vmem:[#allocation14 + $0xbc] sm:$0xf]
    %v11799 = vld [vmem:[#allocation14 + $0xc0] sm:$0xf]
    %v11800 = vld [vmem:[#allocation14 + $0xc4] sm:$0xf]
    %v11801 = vld [vmem:[#allocation14 + $0xc8] sm:$0xf]
    %v11802 = vld [vmem:[#allocation14 + $0xcc] sm:$0xf]
    %v11803 = vld [vmem:[#allocation14 + $0xd0] sm:$0xf]
    %v11804 = vld [vmem:[#allocation14 + $0xd4] sm:$0xf]
    %v11805 = vld [vmem:[#allocation14 + $0xd8] sm:$0xf]
    %v11806 = vld [vmem:[#allocation14 + $0xdc] sm:$0xf]
    %v11807 = vld [vmem:[#allocation14 + $0xe0] sm:$0xf]
    %v11808 = vld [vmem:[#allocation14 + $0xe4] sm:$0xf]
    %v11809 = vld [vmem:[#allocation14 + $0xe8] sm:$0xf]
    %v11810 = vld [vmem:[#allocation14 + $0xec] sm:$0xf]
    %v11811 = vld [vmem:[#allocation14 + $0xf0] sm:$0xf]
    %v11812 = vld [vmem:[#allocation14 + $0xf4] sm:$0xf]
    %v11813 = vld [vmem:[#allocation14 + $0xf8] sm:$0xf]
    %v11814 = vld [vmem:[#allocation14 + $0xfc] sm:$0xf]
    %v11815 = vld [vmem:[#allocation14 + $0x100] sm:$0xf]
    %v11816 = vld [vmem:[#allocation14 + $0x104] sm:$0xf]
    %v11817 = vld [vmem:[#allocation14 + $0x108] sm:$0xf]
    %v11818 = vld [vmem:[#allocation14 + $0x10c] sm:$0xf]
    %v11819 = vld [vmem:[#allocation14 + $0x110] sm:$0xf]
    %v11820 = vld [vmem:[#allocation14 + $0x114] sm:$0xf]
    %v11821 = vld [vmem:[#allocation14 + $0x118] sm:$0xf]
    %v11822 = vld [vmem:[#allocation14 + $0x11c] sm:$0xf]
    %v11823 = vld [vmem:[#allocation14 + $0x120] sm:$0xf]
    %v11824 = vld [vmem:[#allocation14 + $0x124] sm:$0xf]
    %v11825 = vld [vmem:[#allocation14 + $0x128] sm:$0xf]
    %v11826 = vld [vmem:[#allocation14 + $0x12c] sm:$0xf]
    %v11827 = vld [vmem:[#allocation14 + $0x130] sm:$0xf]
    %v11828 = vld [vmem:[#allocation14 + $0x134] sm:$0xf]
    %v11829 = vld [vmem:[#allocation14 + $0x138] sm:$0xf]
    %v11830 = vld [vmem:[#allocation14 + $0x13c] sm:$0xf]
    %v11831 = vld [vmem:[#allocation14 + $0x140] sm:$0xf]
    %v11832 = vld [vmem:[#allocation14 + $0x144] sm:$0xf]
    %v11833 = vld [vmem:[#allocation14 + $0x148] sm:$0xf]
    %v11834 = vld [vmem:[#allocation14 + $0x14c] sm:$0xf]
    %v11835 = vld [vmem:[#allocation14 + $0x150] sm:$0xf]
    %v11836 = vld [vmem:[#allocation14 + $0x154] sm:$0xf]
    %v11837 = vld [vmem:[#allocation14 + $0x158] sm:$0xf]
    %v11838 = vld [vmem:[#allocation14 + $0x15c] sm:$0xf]
    %v11839 = vld [vmem:[#allocation14 + $0x160] sm:$0xf]
    %v11840 = vld [vmem:[#allocation14 + $0x164] sm:$0xf]
    %v11841 = vld [vmem:[#allocation14 + $0x168] sm:$0xf]
    %v11842 = vld [vmem:[#allocation14 + $0x16c] sm:$0xf]
    %v11843 = vld [vmem:[#allocation14 + $0x170] sm:$0xf]
    %v11844 = vld [vmem:[#allocation14 + $0x174] sm:$0xf]
    %v11845 = vld [vmem:[#allocation14 + $0x178] sm:$0xf]
    %v11846 = vld [vmem:[#allocation14 + $0x17c] sm:$0xf]
    %v11847 = vld [vmem:[#allocation14 + $0x180] sm:$0xf]
    %v11848 = vld [vmem:[#allocation14 + $0x184] sm:$0xf]
    %v11849 = vld [vmem:[#allocation14 + $0x188] sm:$0xf]
    %v11850 = vld [vmem:[#allocation14 + $0x18c] sm:$0xf]
    %v11851 = vld [vmem:[#allocation14 + $0x190] sm:$0xf]
    %v11852 = vld [vmem:[#allocation14 + $0x194] sm:$0xf]
    %v11853 = vld [vmem:[#allocation14 + $0x198] sm:$0xf]
    %v11854 = vld [vmem:[#allocation14 + $0x19c] sm:$0xf]
    %v11855 = vld [vmem:[#allocation14 + $0x1a0] sm:$0xf]
    %v11856 = vld [vmem:[#allocation14 + $0x1a4] sm:$0xf]
    %v11857 = vld [vmem:[#allocation14 + $0x1a8] sm:$0xf]
    %v11858 = vld [vmem:[#allocation14 + $0x1ac] sm:$0xf]
    %v11859 = vld [vmem:[#allocation14 + $0x1b0] sm:$0xf]
    %v11860 = vld [vmem:[#allocation14 + $0x1b4] sm:$0xf]
    %v11861 = vld [vmem:[#allocation14 + $0x1b8] sm:$0xf]
    %v11862 = vld [vmem:[#allocation14 + $0x1bc] sm:$0xf]
    %v11863 = vld [vmem:[#allocation14 + $0x1c0] sm:$0xf]
    %v11864 = vld [vmem:[#allocation14 + $0x1c4] sm:$0xf]
    %v11865 = vld [vmem:[#allocation14 + $0x1c8] sm:$0xf]
    %v11866 = vld [vmem:[#allocation14 + $0x1cc] sm:$0xf]
    %v11867 = vld [vmem:[#allocation14 + $0x1d0] sm:$0xf]
    %v11868 = vld [vmem:[#allocation14 + $0x1d4] sm:$0xf]
    %v11869 = vld [vmem:[#allocation14 + $0x1d8] sm:$0xf]
    %v11870 = vld [vmem:[#allocation14 + $0x1dc] sm:$0xf]
    %v11871 = vld [vmem:[#allocation14 + $0x1e0] sm:$0xf]
    %v11872 = vld [vmem:[#allocation14 + $0x1e4] sm:$0xf]
    %v11873 = vld [vmem:[#allocation14 + $0x1e8] sm:$0xf]
    %v11874 = vld [vmem:[#allocation14 + $0x1ec] sm:$0xf]
    %v11875 = vld [vmem:[#allocation14 + $0x1f0] sm:$0xf]
    %v11876 = vld [vmem:[#allocation14 + $0x1f4] sm:$0xf]
    %v11877 = vld [vmem:[#allocation14 + $0x1f8] sm:$0xf]
    %v11878 = vld [vmem:[#allocation14 + $0x1fc] sm:$0xf]
    %v11879 = vld [vmem:[#allocation14 + $0x200] sm:$0xf]
    %v11880 = vld [vmem:[#allocation14 + $0x204] sm:$0xf]
    %v11881 = vld [vmem:[#allocation14 + $0x208] sm:$0xf]
    %v11882 = vld [vmem:[#allocation14 + $0x20c] sm:$0xf]
    %v11883 = vld [vmem:[#allocation14 + $0x210] sm:$0xf]
    %v11884 = vld [vmem:[#allocation14 + $0x214] sm:$0xf]
    %v11885 = vld [vmem:[#allocation14 + $0x218] sm:$0xf]
    %v11886 = vld [vmem:[#allocation14 + $0x21c] sm:$0xf]
    %v11887 = vld [vmem:[#allocation14 + $0x220] sm:$0xf]
    %v11888 = vld [vmem:[#allocation14 + $0x224] sm:$0xf]
    %v11889 = vld [vmem:[#allocation14 + $0x228] sm:$0xf]
    %v11890 = vld [vmem:[#allocation14 + $0x22c] sm:$0xf]
    %v11891 = vld [vmem:[#allocation14 + $0x230] sm:$0xf]
    %v11892 = vld [vmem:[#allocation14 + $0x234] sm:$0xf]
    %v11893 = vld [vmem:[#allocation14 + $0x238] sm:$0xf]
    %v11894 = vld [vmem:[#allocation14 + $0x23c] sm:$0xf]
    %v11895 = vld [vmem:[#allocation14 + $0x240] sm:$0xf]
    %v11896 = vld [vmem:[#allocation14 + $0x244] sm:$0xf]
    %v11897 = vld [vmem:[#allocation14 + $0x248] sm:$0xf]
    %v11898 = vld [vmem:[#allocation14 + $0x24c] sm:$0xf]
    %v11899 = vld [vmem:[#allocation14 + $0x250] sm:$0xf]
    %v11900 = vld [vmem:[#allocation14 + $0x254] sm:$0xf]
    %v11901 = vld [vmem:[#allocation14 + $0x258] sm:$0xf]
    %v11902 = vld [vmem:[#allocation14 + $0x25c] sm:$0xf]
    %v11903 = vld [vmem:[#allocation14 + $0x260] sm:$0xf]
    %v11904 = vld [vmem:[#allocation14 + $0x264] sm:$0xf]
    %v11905 = vld [vmem:[#allocation14 + $0x268] sm:$0xf]
    %v11906 = vld [vmem:[#allocation14 + $0x26c] sm:$0xf]
    %v11907 = vld [vmem:[#allocation14 + $0x270] sm:$0xf]
    %v11908 = vld [vmem:[#allocation14 + $0x274] sm:$0xf]
    %v11909 = vld [vmem:[#allocation14 + $0x278] sm:$0xf]
    %v11910 = vld [vmem:[#allocation14 + $0x27c] sm:$0xf]
    %v11911 = vld [vmem:[#allocation14 + $0x280] sm:$0xf]
    %v11912 = vld [vmem:[#allocation14 + $0x284] sm:$0xf]
    %v11913 = vld [vmem:[#allocation14 + $0x288] sm:$0xf]
    %v11914 = vld [vmem:[#allocation14 + $0x28c] sm:$0xf]
    %v11915 = vld [vmem:[#allocation14 + $0x290] sm:$0xf]
    %v11916 = vld [vmem:[#allocation14 + $0x294] sm:$0xf]
    %v11917 = vld [vmem:[#allocation14 + $0x298] sm:$0xf]
    %v11918 = vld [vmem:[#allocation14 + $0x29c] sm:$0xf]
    %v11919 = vld [vmem:[#allocation14 + $0x2a0] sm:$0xf]
    %v11920 = vld [vmem:[#allocation14 + $0x2a4] sm:$0xf]
    %v11921 = vld [vmem:[#allocation14 + $0x2a8] sm:$0xf]
    %v11922 = vld [vmem:[#allocation14 + $0x2ac] sm:$0xf]
    %v11923 = vld [vmem:[#allocation14 + $0x2b0] sm:$0xf]
    %v11924 = vld [vmem:[#allocation14 + $0x2b4] sm:$0xf]
    %v11925 = vld [vmem:[#allocation14 + $0x2b8] sm:$0xf]
    %v11926 = vld [vmem:[#allocation14 + $0x2bc] sm:$0xf]
    %v11927 = vld [vmem:[#allocation14 + $0x2c0] sm:$0xf]
    %v11928 = vld [vmem:[#allocation14 + $0x2c4] sm:$0xf]
    %v11929 = vld [vmem:[#allocation14 + $0x2c8] sm:$0xf]
    %v11930 = vld [vmem:[#allocation14 + $0x2cc] sm:$0xf]
    %v11931 = vld [vmem:[#allocation14 + $0x2d0] sm:$0xf]
    %v11932 = vld [vmem:[#allocation14 + $0x2d4] sm:$0xf]
    %v11933 = vld [vmem:[#allocation14 + $0x2d8] sm:$0xf]
    %v11934 = vld [vmem:[#allocation14 + $0x2dc] sm:$0xf]
    %v11935 = vld [vmem:[#allocation14 + $0x2e0] sm:$0xf]
    %v11936 = vld [vmem:[#allocation14 + $0x2e4] sm:$0xf]
    %v11937 = vld [vmem:[#allocation14 + $0x2e8] sm:$0xf]
    %v11938 = vld [vmem:[#allocation14 + $0x2ec] sm:$0xf]
    %v11939 = vld [vmem:[#allocation14 + $0x2f0] sm:$0xf]
    %v11940 = vld [vmem:[#allocation14 + $0x2f4] sm:$0xf]
    %v11941 = vld [vmem:[#allocation14 + $0x2f8] sm:$0xf]
    %v11942 = vld [vmem:[#allocation14 + $0x2fc] sm:$0xf]
    %v11943 = vld [vmem:[#allocation14 + $0x300] sm:$0xf]
    %v11944 = vld [vmem:[#allocation14 + $0x304] sm:$0xf]
    %v11945 = vld [vmem:[#allocation14 + $0x308] sm:$0xf]
    %v11946 = vld [vmem:[#allocation14 + $0x30c] sm:$0xf]
    %v11947 = vld [vmem:[#allocation14 + $0x310] sm:$0xf]
    %v11948 = vld [vmem:[#allocation14 + $0x314] sm:$0xf]
    %v11949 = vld [vmem:[#allocation14 + $0x318] sm:$0xf]
    %v11950 = vld [vmem:[#allocation14 + $0x31c] sm:$0xf]
    %v11951 = vld [vmem:[#allocation14 + $0x320] sm:$0xf]
    %v11952 = vld [vmem:[#allocation14 + $0x324] sm:$0xf]
    %v11953 = vld [vmem:[#allocation14 + $0x328] sm:$0xf]
    %v11954 = vld [vmem:[#allocation14 + $0x32c] sm:$0xf]
    %v11955 = vld [vmem:[#allocation14 + $0x330] sm:$0xf]
    %v11956 = vld [vmem:[#allocation14 + $0x334] sm:$0xf]
    %v11957 = vld [vmem:[#allocation14 + $0x338] sm:$0xf]
    %v11958 = vld [vmem:[#allocation14 + $0x33c] sm:$0xf]
    %v11959 = vld [vmem:[#allocation14 + $0x340] sm:$0xf]
    %v11960 = vld [vmem:[#allocation14 + $0x344] sm:$0xf]
    %v11961 = vld [vmem:[#allocation14 + $0x348] sm:$0xf]
    %v11962 = vld [vmem:[#allocation14 + $0x34c] sm:$0xf]
    %v11963 = vld [vmem:[#allocation14 + $0x350] sm:$0xf]
    %v11964 = vld [vmem:[#allocation14 + $0x354] sm:$0xf]
    %v11965 = vld [vmem:[#allocation14 + $0x358] sm:$0xf]
    %v11966 = vld [vmem:[#allocation14 + $0x35c] sm:$0xf]
    %v11967 = vld [vmem:[#allocation14 + $0x360] sm:$0xf]
    %v11968 = vld [vmem:[#allocation14 + $0x364] sm:$0xf]
    %v11969 = vld [vmem:[#allocation14 + $0x368] sm:$0xf]
    %v11970 = vld [vmem:[#allocation14 + $0x36c] sm:$0xf]
    %v11971 = vld [vmem:[#allocation14 + $0x370] sm:$0xf]
    %v11972 = vld [vmem:[#allocation14 + $0x374] sm:$0xf]
    %v11973 = vld [vmem:[#allocation14 + $0x378] sm:$0xf]
    %v11974 = vld [vmem:[#allocation14 + $0x37c] sm:$0xf]
    %v11975 = vld [vmem:[#allocation14 + $0x380] sm:$0xf]
    %v11976 = vld [vmem:[#allocation14 + $0x384] sm:$0xf]
    %v11977 = vld [vmem:[#allocation14 + $0x388] sm:$0xf]
    %v11978 = vld [vmem:[#allocation14 + $0x38c] sm:$0xf]
    %v11979 = vld [vmem:[#allocation14 + $0x390] sm:$0xf]
    %v11980 = vld [vmem:[#allocation14 + $0x394] sm:$0xf]
    %v11981 = vld [vmem:[#allocation14 + $0x398] sm:$0xf]
    %v11982 = vld [vmem:[#allocation14 + $0x39c] sm:$0xf]
    %v11983 = vld [vmem:[#allocation14 + $0x3a0] sm:$0xf]
    %v11984 = vld [vmem:[#allocation14 + $0x3a4] sm:$0xf]
    %v11985 = vld [vmem:[#allocation14 + $0x3a8] sm:$0xf]
    %v11986 = vld [vmem:[#allocation14 + $0x3ac] sm:$0xf]
    %v11987 = vld [vmem:[#allocation14 + $0x3b0] sm:$0xf]
    %v11988 = vld [vmem:[#allocation14 + $0x3b4] sm:$0xf]
    %v11989 = vld [vmem:[#allocation14 + $0x3b8] sm:$0xf]
    %v11990 = vld [vmem:[#allocation14 + $0x3bc] sm:$0xf]
    %v11991 = vld [vmem:[#allocation14 + $0x3c0] sm:$0xf]
    %v11992 = vld [vmem:[#allocation14 + $0x3c4] sm:$0xf]
    %v11993 = vld [vmem:[#allocation14 + $0x3c8] sm:$0xf]
    %v11994 = vld [vmem:[#allocation14 + $0x3cc] sm:$0xf]
    %v11995 = vld [vmem:[#allocation14 + $0x3d0] sm:$0xf]
    %v11996 = vld [vmem:[#allocation14 + $0x3d4] sm:$0xf]
    %v11997 = vld [vmem:[#allocation14 + $0x3d8] sm:$0xf]
    %v11998 = vld [vmem:[#allocation14 + $0x3dc] sm:$0xf]
    %v11999 = vld [vmem:[#allocation14 + $0x3e0] sm:$0xf]
    %v12000 = vld [vmem:[#allocation14 + $0x3e4] sm:$0xf]
    %v12001 = vld [vmem:[#allocation14 + $0x3e8] sm:$0xf]
    %v12002 = vld [vmem:[#allocation14 + $0x3ec] sm:$0xf]
    %v12003 = vld [vmem:[#allocation14 + $0x3f0] sm:$0xf]
    %v12004 = vld [vmem:[#allocation14 + $0x3f4] sm:$0xf]
    %v12005 = vld [vmem:[#allocation14 + $0x3f8] sm:$0xf]
    %v12006 = vld [vmem:[#allocation14 + $0x3fc] sm:$0xf]
    %v12007 = vld [vmem:[#allocation14 + $0x400] sm:$0xf]
    %v12008 = vld [vmem:[#allocation14 + $0x404] sm:$0xf]
    %v12009 = vld [vmem:[#allocation14 + $0x408] sm:$0xf]
    %v12010 = vld [vmem:[#allocation14 + $0x40c] sm:$0xf]
    %v12011 = vld [vmem:[#allocation14 + $0x410] sm:$0xf]
    %v12012 = vld [vmem:[#allocation14 + $0x414] sm:$0xf]
    %v12013 = vld [vmem:[#allocation14 + $0x418] sm:$0xf]
    %v12014 = vld [vmem:[#allocation14 + $0x41c] sm:$0xf]
    %v12015 = vld [vmem:[#allocation14 + $0x420] sm:$0xf]
    %v12016 = vld [vmem:[#allocation14 + $0x424] sm:$0xf]
    %v12017 = vld [vmem:[#allocation14 + $0x428] sm:$0xf]
    %v12018 = vld [vmem:[#allocation14 + $0x42c] sm:$0xf]
    %v12019 = vld [vmem:[#allocation14 + $0x430] sm:$0xf]
    %v12020 = vld [vmem:[#allocation14 + $0x434] sm:$0xf]
    %v12021 = vld [vmem:[#allocation14 + $0x438] sm:$0xf]
    %v12022 = vld [vmem:[#allocation14 + $0x43c] sm:$0xf]
    %v12023 = vld [vmem:[#allocation14 + $0x440] sm:$0xf]
    %v12024 = vld [vmem:[#allocation14 + $0x444] sm:$0xf]
    %v12025 = vld [vmem:[#allocation14 + $0x448] sm:$0xf]
    %v12026 = vld [vmem:[#allocation14 + $0x44c] sm:$0xf]
    %v12027 = vld [vmem:[#allocation14 + $0x450] sm:$0xf]
    %v12028 = vld [vmem:[#allocation14 + $0x454] sm:$0xf]
    %v12029 = vld [vmem:[#allocation14 + $0x458] sm:$0xf]
    %v12030 = vld [vmem:[#allocation14 + $0x45c] sm:$0xf]
    %v12031 = vld [vmem:[#allocation14 + $0x460] sm:$0xf]
    %v12032 = vld [vmem:[#allocation14 + $0x464] sm:$0xf]
    %v12033 = vld [vmem:[#allocation14 + $0x468] sm:$0xf]
    %v12034 = vld [vmem:[#allocation14 + $0x46c] sm:$0xf]
    %v12035 = vld [vmem:[#allocation14 + $0x470] sm:$0xf]
    %v12036 = vld [vmem:[#allocation14 + $0x474] sm:$0xf]
    %v12037 = vld [vmem:[#allocation14 + $0x478] sm:$0xf]
    %v12038 = vld [vmem:[#allocation14 + $0x47c] sm:$0xf]
    %v12039 = vld [vmem:[#allocation15] sm:$0x1]
    %v12041 = vlaneseq
    %v12042 = vshrl.u32 %v12041, 7
    %v12043 = vsub.s32 0, %v12042
    %v12044 = vrot.slane %v12039, %v12043
    %v12334 = vunpack.c.l.b16 %v11751
    %v12335 = vunpack.c.l.b16 %v11752
    %v12336 = vunpack.c.l.b16 %v11753
    %v12337 = vunpack.c.l.b16 %v11754
    %v12338 = vunpack.c.l.b16 %v11755
    %v12339 = vunpack.c.l.b16 %v11756
    %v12340 = vunpack.c.l.b16 %v11757
    %v12341 = vunpack.c.l.b16 %v11758
    %v12342 = vunpack.c.l.b16 %v11759
    %v12343 = vunpack.c.l.b16 %v11760
    %v12344 = vunpack.c.l.b16 %v11761
    %v12345 = vunpack.c.l.b16 %v11762
    %v12346 = vunpack.c.l.b16 %v11763
    %v12347 = vunpack.c.l.b16 %v11764
    %v12348 = vunpack.c.l.b16 %v11765
    %v12349 = vunpack.c.l.b16 %v11766
    %v12350 = vunpack.c.l.b16 %v11767
    %v12351 = vunpack.c.l.b16 %v11768
    %v12352 = vunpack.c.l.b16 %v11769
    %v12353 = vunpack.c.l.b16 %v11770
    %v12354 = vunpack.c.l.b16 %v11771
    %v12355 = vunpack.c.l.b16 %v11772
    %v12356 = vunpack.c.l.b16 %v11773
    %v12357 = vunpack.c.l.b16 %v11774
    %v12358 = vunpack.c.l.b16 %v11775
    %v12359 = vunpack.c.l.b16 %v11776
    %v12360 = vunpack.c.l.b16 %v11777
    %v12361 = vunpack.c.l.b16 %v11778
    %v12362 = vunpack.c.l.b16 %v11779
    %v12363 = vunpack.c.l.b16 %v11780
    %v12364 = vunpack.c.l.b16 %v11781
    %v12365 = vunpack.c.l.b16 %v11782
    %v12366 = vunpack.c.l.b16 %v11783
    %v12367 = vunpack.c.l.b16 %v11784
    %v12368 = vunpack.c.l.b16 %v11785
    %v12369 = vunpack.c.l.b16 %v11786
    %v12370 = vunpack.c.l.b16 %v11787
    %v12371 = vunpack.c.l.b16 %v11788
    %v12372 = vunpack.c.l.b16 %v11789
    %v12373 = vunpack.c.l.b16 %v11790
    %v12374 = vunpack.c.l.b16 %v11791
    %v12375 = vunpack.c.l.b16 %v11792
    %v12376 = vunpack.c.l.b16 %v11793
    %v12377 = vunpack.c.l.b16 %v11794
    %v12378 = vunpack.c.l.b16 %v11795
    %v12379 = vunpack.c.l.b16 %v11796
    %v12380 = vunpack.c.l.b16 %v11797
    %v12381 = vunpack.c.l.b16 %v11798
    %v12382 = vunpack.c.l.b16 %v11799
    %v12383 = vunpack.c.l.b16 %v11800
    %v12384 = vunpack.c.l.b16 %v11801
    %v12385 = vunpack.c.l.b16 %v11802
    %v12386 = vunpack.c.l.b16 %v11803
    %v12387 = vunpack.c.l.b16 %v11804
    %v12388 = vunpack.c.l.b16 %v11805
    %v12389 = vunpack.c.l.b16 %v11806
    %v12390 = vunpack.c.l.b16 %v11807
    %v12391 = vunpack.c.l.b16 %v11808
    %v12392 = vunpack.c.l.b16 %v11809
    %v12393 = vunpack.c.l.b16 %v11810
    %v12394 = vunpack.c.l.b16 %v11811
    %v12395 = vunpack.c.l.b16 %v11812
    %v12396 = vunpack.c.l.b16 %v11813
    %v12397 = vunpack.c.l.b16 %v11814
    %v12398 = vunpack.c.l.b16 %v11815
    %v12399 = vunpack.c.l.b16 %v11816
    %v12400 = vunpack.c.l.b16 %v11817
    %v12401 = vunpack.c.l.b16 %v11818
    %v12402 = vunpack.c.l.b16 %v11819
    %v12403 = vunpack.c.l.b16 %v11820
    %v12404 = vunpack.c.l.b16 %v11821
    %v12405 = vunpack.c.l.b16 %v11822
    %v12406 = vunpack.c.l.b16 %v11823
    %v12407 = vunpack.c.l.b16 %v11824
    %v12408 = vunpack.c.l.b16 %v11825
    %v12409 = vunpack.c.l.b16 %v11826
    %v12410 = vunpack.c.l.b16 %v11827
    %v12411 = vunpack.c.l.b16 %v11828
    %v12412 = vunpack.c.l.b16 %v11829
    %v12413 = vunpack.c.l.b16 %v11830
    %v12414 = vunpack.c.l.b16 %v11831
    %v12415 = vunpack.c.l.b16 %v11832
    %v12416 = vunpack.c.l.b16 %v11833
    %v12417 = vunpack.c.l.b16 %v11834
    %v12418 = vunpack.c.l.b16 %v11835
    %v12419 = vunpack.c.l.b16 %v11836
    %v12420 = vunpack.c.l.b16 %v11837
    %v12421 = vunpack.c.l.b16 %v11838
    %v12422 = vunpack.c.l.b16 %v11839
    %v12423 = vunpack.c.l.b16 %v11840
    %v12424 = vunpack.c.l.b16 %v11841
    %v12425 = vunpack.c.l.b16 %v11842
    %v12426 = vunpack.c.l.b16 %v11843
    %v12427 = vunpack.c.l.b16 %v11844
    %v12428 = vunpack.c.l.b16 %v11845
    %v12429 = vunpack.c.l.b16 %v11846
    %v12430 = vunpack.c.l.b16 %v11847
    %v12431 = vunpack.c.l.b16 %v11848
    %v12432 = vunpack.c.l.b16 %v11849
    %v12433 = vunpack.c.l.b16 %v11850
    %v12434 = vunpack.c.l.b16 %v11851
    %v12435 = vunpack.c.l.b16 %v11852
    %v12436 = vunpack.c.l.b16 %v11853
    %v12437 = vunpack.c.l.b16 %v11854
    %v12438 = vunpack.c.l.b16 %v11855
    %v12439 = vunpack.c.l.b16 %v11856
    %v12440 = vunpack.c.l.b16 %v11857
    %v12441 = vunpack.c.l.b16 %v11858
    %v12442 = vunpack.c.l.b16 %v11859
    %v12443 = vunpack.c.l.b16 %v11860
    %v12444 = vunpack.c.l.b16 %v11861
    %v12445 = vunpack.c.l.b16 %v11862
    %v12446 = vunpack.c.l.b16 %v11863
    %v12447 = vunpack.c.l.b16 %v11864
    %v12448 = vunpack.c.l.b16 %v11865
    %v12449 = vunpack.c.l.b16 %v11866
    %v12450 = vunpack.c.l.b16 %v11867
    %v12451 = vunpack.c.l.b16 %v11868
    %v12452 = vunpack.c.l.b16 %v11869
    %v12453 = vunpack.c.l.b16 %v11870
    %v12454 = vunpack.c.l.b16 %v11871
    %v12455 = vunpack.c.l.b16 %v11872
    %v12456 = vunpack.c.l.b16 %v11873
    %v12457 = vunpack.c.l.b16 %v11874
    %v12458 = vunpack.c.l.b16 %v11875
    %v12459 = vunpack.c.l.b16 %v11876
    %v12460 = vunpack.c.l.b16 %v11877
    %v12461 = vunpack.c.l.b16 %v11878
    %v12462 = vunpack.c.l.b16 %v11879
    %v12463 = vunpack.c.l.b16 %v11880
    %v12464 = vunpack.c.l.b16 %v11881
    %v12465 = vunpack.c.l.b16 %v11882
    %v12466 = vunpack.c.l.b16 %v11883
    %v12467 = vunpack.c.l.b16 %v11884
    %v12468 = vunpack.c.l.b16 %v11885
    %v12469 = vunpack.c.l.b16 %v11886
    %v12470 = vunpack.c.l.b16 %v11887
    %v12471 = vunpack.c.l.b16 %v11888
    %v12472 = vunpack.c.l.b16 %v11889
    %v12473 = vunpack.c.l.b16 %v11890
    %v12474 = vunpack.c.l.b16 %v11891
    %v12475 = vunpack.c.l.b16 %v11892
    %v12476 = vunpack.c.l.b16 %v11893
    %v12477 = vunpack.c.l.b16 %v11894
    %v12478 = vunpack.c.l.b16 %v11895
    %v12479 = vunpack.c.l.b16 %v11896
    %v12480 = vunpack.c.l.b16 %v11897
    %v12481 = vunpack.c.l.b16 %v11898
    %v12482 = vunpack.c.l.b16 %v11899
    %v12483 = vunpack.c.l.b16 %v11900
    %v12484 = vunpack.c.l.b16 %v11901
    %v12485 = vunpack.c.l.b16 %v11902
    %v12486 = vunpack.c.l.b16 %v11903
    %v12487 = vunpack.c.l.b16 %v11904
    %v12488 = vunpack.c.l.b16 %v11905
    %v12489 = vunpack.c.l.b16 %v11906
    %v12490 = vunpack.c.l.b16 %v11907
    %v12491 = vunpack.c.l.b16 %v11908
    %v12492 = vunpack.c.l.b16 %v11909
    %v12493 = vunpack.c.l.b16 %v11910
    %v12494 = vunpack.c.l.b16 %v11911
    %v12495 = vunpack.c.l.b16 %v11912
    %v12496 = vunpack.c.l.b16 %v11913
    %v12497 = vunpack.c.l.b16 %v11914
    %v12498 = vunpack.c.l.b16 %v11915
    %v12499 = vunpack.c.l.b16 %v11916
    %v12500 = vunpack.c.l.b16 %v11917
    %v12501 = vunpack.c.l.b16 %v11918
    %v12502 = vunpack.c.l.b16 %v11919
    %v12503 = vunpack.c.l.b16 %v11920
    %v12504 = vunpack.c.l.b16 %v11921
    %v12505 = vunpack.c.l.b16 %v11922
    %v12506 = vunpack.c.l.b16 %v11923
    %v12507 = vunpack.c.l.b16 %v11924
    %v12508 = vunpack.c.l.b16 %v11925
    %v12509 = vunpack.c.l.b16 %v11926
    %v12510 = vunpack.c.l.b16 %v11927
    %v12511 = vunpack.c.l.b16 %v11928
    %v12512 = vunpack.c.l.b16 %v11929
    %v12513 = vunpack.c.l.b16 %v11930
    %v12514 = vunpack.c.l.b16 %v11931
    %v12515 = vunpack.c.l.b16 %v11932
    %v12516 = vunpack.c.l.b16 %v11933
    %v12517 = vunpack.c.l.b16 %v11934
    %v12518 = vunpack.c.l.b16 %v11935
    %v12519 = vunpack.c.l.b16 %v11936
    %v12520 = vunpack.c.l.b16 %v11937
    %v12521 = vunpack.c.l.b16 %v11938
    %v12522 = vunpack.c.l.b16 %v11939
    %v12523 = vunpack.c.l.b16 %v11940
    %v12524 = vunpack.c.l.b16 %v11941
    %v12525 = vunpack.c.l.b16 %v11942
    %v12526 = vunpack.c.l.b16 %v11943
    %v12527 = vunpack.c.l.b16 %v11944
    %v12528 = vunpack.c.l.b16 %v11945
    %v12529 = vunpack.c.l.b16 %v11946
    %v12530 = vunpack.c.l.b16 %v11947
    %v12531 = vunpack.c.l.b16 %v11948
    %v12532 = vunpack.c.l.b16 %v11949
    %v12533 = vunpack.c.l.b16 %v11950
    %v12534 = vunpack.c.l.b16 %v11951
    %v12535 = vunpack.c.l.b16 %v11952
    %v12536 = vunpack.c.l.b16 %v11953
    %v12537 = vunpack.c.l.b16 %v11954
    %v12538 = vunpack.c.l.b16 %v11955
    %v12539 = vunpack.c.l.b16 %v11956
    %v12540 = vunpack.c.l.b16 %v11957
    %v12541 = vunpack.c.l.b16 %v11958
    %v12542 = vunpack.c.l.b16 %v11959
    %v12543 = vunpack.c.l.b16 %v11960
    %v12544 = vunpack.c.l.b16 %v11961
    %v12545 = vunpack.c.l.b16 %v11962
    %v12546 = vunpack.c.l.b16 %v11963
    %v12547 = vunpack.c.l.b16 %v11964
    %v12548 = vunpack.c.l.b16 %v11965
    %v12549 = vunpack.c.l.b16 %v11966
    %v12550 = vunpack.c.l.b16 %v11967
    %v12551 = vunpack.c.l.b16 %v11968
    %v12552 = vunpack.c.l.b16 %v11969
    %v12553 = vunpack.c.l.b16 %v11970
    %v12554 = vunpack.c.l.b16 %v11971
    %v12555 = vunpack.c.l.b16 %v11972
    %v12556 = vunpack.c.l.b16 %v11973
    %v12557 = vunpack.c.l.b16 %v11974
    %v12558 = vunpack.c.l.b16 %v11975
    %v12559 = vunpack.c.l.b16 %v11976
    %v12560 = vunpack.c.l.b16 %v11977
    %v12561 = vunpack.c.l.b16 %v11978
    %v12562 = vunpack.c.l.b16 %v11979
    %v12563 = vunpack.c.l.b16 %v11980
    %v12564 = vunpack.c.l.b16 %v11981
    %v12565 = vunpack.c.l.b16 %v11982
    %v12566 = vunpack.c.l.b16 %v11983
    %v12567 = vunpack.c.l.b16 %v11984
    %v12568 = vunpack.c.l.b16 %v11985
    %v12569 = vunpack.c.l.b16 %v11986
    %v12570 = vunpack.c.l.b16 %v11987
    %v12571 = vunpack.c.l.b16 %v11988
    %v12572 = vunpack.c.l.b16 %v11989
    %v12573 = vunpack.c.l.b16 %v11990
    %v12574 = vunpack.c.l.b16 %v11991
    %v12575 = vunpack.c.l.b16 %v11992
    %v12576 = vunpack.c.l.b16 %v11993
    %v12577 = vunpack.c.l.b16 %v11994
    %v12578 = vunpack.c.l.b16 %v11995
    %v12579 = vunpack.c.l.b16 %v11996
    %v12580 = vunpack.c.l.b16 %v11997
    %v12581 = vunpack.c.l.b16 %v11998
    %v12582 = vunpack.c.l.b16 %v11999
    %v12583 = vunpack.c.l.b16 %v12000
    %v12584 = vunpack.c.l.b16 %v12001
    %v12585 = vunpack.c.l.b16 %v12002
    %v12586 = vunpack.c.l.b16 %v12003
    %v12587 = vunpack.c.l.b16 %v12004
    %v12588 = vunpack.c.l.b16 %v12005
    %v12589 = vunpack.c.l.b16 %v12006
    %v12590 = vunpack.c.l.b16 %v12007
    %v12591 = vunpack.c.l.b16 %v12008
    %v12592 = vunpack.c.l.b16 %v12009
    %v12593 = vunpack.c.l.b16 %v12010
    %v12594 = vunpack.c.l.b16 %v12011
    %v12595 = vunpack.c.l.b16 %v12012
    %v12596 = vunpack.c.l.b16 %v12013
    %v12597 = vunpack.c.l.b16 %v12014
    %v12598 = vunpack.c.l.b16 %v12015
    %v12599 = vunpack.c.l.b16 %v12016
    %v12600 = vunpack.c.l.b16 %v12017
    %v12601 = vunpack.c.l.b16 %v12018
    %v12602 = vunpack.c.l.b16 %v12019
    %v12603 = vunpack.c.l.b16 %v12020
    %v12604 = vunpack.c.l.b16 %v12021
    %v12605 = vunpack.c.l.b16 %v12022
    %v12606 = vunpack.c.l.b16 %v12023
    %v12607 = vunpack.c.l.b16 %v12024
    %v12608 = vunpack.c.l.b16 %v12025
    %v12609 = vunpack.c.l.b16 %v12026
    %v12610 = vunpack.c.l.b16 %v12027
    %v12611 = vunpack.c.l.b16 %v12028
    %v12612 = vunpack.c.l.b16 %v12029
    %v12613 = vunpack.c.l.b16 %v12030
    %v12614 = vunpack.c.l.b16 %v12031
    %v12615 = vunpack.c.l.b16 %v12032
    %v12616 = vunpack.c.l.b16 %v12033
    %v12617 = vunpack.c.l.b16 %v12034
    %v12618 = vunpack.c.l.b16 %v12035
    %v12619 = vunpack.c.l.b16 %v12036
    %v12620 = vunpack.c.l.b16 %v12037
    %v12621 = vunpack.c.l.b16 %v12038
    %v12622 = vpack.c.b16 %v12335, %v12334
    %v12623 = vpack.c.b16 %v12337, %v12336
    %v12624 = vpack.c.b16 %v12339, %v12338
    %v12625 = vpack.c.b16 %v12341, %v12340
    %v12626 = vpack.c.b16 %v12343, %v12342
    %v12627 = vpack.c.b16 %v12345, %v12344
    %v12628 = vpack.c.b16 %v12347, %v12346
    %v12629 = vpack.c.b16 %v12349, %v12348
    %v12630 = vpack.c.b16 %v12351, %v12350
    %v12631 = vpack.c.b16 %v12353, %v12352
    %v12632 = vpack.c.b16 %v12355, %v12354
    %v12633 = vpack.c.b16 %v12357, %v12356
    %v12634 = vpack.c.b16 %v12359, %v12358
    %v12635 = vpack.c.b16 %v12361, %v12360
    %v12636 = vpack.c.b16 %v12363, %v12362
    %v12637 = vpack.c.b16 %v12365, %v12364
    %v12638 = vpack.c.b16 %v12367, %v12366
    %v12639 = vpack.c.b16 %v12369, %v12368
    %v12640 = vpack.c.b16 %v12371, %v12370
    %v12641 = vpack.c.b16 %v12373, %v12372
    %v12642 = vpack.c.b16 %v12375, %v12374
    %v12643 = vpack.c.b16 %v12377, %v12376
    %v12644 = vpack.c.b16 %v12379, %v12378
    %v12645 = vpack.c.b16 %v12381, %v12380
    %v12646 = vpack.c.b16 %v12383, %v12382
    %v12647 = vpack.c.b16 %v12385, %v12384
    %v12648 = vpack.c.b16 %v12387, %v12386
    %v12649 = vpack.c.b16 %v12389, %v12388
    %v12650 = vpack.c.b16 %v12391, %v12390
    %v12651 = vpack.c.b16 %v12393, %v12392
    %v12652 = vpack.c.b16 %v12395, %v12394
    %v12653 = vpack.c.b16 %v12397, %v12396
    %v12654 = vpack.c.b16 %v12399, %v12398
    %v12655 = vpack.c.b16 %v12401, %v12400
    %v12656 = vpack.c.b16 %v12403, %v12402
    %v12657 = vpack.c.b16 %v12405, %v12404
    %v12658 = vpack.c.b16 %v12407, %v12406
    %v12659 = vpack.c.b16 %v12409, %v12408
    %v12660 = vpack.c.b16 %v12411, %v12410
    %v12661 = vpack.c.b16 %v12413, %v12412
    %v12662 = vpack.c.b16 %v12415, %v12414
    %v12663 = vpack.c.b16 %v12417, %v12416
    %v12664 = vpack.c.b16 %v12419, %v12418
    %v12665 = vpack.c.b16 %v12421, %v12420
    %v12666 = vpack.c.b16 %v12423, %v12422
    %v12667 = vpack.c.b16 %v12425, %v12424
    %v12668 = vpack.c.b16 %v12427, %v12426
    %v12669 = vpack.c.b16 %v12429, %v12428
    %v12670 = vpack.c.b16 %v12431, %v12430
    %v12671 = vpack.c.b16 %v12433, %v12432
    %v12672 = vpack.c.b16 %v12435, %v12434
    %v12673 = vpack.c.b16 %v12437, %v12436
    %v12674 = vpack.c.b16 %v12439, %v12438
    %v12675 = vpack.c.b16 %v12441, %v12440
    %v12676 = vpack.c.b16 %v12443, %v12442
    %v12677 = vpack.c.b16 %v12445, %v12444
    %v12678 = vpack.c.b16 %v12447, %v12446
    %v12679 = vpack.c.b16 %v12449, %v12448
    %v12680 = vpack.c.b16 %v12451, %v12450
    %v12681 = vpack.c.b16 %v12453, %v12452
    %v12682 = vpack.c.b16 %v12455, %v12454
    %v12683 = vpack.c.b16 %v12457, %v12456
    %v12684 = vpack.c.b16 %v12459, %v12458
    %v12685 = vpack.c.b16 %v12461, %v12460
    %v12686 = vpack.c.b16 %v12463, %v12462
    %v12687 = vpack.c.b16 %v12465, %v12464
    %v12688 = vpack.c.b16 %v12467, %v12466
    %v12689 = vpack.c.b16 %v12469, %v12468
    %v12690 = vpack.c.b16 %v12471, %v12470
    %v12691 = vpack.c.b16 %v12473, %v12472
    %v12692 = vpack.c.b16 %v12475, %v12474
    %v12693 = vpack.c.b16 %v12477, %v12476
    %v12694 = vpack.c.b16 %v12479, %v12478
    %v12695 = vpack.c.b16 %v12481, %v12480
    %v12696 = vpack.c.b16 %v12483, %v12482
    %v12697 = vpack.c.b16 %v12485, %v12484
    %v12698 = vpack.c.b16 %v12487, %v12486
    %v12699 = vpack.c.b16 %v12489, %v12488
    %v12700 = vpack.c.b16 %v12491, %v12490
    %v12701 = vpack.c.b16 %v12493, %v12492
    %v12702 = vpack.c.b16 %v12495, %v12494
    %v12703 = vpack.c.b16 %v12497, %v12496
    %v12704 = vpack.c.b16 %v12499, %v12498
    %v12705 = vpack.c.b16 %v12501, %v12500
    %v12706 = vpack.c.b16 %v12503, %v12502
    %v12707 = vpack.c.b16 %v12505, %v12504
    %v12708 = vpack.c.b16 %v12507, %v12506
    %v12709 = vpack.c.b16 %v12509, %v12508
    %v12710 = vpack.c.b16 %v12511, %v12510
    %v12711 = vpack.c.b16 %v12513, %v12512
    %v12712 = vpack.c.b16 %v12515, %v12514
    %v12713 = vpack.c.b16 %v12517, %v12516
    %v12714 = vpack.c.b16 %v12519, %v12518
    %v12715 = vpack.c.b16 %v12521, %v12520
    %v12716 = vpack.c.b16 %v12523, %v12522
    %v12717 = vpack.c.b16 %v12525, %v12524
    %v12718 = vpack.c.b16 %v12527, %v12526
    %v12719 = vpack.c.b16 %v12529, %v12528
    %v12720 = vpack.c.b16 %v12531, %v12530
    %v12721 = vpack.c.b16 %v12533, %v12532
    %v12722 = vpack.c.b16 %v12535, %v12534
    %v12723 = vpack.c.b16 %v12537, %v12536
    %v12724 = vpack.c.b16 %v12539, %v12538
    %v12725 = vpack.c.b16 %v12541, %v12540
    %v12726 = vpack.c.b16 %v12543, %v12542
    %v12727 = vpack.c.b16 %v12545, %v12544
    %v12728 = vpack.c.b16 %v12547, %v12546
    %v12729 = vpack.c.b16 %v12549, %v12548
    %v12730 = vpack.c.b16 %v12551, %v12550
    %v12731 = vpack.c.b16 %v12553, %v12552
    %v12732 = vpack.c.b16 %v12555, %v12554
    %v12733 = vpack.c.b16 %v12557, %v12556
    %v12734 = vpack.c.b16 %v12559, %v12558
    %v12735 = vpack.c.b16 %v12561, %v12560
    %v12736 = vpack.c.b16 %v12563, %v12562
    %v12737 = vpack.c.b16 %v12565, %v12564
    %v12738 = vpack.c.b16 %v12567, %v12566
    %v12739 = vpack.c.b16 %v12569, %v12568
    %v12740 = vpack.c.b16 %v12571, %v12570
    %v12741 = vpack.c.b16 %v12573, %v12572
    %v12742 = vpack.c.b16 %v12575, %v12574
    %v12743 = vpack.c.b16 %v12577, %v12576
    %v12744 = vpack.c.b16 %v12579, %v12578
    %v12745 = vpack.c.b16 %v12581, %v12580
    %v12746 = vpack.c.b16 %v12583, %v12582
    %v12747 = vpack.c.b16 %v12585, %v12584
    %v12748 = vpack.c.b16 %v12587, %v12586
    %v12749 = vpack.c.b16 %v12589, %v12588
    %v12750 = vpack.c.b16 %v12591, %v12590
    %v12751 = vpack.c.b16 %v12593, %v12592
    %v12752 = vpack.c.b16 %v12595, %v12594
    %v12753 = vpack.c.b16 %v12597, %v12596
    %v12754 = vpack.c.b16 %v12599, %v12598
    %v12755 = vpack.c.b16 %v12601, %v12600
    %v12756 = vpack.c.b16 %v12603, %v12602
    %v12757 = vpack.c.b16 %v12605, %v12604
    %v12758 = vpack.c.b16 %v12607, %v12606
    %v12759 = vpack.c.b16 %v12609, %v12608
    %v12760 = vpack.c.b16 %v12611, %v12610
    %v12761 = vpack.c.b16 %v12613, %v12612
    %v12762 = vpack.c.b16 %v12615, %v12614
    %v12763 = vpack.c.b16 %v12617, %v12616
    %v12764 = vpack.c.b16 %v12619, %v12618
    %v12765 = vpack.c.b16 %v12621, %v12620
    %12910 = vmatprep.subr.bf16.mxu0 0
    %12911 = vmatpush1.bf16.msra.mxu0 %v12622
    %12912 = vmatprep.subr.bf16.mxu0 0
    %12913 = vmatpush1.bf16.msra.mxu0 %v12623
    %12914 = vmatprep.subr.bf16.mxu0 0
    %12915 = vmatpush1.bf16.msra.mxu0 %v12624
    %12916 = vmatprep.subr.bf16.mxu0 0
    %12917 = vmatpush1.bf16.msra.mxu0 %v12625
    %12918 = vmatprep.subr.bf16.mxu0 0
    %12919 = vmatpush1.bf16.msra.mxu0 %v12626
    %12920 = vmatprep.subr.bf16.mxu0 0
    %12921 = vmatpush1.bf16.msra.mxu0 %v12627
    %12922 = vmatprep.subr.bf16.mxu0 0
    %12923 = vmatpush1.bf16.msra.mxu0 %v12628
    %12924 = vmatprep.subr.bf16.mxu0 0
    %12925 = vmatpush1.bf16.msra.mxu0 %v12629
    %12926 = vmatprep.subr.bf16.mxu0 0
    %12927 = vmatpush1.bf16.msra.mxu0 %v12630
    %12928 = vmatprep.subr.bf16.mxu0 0
    %12929 = vmatpush1.bf16.msra.mxu0 %v12631
    %12930 = vmatprep.subr.bf16.mxu0 0
    %12931 = vmatpush1.bf16.msra.mxu0 %v12632
    %12932 = vmatprep.subr.bf16.mxu0 0
    %12933 = vmatpush1.bf16.msra.mxu0 %v12633
    %12934 = vmatprep.subr.bf16.mxu0 0
    %12935 = vmatpush1.bf16.msra.mxu0 %v12634
    %12936 = vmatprep.subr.bf16.mxu0 0
    %12937 = vmatpush1.bf16.msra.mxu0 %v12635
    %12938 = vmatprep.subr.bf16.mxu0 0
    %12939 = vmatpush1.bf16.msra.mxu0 %v12636
    %12940 = vmatprep.subr.bf16.mxu0 0
    %12941 = vmatpush1.bf16.msra.mxu0 %v12637
    %12942 = vmatprep.mubr.bf16.mxu0 %v11734
    %12943 = vmatmul.mubr.bf16.gmra.mrb[0].mxu0 %v11733
    %v12944 = vpop.f32.mrb[0].mxu0
    %v12945 = vadd.f32 %v12044, %v12944
    %v12946 = vpop.f32.mrb[0].mxu0
    %v12947 = vpop.f32.mrb[0].mxu0
    %v12948 = vpop.f32.mrb[0].mxu0
    %12949 = vdwg.mxu0
    %12950 = vmatprep.subr.bf16.mxu0 0
    %12951 = vmatpush1.bf16.msra.mxu0 %v12638
    %12952 = vmatprep.subr.bf16.mxu0 0
    %12953 = vmatpush1.bf16.msra.mxu0 %v12639
    %12954 = vmatprep.subr.bf16.mxu0 0
    %12955 = vmatpush1.bf16.msra.mxu0 %v12640
    %12956 = vmatprep.subr.bf16.mxu0 0
    %12957 = vmatpush1.bf16.msra.mxu0 %v12641
    %12958 = vmatprep.subr.bf16.mxu0 0
    %12959 = vmatpush1.bf16.msra.mxu0 %v12642
    %12960 = vmatprep.subr.bf16.mxu0 0
    %12961 = vmatpush1.bf16.msra.mxu0 %v12643
    %12962 = vmatprep.subr.bf16.mxu0 0
    %12963 = vmatpush1.bf16.msra.mxu0 %v12644
    %12964 = vmatprep.subr.bf16.mxu0 0
    %12965 = vmatpush1.bf16.msra.mxu0 %v12645
    %12966 = vmatprep.subr.bf16.mxu0 0
    %12967 = vmatpush1.bf16.msra.mxu0 %v12646
    %12968 = vmatprep.subr.bf16.mxu0 0
    %12969 = vmatpush1.bf16.msra.mxu0 %v12647
    %12970 = vmatprep.subr.bf16.mxu0 0
    %12971 = vmatpush1.bf16.msra.mxu0 %v12648
    %12972 = vmatprep.subr.bf16.mxu0 0
    %12973 = vmatpush1.bf16.msra.mxu0 %v12649
    %12974 = vmatprep.subr.bf16.mxu0 0
    %12975 = vmatpush1.bf16.msra.mxu0 %v12650
    %12976 = vmatprep.subr.bf16.mxu0 0
    %12977 = vmatpush1.bf16.msra.mxu0 %v12651
    %12978 = vmatprep.subr.bf16.mxu0 0
    %12979 = vmatpush1.bf16.msra.mxu0 %v12652
    %12980 = vmatprep.subr.bf16.mxu0 0
    %12981 = vmatpush1.bf16.msra.mxu0 %v12653
    %12982 = vmatprep.mubr.bf16.mxu0 %v11736
    %12983 = vmatmul.mubr.bf16.gmra.mrb[0].mxu0 %v11735
    %v12984 = vpop.f32.mrb[0].mxu0
    %v12985 = vadd.f32 %v12945, %v12984
    %v12986 = vpop.f32.mrb[0].mxu0
    %v12987 = vpop.f32.mrb[0].mxu0
    %v12988 = vpop.f32.mrb[0].mxu0
    %12989 = vdwg.mxu0
    %12990 = vmatprep.subr.bf16.mxu0 0
    %12991 = vmatpush1.bf16.msra.mxu0 %v12654
    %12992 = vmatprep.subr.bf16.mxu0 0
    %12993 = vmatpush1.bf16.msra.mxu0 %v12655
    %12994 = vmatprep.subr.bf16.mxu0 0
    %12995 = vmatpush1.bf16.msra.mxu0 %v12656
    %12996 = vmatprep.subr.bf16.mxu0 0
    %12997 = vmatpush1.bf16.msra.mxu0 %v12657
    %12998 = vmatprep.subr.bf16.mxu0 0
    %12999 = vmatpush1.bf16.msra.mxu0 %v12658
    %13000 = vmatprep.subr.bf16.mxu0 0
    %13001 = vmatpush1.bf16.msra.mxu0 %v12659
    %13002 = vmatprep.subr.bf16.mxu0 0
    %13003 = vmatpush1.bf16.msra.mxu0 %v12660
    %13004 = vmatprep.subr.bf16.mxu0 0
    %13005 = vmatpush1.bf16.msra.mxu0 %v12661
    %13006 = vmatprep.subr.bf16.mxu0 0
    %13007 = vmatpush1.bf16.msra.mxu0 %v12662
    %13008 = vmatprep.subr.bf16.mxu0 0
    %13009 = vmatpush1.bf16.msra.mxu0 %v12663
    %13010 = vmatprep.subr.bf16.mxu0 0
    %13011 = vmatpush1.bf16.msra.mxu0 %v12664
    %13012 = vmatprep.subr.bf16.mxu0 0
    %13013 = vmatpush1.bf16.msra.mxu0 %v12665
    %13014 = vmatprep.subr.bf16.mxu0 0
    %13015 = vmatpush1.bf16.msra.mxu0 %v12666
    %13016 = vmatprep.subr.bf16.mxu0 0
    %13017 = vmatpush1.bf16.msra.mxu0 %v12667
    %13018 = vmatprep.subr.bf16.mxu0 0
    %13019 = vmatpush1.bf16.msra.mxu0 %v12668
    %13020 = vmatprep.subr.bf16.mxu0 0
    %13021 = vmatpush1.bf16.msra.mxu0 %v12669
    %13022 = vmatprep.mubr.bf16.mxu0 %v11738
    %13023 = vmatmul.mubr.bf16.gmra.mrb[0].mxu0 %v11737
    %v13024 = vpop.f32.mrb[0].mxu0
    %v13025 = vadd.f32 %v12985, %v13024
    %v13026 = vpop.f32.mrb[0].mxu0
    %v13027 = vpop.f32.mrb[0].mxu0
    %v13028 = vpop.f32.mrb[0].mxu0
    %13029 = vdwg.mxu0
    %13030 = vmatprep.subr.bf16.mxu0 0
    %13031 = vmatpush1.bf16.msra.mxu0 %v12670
    %13032 = vmatprep.subr.bf16.mxu0 0
    %13033 = vmatpush1.bf16.msra.mxu0 %v12671
    %13034 = vmatprep.subr.bf16.mxu0 0
    %13035 = vmatpush1.bf16.msra.mxu0 %v12672
    %13036 = vmatprep.subr.bf16.mxu0 0
    %13037 = vmatpush1.bf16.msra.mxu0 %v12673
    %13038 = vmatprep.subr.bf16.mxu0 0
    %13039 = vmatpush1.bf16.msra.mxu0 %v12674
    %13040 = vmatprep.subr.bf16.mxu0 0
    %13041 = vmatpush1.bf16.msra.mxu0 %v12675
    %13042 = vmatprep.subr.bf16.mxu0 0
    %13043 = vmatpush1.bf16.msra.mxu0 %v12676
    %13044 = vmatprep.subr.bf16.mxu0 0
    %13045 = vmatpush1.bf16.msra.mxu0 %v12677
    %13046 = vmatprep.subr.bf16.mxu0 0
    %13047 = vmatpush1.bf16.msra.mxu0 %v12678
    %13048 = vmatprep.subr.bf16.mxu0 0
    %13049 = vmatpush1.bf16.msra.mxu0 %v12679
    %13050 = vmatprep.subr.bf16.mxu0 0
    %13051 = vmatpush1.bf16.msra.mxu0 %v12680
    %13052 = vmatprep.subr.bf16.mxu0 0
    %13053 = vmatpush1.bf16.msra.mxu0 %v12681
    %13054 = vmatprep.subr.bf16.mxu0 0
    %13055 = vmatpush1.bf16.msra.mxu0 %v12682
    %13056 = vmatprep.subr.bf16.mxu0 0
    %13057 = vmatpush1.bf16.msra.mxu0 %v12683
    %13058 = vmatprep.subr.bf16.mxu0 0
    %13059 = vmatpush1.bf16.msra.mxu0 %v12684
    %13060 = vmatprep.subr.bf16.mxu0 0
    %13061 = vmatpush1.bf16.msra.mxu0 %v12685
    %13062 = vmatprep.mubr.bf16.mxu0 %v11740
    %13063 = vmatmul.mubr.bf16.gmra.mrb[0].mxu0 %v11739
    %v13064 = vpop.f32.mrb[0].mxu0
    %v13065 = vadd.f32 %v13025, %v13064
    %v13066 = vpop.f32.mrb[0].mxu0
    %v13067 = vpop.f32.mrb[0].mxu0
    %v13068 = vpop.f32.mrb[0].mxu0
    %13069 = vdwg.mxu0
    %13070 = vmatprep.subr.bf16.mxu0 0
    %13071 = vmatpush1.bf16.msra.mxu0 %v12686
    %13072 = vmatprep.subr.bf16.mxu0 0
    %13073 = vmatpush1.bf16.msra.mxu0 %v12687
    %13074 = vmatprep.subr.bf16.mxu0 0
    %13075 = vmatpush1.bf16.msra.mxu0 %v12688
    %13076 = vmatprep.subr.bf16.mxu0 0
    %13077 = vmatpush1.bf16.msra.mxu0 %v12689
    %13078 = vmatprep.subr.bf16.mxu0 0
    %13079 = vmatpush1.bf16.msra.mxu0 %v12690
    %13080 = vmatprep.subr.bf16.mxu0 0
    %13081 = vmatpush1.bf16.msra.mxu0 %v12691
    %13082 = vmatprep.subr.bf16.mxu0 0
    %13083 = vmatpush1.bf16.msra.mxu0 %v12692
    %13084 = vmatprep.subr.bf16.mxu0 0
    %13085 = vmatpush1.bf16.msra.mxu0 %v12693
    %13086 = vmatprep.subr.bf16.mxu0 0
    %13087 = vmatpush1.bf16.msra.mxu0 %v12694
    %13088 = vmatprep.subr.bf16.mxu0 0
    %13089 = vmatpush1.bf16.msra.mxu0 %v12695
    %13090 = vmatprep.subr.bf16.mxu0 0
    %13091 = vmatpush1.bf16.msra.mxu0 %v12696
    %13092 = vmatprep.subr.bf16.mxu0 0
    %13093 = vmatpush1.bf16.msra.mxu0 %v12697
    %13094 = vmatprep.subr.bf16.mxu0 0
    %13095 = vmatpush1.bf16.msra.mxu0 %v12698
    %13096 = vmatprep.subr.bf16.mxu0 0
    %13097 = vmatpush1.bf16.msra.mxu0 %v12699
    %13098 = vmatprep.subr.bf16.mxu0 0
    %13099 = vmatpush1.bf16.msra.mxu0 %v12700
    %13100 = vmatprep.subr.bf16.mxu0 0
    %13101 = vmatpush1.bf16.msra.mxu0 %v12701
    %13102 = vmatprep.mubr.bf16.mxu0 %v11742
    %13103 = vmatmul.mubr.bf16.gmra.mrb[0].mxu0 %v11741
    %v13104 = vpop.f32.mrb[0].mxu0
    %v13105 = vadd.f32 %v13065, %v13104
    %v13106 = vpop.f32.mrb[0].mxu0
    %v13107 = vpop.f32.mrb[0].mxu0
    %v13108 = vpop.f32.mrb[0].mxu0
    %13109 = vdwg.mxu0
    %13110 = vmatprep.subr.bf16.mxu0 0
    %13111 = vmatpush1.bf16.msra.mxu0 %v12702
    %13112 = vmatprep.subr.bf16.mxu0 0
    %13113 = vmatpush1.bf16.msra.mxu0 %v12703
    %13114 = vmatprep.subr.bf16.mxu0 0
    %13115 = vmatpush1.bf16.msra.mxu0 %v12704
    %13116 = vmatprep.subr.bf16.mxu0 0
    %13117 = vmatpush1.bf16.msra.mxu0 %v12705
    %13118 = vmatprep.subr.bf16.mxu0 0
    %13119 = vmatpush1.bf16.msra.mxu0 %v12706
    %13120 = vmatprep.subr.bf16.mxu0 0
    %13121 = vmatpush1.bf16.msra.mxu0 %v12707
    %13122 = vmatprep.subr.bf16.mxu0 0
    %13123 = vmatpush1.bf16.msra.mxu0 %v12708
    %13124 = vmatprep.subr.bf16.mxu0 0
    %13125 = vmatpush1.bf16.msra.mxu0 %v12709
    %13126 = vmatprep.subr.bf16.mxu0 0
    %13127 = vmatpush1.bf16.msra.mxu0 %v12710
    %13128 = vmatprep.subr.bf16.mxu0 0
    %13129 = vmatpush1.bf16.msra.mxu0 %v12711
    %13130 = vmatprep.subr.bf16.mxu0 0
    %13131 = vmatpush1.bf16.msra.mxu0 %v12712
    %13132 = vmatprep.subr.bf16.mxu0 0
    %13133 = vmatpush1.bf16.msra.mxu0 %v12713
    %13134 = vmatprep.subr.bf16.mxu0 0
    %13135 = vmatpush1.bf16.msra.mxu0 %v12714
    %13136 = vmatprep.subr.bf16.mxu0 0
    %13137 = vmatpush1.bf16.msra.mxu0 %v12715
    %13138 = vmatprep.subr.bf16.mxu0 0
    %13139 = vmatpush1.bf16.msra.mxu0 %v12716
    %13140 = vmatprep.subr.bf16.mxu0 0
    %13141 = vmatpush1.bf16.msra.mxu0 %v12717
    %13142 = vmatprep.mubr.bf16.mxu0 %v11744
    %13143 = vmatmul.mubr.bf16.gmra.mrb[0].mxu0 %v11743
    %v13144 = vpop.f32.mrb[0].mxu0
    %v13145 = vadd.f32 %v13105, %v13144
    %v13146 = vpop.f32.mrb[0].mxu0
    %v13147 = vpop.f32.mrb[0].mxu0
    %v13148 = vpop.f32.mrb[0].mxu0
    %13149 = vdwg.mxu0
    %13150 = vmatprep.subr.bf16.mxu0 0
    %13151 = vmatpush1.bf16.msra.mxu0 %v12718
    %13152 = vmatprep.subr.bf16.mxu0 0
    %13153 = vmatpush1.bf16.msra.mxu0 %v12719
    %13154 = vmatprep.subr.bf16.mxu0 0
    %13155 = vmatpush1.bf16.msra.mxu0 %v12720
    %13156 = vmatprep.subr.bf16.mxu0 0
    %13157 = vmatpush1.bf16.msra.mxu0 %v12721
    %13158 = vmatprep.subr.bf16.mxu0 0
    %13159 = vmatpush1.bf16.msra.mxu0 %v12722
    %13160 = vmatprep.subr.bf16.mxu0 0
    %13161 = vmatpush1.bf16.msra.mxu0 %v12723
    %13162 = vmatprep.subr.bf16.mxu0 0
    %13163 = vmatpush1.bf16.msra.mxu0 %v12724
    %13164 = vmatprep.subr.bf16.mxu0 0
    %13165 = vmatpush1.bf16.msra.mxu0 %v12725
    %13166 = vmatprep.subr.bf16.mxu0 0
    %13167 = vmatpush1.bf16.msra.mxu0 %v12726
    %13168 = vmatprep.subr.bf16.mxu0 0
    %13169 = vmatpush1.bf16.msra.mxu0 %v12727
    %13170 = vmatprep.subr.bf16.mxu0 0
    %13171 = vmatpush1.bf16.msra.mxu0 %v12728
    %13172 = vmatprep.subr.bf16.mxu0 0
    %13173 = vmatpush1.bf16.msra.mxu0 %v12729
    %13174 = vmatprep.subr.bf16.mxu0 0
    %13175 = vmatpush1.bf16.msra.mxu0 %v12730
    %13176 = vmatprep.subr.bf16.mxu0 0
    %13177 = vmatpush1.bf16.msra.mxu0 %v12731
    %13178 = vmatprep.subr.bf16.mxu0 0
    %13179 = vmatpush1.bf16.msra.mxu0 %v12732
    %13180 = vmatprep.subr.bf16.mxu0 0
    %13181 = vmatpush1.bf16.msra.mxu0 %v12733
    %13182 = vmatprep.mubr.bf16.mxu0 %v11746
    %13183 = vmatmul.mubr.bf16.gmra.mrb[0].mxu0 %v11745
    %v13184 = vpop.f32.mrb[0].mxu0
    %v13185 = vadd.f32 %v13145, %v13184
    %v13186 = vpop.f32.mrb[0].mxu0
    %v13187 = vpop.f32.mrb[0].mxu0
    %v13188 = vpop.f32.mrb[0].mxu0
    %13189 = vdwg.mxu0
    %13190 = vmatprep.subr.bf16.mxu0 0
    %13191 = vmatpush1.bf16.msra.mxu0 %v12734
    %13192 = vmatprep.subr.bf16.mxu0 0
    %13193 = vmatpush1.bf16.msra.mxu0 %v12735
    %13194 = vmatprep.subr.bf16.mxu0 0
    %13195 = vmatpush1.bf16.msra.mxu0 %v12736
    %13196 = vmatprep.subr.bf16.mxu0 0
    %13197 = vmatpush1.bf16.msra.mxu0 %v12737
    %13198 = vmatprep.subr.bf16.mxu0 0
    %13199 = vmatpush1.bf16.msra.mxu0 %v12738
    %13200 = vmatprep.subr.bf16.mxu0 0
    %13201 = vmatpush1.bf16.msra.mxu0 %v12739
    %13202 = vmatprep.subr.bf16.mxu0 0
    %13203 = vmatpush1.bf16.msra.mxu0 %v12740
    %13204 = vmatprep.subr.bf16.mxu0 0
    %13205 = vmatpush1.bf16.msra.mxu0 %v12741
    %13206 = vmatprep.subr.bf16.mxu0 0
    %13207 = vmatpush1.bf16.msra.mxu0 %v12742
    %13208 = vmatprep.subr.bf16.mxu0 0
    %13209 = vmatpush1.bf16.msra.mxu0 %v12743
    %13210 = vmatprep.subr.bf16.mxu0 0
    %13211 = vmatpush1.bf16.msra.mxu0 %v12744
    %13212 = vmatprep.subr.bf16.mxu0 0
    %13213 = vmatpush1.bf16.msra.mxu0 %v12745
    %13214 = vmatprep.subr.bf16.mxu0 0
    %13215 = vmatpush1.bf16.msra.mxu0 %v12746
    %13216 = vmatprep.subr.bf16.mxu0 0
    %13217 = vmatpush1.bf16.msra.mxu0 %v12747
    %13218 = vmatprep.subr.bf16.mxu0 0
    %13219 = vmatpush1.bf16.msra.mxu0 %v12748
    %13220 = vmatprep.subr.bf16.mxu0 0
    %13221 = vmatpush1.bf16.msra.mxu0 %v12749
    %13222 = vmatprep.mubr.bf16.mxu0 %v11748
    %13223 = vmatmul.mubr.bf16.gmra.mrb[0].mxu0 %v11747
    %v13224 = vpop.f32.mrb[0].mxu0
    %v13225 = vadd.f32 %v13185, %v13224
    %v13226 = vpop.f32.mrb[0].mxu0
    %v13227 = vpop.f32.mrb[0].mxu0
    %v13228 = vpop.f32.mrb[0].mxu0
    %13229 = vdwg.mxu0
    %13230 = vmatprep.subr.bf16.mxu0 0
    %13231 = vmatpush1.bf16.msra.mxu0 %v12750
    %13232 = vmatprep.subr.bf16.mxu0 0
    %13233 = vmatpush1.bf16.msra.mxu0 %v12751
    %13234 = vmatprep.subr.bf16.mxu0 0
    %13235 = vmatpush1.bf16.msra.mxu0 %v12752
    %13236 = vmatprep.subr.bf16.mxu0 0
    %13237 = vmatpush1.bf16.msra.mxu0 %v12753
    %13238 = vmatprep.subr.bf16.mxu0 0
    %13239 = vmatpush1.bf16.msra.mxu0 %v12754
    %13240 = vmatprep.subr.bf16.mxu0 0
    %13241 = vmatpush1.bf16.msra.mxu0 %v12755
    %13242 = vmatprep.subr.bf16.mxu0 0
    %13243 = vmatpush1.bf16.msra.mxu0 %v12756
    %13244 = vmatprep.subr.bf16.mxu0 0
    %13245 = vmatpush1.bf16.msra.mxu0 %v12757
    %13246 = vmatprep.subr.bf16.mxu0 0
    %13247 = vmatpush1.bf16.msra.mxu0 %v12758
    %13248 = vmatprep.subr.bf16.mxu0 0
    %13249 = vmatpush1.bf16.msra.mxu0 %v12759
    %13250 = vmatprep.subr.bf16.mxu0 0
    %13251 = vmatpush1.bf16.msra.mxu0 %v12760
    %13252 = vmatprep.subr.bf16.mxu0 0
    %13253 = vmatpush1.bf16.msra.mxu0 %v12761
    %13254 = vmatprep.subr.bf16.mxu0 0
    %13255 = vmatpush1.bf16.msra.mxu0 %v12762
    %13256 = vmatprep.subr.bf16.mxu0 0
    %13257 = vmatpush1.bf16.msra.mxu0 %v12763
    %13258 = vmatprep.subr.bf16.mxu0 0
    %13259 = vmatpush1.bf16.msra.mxu0 %v12764
    %13260 = vmatprep.subr.bf16.mxu0 0
    %13261 = vmatpush1.bf16.msra.mxu0 %v12765
    %13262 = vmatprep.mubr.bf16.mxu0 %v11750
    %13263 = vmatmul.mubr.bf16.gmra.mrb[0].mxu0 %v11749
    %v13264 = vpop.f32.mrb[0].mxu0
    %v13265 = vadd.f32 %v13225, %v13264
    %v13266 = vpop.f32.mrb[0].mxu0
    %v13267 = vpop.f32.mrb[0].mxu0
    %v13268 = vpop.f32.mrb[0].mxu0
    %13269 = vdwg.mxu0
    %13270 = vst [vmem:[#allocation17] sm:$0x3] %v13265
    // Predicated region
    $region70: #{alexnet_up_forward.1} parent=1 // pred_check
      _
    $region71: #{alexnet_up_forward.1} parent=1 // pred_check_branch
      %13272 = sbr.rel (0) target = $region73
    $region72: #{alexnet_up_forward.1} parent=1 // pred_region
      %s13274 = ssub.s32 32, 32
      %13275 = vsyncadd [#allocation5], %s13274
      %s13277 = sshll.u32 [#allocation17], 4
      %s13278 = int_to_ptr.vmem [resolvable:$true] %s13277
      %13280 = dma.vmem_to_hbm [thread:$0]  %s13278, 32, %s9, [#allocation5]
    $region73: #{alexnet_up_forward.1} parent=1 // pred_fallthru
      _
    // Predicated region
    $region74: #{alexnet_up_forward.1} parent=1 // pred_check
      _
    $region75: #{alexnet_up_forward.1} parent=1 // pred_check_branch
      %13282 = sbr.rel (0) target = $region77
    $region76: #{alexnet_up_forward.1} parent=1 // pred_region
      %13283 = dma.done [#allocation5], 32
    $region77: #{alexnet_up_forward.1} parent=1 // pred_fallthru
      _
    %13284 = vsyncpa [#allocation4], 1
    %13285 = vsyncpa [#allocation7], 1
    %13286 = vsyncpa [#allocation10], 1
    %13287 = vsyncpa [#allocation13], 1
    %13288 = vsyncpa [#allocation16], 1
    %13289 = vsyncpa [#allocation5], 1

</llo_original>
